<compile_context>
chip_gen: v7x
topology: tpu7x:2x2x1
jax: 0.10.0
libtpu: 0.0.40
codegen_flags: <defaults>
</compile_context>

<pallas_src>
import numpy as np
import jax
import jax.numpy as jnp
from jax import lax
from jax.experimental import pallas as pl
from jax.experimental.pallas import tpu as pltpu

LANE_CHUNK = 128  # inner batch-chunk width (one vreg lane tile)


def net3_kernel(x_ref, wc_ref, bc_ref, wl_ref, bl_ref, out_ref):
    # x_ref : (10, 10, 8, TN)  VMEM  zero-padded volume (D_pad, H_pad, W_pad, batch-on-lanes)
    # wc_ref: (27,)            SMEM  conv3d weights, (kd, kh, kw) row-major
    # bc_ref: (1,)             SMEM  conv3d bias
    # wl_ref: (16, 5, 128)     VMEM  linear weights, lane-replicated, scattered on even sublanes
    # bl_ref: (1,)             SMEM  linear bias
    # out_ref: (1, TN)         VMEM  lane-dense output block
    tn = out_ref.shape[1]
    bc = bc_ref[0]
    bl = bl_ref[0]

    for c in range(tn // LANE_CHUNK):            # 128-lane chunks: bounded vreg live set
        lo = c * LANE_CHUNK
        hi = lo + LANE_CHUNK
        total = jnp.zeros((5, LANE_CHUNK), jnp.float32)

        for d in range(4):                       # pooled depth index
            m_d = None
            for r in range(2):                   # the two conv-output depth rows in this pool
                z = 2 * d + r
                acc = None
                for kd in range(3):
                    # ONE aligned full-width load per (z, kd): (10, 8, 128) = 10 vregs.
                    slab = x_ref[z + kd, :, :, lo:hi]
                    for kh in range(3):
                        hwin = slab[kh:kh + 8]                    # free leading-dim vreg pick
                        for kw in range(3):
                            w = wc_ref[kd * 9 + kh * 3 + kw]      # scalar from SMEM
                            term = w * hwin[:, kw:kw + 6, :]      # sublane slice of loaded vregs
                            acc = term if acc is None else acc + term
                # fold depth max immediately -> acc's 8 vregs die here
                m_d = acc if m_d is None else jnp.maximum(m_d, acc)   # (8, 6, 128)

            for h in range(4):                   # pooled height index
                m_dh = jnp.maximum(m_d[2 * h], m_d[2 * h + 1])        # pool over height (6, 128)
                m_w = jnp.maximum(m_dh[0:5, :], m_dh[1:6, :])         # rows 0,2,4 = W-pool (5, 128)
                y = jnp.tanh(m_w + bc)           # tanh/bias hoisted after the max (monotone)
                total = total + wl_ref[4 * d + h] * y                 # (5,128) * (5,128), no bcast

        out_ref[:, lo:hi] = jnp.sum(total, axis=0, keepdims=True) + bl


def _pick_block_n(n):
    """Batch block size (multiple of 128): guarantee >=2 grid steps when N > 128
    (v7x's two TensorCores both get work), up to 512 lanes for large batches to
    amortize the per-grid-step overhead."""
    n_chunks = pl.cdiv(n, LANE_CHUNK)
    if n_chunks <= 1:
        return LANE_CHUNK
    return max(1, min(4, n_chunks // 2)) * LANE_CHUNK


def net3_forward(x, w_conv, b_conv, w_lin, b_lin, block_n=None):
    """x: (N, 1, 8, 8, 6) float32 (NCDHW). Returns (N, 1) float32."""
    N = x.shape[0]
    tn = block_n if block_n is not None else _pick_block_n(N)
    assert tn % LANE_CHUNK == 0
    n_pad = pl.cdiv(N, tn) * tn

    # Kernel-layout prep: transpose the small unpadded tensor once, then ONE fused
    # pad for conv D/H/W zero padding + batch tail.  If Net3 is called repeatedly,
    # reuse `xt` across calls instead of rebuilding it.
    xt = jnp.transpose(x[:, 0].astype(jnp.float32), (1, 2, 3, 0))    # (8, 8, 6, N)
    xt = jnp.pad(xt, ((1, 1), (1, 1), (1, 1), (0, n_pad - N)))       # (10, 10, 8, n_pad)

    wc = w_conv.reshape(27).astype(jnp.float32)                      # (27,)
    # Linear weights: flat index ((d*4 + h)*3 + w) -> wl[4*d+h, 2*w, :], lane-replicated.
    wl16 = w_lin.reshape(16, 3).astype(jnp.float32)
    wl5 = jnp.zeros((16, 5), jnp.float32).at[:, 0::2].set(wl16)
    wl_rep = jnp.broadcast_to(wl5[:, :, None], (16, 5, LANE_CHUNK))

    out = pl.pallas_call(
        net3_kernel,
        out_shape=jax.ShapeDtypeStruct((1, n_pad), jnp.float32),
        grid=(n_pad // tn,),
        in_specs=[
            pl.BlockSpec((10, 10, 8, tn), lambda i: (0, 0, 0, i)),        # input volume
            pl.BlockSpec(memory_space=pltpu.MemorySpace.SMEM),            # conv weights
            pl.BlockSpec(memory_space=pltpu.MemorySpace.SMEM),            # conv bias
            pl.BlockSpec((16, 5, LANE_CHUNK), lambda i: (0, 0, 0)),       # linear weights
            pl.BlockSpec(memory_space=pltpu.MemorySpace.SMEM),            # linear bias
        ],
        out_specs=pl.BlockSpec((1, tn), lambda i: (0, i)),
        compiler_params=pltpu.CompilerParams(
            dimension_semantics=("parallel",)),
    )(xt, wc, b_conv.astype(jnp.float32), wl_rep, b_lin.astype(jnp.float32))
    return out[:, :N].T                                                   # (N, 1)


def net3_reference(x, w_conv, b_conv, w_lin, b_lin):
    """Pure-JAX/XLA reference for verification."""
    y = lax.conv_general_dilated(
        x, w_conv, window_strides=(1, 1, 1),
        padding=((1, 1), (1, 1), (1, 1)),
        dimension_numbers=("NCDHW", "OIDHW", "NCDHW"))
    y = jnp.tanh(y + b_conv.reshape(1, 1, 1, 1, 1))                  # (N,1,8,8,6)
    N = x.shape[0]
    pooled = y.reshape(N, 1, 4, 2, 4, 2, 3, 2).max(axis=(3, 5, 7))   # (N,1,4,4,3)
    flat = pooled.reshape(N, -1)                                     # (N,48)
    return flat @ w_lin.T + b_lin                                    # (N,1)


if __name__ == "__main__":
    key = jax.random.PRNGKey(0)
    k1, k2, k3, k4, k5, k6, k7 = jax.random.split(key, 7)

    # Deterministic parameter init (PyTorch-like uniform bounds).
    bc = 1.0 / np.sqrt(27.0)
    bl = 1.0 / np.sqrt(48.0)
    w_conv = jax.random.uniform(k1, (1, 1, 3, 3, 3), jnp.float32, -bc, bc)
    b_conv = jax.random.uniform(k2, (1,), jnp.float32, -bc, bc)
    w_lin = jax.random.uniform(k3, (1, 48), jnp.float32, -bl, bl)
    b_lin = jax.random.uniform(k4, (1,), jnp.float32, -bl, bl)

    # Input: (N=2, C=1, D=8, H=8, W=6) so that pooled volume = 4*4*3 = 48.
    x = jax.random.normal(k5, (2, 1, 8, 8, 6), jnp.float32)
    out = jax.block_until_ready(net3_forward(x, w_conv, b_conv, w_lin, b_lin))
    ref = net3_reference(x, w_conv, b_conv, w_lin, b_lin)
    np.testing.assert_allclose(np.asarray(out), np.asarray(ref),
                               rtol=1e-4, atol=1e-4)

    # Non-multiple-of-128 batch: exercises batch-tail padding + a multi-step grid.
    x2 = jax.random.normal(k6, (300, 1, 8, 8, 6), jnp.float32)
    out2 = jax.block_until_ready(net3_forward(x2, w_conv, b_conv, w_lin, b_lin))
    ref2 = net3_reference(x2, w_conv, b_conv, w_lin, b_lin)
    np.testing.assert_allclose(np.asarray(out2), np.asarray(ref2),
                               rtol=1e-4, atol=1e-4)

    # Larger batch: exercises the 256-lane block with inner 128-lane chunking.
    x3 = jax.random.normal(k7, (520, 1, 8, 8, 6), jnp.float32)
    out3 = jax.block_until_ready(net3_forward(x3, w_conv, b_conv, w_lin, b_lin))
    ref3 = net3_reference(x3, w_conv, b_conv, w_lin, b_lin)
    np.testing.assert_allclose(np.asarray(out3), np.asarray(ref3),
                               rtol=1e-4, atol=1e-4)

    print("KERNEL_OK")
</pallas_src>

<mosaic_0001>
module attributes {stable_mosaic.version = 11 : i64} {
  func.func @net3_kernel(%arg0: i32, %arg1: memref<10x10x8x128xf32, #tpu.memory_space<vmem>>, %arg2: memref<27xf32, #tpu.memory_space<smem>>, %arg3: memref<1xf32, #tpu.memory_space<smem>>, %arg4: memref<16x5x128xf32, #tpu.memory_space<vmem>>, %arg5: memref<1xf32, #tpu.memory_space<smem>>, %arg6: memref<1x128xf32, #tpu.memory_space<vmem>>) attributes {dimension_semantics = [#tpu.dimension_semantics<parallel>], iteration_bounds = array<i64: 1>, scalar_prefetch = 0 : i64, scratch_operands = 0 : i64, tpu.core_type = #tpu.core_type<tc>, window_params = [{transform_indices = @transform_0, window_bounds = array<i64: 10, 10, 8, 128>}, {transform_indices = @transform_1, window_bounds = array<i64: 27>}, {transform_indices = @transform_2, window_bounds = array<i64: 1>}, {pipeline_mode = #tpu.pipeline_mode<synchronous>, transform_indices = @transform_3, window_bounds = array<i64: 16, 5, 128>}, {transform_indices = @transform_4, window_bounds = array<i64: 1>}, {transform_indices = @transform_5, window_bounds = array<i64: 1, 128>}]} {
    %c0 = arith.constant 0 : index
    %0 = memref.load %arg3[%c0] : memref<1xf32, #tpu.memory_space<smem>>
    %c0_0 = arith.constant 0 : index
    %1 = memref.load %arg5[%c0_0] : memref<1xf32, #tpu.memory_space<smem>>
    %cst = arith.constant 0.000000e+00 : f32
    %2 = vector.broadcast %cst : f32 to vector<5x128xf32>
    %c0_1 = arith.constant 0 : index
    %c0_2 = arith.constant 0 : index
    %c0_3 = arith.constant 0 : index
    %c0_4 = arith.constant 0 : index
    %3 = vector.load %arg1[%c0_1, %c0_2, %c0_3, %c0_4] : memref<10x10x8x128xf32, #tpu.memory_space<vmem>>, vector<1x10x8x128xf32>
    %4 = vector.shape_cast %3 : vector<1x10x8x128xf32> to vector<10x8x128xf32>
    %5 = vector.extract_strided_slice %4 {offsets = [0, 0, 0], sizes = [8, 8, 128], strides = [1, 1, 1]} : vector<10x8x128xf32> to vector<8x8x128xf32>
    %c0_5 = arith.constant 0 : index
    %6 = memref.load %arg2[%c0_5] : memref<27xf32, #tpu.memory_space<smem>>
    %7 = vector.extract_strided_slice %5 {offsets = [0, 0, 0], sizes = [8, 6, 128], strides = [1, 1, 1]} : vector<8x8x128xf32> to vector<8x6x128xf32>
    %8 = vector.broadcast %6 : f32 to vector<8x6x128xf32>
    %9 = arith.mulf %8, %7 : vector<8x6x128xf32>
    %c1 = arith.constant 1 : index
    %10 = memref.load %arg2[%c1] : memref<27xf32, #tpu.memory_space<smem>>
    %11 = vector.extract_strided_slice %5 {offsets = [0, 1, 0], sizes = [8, 6, 128], strides = [1, 1, 1]} : vector<8x8x128xf32> to vector<8x6x128xf32>
    %12 = vector.broadcast %10 : f32 to vector<8x6x128xf32>
    %13 = arith.mulf %12, %11 : vector<8x6x128xf32>
    %14 = arith.addf %9, %13 : vector<8x6x128xf32>
    %c2 = arith.constant 2 : index
    %15 = memref.load %arg2[%c2] : memref<27xf32, #tpu.memory_space<smem>>
    %16 = vector.extract_strided_slice %5 {offsets = [0, 2, 0], sizes = [8, 6, 128], strides = [1, 1, 1]} : vector<8x8x128xf32> to vector<8x6x128xf32>
    %17 = vector.broadcast %15 : f32 to vector<8x6x128xf32>
    %18 = arith.mulf %17, %16 : vector<8x6x128xf32>
    %19 = arith.addf %14, %18 : vector<8x6x128xf32>
    %20 = vector.extract_strided_slice %4 {offsets = [1, 0, 0], sizes = [8, 8, 128], strides = [1, 1, 1]} : vector<10x8x128xf32> to vector<8x8x128xf32>
    %c3 = arith.constant 3 : index
    %21 = memref.load %arg2[%c3] : memref<27xf32, #tpu.memory_space<smem>>
    %22 = vector.extract_strided_slice %20 {offsets = [0, 0, 0], sizes = [8, 6, 128], strides = [1, 1, 1]} : vector<8x8x128xf32> to vector<8x6x128xf32>
    %23 = vector.broadcast %21 : f32 to vector<8x6x128xf32>
    %24 = arith.mulf %23, %22 : vector<8x6x128xf32>
    %25 = arith.addf %19, %24 : vector<8x6x128xf32>
    %c4 = arith.constant 4 : index
    %26 = memref.load %arg2[%c4] : memref<27xf32, #tpu.memory_space<smem>>
    %27 = vector.extract_strided_slice %20 {offsets = [0, 1, 0], sizes = [8, 6, 128], strides = [1, 1, 1]} : vector<8x8x128xf32> to vector<8x6x128xf32>
    %28 = vector.broadcast %26 : f32 to vector<8x6x128xf32>
    %29 = arith.mulf %28, %27 : vector<8x6x128xf32>
    %30 = arith.addf %25, %29 : vector<8x6x128xf32>
    %c5 = arith.constant 5 : index
    %31 = memref.load %arg2[%c5] : memref<27xf32, #tpu.memory_space<smem>>
    %32 = vector.extract_strided_slice %20 {offsets = [0, 2, 0], sizes = [8, 6, 128], strides = [1, 1, 1]} : vector<8x8x128xf32> to vector<8x6x128xf32>
    %33 = vector.broadcast %31 : f32 to vector<8x6x128xf32>
    %34 = arith.mulf %33, %32 : vector<8x6x128xf32>
    %35 = arith.addf %30, %34 : vector<8x6x128xf32>
    %36 = vector.extract_strided_slice %4 {offsets = [2, 0, 0], sizes = [8, 8, 128], strides = [1, 1, 1]} : vector<10x8x128xf32> to vector<8x8x128xf32>
    %c6 = arith.constant 6 : index
    %37 = memref.load %arg2[%c6] : memref<27xf32, #tpu.memory_space<smem>>
    %38 = vector.extract_strided_slice %36 {offsets = [0, 0, 0], sizes = [8, 6, 128], strides = [1, 1, 1]} : vector<8x8x128xf32> to vector<8x6x128xf32>
    %39 = vector.broadcast %37 : f32 to vector<8x6x128xf32>
    %40 = arith.mulf %39, %38 : vector<8x6x128xf32>
    %41 = arith.addf %35, %40 : vector<8x6x128xf32>
    %c7 = arith.constant 7 : index
    %42 = memref.load %arg2[%c7] : memref<27xf32, #tpu.memory_space<smem>>
    %43 = vector.extract_strided_slice %36 {offsets = [0, 1, 0], sizes = [8, 6, 128], strides = [1, 1, 1]} : vector<8x8x128xf32> to vector<8x6x128xf32>
    %44 = vector.broadcast %42 : f32 to vector<8x6x128xf32>
    %45 = arith.mulf %44, %43 : vector<8x6x128xf32>
    %46 = arith.addf %41, %45 : vector<8x6x128xf32>
    %c8 = arith.constant 8 : index
    %47 = memref.load %arg2[%c8] : memref<27xf32, #tpu.memory_space<smem>>
    %48 = vector.extract_strided_slice %36 {offsets = [0, 2, 0], sizes = [8, 6, 128], strides = [1, 1, 1]} : vector<8x8x128xf32> to vector<8x6x128xf32>
    %49 = vector.broadcast %47 : f32 to vector<8x6x128xf32>
    %50 = arith.mulf %49, %48 : vector<8x6x128xf32>
    %51 = arith.addf %46, %50 : vector<8x6x128xf32>
    %c1_6 = arith.constant 1 : index
    %c0_7 = arith.constant 0 : index
    %c0_8 = arith.constant 0 : index
    %c0_9 = arith.constant 0 : index
    %52 = vector.load %arg1[%c1_6, %c0_7, %c0_8, %c0_9] : memref<10x10x8x128xf32, #tpu.memory_space<vmem>>, vector<1x10x8x128xf32>
    %53 = vector.shape_cast %52 : vector<1x10x8x128xf32> to vector<10x8x128xf32>
    %54 = vector.extract_strided_slice %53 {offsets = [0, 0, 0], sizes = [8, 8, 128], strides = [1, 1, 1]} : vector<10x8x128xf32> to vector<8x8x128xf32>
    %c9 = arith.constant 9 : index
    %55 = memref.load %arg2[%c9] : memref<27xf32, #tpu.memory_space<smem>>
    %56 = vector.extract_strided_slice %54 {offsets = [0, 0, 0], sizes = [8, 6, 128], strides = [1, 1, 1]} : vector<8x8x128xf32> to vector<8x6x128xf32>
    %57 = vector.broadcast %55 : f32 to vector<8x6x128xf32>
    %58 = arith.mulf %57, %56 : vector<8x6x128xf32>
    %59 = arith.addf %51, %58 : vector<8x6x128xf32>
    %c10 = arith.constant 10 : index
    %60 = memref.load %arg2[%c10] : memref<27xf32, #tpu.memory_space<smem>>
    %61 = vector.extract_strided_slice %54 {offsets = [0, 1, 0], sizes = [8, 6, 128], strides = [1, 1, 1]} : vector<8x8x128xf32> to vector<8x6x128xf32>
    %62 = vector.broadcast %60 : f32 to vector<8x6x128xf32>
    %63 = arith.mulf %62, %61 : vector<8x6x128xf32>
    %64 = arith.addf %59, %63 : vector<8x6x128xf32>
    %c11 = arith.constant 11 : index
    %65 = memref.load %arg2[%c11] : memref<27xf32, #tpu.memory_space<smem>>
    %66 = vector.extract_strided_slice %54 {offsets = [0, 2, 0], sizes = [8, 6, 128], strides = [1, 1, 1]} : vector<8x8x128xf32> to vector<8x6x128xf32>
    %67 = vector.broadcast %65 : f32 to vector<8x6x128xf32>
    %68 = arith.mulf %67, %66 : vector<8x6x128xf32>
    %69 = arith.addf %64, %68 : vector<8x6x128xf32>
    %70 = vector.extract_strided_slice %53 {offsets = [1, 0, 0], sizes = [8, 8, 128], strides = [1, 1, 1]} : vector<10x8x128xf32> to vector<8x8x128xf32>
    %c12 = arith.constant 12 : index
    %71 = memref.load %arg2[%c12] : memref<27xf32, #tpu.memory_space<smem>>
    %72 = vector.extract_strided_slice %70 {offsets = [0, 0, 0], sizes = [8, 6, 128], strides = [1, 1, 1]} : vector<8x8x128xf32> to vector<8x6x128xf32>
    %73 = vector.broadcast %71 : f32 to vector<8x6x128xf32>
    %74 = arith.mulf %73, %72 : vector<8x6x128xf32>
    %75 = arith.addf %69, %74 : vector<8x6x128xf32>
    %c13 = arith.constant 13 : index
    %76 = memref.load %arg2[%c13] : memref<27xf32, #tpu.memory_space<smem>>
    %77 = vector.extract_strided_slice %70 {offsets = [0, 1, 0], sizes = [8, 6, 128], strides = [1, 1, 1]} : vector<8x8x128xf32> to vector<8x6x128xf32>
    %78 = vector.broadcast %76 : f32 to vector<8x6x128xf32>
    %79 = arith.mulf %78, %77 : vector<8x6x128xf32>
    %80 = arith.addf %75, %79 : vector<8x6x128xf32>
    %c14 = arith.constant 14 : index
    %81 = memref.load %arg2[%c14] : memref<27xf32, #tpu.memory_space<smem>>
    %82 = vector.extract_strided_slice %70 {offsets = [0, 2, 0], sizes = [8, 6, 128], strides = [1, 1, 1]} : vector<8x8x128xf32> to vector<8x6x128xf32>
    %83 = vector.broadcast %81 : f32 to vector<8x6x128xf32>
    %84 = arith.mulf %83, %82 : vector<8x6x128xf32>
    %85 = arith.addf %80, %84 : vector<8x6x128xf32>
    %86 = vector.extract_strided_slice %53 {offsets = [2, 0, 0], sizes = [8, 8, 128], strides = [1, 1, 1]} : vector<10x8x128xf32> to vector<8x8x128xf32>
    %c15 = arith.constant 15 : index
    %87 = memref.load %arg2[%c15] : memref<27xf32, #tpu.memory_space<smem>>
    %88 = vector.extract_strided_slice %86 {offsets = [0, 0, 0], sizes = [8, 6, 128], strides = [1, 1, 1]} : vector<8x8x128xf32> to vector<8x6x128xf32>
    %89 = vector.broadcast %87 : f32 to vector<8x6x128xf32>
    %90 = arith.mulf %89, %88 : vector<8x6x128xf32>
    %91 = arith.addf %85, %90 : vector<8x6x128xf32>
    %c16 = arith.constant 16 : index
    %92 = memref.load %arg2[%c16] : memref<27xf32, #tpu.memory_space<smem>>
    %93 = vector.extract_strided_slice %86 {offsets = [0, 1, 0], sizes = [8, 6, 128], strides = [1, 1, 1]} : vector<8x8x128xf32> to vector<8x6x128xf32>
    %94 = vector.broadcast %92 : f32 to vector<8x6x128xf32>
    %95 = arith.mulf %94, %93 : vector<8x6x128xf32>
    %96 = arith.addf %91, %95 : vector<8x6x128xf32>
    %c17 = arith.constant 17 : index
    %97 = memref.load %arg2[%c17] : memref<27xf32, #tpu.memory_space<smem>>
    %98 = vector.extract_strided_slice %86 {offsets = [0, 2, 0], sizes = [8, 6, 128], strides = [1, 1, 1]} : vector<8x8x128xf32> to vector<8x6x128xf32>
    %99 = vector.broadcast %97 : f32 to vector<8x6x128xf32>
    %100 = arith.mulf %99, %98 : vector<8x6x128xf32>
    %101 = arith.addf %96, %100 : vector<8x6x128xf32>
    %c2_10 = arith.constant 2 : index
    %c0_11 = arith.constant 0 : index
    %c0_12 = arith.constant 0 : index
    %c0_13 = arith.constant 0 : index
    %102 = vector.load %arg1[%c2_10, %c0_11, %c0_12, %c0_13] : memref<10x10x8x128xf32, #tpu.memory_space<vmem>>, vector<1x10x8x128xf32>
    %103 = vector.shape_cast %102 : vector<1x10x8x128xf32> to vector<10x8x128xf32>
    %104 = vector.extract_strided_slice %103 {offsets = [0, 0, 0], sizes = [8, 8, 128], strides = [1, 1, 1]} : vector<10x8x128xf32> to vector<8x8x128xf32>
    %c18 = arith.constant 18 : index
    %105 = memref.load %arg2[%c18] : memref<27xf32, #tpu.memory_space<smem>>
    %106 = vector.extract_strided_slice %104 {offsets = [0, 0, 0], sizes = [8, 6, 128], strides = [1, 1, 1]} : vector<8x8x128xf32> to vector<8x6x128xf32>
    %107 = vector.broadcast %105 : f32 to vector<8x6x128xf32>
    %108 = arith.mulf %107, %106 : vector<8x6x128xf32>
    %109 = arith.addf %101, %108 : vector<8x6x128xf32>
    %c19 = arith.constant 19 : index
    %110 = memref.load %arg2[%c19] : memref<27xf32, #tpu.memory_space<smem>>
    %111 = vector.extract_strided_slice %104 {offsets = [0, 1, 0], sizes = [8, 6, 128], strides = [1, 1, 1]} : vector<8x8x128xf32> to vector<8x6x128xf32>
    %112 = vector.broadcast %110 : f32 to vector<8x6x128xf32>
    %113 = arith.mulf %112, %111 : vector<8x6x128xf32>
    %114 = arith.addf %109, %113 : vector<8x6x128xf32>
    %c20 = arith.constant 20 : index
    %115 = memref.load %arg2[%c20] : memref<27xf32, #tpu.memory_space<smem>>
    %116 = vector.extract_strided_slice %104 {offsets = [0, 2, 0], sizes = [8, 6, 128], strides = [1, 1, 1]} : vector<8x8x128xf32> to vector<8x6x128xf32>
    %117 = vector.broadcast %115 : f32 to vector<8x6x128xf32>
    %118 = arith.mulf %117, %116 : vector<8x6x128xf32>
    %119 = arith.addf %114, %118 : vector<8x6x128xf32>
    %120 = vector.extract_strided_slice %103 {offsets = [1, 0, 0], sizes = [8, 8, 128], strides = [1, 1, 1]} : vector<10x8x128xf32> to vector<8x8x128xf32>
    %c21 = arith.constant 21 : index
    %121 = memref.load %arg2[%c21] : memref<27xf32, #tpu.memory_space<smem>>
    %122 = vector.extract_strided_slice %120 {offsets = [0, 0, 0], sizes = [8, 6, 128], strides = [1, 1, 1]} : vector<8x8x128xf32> to vector<8x6x128xf32>
    %123 = vector.broadcast %121 : f32 to vector<8x6x128xf32>
    %124 = arith.mulf %123, %122 : vector<8x6x128xf32>
    %125 = arith.addf %119, %124 : vector<8x6x128xf32>
    %c22 = arith.constant 22 : index
    %126 = memref.load %arg2[%c22] : memref<27xf32, #tpu.memory_space<smem>>
    %127 = vector.extract_strided_slice %120 {offsets = [0, 1, 0], sizes = [8, 6, 128], strides = [1, 1, 1]} : vector<8x8x128xf32> to vector<8x6x128xf32>
    %128 = vector.broadcast %126 : f32 to vector<8x6x128xf32>
    %129 = arith.mulf %128, %127 : vector<8x6x128xf32>
    %130 = arith.addf %125, %129 : vector<8x6x128xf32>
    %c23 = arith.constant 23 : index
    %131 = memref.load %arg2[%c23] : memref<27xf32, #tpu.memory_space<smem>>
    %132 = vector.extract_strided_slice %120 {offsets = [0, 2, 0], sizes = [8, 6, 128], strides = [1, 1, 1]} : vector<8x8x128xf32> to vector<8x6x128xf32>
    %133 = vector.broadcast %131 : f32 to vector<8x6x128xf32>
    %134 = arith.mulf %133, %132 : vector<8x6x128xf32>
    %135 = arith.addf %130, %134 : vector<8x6x128xf32>
    %136 = vector.extract_strided_slice %103 {offsets = [2, 0, 0], sizes = [8, 8, 128], strides = [1, 1, 1]} : vector<10x8x128xf32> to vector<8x8x128xf32>
    %c24 = arith.constant 24 : index
    %137 = memref.load %arg2[%c24] : memref<27xf32, #tpu.memory_space<smem>>
    %138 = vector.extract_strided_slice %136 {offsets = [0, 0, 0], sizes = [8, 6, 128], strides = [1, 1, 1]} : vector<8x8x128xf32> to vector<8x6x128xf32>
    %139 = vector.broadcast %137 : f32 to vector<8x6x128xf32>
    %140 = arith.mulf %139, %138 : vector<8x6x128xf32>
    %141 = arith.addf %135, %140 : vector<8x6x128xf32>
    %c25 = arith.constant 25 : index
    %142 = memref.load %arg2[%c25] : memref<27xf32, #tpu.memory_space<smem>>
    %143 = vector.extract_strided_slice %136 {offsets = [0, 1, 0], sizes = [8, 6, 128], strides = [1, 1, 1]} : vector<8x8x128xf32> to vector<8x6x128xf32>
    %144 = vector.broadcast %142 : f32 to vector<8x6x128xf32>
    %145 = arith.mulf %144, %143 : vector<8x6x128xf32>
    %146 = arith.addf %141, %145 : vector<8x6x128xf32>
    %c26 = arith.constant 26 : index
    %147 = memref.load %arg2[%c26] : memref<27xf32, #tpu.memory_space<smem>>
    %148 = vector.extract_strided_slice %136 {offsets = [0, 2, 0], sizes = [8, 6, 128], strides = [1, 1, 1]} : vector<8x8x128xf32> to vector<8x6x128xf32>
    %149 = vector.broadcast %147 : f32 to vector<8x6x128xf32>
    %150 = arith.mulf %149, %148 : vector<8x6x128xf32>
    %151 = arith.addf %146, %150 : vector<8x6x128xf32>
    %c1_14 = arith.constant 1 : index
    %c0_15 = arith.constant 0 : index
    %c0_16 = arith.constant 0 : index
    %c0_17 = arith.constant 0 : index
    %152 = vector.load %arg1[%c1_14, %c0_15, %c0_16, %c0_17] : memref<10x10x8x128xf32, #tpu.memory_space<vmem>>, vector<1x10x8x128xf32>
    %153 = vector.shape_cast %152 : vector<1x10x8x128xf32> to vector<10x8x128xf32>
    %154 = vector.extract_strided_slice %153 {offsets = [0, 0, 0], sizes = [8, 8, 128], strides = [1, 1, 1]} : vector<10x8x128xf32> to vector<8x8x128xf32>
    %c0_18 = arith.constant 0 : index
    %155 = memref.load %arg2[%c0_18] : memref<27xf32, #tpu.memory_space<smem>>
    %156 = vector.extract_strided_slice %154 {offsets = [0, 0, 0], sizes = [8, 6, 128], strides = [1, 1, 1]} : vector<8x8x128xf32> to vector<8x6x128xf32>
    %157 = vector.broadcast %155 : f32 to vector<8x6x128xf32>
    %158 = arith.mulf %157, %156 : vector<8x6x128xf32>
    %c1_19 = arith.constant 1 : index
    %159 = memref.load %arg2[%c1_19] : memref<27xf32, #tpu.memory_space<smem>>
    %160 = vector.extract_strided_slice %154 {offsets = [0, 1, 0], sizes = [8, 6, 128], strides = [1, 1, 1]} : vector<8x8x128xf32> to vector<8x6x128xf32>
    %161 = vector.broadcast %159 : f32 to vector<8x6x128xf32>
    %162 = arith.mulf %161, %160 : vector<8x6x128xf32>
    %163 = arith.addf %158, %162 : vector<8x6x128xf32>
    %c2_20 = arith.constant 2 : index
    %164 = memref.load %arg2[%c2_20] : memref<27xf32, #tpu.memory_space<smem>>
    %165 = vector.extract_strided_slice %154 {offsets = [0, 2, 0], sizes = [8, 6, 128], strides = [1, 1, 1]} : vector<8x8x128xf32> to vector<8x6x128xf32>
    %166 = vector.broadcast %164 : f32 to vector<8x6x128xf32>
    %167 = arith.mulf %166, %165 : vector<8x6x128xf32>
    %168 = arith.addf %163, %167 : vector<8x6x128xf32>
    %169 = vector.extract_strided_slice %153 {offsets = [1, 0, 0], sizes = [8, 8, 128], strides = [1, 1, 1]} : vector<10x8x128xf32> to vector<8x8x128xf32>
    %c3_21 = arith.constant 3 : index
    %170 = memref.load %arg2[%c3_21] : memref<27xf32, #tpu.memory_space<smem>>
    %171 = vector.extract_strided_slice %169 {offsets = [0, 0, 0], sizes = [8, 6, 128], strides = [1, 1, 1]} : vector<8x8x128xf32> to vector<8x6x128xf32>
    %172 = vector.broadcast %170 : f32 to vector<8x6x128xf32>
    %173 = arith.mulf %172, %171 : vector<8x6x128xf32>
    %174 = arith.addf %168, %173 : vector<8x6x128xf32>
    %c4_22 = arith.constant 4 : index
    %175 = memref.load %arg2[%c4_22] : memref<27xf32, #tpu.memory_space<smem>>
    %176 = vector.extract_strided_slice %169 {offsets = [0, 1, 0], sizes = [8, 6, 128], strides = [1, 1, 1]} : vector<8x8x128xf32> to vector<8x6x128xf32>
    %177 = vector.broadcast %175 : f32 to vector<8x6x128xf32>
    %178 = arith.mulf %177, %176 : vector<8x6x128xf32>
    %179 = arith.addf %174, %178 : vector<8x6x128xf32>
    %c5_23 = arith.constant 5 : index
    %180 = memref.load %arg2[%c5_23] : memref<27xf32, #tpu.memory_space<smem>>
    %181 = vector.extract_strided_slice %169 {offsets = [0, 2, 0], sizes = [8, 6, 128], strides = [1, 1, 1]} : vector<8x8x128xf32> to vector<8x6x128xf32>
    %182 = vector.broadcast %180 : f32 to vector<8x6x128xf32>
    %183 = arith.mulf %182, %181 : vector<8x6x128xf32>
    %184 = arith.addf %179, %183 : vector<8x6x128xf32>
    %185 = vector.extract_strided_slice %153 {offsets = [2, 0, 0], sizes = [8, 8, 128], strides = [1, 1, 1]} : vector<10x8x128xf32> to vector<8x8x128xf32>
    %c6_24 = arith.constant 6 : index
    %186 = memref.load %arg2[%c6_24] : memref<27xf32, #tpu.memory_space<smem>>
    %187 = vector.extract_strided_slice %185 {offsets = [0, 0, 0], sizes = [8, 6, 128], strides = [1, 1, 1]} : vector<8x8x128xf32> to vector<8x6x128xf32>
    %188 = vector.broadcast %186 : f32 to vector<8x6x128xf32>
    %189 = arith.mulf %188, %187 : vector<8x6x128xf32>
    %190 = arith.addf %184, %189 : vector<8x6x128xf32>
    %c7_25 = arith.constant 7 : index
    %191 = memref.load %arg2[%c7_25] : memref<27xf32, #tpu.memory_space<smem>>
    %192 = vector.extract_strided_slice %185 {offsets = [0, 1, 0], sizes = [8, 6, 128], strides = [1, 1, 1]} : vector<8x8x128xf32> to vector<8x6x128xf32>
    %193 = vector.broadcast %191 : f32 to vector<8x6x128xf32>
    %194 = arith.mulf %193, %192 : vector<8x6x128xf32>
    %195 = arith.addf %190, %194 : vector<8x6x128xf32>
    %c8_26 = arith.constant 8 : index
    %196 = memref.load %arg2[%c8_26] : memref<27xf32, #tpu.memory_space<smem>>
    %197 = vector.extract_strided_slice %185 {offsets = [0, 2, 0], sizes = [8, 6, 128], strides = [1, 1, 1]} : vector<8x8x128xf32> to vector<8x6x128xf32>
    %198 = vector.broadcast %196 : f32 to vector<8x6x128xf32>
    %199 = arith.mulf %198, %197 : vector<8x6x128xf32>
    %200 = arith.addf %195, %199 : vector<8x6x128xf32>
    %c2_27 = arith.constant 2 : index
    %c0_28 = arith.constant 0 : index
    %c0_29 = arith.constant 0 : index
    %c0_30 = arith.constant 0 : index
    %201 = vector.load %arg1[%c2_27, %c0_28, %c0_29, %c0_30] : memref<10x10x8x128xf32, #tpu.memory_space<vmem>>, vector<1x10x8x128xf32>
    %202 = vector.shape_cast %201 : vector<1x10x8x128xf32> to vector<10x8x128xf32>
    %203 = vector.extract_strided_slice %202 {offsets = [0, 0, 0], sizes = [8, 8, 128], strides = [1, 1, 1]} : vector<10x8x128xf32> to vector<8x8x128xf32>
    %c9_31 = arith.constant 9 : index
    %204 = memref.load %arg2[%c9_31] : memref<27xf32, #tpu.memory_space<smem>>
    %205 = vector.extract_strided_slice %203 {offsets = [0, 0, 0], sizes = [8, 6, 128], strides = [1, 1, 1]} : vector<8x8x128xf32> to vector<8x6x128xf32>
    %206 = vector.broadcast %204 : f32 to vector<8x6x128xf32>
    %207 = arith.mulf %206, %205 : vector<8x6x128xf32>
    %208 = arith.addf %200, %207 : vector<8x6x128xf32>
    %c10_32 = arith.constant 10 : index
    %209 = memref.load %arg2[%c10_32] : memref<27xf32, #tpu.memory_space<smem>>
    %210 = vector.extract_strided_slice %203 {offsets = [0, 1, 0], sizes = [8, 6, 128], strides = [1, 1, 1]} : vector<8x8x128xf32> to vector<8x6x128xf32>
    %211 = vector.broadcast %209 : f32 to vector<8x6x128xf32>
    %212 = arith.mulf %211, %210 : vector<8x6x128xf32>
    %213 = arith.addf %208, %212 : vector<8x6x128xf32>
    %c11_33 = arith.constant 11 : index
    %214 = memref.load %arg2[%c11_33] : memref<27xf32, #tpu.memory_space<smem>>
    %215 = vector.extract_strided_slice %203 {offsets = [0, 2, 0], sizes = [8, 6, 128], strides = [1, 1, 1]} : vector<8x8x128xf32> to vector<8x6x128xf32>
    %216 = vector.broadcast %214 : f32 to vector<8x6x128xf32>
    %217 = arith.mulf %216, %215 : vector<8x6x128xf32>
    %218 = arith.addf %213, %217 : vector<8x6x128xf32>
    %219 = vector.extract_strided_slice %202 {offsets = [1, 0, 0], sizes = [8, 8, 128], strides = [1, 1, 1]} : vector<10x8x128xf32> to vector<8x8x128xf32>
    %c12_34 = arith.constant 12 : index
    %220 = memref.load %arg2[%c12_34] : memref<27xf32, #tpu.memory_space<smem>>
    %221 = vector.extract_strided_slice %219 {offsets = [0, 0, 0], sizes = [8, 6, 128], strides = [1, 1, 1]} : vector<8x8x128xf32> to vector<8x6x128xf32>
    %222 = vector.broadcast %220 : f32 to vector<8x6x128xf32>
    %223 = arith.mulf %222, %221 : vector<8x6x128xf32>
    %224 = arith.addf %218, %223 : vector<8x6x128xf32>
    %c13_35 = arith.constant 13 : index
    %225 = memref.load %arg2[%c13_35] : memref<27xf32, #tpu.memory_space<smem>>
    %226 = vector.extract_strided_slice %219 {offsets = [0, 1, 0], sizes = [8, 6, 128], strides = [1, 1, 1]} : vector<8x8x128xf32> to vector<8x6x128xf32>
    %227 = vector.broadcast %225 : f32 to vector<8x6x128xf32>
    %228 = arith.mulf %227, %226 : vector<8x6x128xf32>
    %229 = arith.addf %224, %228 : vector<8x6x128xf32>
    %c14_36 = arith.constant 14 : index
    %230 = memref.load %arg2[%c14_36] : memref<27xf32, #tpu.memory_space<smem>>
    %231 = vector.extract_strided_slice %219 {offsets = [0, 2, 0], sizes = [8, 6, 128], strides = [1, 1, 1]} : vector<8x8x128xf32> to vector<8x6x128xf32>
    %232 = vector.broadcast %230 : f32 to vector<8x6x128xf32>
    %233 = arith.mulf %232, %231 : vector<8x6x128xf32>
    %234 = arith.addf %229, %233 : vector<8x6x128xf32>
    %235 = vector.extract_strided_slice %202 {offsets = [2, 0, 0], sizes = [8, 8, 128], strides = [1, 1, 1]} : vector<10x8x128xf32> to vector<8x8x128xf32>
    %c15_37 = arith.constant 15 : index
    %236 = memref.load %arg2[%c15_37] : memref<27xf32, #tpu.memory_space<smem>>
    %237 = vector.extract_strided_slice %235 {offsets = [0, 0, 0], sizes = [8, 6, 128], strides = [1, 1, 1]} : vector<8x8x128xf32> to vector<8x6x128xf32>
    %238 = vector.broadcast %236 : f32 to vector<8x6x128xf32>
    %239 = arith.mulf %238, %237 : vector<8x6x128xf32>
    %240 = arith.addf %234, %239 : vector<8x6x128xf32>
    %c16_38 = arith.constant 16 : index
    %241 = memref.load %arg2[%c16_38] : memref<27xf32, #tpu.memory_space<smem>>
    %242 = vector.extract_strided_slice %235 {offsets = [0, 1, 0], sizes = [8, 6, 128], strides = [1, 1, 1]} : vector<8x8x128xf32> to vector<8x6x128xf32>
    %243 = vector.broadcast %241 : f32 to vector<8x6x128xf32>
    %244 = arith.mulf %243, %242 : vector<8x6x128xf32>
    %245 = arith.addf %240, %244 : vector<8x6x128xf32>
    %c17_39 = arith.constant 17 : index
    %246 = memref.load %arg2[%c17_39] : memref<27xf32, #tpu.memory_space<smem>>
    %247 = vector.extract_strided_slice %235 {offsets = [0, 2, 0], sizes = [8, 6, 128], strides = [1, 1, 1]} : vector<8x8x128xf32> to vector<8x6x128xf32>
    %248 = vector.broadcast %246 : f32 to vector<8x6x128xf32>
    %249 = arith.mulf %248, %247 : vector<8x6x128xf32>
    %250 = arith.addf %245, %249 : vector<8x6x128xf32>
    %c3_40 = arith.constant 3 : index
    %c0_41 = arith.constant 0 : index
    %c0_42 = arith.constant 0 : index
    %c0_43 = arith.constant 0 : index
    %251 = vector.load %arg1[%c3_40, %c0_41, %c0_42, %c0_43] : memref<10x10x8x128xf32, #tpu.memory_space<vmem>>, vector<1x10x8x128xf32>
    %252 = vector.shape_cast %251 : vector<1x10x8x128xf32> to vector<10x8x128xf32>
    %253 = vector.extract_strided_slice %252 {offsets = [0, 0, 0], sizes = [8, 8, 128], strides = [1, 1, 1]} : vector<10x8x128xf32> to vector<8x8x128xf32>
    %c18_44 = arith.constant 18 : index
    %254 = memref.load %arg2[%c18_44] : memref<27xf32, #tpu.memory_space<smem>>
    %255 = vector.extract_strided_slice %253 {offsets = [0, 0, 0], sizes = [8, 6, 128], strides = [1, 1, 1]} : vector<8x8x128xf32> to vector<8x6x128xf32>
    %256 = vector.broadcast %254 : f32 to vector<8x6x128xf32>
    %257 = arith.mulf %256, %255 : vector<8x6x128xf32>
    %258 = arith.addf %250, %257 : vector<8x6x128xf32>
    %c19_45 = arith.constant 19 : index
    %259 = memref.load %arg2[%c19_45] : memref<27xf32, #tpu.memory_space<smem>>
    %260 = vector.extract_strided_slice %253 {offsets = [0, 1, 0], sizes = [8, 6, 128], strides = [1, 1, 1]} : vector<8x8x128xf32> to vector<8x6x128xf32>
    %261 = vector.broadcast %259 : f32 to vector<8x6x128xf32>
    %262 = arith.mulf %261, %260 : vector<8x6x128xf32>
    %263 = arith.addf %258, %262 : vector<8x6x128xf32>
    %c20_46 = arith.constant 20 : index
    %264 = memref.load %arg2[%c20_46] : memref<27xf32, #tpu.memory_space<smem>>
    %265 = vector.extract_strided_slice %253 {offsets = [0, 2, 0], sizes = [8, 6, 128], strides = [1, 1, 1]} : vector<8x8x128xf32> to vector<8x6x128xf32>
    %266 = vector.broadcast %264 : f32 to vector<8x6x128xf32>
    %267 = arith.mulf %266, %265 : vector<8x6x128xf32>
    %268 = arith.addf %263, %267 : vector<8x6x128xf32>
    %269 = vector.extract_strided_slice %252 {offsets = [1, 0, 0], sizes = [8, 8, 128], strides = [1, 1, 1]} : vector<10x8x128xf32> to vector<8x8x128xf32>
    %c21_47 = arith.constant 21 : index
    %270 = memref.load %arg2[%c21_47] : memref<27xf32, #tpu.memory_space<smem>>
    %271 = vector.extract_strided_slice %269 {offsets = [0, 0, 0], sizes = [8, 6, 128], strides = [1, 1, 1]} : vector<8x8x128xf32> to vector<8x6x128xf32>
    %272 = vector.broadcast %270 : f32 to vector<8x6x128xf32>
    %273 = arith.mulf %272, %271 : vector<8x6x128xf32>
    %274 = arith.addf %268, %273 : vector<8x6x128xf32>
    %c22_48 = arith.constant 22 : index
    %275 = memref.load %arg2[%c22_48] : memref<27xf32, #tpu.memory_space<smem>>
    %276 = vector.extract_strided_slice %269 {offsets = [0, 1, 0], sizes = [8, 6, 128], strides = [1, 1, 1]} : vector<8x8x128xf32> to vector<8x6x128xf32>
    %277 = vector.broadcast %275 : f32 to vector<8x6x128xf32>
    %278 = arith.mulf %277, %276 : vector<8x6x128xf32>
    %279 = arith.addf %274, %278 : vector<8x6x128xf32>
    %c23_49 = arith.constant 23 : index
    %280 = memref.load %arg2[%c23_49] : memref<27xf32, #tpu.memory_space<smem>>
    %281 = vector.extract_strided_slice %269 {offsets = [0, 2, 0], sizes = [8, 6, 128], strides = [1, 1, 1]} : vector<8x8x128xf32> to vector<8x6x128xf32>
    %282 = vector.broadcast %280 : f32 to vector<8x6x128xf32>
    %283 = arith.mulf %282, %281 : vector<8x6x128xf32>
    %284 = arith.addf %279, %283 : vector<8x6x128xf32>
    %285 = vector.extract_strided_slice %252 {offsets = [2, 0, 0], sizes = [8, 8, 128], strides = [1, 1, 1]} : vector<10x8x128xf32> to vector<8x8x128xf32>
    %c24_50 = arith.constant 24 : index
    %286 = memref.load %arg2[%c24_50] : memref<27xf32, #tpu.memory_space<smem>>
    %287 = vector.extract_strided_slice %285 {offsets = [0, 0, 0], sizes = [8, 6, 128], strides = [1, 1, 1]} : vector<8x8x128xf32> to vector<8x6x128xf32>
    %288 = vector.broadcast %286 : f32 to vector<8x6x128xf32>
    %289 = arith.mulf %288, %287 : vector<8x6x128xf32>
    %290 = arith.addf %284, %289 : vector<8x6x128xf32>
    %c25_51 = arith.constant 25 : index
    %291 = memref.load %arg2[%c25_51] : memref<27xf32, #tpu.memory_space<smem>>
    %292 = vector.extract_strided_slice %285 {offsets = [0, 1, 0], sizes = [8, 6, 128], strides = [1, 1, 1]} : vector<8x8x128xf32> to vector<8x6x128xf32>
    %293 = vector.broadcast %291 : f32 to vector<8x6x128xf32>
    %294 = arith.mulf %293, %292 : vector<8x6x128xf32>
    %295 = arith.addf %290, %294 : vector<8x6x128xf32>
    %c26_52 = arith.constant 26 : index
    %296 = memref.load %arg2[%c26_52] : memref<27xf32, #tpu.memory_space<smem>>
    %297 = vector.extract_strided_slice %285 {offsets = [0, 2, 0], sizes = [8, 6, 128], strides = [1, 1, 1]} : vector<8x8x128xf32> to vector<8x6x128xf32>
    %298 = vector.broadcast %296 : f32 to vector<8x6x128xf32>
    %299 = arith.mulf %298, %297 : vector<8x6x128xf32>
    %300 = arith.addf %295, %299 : vector<8x6x128xf32>
    %301 = arith.maximumf %151, %300 : vector<8x6x128xf32>
    %302 = vector.extract_strided_slice %301 {offsets = [0, 0, 0], sizes = [1, 6, 128], strides = [1, 1, 1]} : vector<8x6x128xf32> to vector<1x6x128xf32>
    %303 = vector.shape_cast %302 : vector<1x6x128xf32> to vector<6x128xf32>
    %304 = vector.extract_strided_slice %301 {offsets = [1, 0, 0], sizes = [1, 6, 128], strides = [1, 1, 1]} : vector<8x6x128xf32> to vector<1x6x128xf32>
    %305 = vector.shape_cast %304 : vector<1x6x128xf32> to vector<6x128xf32>
    %306 = arith.maximumf %303, %305 : vector<6x128xf32>
    %307 = vector.extract_strided_slice %306 {offsets = [0, 0], sizes = [5, 128], strides = [1, 1]} : vector<6x128xf32> to vector<5x128xf32>
    %308 = vector.extract_strided_slice %306 {offsets = [1, 0], sizes = [5, 128], strides = [1, 1]} : vector<6x128xf32> to vector<5x128xf32>
    %309 = arith.maximumf %307, %308 : vector<5x128xf32>
    %310 = vector.broadcast %0 : f32 to vector<5x128xf32>
    %311 = arith.addf %309, %310 : vector<5x128xf32>
    %312 = math.tanh %311 : vector<5x128xf32>
    %c0_53 = arith.constant 0 : index
    %c0_54 = arith.constant 0 : index
    %c0_55 = arith.constant 0 : index
    %313 = vector.load %arg4[%c0_53, %c0_54, %c0_55] : memref<16x5x128xf32, #tpu.memory_space<vmem>>, vector<1x5x128xf32>
    %314 = vector.shape_cast %313 : vector<1x5x128xf32> to vector<5x128xf32>
    %315 = arith.mulf %314, %312 : vector<5x128xf32>
    %316 = arith.addf %2, %315 : vector<5x128xf32>
    %317 = vector.extract_strided_slice %301 {offsets = [2, 0, 0], sizes = [1, 6, 128], strides = [1, 1, 1]} : vector<8x6x128xf32> to vector<1x6x128xf32>
    %318 = vector.shape_cast %317 : vector<1x6x128xf32> to vector<6x128xf32>
    %319 = vector.extract_strided_slice %301 {offsets = [3, 0, 0], sizes = [1, 6, 128], strides = [1, 1, 1]} : vector<8x6x128xf32> to vector<1x6x128xf32>
    %320 = vector.shape_cast %319 : vector<1x6x128xf32> to vector<6x128xf32>
    %321 = arith.maximumf %318, %320 : vector<6x128xf32>
    %322 = vector.extract_strided_slice %321 {offsets = [0, 0], sizes = [5, 128], strides = [1, 1]} : vector<6x128xf32> to vector<5x128xf32>
    %323 = vector.extract_strided_slice %321 {offsets = [1, 0], sizes = [5, 128], strides = [1, 1]} : vector<6x128xf32> to vector<5x128xf32>
    %324 = arith.maximumf %322, %323 : vector<5x128xf32>
    %325 = vector.broadcast %0 : f32 to vector<5x128xf32>
    %326 = arith.addf %324, %325 : vector<5x128xf32>
    %327 = math.tanh %326 : vector<5x128xf32>
    %c1_56 = arith.constant 1 : index
    %c0_57 = arith.constant 0 : index
    %c0_58 = arith.constant 0 : index
    %328 = vector.load %arg4[%c1_56, %c0_57, %c0_58] : memref<16x5x128xf32, #tpu.memory_space<vmem>>, vector<1x5x128xf32>
    %329 = vector.shape_cast %328 : vector<1x5x128xf32> to vector<5x128xf32>
    %330 = arith.mulf %329, %327 : vector<5x128xf32>
    %331 = arith.addf %316, %330 : vector<5x128xf32>
    %332 = vector.extract_strided_slice %301 {offsets = [4, 0, 0], sizes = [1, 6, 128], strides = [1, 1, 1]} : vector<8x6x128xf32> to vector<1x6x128xf32>
    %333 = vector.shape_cast %332 : vector<1x6x128xf32> to vector<6x128xf32>
    %334 = vector.extract_strided_slice %301 {offsets = [5, 0, 0], sizes = [1, 6, 128], strides = [1, 1, 1]} : vector<8x6x128xf32> to vector<1x6x128xf32>
    %335 = vector.shape_cast %334 : vector<1x6x128xf32> to vector<6x128xf32>
    %336 = arith.maximumf %333, %335 : vector<6x128xf32>
    %337 = vector.extract_strided_slice %336 {offsets = [0, 0], sizes = [5, 128], strides = [1, 1]} : vector<6x128xf32> to vector<5x128xf32>
    %338 = vector.extract_strided_slice %336 {offsets = [1, 0], sizes = [5, 128], strides = [1, 1]} : vector<6x128xf32> to vector<5x128xf32>
    %339 = arith.maximumf %337, %338 : vector<5x128xf32>
    %340 = vector.broadcast %0 : f32 to vector<5x128xf32>
    %341 = arith.addf %339, %340 : vector<5x128xf32>
    %342 = math.tanh %341 : vector<5x128xf32>
    %c2_59 = arith.constant 2 : index
    %c0_60 = arith.constant 0 : index
    %c0_61 = arith.constant 0 : index
    %343 = vector.load %arg4[%c2_59, %c0_60, %c0_61] : memref<16x5x128xf32, #tpu.memory_space<vmem>>, vector<1x5x128xf32>
    %344 = vector.shape_cast %343 : vector<1x5x128xf32> to vector<5x128xf32>
    %345 = arith.mulf %344, %342 : vector<5x128xf32>
    %346 = arith.addf %331, %345 : vector<5x128xf32>
    %347 = vector.extract_strided_slice %301 {offsets = [6, 0, 0], sizes = [1, 6, 128], strides = [1, 1, 1]} : vector<8x6x128xf32> to vector<1x6x128xf32>
    %348 = vector.shape_cast %347 : vector<1x6x128xf32> to vector<6x128xf32>
    %349 = vector.extract_strided_slice %301 {offsets = [7, 0, 0], sizes = [1, 6, 128], strides = [1, 1, 1]} : vector<8x6x128xf32> to vector<1x6x128xf32>
    %350 = vector.shape_cast %349 : vector<1x6x128xf32> to vector<6x128xf32>
    %351 = arith.maximumf %348, %350 : vector<6x128xf32>
    %352 = vector.extract_strided_slice %351 {offsets = [0, 0], sizes = [5, 128], strides = [1, 1]} : vector<6x128xf32> to vector<5x128xf32>
    %353 = vector.extract_strided_slice %351 {offsets = [1, 0], sizes = [5, 128], strides = [1, 1]} : vector<6x128xf32> to vector<5x128xf32>
    %354 = arith.maximumf %352, %353 : vector<5x128xf32>
    %355 = vector.broadcast %0 : f32 to vector<5x128xf32>
    %356 = arith.addf %354, %355 : vector<5x128xf32>
    %357 = math.tanh %356 : vector<5x128xf32>
    %c3_62 = arith.constant 3 : index
    %c0_63 = arith.constant 0 : index
    %c0_64 = arith.constant 0 : index
    %358 = vector.load %arg4[%c3_62, %c0_63, %c0_64] : memref<16x5x128xf32, #tpu.memory_space<vmem>>, vector<1x5x128xf32>
    %359 = vector.shape_cast %358 : vector<1x5x128xf32> to vector<5x128xf32>
    %360 = arith.mulf %359, %357 : vector<5x128xf32>
    %361 = arith.addf %346, %360 : vector<5x128xf32>
    %c2_65 = arith.constant 2 : index
    %c0_66 = arith.constant 0 : index
    %c0_67 = arith.constant 0 : index
    %c0_68 = arith.constant 0 : index
    %362 = vector.load %arg1[%c2_65, %c0_66, %c0_67, %c0_68] : memref<10x10x8x128xf32, #tpu.memory_space<vmem>>, vector<1x10x8x128xf32>
    %363 = vector.shape_cast %362 : vector<1x10x8x128xf32> to vector<10x8x128xf32>
    %364 = vector.extract_strided_slice %363 {offsets = [0, 0, 0], sizes = [8, 8, 128], strides = [1, 1, 1]} : vector<10x8x128xf32> to vector<8x8x128xf32>
    %c0_69 = arith.constant 0 : index
    %365 = memref.load %arg2[%c0_69] : memref<27xf32, #tpu.memory_space<smem>>
    %366 = vector.extract_strided_slice %364 {offsets = [0, 0, 0], sizes = [8, 6, 128], strides = [1, 1, 1]} : vector<8x8x128xf32> to vector<8x6x128xf32>
    %367 = vector.broadcast %365 : f32 to vector<8x6x128xf32>
    %368 = arith.mulf %367, %366 : vector<8x6x128xf32>
    %c1_70 = arith.constant 1 : index
    %369 = memref.load %arg2[%c1_70] : memref<27xf32, #tpu.memory_space<smem>>
    %370 = vector.extract_strided_slice %364 {offsets = [0, 1, 0], sizes = [8, 6, 128], strides = [1, 1, 1]} : vector<8x8x128xf32> to vector<8x6x128xf32>
    %371 = vector.broadcast %369 : f32 to vector<8x6x128xf32>
    %372 = arith.mulf %371, %370 : vector<8x6x128xf32>
    %373 = arith.addf %368, %372 : vector<8x6x128xf32>
    %c2_71 = arith.constant 2 : index
    %374 = memref.load %arg2[%c2_71] : memref<27xf32, #tpu.memory_space<smem>>
    %375 = vector.extract_strided_slice %364 {offsets = [0, 2, 0], sizes = [8, 6, 128], strides = [1, 1, 1]} : vector<8x8x128xf32> to vector<8x6x128xf32>
    %376 = vector.broadcast %374 : f32 to vector<8x6x128xf32>
    %377 = arith.mulf %376, %375 : vector<8x6x128xf32>
    %378 = arith.addf %373, %377 : vector<8x6x128xf32>
    %379 = vector.extract_strided_slice %363 {offsets = [1, 0, 0], sizes = [8, 8, 128], strides = [1, 1, 1]} : vector<10x8x128xf32> to vector<8x8x128xf32>
    %c3_72 = arith.constant 3 : index
    %380 = memref.load %arg2[%c3_72] : memref<27xf32, #tpu.memory_space<smem>>
    %381 = vector.extract_strided_slice %379 {offsets = [0, 0, 0], sizes = [8, 6, 128], strides = [1, 1, 1]} : vector<8x8x128xf32> to vector<8x6x128xf32>
    %382 = vector.broadcast %380 : f32 to vector<8x6x128xf32>
    %383 = arith.mulf %382, %381 : vector<8x6x128xf32>
    %384 = arith.addf %378, %383 : vector<8x6x128xf32>
    %c4_73 = arith.constant 4 : index
    %385 = memref.load %arg2[%c4_73] : memref<27xf32, #tpu.memory_space<smem>>
    %386 = vector.extract_strided_slice %379 {offsets = [0, 1, 0], sizes = [8, 6, 128], strides = [1, 1, 1]} : vector<8x8x128xf32> to vector<8x6x128xf32>
    %387 = vector.broadcast %385 : f32 to vector<8x6x128xf32>
    %388 = arith.mulf %387, %386 : vector<8x6x128xf32>
    %389 = arith.addf %384, %388 : vector<8x6x128xf32>
    %c5_74 = arith.constant 5 : index
    %390 = memref.load %arg2[%c5_74] : memref<27xf32, #tpu.memory_space<smem>>
    %391 = vector.extract_strided_slice %379 {offsets = [0, 2, 0], sizes = [8, 6, 128], strides = [1, 1, 1]} : vector<8x8x128xf32> to vector<8x6x128xf32>
    %392 = vector.broadcast %390 : f32 to vector<8x6x128xf32>
    %393 = arith.mulf %392, %391 : vector<8x6x128xf32>
    %394 = arith.addf %389, %393 : vector<8x6x128xf32>
    %395 = vector.extract_strided_slice %363 {offsets = [2, 0, 0], sizes = [8, 8, 128], strides = [1, 1, 1]} : vector<10x8x128xf32> to vector<8x8x128xf32>
    %c6_75 = arith.constant 6 : index
    %396 = memref.load %arg2[%c6_75] : memref<27xf32, #tpu.memory_space<smem>>
    %397 = vector.extract_strided_slice %395 {offsets = [0, 0, 0], sizes = [8, 6, 128], strides = [1, 1, 1]} : vector<8x8x128xf32> to vector<8x6x128xf32>
    %398 = vector.broadcast %396 : f32 to vector<8x6x128xf32>
    %399 = arith.mulf %398, %397 : vector<8x6x128xf32>
    %400 = arith.addf %394, %399 : vector<8x6x128xf32>
    %c7_76 = arith.constant 7 : index
    %401 = memref.load %arg2[%c7_76] : memref<27xf32, #tpu.memory_space<smem>>
    %402 = vector.extract_strided_slice %395 {offsets = [0, 1, 0], sizes = [8, 6, 128], strides = [1, 1, 1]} : vector<8x8x128xf32> to vector<8x6x128xf32>
    %403 = vector.broadcast %401 : f32 to vector<8x6x128xf32>
    %404 = arith.mulf %403, %402 : vector<8x6x128xf32>
    %405 = arith.addf %400, %404 : vector<8x6x128xf32>
    %c8_77 = arith.constant 8 : index
    %406 = memref.load %arg2[%c8_77] : memref<27xf32, #tpu.memory_space<smem>>
    %407 = vector.extract_strided_slice %395 {offsets = [0, 2, 0], sizes = [8, 6, 128], strides = [1, 1, 1]} : vector<8x8x128xf32> to vector<8x6x128xf32>
    %408 = vector.broadcast %406 : f32 to vector<8x6x128xf32>
    %409 = arith.mulf %408, %407 : vector<8x6x128xf32>
    %410 = arith.addf %405, %409 : vector<8x6x128xf32>
    %c3_78 = arith.constant 3 : index
    %c0_79 = arith.constant 0 : index
    %c0_80 = arith.constant 0 : index
    %c0_81 = arith.constant 0 : index
    %411 = vector.load %arg1[%c3_78, %c0_79, %c0_80, %c0_81] : memref<10x10x8x128xf32, #tpu.memory_space<vmem>>, vector<1x10x8x128xf32>
    %412 = vector.shape_cast %411 : vector<1x10x8x128xf32> to vector<10x8x128xf32>
    %413 = vector.extract_strided_slice %412 {offsets = [0, 0, 0], sizes = [8, 8, 128], strides = [1, 1, 1]} : vector<10x8x128xf32> to vector<8x8x128xf32>
    %c9_82 = arith.constant 9 : index
    %414 = memref.load %arg2[%c9_82] : memref<27xf32, #tpu.memory_space<smem>>
    %415 = vector.extract_strided_slice %413 {offsets = [0, 0, 0], sizes = [8, 6, 128], strides = [1, 1, 1]} : vector<8x8x128xf32> to vector<8x6x128xf32>
    %416 = vector.broadcast %414 : f32 to vector<8x6x128xf32>
    %417 = arith.mulf %416, %415 : vector<8x6x128xf32>
    %418 = arith.addf %410, %417 : vector<8x6x128xf32>
    %c10_83 = arith.constant 10 : index
    %419 = memref.load %arg2[%c10_83] : memref<27xf32, #tpu.memory_space<smem>>
    %420 = vector.extract_strided_slice %413 {offsets = [0, 1, 0], sizes = [8, 6, 128], strides = [1, 1, 1]} : vector<8x8x128xf32> to vector<8x6x128xf32>
    %421 = vector.broadcast %419 : f32 to vector<8x6x128xf32>
    %422 = arith.mulf %421, %420 : vector<8x6x128xf32>
    %423 = arith.addf %418, %422 : vector<8x6x128xf32>
    %c11_84 = arith.constant 11 : index
    %424 = memref.load %arg2[%c11_84] : memref<27xf32, #tpu.memory_space<smem>>
    %425 = vector.extract_strided_slice %413 {offsets = [0, 2, 0], sizes = [8, 6, 128], strides = [1, 1, 1]} : vector<8x8x128xf32> to vector<8x6x128xf32>
    %426 = vector.broadcast %424 : f32 to vector<8x6x128xf32>
    %427 = arith.mulf %426, %425 : vector<8x6x128xf32>
    %428 = arith.addf %423, %427 : vector<8x6x128xf32>
    %429 = vector.extract_strided_slice %412 {offsets = [1, 0, 0], sizes = [8, 8, 128], strides = [1, 1, 1]} : vector<10x8x128xf32> to vector<8x8x128xf32>
    %c12_85 = arith.constant 12 : index
    %430 = memref.load %arg2[%c12_85] : memref<27xf32, #tpu.memory_space<smem>>
    %431 = vector.extract_strided_slice %429 {offsets = [0, 0, 0], sizes = [8, 6, 128], strides = [1, 1, 1]} : vector<8x8x128xf32> to vector<8x6x128xf32>
    %432 = vector.broadcast %430 : f32 to vector<8x6x128xf32>
    %433 = arith.mulf %432, %431 : vector<8x6x128xf32>
    %434 = arith.addf %428, %433 : vector<8x6x128xf32>
    %c13_86 = arith.constant 13 : index
    %435 = memref.load %arg2[%c13_86] : memref<27xf32, #tpu.memory_space<smem>>
    %436 = vector.extract_strided_slice %429 {offsets = [0, 1, 0], sizes = [8, 6, 128], strides = [1, 1, 1]} : vector<8x8x128xf32> to vector<8x6x128xf32>
    %437 = vector.broadcast %435 : f32 to vector<8x6x128xf32>
    %438 = arith.mulf %437, %436 : vector<8x6x128xf32>
    %439 = arith.addf %434, %438 : vector<8x6x128xf32>
    %c14_87 = arith.constant 14 : index
    %440 = memref.load %arg2[%c14_87] : memref<27xf32, #tpu.memory_space<smem>>
    %441 = vector.extract_strided_slice %429 {offsets = [0, 2, 0], sizes = [8, 6, 128], strides = [1, 1, 1]} : vector<8x8x128xf32> to vector<8x6x128xf32>
    %442 = vector.broadcast %440 : f32 to vector<8x6x128xf32>
    %443 = arith.mulf %442, %441 : vector<8x6x128xf32>
    %444 = arith.addf %439, %443 : vector<8x6x128xf32>
    %445 = vector.extract_strided_slice %412 {offsets = [2, 0, 0], sizes = [8, 8, 128], strides = [1, 1, 1]} : vector<10x8x128xf32> to vector<8x8x128xf32>
    %c15_88 = arith.constant 15 : index
    %446 = memref.load %arg2[%c15_88] : memref<27xf32, #tpu.memory_space<smem>>
    %447 = vector.extract_strided_slice %445 {offsets = [0, 0, 0], sizes = [8, 6, 128], strides = [1, 1, 1]} : vector<8x8x128xf32> to vector<8x6x128xf32>
    %448 = vector.broadcast %446 : f32 to vector<8x6x128xf32>
    %449 = arith.mulf %448, %447 : vector<8x6x128xf32>
    %450 = arith.addf %444, %449 : vector<8x6x128xf32>
    %c16_89 = arith.constant 16 : index
    %451 = memref.load %arg2[%c16_89] : memref<27xf32, #tpu.memory_space<smem>>
    %452 = vector.extract_strided_slice %445 {offsets = [0, 1, 0], sizes = [8, 6, 128], strides = [1, 1, 1]} : vector<8x8x128xf32> to vector<8x6x128xf32>
    %453 = vector.broadcast %451 : f32 to vector<8x6x128xf32>
    %454 = arith.mulf %453, %452 : vector<8x6x128xf32>
    %455 = arith.addf %450, %454 : vector<8x6x128xf32>
    %c17_90 = arith.constant 17 : index
    %456 = memref.load %arg2[%c17_90] : memref<27xf32, #tpu.memory_space<smem>>
    %457 = vector.extract_strided_slice %445 {offsets = [0, 2, 0], sizes = [8, 6, 128], strides = [1, 1, 1]} : vector<8x8x128xf32> to vector<8x6x128xf32>
    %458 = vector.broadcast %456 : f32 to vector<8x6x128xf32>
    %459 = arith.mulf %458, %457 : vector<8x6x128xf32>
    %460 = arith.addf %455, %459 : vector<8x6x128xf32>
    %c4_91 = arith.constant 4 : index
    %c0_92 = arith.constant 0 : index
    %c0_93 = arith.constant 0 : index
    %c0_94 = arith.constant 0 : index
    %461 = vector.load %arg1[%c4_91, %c0_92, %c0_93, %c0_94] : memref<10x10x8x128xf32, #tpu.memory_space<vmem>>, vector<1x10x8x128xf32>
    %462 = vector.shape_cast %461 : vector<1x10x8x128xf32> to vector<10x8x128xf32>
    %463 = vector.extract_strided_slice %462 {offsets = [0, 0, 0], sizes = [8, 8, 128], strides = [1, 1, 1]} : vector<10x8x128xf32> to vector<8x8x128xf32>
    %c18_95 = arith.constant 18 : index
    %464 = memref.load %arg2[%c18_95] : memref<27xf32, #tpu.memory_space<smem>>
    %465 = vector.extract_strided_slice %463 {offsets = [0, 0, 0], sizes = [8, 6, 128], strides = [1, 1, 1]} : vector<8x8x128xf32> to vector<8x6x128xf32>
    %466 = vector.broadcast %464 : f32 to vector<8x6x128xf32>
    %467 = arith.mulf %466, %465 : vector<8x6x128xf32>
    %468 = arith.addf %460, %467 : vector<8x6x128xf32>
    %c19_96 = arith.constant 19 : index
    %469 = memref.load %arg2[%c19_96] : memref<27xf32, #tpu.memory_space<smem>>
    %470 = vector.extract_strided_slice %463 {offsets = [0, 1, 0], sizes = [8, 6, 128], strides = [1, 1, 1]} : vector<8x8x128xf32> to vector<8x6x128xf32>
    %471 = vector.broadcast %469 : f32 to vector<8x6x128xf32>
    %472 = arith.mulf %471, %470 : vector<8x6x128xf32>
    %473 = arith.addf %468, %472 : vector<8x6x128xf32>
    %c20_97 = arith.constant 20 : index
    %474 = memref.load %arg2[%c20_97] : memref<27xf32, #tpu.memory_space<smem>>
    %475 = vector.extract_strided_slice %463 {offsets = [0, 2, 0], sizes = [8, 6, 128], strides = [1, 1, 1]} : vector<8x8x128xf32> to vector<8x6x128xf32>
    %476 = vector.broadcast %474 : f32 to vector<8x6x128xf32>
    %477 = arith.mulf %476, %475 : vector<8x6x128xf32>
    %478 = arith.addf %473, %477 : vector<8x6x128xf32>
    %479 = vector.extract_strided_slice %462 {offsets = [1, 0, 0], sizes = [8, 8, 128], strides = [1, 1, 1]} : vector<10x8x128xf32> to vector<8x8x128xf32>
    %c21_98 = arith.constant 21 : index
    %480 = memref.load %arg2[%c21_98] : memref<27xf32, #tpu.memory_space<smem>>
    %481 = vector.extract_strided_slice %479 {offsets = [0, 0, 0], sizes = [8, 6, 128], strides = [1, 1, 1]} : vector<8x8x128xf32> to vector<8x6x128xf32>
    %482 = vector.broadcast %480 : f32 to vector<8x6x128xf32>
    %483 = arith.mulf %482, %481 : vector<8x6x128xf32>
    %484 = arith.addf %478, %483 : vector<8x6x128xf32>
    %c22_99 = arith.constant 22 : index
    %485 = memref.load %arg2[%c22_99] : memref<27xf32, #tpu.memory_space<smem>>
    %486 = vector.extract_strided_slice %479 {offsets = [0, 1, 0], sizes = [8, 6, 128], strides = [1, 1, 1]} : vector<8x8x128xf32> to vector<8x6x128xf32>
    %487 = vector.broadcast %485 : f32 to vector<8x6x128xf32>
    %488 = arith.mulf %487, %486 : vector<8x6x128xf32>
    %489 = arith.addf %484, %488 : vector<8x6x128xf32>
    %c23_100 = arith.constant 23 : index
    %490 = memref.load %arg2[%c23_100] : memref<27xf32, #tpu.memory_space<smem>>
    %491 = vector.extract_strided_slice %479 {offsets = [0, 2, 0], sizes = [8, 6, 128], strides = [1, 1, 1]} : vector<8x8x128xf32> to vector<8x6x128xf32>
    %492 = vector.broadcast %490 : f32 to vector<8x6x128xf32>
    %493 = arith.mulf %492, %491 : vector<8x6x128xf32>
    %494 = arith.addf %489, %493 : vector<8x6x128xf32>
    %495 = vector.extract_strided_slice %462 {offsets = [2, 0, 0], sizes = [8, 8, 128], strides = [1, 1, 1]} : vector<10x8x128xf32> to vector<8x8x128xf32>
    %c24_101 = arith.constant 24 : index
    %496 = memref.load %arg2[%c24_101] : memref<27xf32, #tpu.memory_space<smem>>
    %497 = vector.extract_strided_slice %495 {offsets = [0, 0, 0], sizes = [8, 6, 128], strides = [1, 1, 1]} : vector<8x8x128xf32> to vector<8x6x128xf32>
    %498 = vector.broadcast %496 : f32 to vector<8x6x128xf32>
    %499 = arith.mulf %498, %497 : vector<8x6x128xf32>
    %500 = arith.addf %494, %499 : vector<8x6x128xf32>
    %c25_102 = arith.constant 25 : index
    %501 = memref.load %arg2[%c25_102] : memref<27xf32, #tpu.memory_space<smem>>
    %502 = vector.extract_strided_slice %495 {offsets = [0, 1, 0], sizes = [8, 6, 128], strides = [1, 1, 1]} : vector<8x8x128xf32> to vector<8x6x128xf32>
    %503 = vector.broadcast %501 : f32 to vector<8x6x128xf32>
    %504 = arith.mulf %503, %502 : vector<8x6x128xf32>
    %505 = arith.addf %500, %504 : vector<8x6x128xf32>
    %c26_103 = arith.constant 26 : index
    %506 = memref.load %arg2[%c26_103] : memref<27xf32, #tpu.memory_space<smem>>
    %507 = vector.extract_strided_slice %495 {offsets = [0, 2, 0], sizes = [8, 6, 128], strides = [1, 1, 1]} : vector<8x8x128xf32> to vector<8x6x128xf32>
    %508 = vector.broadcast %506 : f32 to vector<8x6x128xf32>
    %509 = arith.mulf %508, %507 : vector<8x6x128xf32>
    %510 = arith.addf %505, %509 : vector<8x6x128xf32>
    %c3_104 = arith.constant 3 : index
    %c0_105 = arith.constant 0 : index
    %c0_106 = arith.constant 0 : index
    %c0_107 = arith.constant 0 : index
    %511 = vector.load %arg1[%c3_104, %c0_105, %c0_106, %c0_107] : memref<10x10x8x128xf32, #tpu.memory_space<vmem>>, vector<1x10x8x128xf32>
    %512 = vector.shape_cast %511 : vector<1x10x8x128xf32> to vector<10x8x128xf32>
    %513 = vector.extract_strided_slice %512 {offsets = [0, 0, 0], sizes = [8, 8, 128], strides = [1, 1, 1]} : vector<10x8x128xf32> to vector<8x8x128xf32>
    %c0_108 = arith.constant 0 : index
    %514 = memref.load %arg2[%c0_108] : memref<27xf32, #tpu.memory_space<smem>>
    %515 = vector.extract_strided_slice %513 {offsets = [0, 0, 0], sizes = [8, 6, 128], strides = [1, 1, 1]} : vector<8x8x128xf32> to vector<8x6x128xf32>
    %516 = vector.broadcast %514 : f32 to vector<8x6x128xf32>
    %517 = arith.mulf %516, %515 : vector<8x6x128xf32>
    %c1_109 = arith.constant 1 : index
    %518 = memref.load %arg2[%c1_109] : memref<27xf32, #tpu.memory_space<smem>>
    %519 = vector.extract_strided_slice %513 {offsets = [0, 1, 0], sizes = [8, 6, 128], strides = [1, 1, 1]} : vector<8x8x128xf32> to vector<8x6x128xf32>
    %520 = vector.broadcast %518 : f32 to vector<8x6x128xf32>
    %521 = arith.mulf %520, %519 : vector<8x6x128xf32>
    %522 = arith.addf %517, %521 : vector<8x6x128xf32>
    %c2_110 = arith.constant 2 : index
    %523 = memref.load %arg2[%c2_110] : memref<27xf32, #tpu.memory_space<smem>>
    %524 = vector.extract_strided_slice %513 {offsets = [0, 2, 0], sizes = [8, 6, 128], strides = [1, 1, 1]} : vector<8x8x128xf32> to vector<8x6x128xf32>
    %525 = vector.broadcast %523 : f32 to vector<8x6x128xf32>
    %526 = arith.mulf %525, %524 : vector<8x6x128xf32>
    %527 = arith.addf %522, %526 : vector<8x6x128xf32>
    %528 = vector.extract_strided_slice %512 {offsets = [1, 0, 0], sizes = [8, 8, 128], strides = [1, 1, 1]} : vector<10x8x128xf32> to vector<8x8x128xf32>
    %c3_111 = arith.constant 3 : index
    %529 = memref.load %arg2[%c3_111] : memref<27xf32, #tpu.memory_space<smem>>
    %530 = vector.extract_strided_slice %528 {offsets = [0, 0, 0], sizes = [8, 6, 128], strides = [1, 1, 1]} : vector<8x8x128xf32> to vector<8x6x128xf32>
    %531 = vector.broadcast %529 : f32 to vector<8x6x128xf32>
    %532 = arith.mulf %531, %530 : vector<8x6x128xf32>
    %533 = arith.addf %527, %532 : vector<8x6x128xf32>
    %c4_112 = arith.constant 4 : index
    %534 = memref.load %arg2[%c4_112] : memref<27xf32, #tpu.memory_space<smem>>
    %535 = vector.extract_strided_slice %528 {offsets = [0, 1, 0], sizes = [8, 6, 128], strides = [1, 1, 1]} : vector<8x8x128xf32> to vector<8x6x128xf32>
    %536 = vector.broadcast %534 : f32 to vector<8x6x128xf32>
    %537 = arith.mulf %536, %535 : vector<8x6x128xf32>
    %538 = arith.addf %533, %537 : vector<8x6x128xf32>
    %c5_113 = arith.constant 5 : index
    %539 = memref.load %arg2[%c5_113] : memref<27xf32, #tpu.memory_space<smem>>
    %540 = vector.extract_strided_slice %528 {offsets = [0, 2, 0], sizes = [8, 6, 128], strides = [1, 1, 1]} : vector<8x8x128xf32> to vector<8x6x128xf32>
    %541 = vector.broadcast %539 : f32 to vector<8x6x128xf32>
    %542 = arith.mulf %541, %540 : vector<8x6x128xf32>
    %543 = arith.addf %538, %542 : vector<8x6x128xf32>
    %544 = vector.extract_strided_slice %512 {offsets = [2, 0, 0], sizes = [8, 8, 128], strides = [1, 1, 1]} : vector<10x8x128xf32> to vector<8x8x128xf32>
    %c6_114 = arith.constant 6 : index
    %545 = memref.load %arg2[%c6_114] : memref<27xf32, #tpu.memory_space<smem>>
    %546 = vector.extract_strided_slice %544 {offsets = [0, 0, 0], sizes = [8, 6, 128], strides = [1, 1, 1]} : vector<8x8x128xf32> to vector<8x6x128xf32>
    %547 = vector.broadcast %545 : f32 to vector<8x6x128xf32>
    %548 = arith.mulf %547, %546 : vector<8x6x128xf32>
    %549 = arith.addf %543, %548 : vector<8x6x128xf32>
    %c7_115 = arith.constant 7 : index
    %550 = memref.load %arg2[%c7_115] : memref<27xf32, #tpu.memory_space<smem>>
    %551 = vector.extract_strided_slice %544 {offsets = [0, 1, 0], sizes = [8, 6, 128], strides = [1, 1, 1]} : vector<8x8x128xf32> to vector<8x6x128xf32>
    %552 = vector.broadcast %550 : f32 to vector<8x6x128xf32>
    %553 = arith.mulf %552, %551 : vector<8x6x128xf32>
    %554 = arith.addf %549, %553 : vector<8x6x128xf32>
    %c8_116 = arith.constant 8 : index
    %555 = memref.load %arg2[%c8_116] : memref<27xf32, #tpu.memory_space<smem>>
    %556 = vector.extract_strided_slice %544 {offsets = [0, 2, 0], sizes = [8, 6, 128], strides = [1, 1, 1]} : vector<8x8x128xf32> to vector<8x6x128xf32>
    %557 = vector.broadcast %555 : f32 to vector<8x6x128xf32>
    %558 = arith.mulf %557, %556 : vector<8x6x128xf32>
    %559 = arith.addf %554, %558 : vector<8x6x128xf32>
    %c4_117 = arith.constant 4 : index
    %c0_118 = arith.constant 0 : index
    %c0_119 = arith.constant 0 : index
    %c0_120 = arith.constant 0 : index
    %560 = vector.load %arg1[%c4_117, %c0_118, %c0_119, %c0_120] : memref<10x10x8x128xf32, #tpu.memory_space<vmem>>, vector<1x10x8x128xf32>
    %561 = vector.shape_cast %560 : vector<1x10x8x128xf32> to vector<10x8x128xf32>
    %562 = vector.extract_strided_slice %561 {offsets = [0, 0, 0], sizes = [8, 8, 128], strides = [1, 1, 1]} : vector<10x8x128xf32> to vector<8x8x128xf32>
    %c9_121 = arith.constant 9 : index
    %563 = memref.load %arg2[%c9_121] : memref<27xf32, #tpu.memory_space<smem>>
    %564 = vector.extract_strided_slice %562 {offsets = [0, 0, 0], sizes = [8, 6, 128], strides = [1, 1, 1]} : vector<8x8x128xf32> to vector<8x6x128xf32>
    %565 = vector.broadcast %563 : f32 to vector<8x6x128xf32>
    %566 = arith.mulf %565, %564 : vector<8x6x128xf32>
    %567 = arith.addf %559, %566 : vector<8x6x128xf32>
    %c10_122 = arith.constant 10 : index
    %568 = memref.load %arg2[%c10_122] : memref<27xf32, #tpu.memory_space<smem>>
    %569 = vector.extract_strided_slice %562 {offsets = [0, 1, 0], sizes = [8, 6, 128], strides = [1, 1, 1]} : vector<8x8x128xf32> to vector<8x6x128xf32>
    %570 = vector.broadcast %568 : f32 to vector<8x6x128xf32>
    %571 = arith.mulf %570, %569 : vector<8x6x128xf32>
    %572 = arith.addf %567, %571 : vector<8x6x128xf32>
    %c11_123 = arith.constant 11 : index
    %573 = memref.load %arg2[%c11_123] : memref<27xf32, #tpu.memory_space<smem>>
    %574 = vector.extract_strided_slice %562 {offsets = [0, 2, 0], sizes = [8, 6, 128], strides = [1, 1, 1]} : vector<8x8x128xf32> to vector<8x6x128xf32>
    %575 = vector.broadcast %573 : f32 to vector<8x6x128xf32>
    %576 = arith.mulf %575, %574 : vector<8x6x128xf32>
    %577 = arith.addf %572, %576 : vector<8x6x128xf32>
    %578 = vector.extract_strided_slice %561 {offsets = [1, 0, 0], sizes = [8, 8, 128], strides = [1, 1, 1]} : vector<10x8x128xf32> to vector<8x8x128xf32>
    %c12_124 = arith.constant 12 : index
    %579 = memref.load %arg2[%c12_124] : memref<27xf32, #tpu.memory_space<smem>>
    %580 = vector.extract_strided_slice %578 {offsets = [0, 0, 0], sizes = [8, 6, 128], strides = [1, 1, 1]} : vector<8x8x128xf32> to vector<8x6x128xf32>
    %581 = vector.broadcast %579 : f32 to vector<8x6x128xf32>
    %582 = arith.mulf %581, %580 : vector<8x6x128xf32>
    %583 = arith.addf %577, %582 : vector<8x6x128xf32>
    %c13_125 = arith.constant 13 : index
    %584 = memref.load %arg2[%c13_125] : memref<27xf32, #tpu.memory_space<smem>>
    %585 = vector.extract_strided_slice %578 {offsets = [0, 1, 0], sizes = [8, 6, 128], strides = [1, 1, 1]} : vector<8x8x128xf32> to vector<8x6x128xf32>
    %586 = vector.broadcast %584 : f32 to vector<8x6x128xf32>
    %587 = arith.mulf %586, %585 : vector<8x6x128xf32>
    %588 = arith.addf %583, %587 : vector<8x6x128xf32>
    %c14_126 = arith.constant 14 : index
    %589 = memref.load %arg2[%c14_126] : memref<27xf32, #tpu.memory_space<smem>>
    %590 = vector.extract_strided_slice %578 {offsets = [0, 2, 0], sizes = [8, 6, 128], strides = [1, 1, 1]} : vector<8x8x128xf32> to vector<8x6x128xf32>
    %591 = vector.broadcast %589 : f32 to vector<8x6x128xf32>
    %592 = arith.mulf %591, %590 : vector<8x6x128xf32>
    %593 = arith.addf %588, %592 : vector<8x6x128xf32>
    %594 = vector.extract_strided_slice %561 {offsets = [2, 0, 0], sizes = [8, 8, 128], strides = [1, 1, 1]} : vector<10x8x128xf32> to vector<8x8x128xf32>
    %c15_127 = arith.constant 15 : index
    %595 = memref.load %arg2[%c15_127] : memref<27xf32, #tpu.memory_space<smem>>
    %596 = vector.extract_strided_slice %594 {offsets = [0, 0, 0], sizes = [8, 6, 128], strides = [1, 1, 1]} : vector<8x8x128xf32> to vector<8x6x128xf32>
    %597 = vector.broadcast %595 : f32 to vector<8x6x128xf32>
    %598 = arith.mulf %597, %596 : vector<8x6x128xf32>
    %599 = arith.addf %593, %598 : vector<8x6x128xf32>
    %c16_128 = arith.constant 16 : index
    %600 = memref.load %arg2[%c16_128] : memref<27xf32, #tpu.memory_space<smem>>
    %601 = vector.extract_strided_slice %594 {offsets = [0, 1, 0], sizes = [8, 6, 128], strides = [1, 1, 1]} : vector<8x8x128xf32> to vector<8x6x128xf32>
    %602 = vector.broadcast %600 : f32 to vector<8x6x128xf32>
    %603 = arith.mulf %602, %601 : vector<8x6x128xf32>
    %604 = arith.addf %599, %603 : vector<8x6x128xf32>
    %c17_129 = arith.constant 17 : index
    %605 = memref.load %arg2[%c17_129] : memref<27xf32, #tpu.memory_space<smem>>
    %606 = vector.extract_strided_slice %594 {offsets = [0, 2, 0], sizes = [8, 6, 128], strides = [1, 1, 1]} : vector<8x8x128xf32> to vector<8x6x128xf32>
    %607 = vector.broadcast %605 : f32 to vector<8x6x128xf32>
    %608 = arith.mulf %607, %606 : vector<8x6x128xf32>
    %609 = arith.addf %604, %608 : vector<8x6x128xf32>
    %c5_130 = arith.constant 5 : index
    %c0_131 = arith.constant 0 : index
    %c0_132 = arith.constant 0 : index
    %c0_133 = arith.constant 0 : index
    %610 = vector.load %arg1[%c5_130, %c0_131, %c0_132, %c0_133] : memref<10x10x8x128xf32, #tpu.memory_space<vmem>>, vector<1x10x8x128xf32>
    %611 = vector.shape_cast %610 : vector<1x10x8x128xf32> to vector<10x8x128xf32>
    %612 = vector.extract_strided_slice %611 {offsets = [0, 0, 0], sizes = [8, 8, 128], strides = [1, 1, 1]} : vector<10x8x128xf32> to vector<8x8x128xf32>
    %c18_134 = arith.constant 18 : index
    %613 = memref.load %arg2[%c18_134] : memref<27xf32, #tpu.memory_space<smem>>
    %614 = vector.extract_strided_slice %612 {offsets = [0, 0, 0], sizes = [8, 6, 128], strides = [1, 1, 1]} : vector<8x8x128xf32> to vector<8x6x128xf32>
    %615 = vector.broadcast %613 : f32 to vector<8x6x128xf32>
    %616 = arith.mulf %615, %614 : vector<8x6x128xf32>
    %617 = arith.addf %609, %616 : vector<8x6x128xf32>
    %c19_135 = arith.constant 19 : index
    %618 = memref.load %arg2[%c19_135] : memref<27xf32, #tpu.memory_space<smem>>
    %619 = vector.extract_strided_slice %612 {offsets = [0, 1, 0], sizes = [8, 6, 128], strides = [1, 1, 1]} : vector<8x8x128xf32> to vector<8x6x128xf32>
    %620 = vector.broadcast %618 : f32 to vector<8x6x128xf32>
    %621 = arith.mulf %620, %619 : vector<8x6x128xf32>
    %622 = arith.addf %617, %621 : vector<8x6x128xf32>
    %c20_136 = arith.constant 20 : index
    %623 = memref.load %arg2[%c20_136] : memref<27xf32, #tpu.memory_space<smem>>
    %624 = vector.extract_strided_slice %612 {offsets = [0, 2, 0], sizes = [8, 6, 128], strides = [1, 1, 1]} : vector<8x8x128xf32> to vector<8x6x128xf32>
    %625 = vector.broadcast %623 : f32 to vector<8x6x128xf32>
    %626 = arith.mulf %625, %624 : vector<8x6x128xf32>
    %627 = arith.addf %622, %626 : vector<8x6x128xf32>
    %628 = vector.extract_strided_slice %611 {offsets = [1, 0, 0], sizes = [8, 8, 128], strides = [1, 1, 1]} : vector<10x8x128xf32> to vector<8x8x128xf32>
    %c21_137 = arith.constant 21 : index
    %629 = memref.load %arg2[%c21_137] : memref<27xf32, #tpu.memory_space<smem>>
    %630 = vector.extract_strided_slice %628 {offsets = [0, 0, 0], sizes = [8, 6, 128], strides = [1, 1, 1]} : vector<8x8x128xf32> to vector<8x6x128xf32>
    %631 = vector.broadcast %629 : f32 to vector<8x6x128xf32>
    %632 = arith.mulf %631, %630 : vector<8x6x128xf32>
    %633 = arith.addf %627, %632 : vector<8x6x128xf32>
    %c22_138 = arith.constant 22 : index
    %634 = memref.load %arg2[%c22_138] : memref<27xf32, #tpu.memory_space<smem>>
    %635 = vector.extract_strided_slice %628 {offsets = [0, 1, 0], sizes = [8, 6, 128], strides = [1, 1, 1]} : vector<8x8x128xf32> to vector<8x6x128xf32>
    %636 = vector.broadcast %634 : f32 to vector<8x6x128xf32>
    %637 = arith.mulf %636, %635 : vector<8x6x128xf32>
    %638 = arith.addf %633, %637 : vector<8x6x128xf32>
    %c23_139 = arith.constant 23 : index
    %639 = memref.load %arg2[%c23_139] : memref<27xf32, #tpu.memory_space<smem>>
    %640 = vector.extract_strided_slice %628 {offsets = [0, 2, 0], sizes = [8, 6, 128], strides = [1, 1, 1]} : vector<8x8x128xf32> to vector<8x6x128xf32>
    %641 = vector.broadcast %639 : f32 to vector<8x6x128xf32>
    %642 = arith.mulf %641, %640 : vector<8x6x128xf32>
    %643 = arith.addf %638, %642 : vector<8x6x128xf32>
    %644 = vector.extract_strided_slice %611 {offsets = [2, 0, 0], sizes = [8, 8, 128], strides = [1, 1, 1]} : vector<10x8x128xf32> to vector<8x8x128xf32>
    %c24_140 = arith.constant 24 : index
    %645 = memref.load %arg2[%c24_140] : memref<27xf32, #tpu.memory_space<smem>>
    %646 = vector.extract_strided_slice %644 {offsets = [0, 0, 0], sizes = [8, 6, 128], strides = [1, 1, 1]} : vector<8x8x128xf32> to vector<8x6x128xf32>
    %647 = vector.broadcast %645 : f32 to vector<8x6x128xf32>
    %648 = arith.mulf %647, %646 : vector<8x6x128xf32>
    %649 = arith.addf %643, %648 : vector<8x6x128xf32>
    %c25_141 = arith.constant 25 : index
    %650 = memref.load %arg2[%c25_141] : memref<27xf32, #tpu.memory_space<smem>>
    %651 = vector.extract_strided_slice %644 {offsets = [0, 1, 0], sizes = [8, 6, 128], strides = [1, 1, 1]} : vector<8x8x128xf32> to vector<8x6x128xf32>
    %652 = vector.broadcast %650 : f32 to vector<8x6x128xf32>
    %653 = arith.mulf %652, %651 : vector<8x6x128xf32>
    %654 = arith.addf %649, %653 : vector<8x6x128xf32>
    %c26_142 = arith.constant 26 : index
    %655 = memref.load %arg2[%c26_142] : memref<27xf32, #tpu.memory_space<smem>>
    %656 = vector.extract_strided_slice %644 {offsets = [0, 2, 0], sizes = [8, 6, 128], strides = [1, 1, 1]} : vector<8x8x128xf32> to vector<8x6x128xf32>
    %657 = vector.broadcast %655 : f32 to vector<8x6x128xf32>
    %658 = arith.mulf %657, %656 : vector<8x6x128xf32>
    %659 = arith.addf %654, %658 : vector<8x6x128xf32>
    %660 = arith.maximumf %510, %659 : vector<8x6x128xf32>
    %661 = vector.extract_strided_slice %660 {offsets = [0, 0, 0], sizes = [1, 6, 128], strides = [1, 1, 1]} : vector<8x6x128xf32> to vector<1x6x128xf32>
    %662 = vector.shape_cast %661 : vector<1x6x128xf32> to vector<6x128xf32>
    %663 = vector.extract_strided_slice %660 {offsets = [1, 0, 0], sizes = [1, 6, 128], strides = [1, 1, 1]} : vector<8x6x128xf32> to vector<1x6x128xf32>
    %664 = vector.shape_cast %663 : vector<1x6x128xf32> to vector<6x128xf32>
    %665 = arith.maximumf %662, %664 : vector<6x128xf32>
    %666 = vector.extract_strided_slice %665 {offsets = [0, 0], sizes = [5, 128], strides = [1, 1]} : vector<6x128xf32> to vector<5x128xf32>
    %667 = vector.extract_strided_slice %665 {offsets = [1, 0], sizes = [5, 128], strides = [1, 1]} : vector<6x128xf32> to vector<5x128xf32>
    %668 = arith.maximumf %666, %667 : vector<5x128xf32>
    %669 = vector.broadcast %0 : f32 to vector<5x128xf32>
    %670 = arith.addf %668, %669 : vector<5x128xf32>
    %671 = math.tanh %670 : vector<5x128xf32>
    %c4_143 = arith.constant 4 : index
    %c0_144 = arith.constant 0 : index
    %c0_145 = arith.constant 0 : index
    %672 = vector.load %arg4[%c4_143, %c0_144, %c0_145] : memref<16x5x128xf32, #tpu.memory_space<vmem>>, vector<1x5x128xf32>
    %673 = vector.shape_cast %672 : vector<1x5x128xf32> to vector<5x128xf32>
    %674 = arith.mulf %673, %671 : vector<5x128xf32>
    %675 = arith.addf %361, %674 : vector<5x128xf32>
    %676 = vector.extract_strided_slice %660 {offsets = [2, 0, 0], sizes = [1, 6, 128], strides = [1, 1, 1]} : vector<8x6x128xf32> to vector<1x6x128xf32>
    %677 = vector.shape_cast %676 : vector<1x6x128xf32> to vector<6x128xf32>
    %678 = vector.extract_strided_slice %660 {offsets = [3, 0, 0], sizes = [1, 6, 128], strides = [1, 1, 1]} : vector<8x6x128xf32> to vector<1x6x128xf32>
    %679 = vector.shape_cast %678 : vector<1x6x128xf32> to vector<6x128xf32>
    %680 = arith.maximumf %677, %679 : vector<6x128xf32>
    %681 = vector.extract_strided_slice %680 {offsets = [0, 0], sizes = [5, 128], strides = [1, 1]} : vector<6x128xf32> to vector<5x128xf32>
    %682 = vector.extract_strided_slice %680 {offsets = [1, 0], sizes = [5, 128], strides = [1, 1]} : vector<6x128xf32> to vector<5x128xf32>
    %683 = arith.maximumf %681, %682 : vector<5x128xf32>
    %684 = vector.broadcast %0 : f32 to vector<5x128xf32>
    %685 = arith.addf %683, %684 : vector<5x128xf32>
    %686 = math.tanh %685 : vector<5x128xf32>
    %c5_146 = arith.constant 5 : index
    %c0_147 = arith.constant 0 : index
    %c0_148 = arith.constant 0 : index
    %687 = vector.load %arg4[%c5_146, %c0_147, %c0_148] : memref<16x5x128xf32, #tpu.memory_space<vmem>>, vector<1x5x128xf32>
    %688 = vector.shape_cast %687 : vector<1x5x128xf32> to vector<5x128xf32>
    %689 = arith.mulf %688, %686 : vector<5x128xf32>
    %690 = arith.addf %675, %689 : vector<5x128xf32>
    %691 = vector.extract_strided_slice %660 {offsets = [4, 0, 0], sizes = [1, 6, 128], strides = [1, 1, 1]} : vector<8x6x128xf32> to vector<1x6x128xf32>
    %692 = vector.shape_cast %691 : vector<1x6x128xf32> to vector<6x128xf32>
    %693 = vector.extract_strided_slice %660 {offsets = [5, 0, 0], sizes = [1, 6, 128], strides = [1, 1, 1]} : vector<8x6x128xf32> to vector<1x6x128xf32>
    %694 = vector.shape_cast %693 : vector<1x6x128xf32> to vector<6x128xf32>
    %695 = arith.maximumf %692, %694 : vector<6x128xf32>
    %696 = vector.extract_strided_slice %695 {offsets = [0, 0], sizes = [5, 128], strides = [1, 1]} : vector<6x128xf32> to vector<5x128xf32>
    %697 = vector.extract_strided_slice %695 {offsets = [1, 0], sizes = [5, 128], strides = [1, 1]} : vector<6x128xf32> to vector<5x128xf32>
    %698 = arith.maximumf %696, %697 : vector<5x128xf32>
    %699 = vector.broadcast %0 : f32 to vector<5x128xf32>
    %700 = arith.addf %698, %699 : vector<5x128xf32>
    %701 = math.tanh %700 : vector<5x128xf32>
    %c6_149 = arith.constant 6 : index
    %c0_150 = arith.constant 0 : index
    %c0_151 = arith.constant 0 : index
    %702 = vector.load %arg4[%c6_149, %c0_150, %c0_151] : memref<16x5x128xf32, #tpu.memory_space<vmem>>, vector<1x5x128xf32>
    %703 = vector.shape_cast %702 : vector<1x5x128xf32> to vector<5x128xf32>
    %704 = arith.mulf %703, %701 : vector<5x128xf32>
    %705 = arith.addf %690, %704 : vector<5x128xf32>
    %706 = vector.extract_strided_slice %660 {offsets = [6, 0, 0], sizes = [1, 6, 128], strides = [1, 1, 1]} : vector<8x6x128xf32> to vector<1x6x128xf32>
    %707 = vector.shape_cast %706 : vector<1x6x128xf32> to vector<6x128xf32>
    %708 = vector.extract_strided_slice %660 {offsets = [7, 0, 0], sizes = [1, 6, 128], strides = [1, 1, 1]} : vector<8x6x128xf32> to vector<1x6x128xf32>
    %709 = vector.shape_cast %708 : vector<1x6x128xf32> to vector<6x128xf32>
    %710 = arith.maximumf %707, %709 : vector<6x128xf32>
    %711 = vector.extract_strided_slice %710 {offsets = [0, 0], sizes = [5, 128], strides = [1, 1]} : vector<6x128xf32> to vector<5x128xf32>
    %712 = vector.extract_strided_slice %710 {offsets = [1, 0], sizes = [5, 128], strides = [1, 1]} : vector<6x128xf32> to vector<5x128xf32>
    %713 = arith.maximumf %711, %712 : vector<5x128xf32>
    %714 = vector.broadcast %0 : f32 to vector<5x128xf32>
    %715 = arith.addf %713, %714 : vector<5x128xf32>
    %716 = math.tanh %715 : vector<5x128xf32>
    %c7_152 = arith.constant 7 : index
    %c0_153 = arith.constant 0 : index
    %c0_154 = arith.constant 0 : index
    %717 = vector.load %arg4[%c7_152, %c0_153, %c0_154] : memref<16x5x128xf32, #tpu.memory_space<vmem>>, vector<1x5x128xf32>
    %718 = vector.shape_cast %717 : vector<1x5x128xf32> to vector<5x128xf32>
    %719 = arith.mulf %718, %716 : vector<5x128xf32>
    %720 = arith.addf %705, %719 : vector<5x128xf32>
    %c4_155 = arith.constant 4 : index
    %c0_156 = arith.constant 0 : index
    %c0_157 = arith.constant 0 : index
    %c0_158 = arith.constant 0 : index
    %721 = vector.load %arg1[%c4_155, %c0_156, %c0_157, %c0_158] : memref<10x10x8x128xf32, #tpu.memory_space<vmem>>, vector<1x10x8x128xf32>
    %722 = vector.shape_cast %721 : vector<1x10x8x128xf32> to vector<10x8x128xf32>
    %723 = vector.extract_strided_slice %722 {offsets = [0, 0, 0], sizes = [8, 8, 128], strides = [1, 1, 1]} : vector<10x8x128xf32> to vector<8x8x128xf32>
    %c0_159 = arith.constant 0 : index
    %724 = memref.load %arg2[%c0_159] : memref<27xf32, #tpu.memory_space<smem>>
    %725 = vector.extract_strided_slice %723 {offsets = [0, 0, 0], sizes = [8, 6, 128], strides = [1, 1, 1]} : vector<8x8x128xf32> to vector<8x6x128xf32>
    %726 = vector.broadcast %724 : f32 to vector<8x6x128xf32>
    %727 = arith.mulf %726, %725 : vector<8x6x128xf32>
    %c1_160 = arith.constant 1 : index
    %728 = memref.load %arg2[%c1_160] : memref<27xf32, #tpu.memory_space<smem>>
    %729 = vector.extract_strided_slice %723 {offsets = [0, 1, 0], sizes = [8, 6, 128], strides = [1, 1, 1]} : vector<8x8x128xf32> to vector<8x6x128xf32>
    %730 = vector.broadcast %728 : f32 to vector<8x6x128xf32>
    %731 = arith.mulf %730, %729 : vector<8x6x128xf32>
    %732 = arith.addf %727, %731 : vector<8x6x128xf32>
    %c2_161 = arith.constant 2 : index
    %733 = memref.load %arg2[%c2_161] : memref<27xf32, #tpu.memory_space<smem>>
    %734 = vector.extract_strided_slice %723 {offsets = [0, 2, 0], sizes = [8, 6, 128], strides = [1, 1, 1]} : vector<8x8x128xf32> to vector<8x6x128xf32>
    %735 = vector.broadcast %733 : f32 to vector<8x6x128xf32>
    %736 = arith.mulf %735, %734 : vector<8x6x128xf32>
    %737 = arith.addf %732, %736 : vector<8x6x128xf32>
    %738 = vector.extract_strided_slice %722 {offsets = [1, 0, 0], sizes = [8, 8, 128], strides = [1, 1, 1]} : vector<10x8x128xf32> to vector<8x8x128xf32>
    %c3_162 = arith.constant 3 : index
    %739 = memref.load %arg2[%c3_162] : memref<27xf32, #tpu.memory_space<smem>>
    %740 = vector.extract_strided_slice %738 {offsets = [0, 0, 0], sizes = [8, 6, 128], strides = [1, 1, 1]} : vector<8x8x128xf32> to vector<8x6x128xf32>
    %741 = vector.broadcast %739 : f32 to vector<8x6x128xf32>
    %742 = arith.mulf %741, %740 : vector<8x6x128xf32>
    %743 = arith.addf %737, %742 : vector<8x6x128xf32>
    %c4_163 = arith.constant 4 : index
    %744 = memref.load %arg2[%c4_163] : memref<27xf32, #tpu.memory_space<smem>>
    %745 = vector.extract_strided_slice %738 {offsets = [0, 1, 0], sizes = [8, 6, 128], strides = [1, 1, 1]} : vector<8x8x128xf32> to vector<8x6x128xf32>
    %746 = vector.broadcast %744 : f32 to vector<8x6x128xf32>
    %747 = arith.mulf %746, %745 : vector<8x6x128xf32>
    %748 = arith.addf %743, %747 : vector<8x6x128xf32>
    %c5_164 = arith.constant 5 : index
    %749 = memref.load %arg2[%c5_164] : memref<27xf32, #tpu.memory_space<smem>>
    %750 = vector.extract_strided_slice %738 {offsets = [0, 2, 0], sizes = [8, 6, 128], strides = [1, 1, 1]} : vector<8x8x128xf32> to vector<8x6x128xf32>
    %751 = vector.broadcast %749 : f32 to vector<8x6x128xf32>
    %752 = arith.mulf %751, %750 : vector<8x6x128xf32>
    %753 = arith.addf %748, %752 : vector<8x6x128xf32>
    %754 = vector.extract_strided_slice %722 {offsets = [2, 0, 0], sizes = [8, 8, 128], strides = [1, 1, 1]} : vector<10x8x128xf32> to vector<8x8x128xf32>
    %c6_165 = arith.constant 6 : index
    %755 = memref.load %arg2[%c6_165] : memref<27xf32, #tpu.memory_space<smem>>
    %756 = vector.extract_strided_slice %754 {offsets = [0, 0, 0], sizes = [8, 6, 128], strides = [1, 1, 1]} : vector<8x8x128xf32> to vector<8x6x128xf32>
    %757 = vector.broadcast %755 : f32 to vector<8x6x128xf32>
    %758 = arith.mulf %757, %756 : vector<8x6x128xf32>
    %759 = arith.addf %753, %758 : vector<8x6x128xf32>
    %c7_166 = arith.constant 7 : index
    %760 = memref.load %arg2[%c7_166] : memref<27xf32, #tpu.memory_space<smem>>
    %761 = vector.extract_strided_slice %754 {offsets = [0, 1, 0], sizes = [8, 6, 128], strides = [1, 1, 1]} : vector<8x8x128xf32> to vector<8x6x128xf32>
    %762 = vector.broadcast %760 : f32 to vector<8x6x128xf32>
    %763 = arith.mulf %762, %761 : vector<8x6x128xf32>
    %764 = arith.addf %759, %763 : vector<8x6x128xf32>
    %c8_167 = arith.constant 8 : index
    %765 = memref.load %arg2[%c8_167] : memref<27xf32, #tpu.memory_space<smem>>
    %766 = vector.extract_strided_slice %754 {offsets = [0, 2, 0], sizes = [8, 6, 128], strides = [1, 1, 1]} : vector<8x8x128xf32> to vector<8x6x128xf32>
    %767 = vector.broadcast %765 : f32 to vector<8x6x128xf32>
    %768 = arith.mulf %767, %766 : vector<8x6x128xf32>
    %769 = arith.addf %764, %768 : vector<8x6x128xf32>
    %c5_168 = arith.constant 5 : index
    %c0_169 = arith.constant 0 : index
    %c0_170 = arith.constant 0 : index
    %c0_171 = arith.constant 0 : index
    %770 = vector.load %arg1[%c5_168, %c0_169, %c0_170, %c0_171] : memref<10x10x8x128xf32, #tpu.memory_space<vmem>>, vector<1x10x8x128xf32>
    %771 = vector.shape_cast %770 : vector<1x10x8x128xf32> to vector<10x8x128xf32>
    %772 = vector.extract_strided_slice %771 {offsets = [0, 0, 0], sizes = [8, 8, 128], strides = [1, 1, 1]} : vector<10x8x128xf32> to vector<8x8x128xf32>
    %c9_172 = arith.constant 9 : index
    %773 = memref.load %arg2[%c9_172] : memref<27xf32, #tpu.memory_space<smem>>
    %774 = vector.extract_strided_slice %772 {offsets = [0, 0, 0], sizes = [8, 6, 128], strides = [1, 1, 1]} : vector<8x8x128xf32> to vector<8x6x128xf32>
    %775 = vector.broadcast %773 : f32 to vector<8x6x128xf32>
    %776 = arith.mulf %775, %774 : vector<8x6x128xf32>
    %777 = arith.addf %769, %776 : vector<8x6x128xf32>
    %c10_173 = arith.constant 10 : index
    %778 = memref.load %arg2[%c10_173] : memref<27xf32, #tpu.memory_space<smem>>
    %779 = vector.extract_strided_slice %772 {offsets = [0, 1, 0], sizes = [8, 6, 128], strides = [1, 1, 1]} : vector<8x8x128xf32> to vector<8x6x128xf32>
    %780 = vector.broadcast %778 : f32 to vector<8x6x128xf32>
    %781 = arith.mulf %780, %779 : vector<8x6x128xf32>
    %782 = arith.addf %777, %781 : vector<8x6x128xf32>
    %c11_174 = arith.constant 11 : index
    %783 = memref.load %arg2[%c11_174] : memref<27xf32, #tpu.memory_space<smem>>
    %784 = vector.extract_strided_slice %772 {offsets = [0, 2, 0], sizes = [8, 6, 128], strides = [1, 1, 1]} : vector<8x8x128xf32> to vector<8x6x128xf32>
    %785 = vector.broadcast %783 : f32 to vector<8x6x128xf32>
    %786 = arith.mulf %785, %784 : vector<8x6x128xf32>
    %787 = arith.addf %782, %786 : vector<8x6x128xf32>
    %788 = vector.extract_strided_slice %771 {offsets = [1, 0, 0], sizes = [8, 8, 128], strides = [1, 1, 1]} : vector<10x8x128xf32> to vector<8x8x128xf32>
    %c12_175 = arith.constant 12 : index
    %789 = memref.load %arg2[%c12_175] : memref<27xf32, #tpu.memory_space<smem>>
    %790 = vector.extract_strided_slice %788 {offsets = [0, 0, 0], sizes = [8, 6, 128], strides = [1, 1, 1]} : vector<8x8x128xf32> to vector<8x6x128xf32>
    %791 = vector.broadcast %789 : f32 to vector<8x6x128xf32>
    %792 = arith.mulf %791, %790 : vector<8x6x128xf32>
    %793 = arith.addf %787, %792 : vector<8x6x128xf32>
    %c13_176 = arith.constant 13 : index
    %794 = memref.load %arg2[%c13_176] : memref<27xf32, #tpu.memory_space<smem>>
    %795 = vector.extract_strided_slice %788 {offsets = [0, 1, 0], sizes = [8, 6, 128], strides = [1, 1, 1]} : vector<8x8x128xf32> to vector<8x6x128xf32>
    %796 = vector.broadcast %794 : f32 to vector<8x6x128xf32>
    %797 = arith.mulf %796, %795 : vector<8x6x128xf32>
    %798 = arith.addf %793, %797 : vector<8x6x128xf32>
    %c14_177 = arith.constant 14 : index
    %799 = memref.load %arg2[%c14_177] : memref<27xf32, #tpu.memory_space<smem>>
    %800 = vector.extract_strided_slice %788 {offsets = [0, 2, 0], sizes = [8, 6, 128], strides = [1, 1, 1]} : vector<8x8x128xf32> to vector<8x6x128xf32>
    %801 = vector.broadcast %799 : f32 to vector<8x6x128xf32>
    %802 = arith.mulf %801, %800 : vector<8x6x128xf32>
    %803 = arith.addf %798, %802 : vector<8x6x128xf32>
    %804 = vector.extract_strided_slice %771 {offsets = [2, 0, 0], sizes = [8, 8, 128], strides = [1, 1, 1]} : vector<10x8x128xf32> to vector<8x8x128xf32>
    %c15_178 = arith.constant 15 : index
    %805 = memref.load %arg2[%c15_178] : memref<27xf32, #tpu.memory_space<smem>>
    %806 = vector.extract_strided_slice %804 {offsets = [0, 0, 0], sizes = [8, 6, 128], strides = [1, 1, 1]} : vector<8x8x128xf32> to vector<8x6x128xf32>
    %807 = vector.broadcast %805 : f32 to vector<8x6x128xf32>
    %808 = arith.mulf %807, %806 : vector<8x6x128xf32>
    %809 = arith.addf %803, %808 : vector<8x6x128xf32>
    %c16_179 = arith.constant 16 : index
    %810 = memref.load %arg2[%c16_179] : memref<27xf32, #tpu.memory_space<smem>>
    %811 = vector.extract_strided_slice %804 {offsets = [0, 1, 0], sizes = [8, 6, 128], strides = [1, 1, 1]} : vector<8x8x128xf32> to vector<8x6x128xf32>
    %812 = vector.broadcast %810 : f32 to vector<8x6x128xf32>
    %813 = arith.mulf %812, %811 : vector<8x6x128xf32>
    %814 = arith.addf %809, %813 : vector<8x6x128xf32>
    %c17_180 = arith.constant 17 : index
    %815 = memref.load %arg2[%c17_180] : memref<27xf32, #tpu.memory_space<smem>>
    %816 = vector.extract_strided_slice %804 {offsets = [0, 2, 0], sizes = [8, 6, 128], strides = [1, 1, 1]} : vector<8x8x128xf32> to vector<8x6x128xf32>
    %817 = vector.broadcast %815 : f32 to vector<8x6x128xf32>
    %818 = arith.mulf %817, %816 : vector<8x6x128xf32>
    %819 = arith.addf %814, %818 : vector<8x6x128xf32>
    %c6_181 = arith.constant 6 : index
    %c0_182 = arith.constant 0 : index
    %c0_183 = arith.constant 0 : index
    %c0_184 = arith.constant 0 : index
    %820 = vector.load %arg1[%c6_181, %c0_182, %c0_183, %c0_184] : memref<10x10x8x128xf32, #tpu.memory_space<vmem>>, vector<1x10x8x128xf32>
    %821 = vector.shape_cast %820 : vector<1x10x8x128xf32> to vector<10x8x128xf32>
    %822 = vector.extract_strided_slice %821 {offsets = [0, 0, 0], sizes = [8, 8, 128], strides = [1, 1, 1]} : vector<10x8x128xf32> to vector<8x8x128xf32>
    %c18_185 = arith.constant 18 : index
    %823 = memref.load %arg2[%c18_185] : memref<27xf32, #tpu.memory_space<smem>>
    %824 = vector.extract_strided_slice %822 {offsets = [0, 0, 0], sizes = [8, 6, 128], strides = [1, 1, 1]} : vector<8x8x128xf32> to vector<8x6x128xf32>
    %825 = vector.broadcast %823 : f32 to vector<8x6x128xf32>
    %826 = arith.mulf %825, %824 : vector<8x6x128xf32>
    %827 = arith.addf %819, %826 : vector<8x6x128xf32>
    %c19_186 = arith.constant 19 : index
    %828 = memref.load %arg2[%c19_186] : memref<27xf32, #tpu.memory_space<smem>>
    %829 = vector.extract_strided_slice %822 {offsets = [0, 1, 0], sizes = [8, 6, 128], strides = [1, 1, 1]} : vector<8x8x128xf32> to vector<8x6x128xf32>
    %830 = vector.broadcast %828 : f32 to vector<8x6x128xf32>
    %831 = arith.mulf %830, %829 : vector<8x6x128xf32>
    %832 = arith.addf %827, %831 : vector<8x6x128xf32>
    %c20_187 = arith.constant 20 : index
    %833 = memref.load %arg2[%c20_187] : memref<27xf32, #tpu.memory_space<smem>>
    %834 = vector.extract_strided_slice %822 {offsets = [0, 2, 0], sizes = [8, 6, 128], strides = [1, 1, 1]} : vector<8x8x128xf32> to vector<8x6x128xf32>
    %835 = vector.broadcast %833 : f32 to vector<8x6x128xf32>
    %836 = arith.mulf %835, %834 : vector<8x6x128xf32>
    %837 = arith.addf %832, %836 : vector<8x6x128xf32>
    %838 = vector.extract_strided_slice %821 {offsets = [1, 0, 0], sizes = [8, 8, 128], strides = [1, 1, 1]} : vector<10x8x128xf32> to vector<8x8x128xf32>
    %c21_188 = arith.constant 21 : index
    %839 = memref.load %arg2[%c21_188] : memref<27xf32, #tpu.memory_space<smem>>
    %840 = vector.extract_strided_slice %838 {offsets = [0, 0, 0], sizes = [8, 6, 128], strides = [1, 1, 1]} : vector<8x8x128xf32> to vector<8x6x128xf32>
    %841 = vector.broadcast %839 : f32 to vector<8x6x128xf32>
    %842 = arith.mulf %841, %840 : vector<8x6x128xf32>
    %843 = arith.addf %837, %842 : vector<8x6x128xf32>
    %c22_189 = arith.constant 22 : index
    %844 = memref.load %arg2[%c22_189] : memref<27xf32, #tpu.memory_space<smem>>
    %845 = vector.extract_strided_slice %838 {offsets = [0, 1, 0], sizes = [8, 6, 128], strides = [1, 1, 1]} : vector<8x8x128xf32> to vector<8x6x128xf32>
    %846 = vector.broadcast %844 : f32 to vector<8x6x128xf32>
    %847 = arith.mulf %846, %845 : vector<8x6x128xf32>
    %848 = arith.addf %843, %847 : vector<8x6x128xf32>
    %c23_190 = arith.constant 23 : index
    %849 = memref.load %arg2[%c23_190] : memref<27xf32, #tpu.memory_space<smem>>
    %850 = vector.extract_strided_slice %838 {offsets = [0, 2, 0], sizes = [8, 6, 128], strides = [1, 1, 1]} : vector<8x8x128xf32> to vector<8x6x128xf32>
    %851 = vector.broadcast %849 : f32 to vector<8x6x128xf32>
    %852 = arith.mulf %851, %850 : vector<8x6x128xf32>
    %853 = arith.addf %848, %852 : vector<8x6x128xf32>
    %854 = vector.extract_strided_slice %821 {offsets = [2, 0, 0], sizes = [8, 8, 128], strides = [1, 1, 1]} : vector<10x8x128xf32> to vector<8x8x128xf32>
    %c24_191 = arith.constant 24 : index
    %855 = memref.load %arg2[%c24_191] : memref<27xf32, #tpu.memory_space<smem>>
    %856 = vector.extract_strided_slice %854 {offsets = [0, 0, 0], sizes = [8, 6, 128], strides = [1, 1, 1]} : vector<8x8x128xf32> to vector<8x6x128xf32>
    %857 = vector.broadcast %855 : f32 to vector<8x6x128xf32>
    %858 = arith.mulf %857, %856 : vector<8x6x128xf32>
    %859 = arith.addf %853, %858 : vector<8x6x128xf32>
    %c25_192 = arith.constant 25 : index
    %860 = memref.load %arg2[%c25_192] : memref<27xf32, #tpu.memory_space<smem>>
    %861 = vector.extract_strided_slice %854 {offsets = [0, 1, 0], sizes = [8, 6, 128], strides = [1, 1, 1]} : vector<8x8x128xf32> to vector<8x6x128xf32>
    %862 = vector.broadcast %860 : f32 to vector<8x6x128xf32>
    %863 = arith.mulf %862, %861 : vector<8x6x128xf32>
    %864 = arith.addf %859, %863 : vector<8x6x128xf32>
    %c26_193 = arith.constant 26 : index
    %865 = memref.load %arg2[%c26_193] : memref<27xf32, #tpu.memory_space<smem>>
    %866 = vector.extract_strided_slice %854 {offsets = [0, 2, 0], sizes = [8, 6, 128], strides = [1, 1, 1]} : vector<8x8x128xf32> to vector<8x6x128xf32>
    %867 = vector.broadcast %865 : f32 to vector<8x6x128xf32>
    %868 = arith.mulf %867, %866 : vector<8x6x128xf32>
    %869 = arith.addf %864, %868 : vector<8x6x128xf32>
    %c5_194 = arith.constant 5 : index
    %c0_195 = arith.constant 0 : index
    %c0_196 = arith.constant 0 : index
    %c0_197 = arith.constant 0 : index
    %870 = vector.load %arg1[%c5_194, %c0_195, %c0_196, %c0_197] : memref<10x10x8x128xf32, #tpu.memory_space<vmem>>, vector<1x10x8x128xf32>
    %871 = vector.shape_cast %870 : vector<1x10x8x128xf32> to vector<10x8x128xf32>
    %872 = vector.extract_strided_slice %871 {offsets = [0, 0, 0], sizes = [8, 8, 128], strides = [1, 1, 1]} : vector<10x8x128xf32> to vector<8x8x128xf32>
    %c0_198 = arith.constant 0 : index
    %873 = memref.load %arg2[%c0_198] : memref<27xf32, #tpu.memory_space<smem>>
    %874 = vector.extract_strided_slice %872 {offsets = [0, 0, 0], sizes = [8, 6, 128], strides = [1, 1, 1]} : vector<8x8x128xf32> to vector<8x6x128xf32>
    %875 = vector.broadcast %873 : f32 to vector<8x6x128xf32>
    %876 = arith.mulf %875, %874 : vector<8x6x128xf32>
    %c1_199 = arith.constant 1 : index
    %877 = memref.load %arg2[%c1_199] : memref<27xf32, #tpu.memory_space<smem>>
    %878 = vector.extract_strided_slice %872 {offsets = [0, 1, 0], sizes = [8, 6, 128], strides = [1, 1, 1]} : vector<8x8x128xf32> to vector<8x6x128xf32>
    %879 = vector.broadcast %877 : f32 to vector<8x6x128xf32>
    %880 = arith.mulf %879, %878 : vector<8x6x128xf32>
    %881 = arith.addf %876, %880 : vector<8x6x128xf32>
    %c2_200 = arith.constant 2 : index
    %882 = memref.load %arg2[%c2_200] : memref<27xf32, #tpu.memory_space<smem>>
    %883 = vector.extract_strided_slice %872 {offsets = [0, 2, 0], sizes = [8, 6, 128], strides = [1, 1, 1]} : vector<8x8x128xf32> to vector<8x6x128xf32>
    %884 = vector.broadcast %882 : f32 to vector<8x6x128xf32>
    %885 = arith.mulf %884, %883 : vector<8x6x128xf32>
    %886 = arith.addf %881, %885 : vector<8x6x128xf32>
    %887 = vector.extract_strided_slice %871 {offsets = [1, 0, 0], sizes = [8, 8, 128], strides = [1, 1, 1]} : vector<10x8x128xf32> to vector<8x8x128xf32>
    %c3_201 = arith.constant 3 : index
    %888 = memref.load %arg2[%c3_201] : memref<27xf32, #tpu.memory_space<smem>>
    %889 = vector.extract_strided_slice %887 {offsets = [0, 0, 0], sizes = [8, 6, 128], strides = [1, 1, 1]} : vector<8x8x128xf32> to vector<8x6x128xf32>
    %890 = vector.broadcast %888 : f32 to vector<8x6x128xf32>
    %891 = arith.mulf %890, %889 : vector<8x6x128xf32>
    %892 = arith.addf %886, %891 : vector<8x6x128xf32>
    %c4_202 = arith.constant 4 : index
    %893 = memref.load %arg2[%c4_202] : memref<27xf32, #tpu.memory_space<smem>>
    %894 = vector.extract_strided_slice %887 {offsets = [0, 1, 0], sizes = [8, 6, 128], strides = [1, 1, 1]} : vector<8x8x128xf32> to vector<8x6x128xf32>
    %895 = vector.broadcast %893 : f32 to vector<8x6x128xf32>
    %896 = arith.mulf %895, %894 : vector<8x6x128xf32>
    %897 = arith.addf %892, %896 : vector<8x6x128xf32>
    %c5_203 = arith.constant 5 : index
    %898 = memref.load %arg2[%c5_203] : memref<27xf32, #tpu.memory_space<smem>>
    %899 = vector.extract_strided_slice %887 {offsets = [0, 2, 0], sizes = [8, 6, 128], strides = [1, 1, 1]} : vector<8x8x128xf32> to vector<8x6x128xf32>
    %900 = vector.broadcast %898 : f32 to vector<8x6x128xf32>
    %901 = arith.mulf %900, %899 : vector<8x6x128xf32>
    %902 = arith.addf %897, %901 : vector<8x6x128xf32>
    %903 = vector.extract_strided_slice %871 {offsets = [2, 0, 0], sizes = [8, 8, 128], strides = [1, 1, 1]} : vector<10x8x128xf32> to vector<8x8x128xf32>
    %c6_204 = arith.constant 6 : index
    %904 = memref.load %arg2[%c6_204] : memref<27xf32, #tpu.memory_space<smem>>
    %905 = vector.extract_strided_slice %903 {offsets = [0, 0, 0], sizes = [8, 6, 128], strides = [1, 1, 1]} : vector<8x8x128xf32> to vector<8x6x128xf32>
    %906 = vector.broadcast %904 : f32 to vector<8x6x128xf32>
    %907 = arith.mulf %906, %905 : vector<8x6x128xf32>
    %908 = arith.addf %902, %907 : vector<8x6x128xf32>
    %c7_205 = arith.constant 7 : index
    %909 = memref.load %arg2[%c7_205] : memref<27xf32, #tpu.memory_space<smem>>
    %910 = vector.extract_strided_slice %903 {offsets = [0, 1, 0], sizes = [8, 6, 128], strides = [1, 1, 1]} : vector<8x8x128xf32> to vector<8x6x128xf32>
    %911 = vector.broadcast %909 : f32 to vector<8x6x128xf32>
    %912 = arith.mulf %911, %910 : vector<8x6x128xf32>
    %913 = arith.addf %908, %912 : vector<8x6x128xf32>
    %c8_206 = arith.constant 8 : index
    %914 = memref.load %arg2[%c8_206] : memref<27xf32, #tpu.memory_space<smem>>
    %915 = vector.extract_strided_slice %903 {offsets = [0, 2, 0], sizes = [8, 6, 128], strides = [1, 1, 1]} : vector<8x8x128xf32> to vector<8x6x128xf32>
    %916 = vector.broadcast %914 : f32 to vector<8x6x128xf32>
    %917 = arith.mulf %916, %915 : vector<8x6x128xf32>
    %918 = arith.addf %913, %917 : vector<8x6x128xf32>
    %c6_207 = arith.constant 6 : index
    %c0_208 = arith.constant 0 : index
    %c0_209 = arith.constant 0 : index
    %c0_210 = arith.constant 0 : index
    %919 = vector.load %arg1[%c6_207, %c0_208, %c0_209, %c0_210] : memref<10x10x8x128xf32, #tpu.memory_space<vmem>>, vector<1x10x8x128xf32>
    %920 = vector.shape_cast %919 : vector<1x10x8x128xf32> to vector<10x8x128xf32>
    %921 = vector.extract_strided_slice %920 {offsets = [0, 0, 0], sizes = [8, 8, 128], strides = [1, 1, 1]} : vector<10x8x128xf32> to vector<8x8x128xf32>
    %c9_211 = arith.constant 9 : index
    %922 = memref.load %arg2[%c9_211] : memref<27xf32, #tpu.memory_space<smem>>
    %923 = vector.extract_strided_slice %921 {offsets = [0, 0, 0], sizes = [8, 6, 128], strides = [1, 1, 1]} : vector<8x8x128xf32> to vector<8x6x128xf32>
    %924 = vector.broadcast %922 : f32 to vector<8x6x128xf32>
    %925 = arith.mulf %924, %923 : vector<8x6x128xf32>
    %926 = arith.addf %918, %925 : vector<8x6x128xf32>
    %c10_212 = arith.constant 10 : index
    %927 = memref.load %arg2[%c10_212] : memref<27xf32, #tpu.memory_space<smem>>
    %928 = vector.extract_strided_slice %921 {offsets = [0, 1, 0], sizes = [8, 6, 128], strides = [1, 1, 1]} : vector<8x8x128xf32> to vector<8x6x128xf32>
    %929 = vector.broadcast %927 : f32 to vector<8x6x128xf32>
    %930 = arith.mulf %929, %928 : vector<8x6x128xf32>
    %931 = arith.addf %926, %930 : vector<8x6x128xf32>
    %c11_213 = arith.constant 11 : index
    %932 = memref.load %arg2[%c11_213] : memref<27xf32, #tpu.memory_space<smem>>
    %933 = vector.extract_strided_slice %921 {offsets = [0, 2, 0], sizes = [8, 6, 128], strides = [1, 1, 1]} : vector<8x8x128xf32> to vector<8x6x128xf32>
    %934 = vector.broadcast %932 : f32 to vector<8x6x128xf32>
    %935 = arith.mulf %934, %933 : vector<8x6x128xf32>
    %936 = arith.addf %931, %935 : vector<8x6x128xf32>
    %937 = vector.extract_strided_slice %920 {offsets = [1, 0, 0], sizes = [8, 8, 128], strides = [1, 1, 1]} : vector<10x8x128xf32> to vector<8x8x128xf32>
    %c12_214 = arith.constant 12 : index
    %938 = memref.load %arg2[%c12_214] : memref<27xf32, #tpu.memory_space<smem>>
    %939 = vector.extract_strided_slice %937 {offsets = [0, 0, 0], sizes = [8, 6, 128], strides = [1, 1, 1]} : vector<8x8x128xf32> to vector<8x6x128xf32>
    %940 = vector.broadcast %938 : f32 to vector<8x6x128xf32>
    %941 = arith.mulf %940, %939 : vector<8x6x128xf32>
    %942 = arith.addf %936, %941 : vector<8x6x128xf32>
    %c13_215 = arith.constant 13 : index
    %943 = memref.load %arg2[%c13_215] : memref<27xf32, #tpu.memory_space<smem>>
    %944 = vector.extract_strided_slice %937 {offsets = [0, 1, 0], sizes = [8, 6, 128], strides = [1, 1, 1]} : vector<8x8x128xf32> to vector<8x6x128xf32>
    %945 = vector.broadcast %943 : f32 to vector<8x6x128xf32>
    %946 = arith.mulf %945, %944 : vector<8x6x128xf32>
    %947 = arith.addf %942, %946 : vector<8x6x128xf32>
    %c14_216 = arith.constant 14 : index
    %948 = memref.load %arg2[%c14_216] : memref<27xf32, #tpu.memory_space<smem>>
    %949 = vector.extract_strided_slice %937 {offsets = [0, 2, 0], sizes = [8, 6, 128], strides = [1, 1, 1]} : vector<8x8x128xf32> to vector<8x6x128xf32>
    %950 = vector.broadcast %948 : f32 to vector<8x6x128xf32>
    %951 = arith.mulf %950, %949 : vector<8x6x128xf32>
    %952 = arith.addf %947, %951 : vector<8x6x128xf32>
    %953 = vector.extract_strided_slice %920 {offsets = [2, 0, 0], sizes = [8, 8, 128], strides = [1, 1, 1]} : vector<10x8x128xf32> to vector<8x8x128xf32>
    %c15_217 = arith.constant 15 : index
    %954 = memref.load %arg2[%c15_217] : memref<27xf32, #tpu.memory_space<smem>>
    %955 = vector.extract_strided_slice %953 {offsets = [0, 0, 0], sizes = [8, 6, 128], strides = [1, 1, 1]} : vector<8x8x128xf32> to vector<8x6x128xf32>
    %956 = vector.broadcast %954 : f32 to vector<8x6x128xf32>
    %957 = arith.mulf %956, %955 : vector<8x6x128xf32>
    %958 = arith.addf %952, %957 : vector<8x6x128xf32>
    %c16_218 = arith.constant 16 : index
    %959 = memref.load %arg2[%c16_218] : memref<27xf32, #tpu.memory_space<smem>>
    %960 = vector.extract_strided_slice %953 {offsets = [0, 1, 0], sizes = [8, 6, 128], strides = [1, 1, 1]} : vector<8x8x128xf32> to vector<8x6x128xf32>
    %961 = vector.broadcast %959 : f32 to vector<8x6x128xf32>
    %962 = arith.mulf %961, %960 : vector<8x6x128xf32>
    %963 = arith.addf %958, %962 : vector<8x6x128xf32>
    %c17_219 = arith.constant 17 : index
    %964 = memref.load %arg2[%c17_219] : memref<27xf32, #tpu.memory_space<smem>>
    %965 = vector.extract_strided_slice %953 {offsets = [0, 2, 0], sizes = [8, 6, 128], strides = [1, 1, 1]} : vector<8x8x128xf32> to vector<8x6x128xf32>
    %966 = vector.broadcast %964 : f32 to vector<8x6x128xf32>
    %967 = arith.mulf %966, %965 : vector<8x6x128xf32>
    %968 = arith.addf %963, %967 : vector<8x6x128xf32>
    %c7_220 = arith.constant 7 : index
    %c0_221 = arith.constant 0 : index
    %c0_222 = arith.constant 0 : index
    %c0_223 = arith.constant 0 : index
    %969 = vector.load %arg1[%c7_220, %c0_221, %c0_222, %c0_223] : memref<10x10x8x128xf32, #tpu.memory_space<vmem>>, vector<1x10x8x128xf32>
    %970 = vector.shape_cast %969 : vector<1x10x8x128xf32> to vector<10x8x128xf32>
    %971 = vector.extract_strided_slice %970 {offsets = [0, 0, 0], sizes = [8, 8, 128], strides = [1, 1, 1]} : vector<10x8x128xf32> to vector<8x8x128xf32>
    %c18_224 = arith.constant 18 : index
    %972 = memref.load %arg2[%c18_224] : memref<27xf32, #tpu.memory_space<smem>>
    %973 = vector.extract_strided_slice %971 {offsets = [0, 0, 0], sizes = [8, 6, 128], strides = [1, 1, 1]} : vector<8x8x128xf32> to vector<8x6x128xf32>
    %974 = vector.broadcast %972 : f32 to vector<8x6x128xf32>
    %975 = arith.mulf %974, %973 : vector<8x6x128xf32>
    %976 = arith.addf %968, %975 : vector<8x6x128xf32>
    %c19_225 = arith.constant 19 : index
    %977 = memref.load %arg2[%c19_225] : memref<27xf32, #tpu.memory_space<smem>>
    %978 = vector.extract_strided_slice %971 {offsets = [0, 1, 0], sizes = [8, 6, 128], strides = [1, 1, 1]} : vector<8x8x128xf32> to vector<8x6x128xf32>
    %979 = vector.broadcast %977 : f32 to vector<8x6x128xf32>
    %980 = arith.mulf %979, %978 : vector<8x6x128xf32>
    %981 = arith.addf %976, %980 : vector<8x6x128xf32>
    %c20_226 = arith.constant 20 : index
    %982 = memref.load %arg2[%c20_226] : memref<27xf32, #tpu.memory_space<smem>>
    %983 = vector.extract_strided_slice %971 {offsets = [0, 2, 0], sizes = [8, 6, 128], strides = [1, 1, 1]} : vector<8x8x128xf32> to vector<8x6x128xf32>
    %984 = vector.broadcast %982 : f32 to vector<8x6x128xf32>
    %985 = arith.mulf %984, %983 : vector<8x6x128xf32>
    %986 = arith.addf %981, %985 : vector<8x6x128xf32>
    %987 = vector.extract_strided_slice %970 {offsets = [1, 0, 0], sizes = [8, 8, 128], strides = [1, 1, 1]} : vector<10x8x128xf32> to vector<8x8x128xf32>
    %c21_227 = arith.constant 21 : index
    %988 = memref.load %arg2[%c21_227] : memref<27xf32, #tpu.memory_space<smem>>
    %989 = vector.extract_strided_slice %987 {offsets = [0, 0, 0], sizes = [8, 6, 128], strides = [1, 1, 1]} : vector<8x8x128xf32> to vector<8x6x128xf32>
    %990 = vector.broadcast %988 : f32 to vector<8x6x128xf32>
    %991 = arith.mulf %990, %989 : vector<8x6x128xf32>
    %992 = arith.addf %986, %991 : vector<8x6x128xf32>
    %c22_228 = arith.constant 22 : index
    %993 = memref.load %arg2[%c22_228] : memref<27xf32, #tpu.memory_space<smem>>
    %994 = vector.extract_strided_slice %987 {offsets = [0, 1, 0], sizes = [8, 6, 128], strides = [1, 1, 1]} : vector<8x8x128xf32> to vector<8x6x128xf32>
    %995 = vector.broadcast %993 : f32 to vector<8x6x128xf32>
    %996 = arith.mulf %995, %994 : vector<8x6x128xf32>
    %997 = arith.addf %992, %996 : vector<8x6x128xf32>
    %c23_229 = arith.constant 23 : index
    %998 = memref.load %arg2[%c23_229] : memref<27xf32, #tpu.memory_space<smem>>
    %999 = vector.extract_strided_slice %987 {offsets = [0, 2, 0], sizes = [8, 6, 128], strides = [1, 1, 1]} : vector<8x8x128xf32> to vector<8x6x128xf32>
    %1000 = vector.broadcast %998 : f32 to vector<8x6x128xf32>
    %1001 = arith.mulf %1000, %999 : vector<8x6x128xf32>
    %1002 = arith.addf %997, %1001 : vector<8x6x128xf32>
    %1003 = vector.extract_strided_slice %970 {offsets = [2, 0, 0], sizes = [8, 8, 128], strides = [1, 1, 1]} : vector<10x8x128xf32> to vector<8x8x128xf32>
    %c24_230 = arith.constant 24 : index
    %1004 = memref.load %arg2[%c24_230] : memref<27xf32, #tpu.memory_space<smem>>
    %1005 = vector.extract_strided_slice %1003 {offsets = [0, 0, 0], sizes = [8, 6, 128], strides = [1, 1, 1]} : vector<8x8x128xf32> to vector<8x6x128xf32>
    %1006 = vector.broadcast %1004 : f32 to vector<8x6x128xf32>
    %1007 = arith.mulf %1006, %1005 : vector<8x6x128xf32>
    %1008 = arith.addf %1002, %1007 : vector<8x6x128xf32>
    %c25_231 = arith.constant 25 : index
    %1009 = memref.load %arg2[%c25_231] : memref<27xf32, #tpu.memory_space<smem>>
    %1010 = vector.extract_strided_slice %1003 {offsets = [0, 1, 0], sizes = [8, 6, 128], strides = [1, 1, 1]} : vector<8x8x128xf32> to vector<8x6x128xf32>
    %1011 = vector.broadcast %1009 : f32 to vector<8x6x128xf32>
    %1012 = arith.mulf %1011, %1010 : vector<8x6x128xf32>
    %1013 = arith.addf %1008, %1012 : vector<8x6x128xf32>
    %c26_232 = arith.constant 26 : index
    %1014 = memref.load %arg2[%c26_232] : memref<27xf32, #tpu.memory_space<smem>>
    %1015 = vector.extract_strided_slice %1003 {offsets = [0, 2, 0], sizes = [8, 6, 128], strides = [1, 1, 1]} : vector<8x8x128xf32> to vector<8x6x128xf32>
    %1016 = vector.broadcast %1014 : f32 to vector<8x6x128xf32>
    %1017 = arith.mulf %1016, %1015 : vector<8x6x128xf32>
    %1018 = arith.addf %1013, %1017 : vector<8x6x128xf32>
    %1019 = arith.maximumf %869, %1018 : vector<8x6x128xf32>
    %1020 = vector.extract_strided_slice %1019 {offsets = [0, 0, 0], sizes = [1, 6, 128], strides = [1, 1, 1]} : vector<8x6x128xf32> to vector<1x6x128xf32>
    %1021 = vector.shape_cast %1020 : vector<1x6x128xf32> to vector<6x128xf32>
    %1022 = vector.extract_strided_slice %1019 {offsets = [1, 0, 0], sizes = [1, 6, 128], strides = [1, 1, 1]} : vector<8x6x128xf32> to vector<1x6x128xf32>
    %1023 = vector.shape_cast %1022 : vector<1x6x128xf32> to vector<6x128xf32>
    %1024 = arith.maximumf %1021, %1023 : vector<6x128xf32>
    %1025 = vector.extract_strided_slice %1024 {offsets = [0, 0], sizes = [5, 128], strides = [1, 1]} : vector<6x128xf32> to vector<5x128xf32>
    %1026 = vector.extract_strided_slice %1024 {offsets = [1, 0], sizes = [5, 128], strides = [1, 1]} : vector<6x128xf32> to vector<5x128xf32>
    %1027 = arith.maximumf %1025, %1026 : vector<5x128xf32>
    %1028 = vector.broadcast %0 : f32 to vector<5x128xf32>
    %1029 = arith.addf %1027, %1028 : vector<5x128xf32>
    %1030 = math.tanh %1029 : vector<5x128xf32>
    %c8_233 = arith.constant 8 : index
    %c0_234 = arith.constant 0 : index
    %c0_235 = arith.constant 0 : index
    %1031 = vector.load %arg4[%c8_233, %c0_234, %c0_235] : memref<16x5x128xf32, #tpu.memory_space<vmem>>, vector<1x5x128xf32>
    %1032 = vector.shape_cast %1031 : vector<1x5x128xf32> to vector<5x128xf32>
    %1033 = arith.mulf %1032, %1030 : vector<5x128xf32>
    %1034 = arith.addf %720, %1033 : vector<5x128xf32>
    %1035 = vector.extract_strided_slice %1019 {offsets = [2, 0, 0], sizes = [1, 6, 128], strides = [1, 1, 1]} : vector<8x6x128xf32> to vector<1x6x128xf32>
    %1036 = vector.shape_cast %1035 : vector<1x6x128xf32> to vector<6x128xf32>
    %1037 = vector.extract_strided_slice %1019 {offsets = [3, 0, 0], sizes = [1, 6, 128], strides = [1, 1, 1]} : vector<8x6x128xf32> to vector<1x6x128xf32>
    %1038 = vector.shape_cast %1037 : vector<1x6x128xf32> to vector<6x128xf32>
    %1039 = arith.maximumf %1036, %1038 : vector<6x128xf32>
    %1040 = vector.extract_strided_slice %1039 {offsets = [0, 0], sizes = [5, 128], strides = [1, 1]} : vector<6x128xf32> to vector<5x128xf32>
    %1041 = vector.extract_strided_slice %1039 {offsets = [1, 0], sizes = [5, 128], strides = [1, 1]} : vector<6x128xf32> to vector<5x128xf32>
    %1042 = arith.maximumf %1040, %1041 : vector<5x128xf32>
    %1043 = vector.broadcast %0 : f32 to vector<5x128xf32>
    %1044 = arith.addf %1042, %1043 : vector<5x128xf32>
    %1045 = math.tanh %1044 : vector<5x128xf32>
    %c9_236 = arith.constant 9 : index
    %c0_237 = arith.constant 0 : index
    %c0_238 = arith.constant 0 : index
    %1046 = vector.load %arg4[%c9_236, %c0_237, %c0_238] : memref<16x5x128xf32, #tpu.memory_space<vmem>>, vector<1x5x128xf32>
    %1047 = vector.shape_cast %1046 : vector<1x5x128xf32> to vector<5x128xf32>
    %1048 = arith.mulf %1047, %1045 : vector<5x128xf32>
    %1049 = arith.addf %1034, %1048 : vector<5x128xf32>
    %1050 = vector.extract_strided_slice %1019 {offsets = [4, 0, 0], sizes = [1, 6, 128], strides = [1, 1, 1]} : vector<8x6x128xf32> to vector<1x6x128xf32>
    %1051 = vector.shape_cast %1050 : vector<1x6x128xf32> to vector<6x128xf32>
    %1052 = vector.extract_strided_slice %1019 {offsets = [5, 0, 0], sizes = [1, 6, 128], strides = [1, 1, 1]} : vector<8x6x128xf32> to vector<1x6x128xf32>
    %1053 = vector.shape_cast %1052 : vector<1x6x128xf32> to vector<6x128xf32>
    %1054 = arith.maximumf %1051, %1053 : vector<6x128xf32>
    %1055 = vector.extract_strided_slice %1054 {offsets = [0, 0], sizes = [5, 128], strides = [1, 1]} : vector<6x128xf32> to vector<5x128xf32>
    %1056 = vector.extract_strided_slice %1054 {offsets = [1, 0], sizes = [5, 128], strides = [1, 1]} : vector<6x128xf32> to vector<5x128xf32>
    %1057 = arith.maximumf %1055, %1056 : vector<5x128xf32>
    %1058 = vector.broadcast %0 : f32 to vector<5x128xf32>
    %1059 = arith.addf %1057, %1058 : vector<5x128xf32>
    %1060 = math.tanh %1059 : vector<5x128xf32>
    %c10_239 = arith.constant 10 : index
    %c0_240 = arith.constant 0 : index
    %c0_241 = arith.constant 0 : index
    %1061 = vector.load %arg4[%c10_239, %c0_240, %c0_241] : memref<16x5x128xf32, #tpu.memory_space<vmem>>, vector<1x5x128xf32>
    %1062 = vector.shape_cast %1061 : vector<1x5x128xf32> to vector<5x128xf32>
    %1063 = arith.mulf %1062, %1060 : vector<5x128xf32>
    %1064 = arith.addf %1049, %1063 : vector<5x128xf32>
    %1065 = vector.extract_strided_slice %1019 {offsets = [6, 0, 0], sizes = [1, 6, 128], strides = [1, 1, 1]} : vector<8x6x128xf32> to vector<1x6x128xf32>
    %1066 = vector.shape_cast %1065 : vector<1x6x128xf32> to vector<6x128xf32>
    %1067 = vector.extract_strided_slice %1019 {offsets = [7, 0, 0], sizes = [1, 6, 128], strides = [1, 1, 1]} : vector<8x6x128xf32> to vector<1x6x128xf32>
    %1068 = vector.shape_cast %1067 : vector<1x6x128xf32> to vector<6x128xf32>
    %1069 = arith.maximumf %1066, %1068 : vector<6x128xf32>
    %1070 = vector.extract_strided_slice %1069 {offsets = [0, 0], sizes = [5, 128], strides = [1, 1]} : vector<6x128xf32> to vector<5x128xf32>
    %1071 = vector.extract_strided_slice %1069 {offsets = [1, 0], sizes = [5, 128], strides = [1, 1]} : vector<6x128xf32> to vector<5x128xf32>
    %1072 = arith.maximumf %1070, %1071 : vector<5x128xf32>
    %1073 = vector.broadcast %0 : f32 to vector<5x128xf32>
    %1074 = arith.addf %1072, %1073 : vector<5x128xf32>
    %1075 = math.tanh %1074 : vector<5x128xf32>
    %c11_242 = arith.constant 11 : index
    %c0_243 = arith.constant 0 : index
    %c0_244 = arith.constant 0 : index
    %1076 = vector.load %arg4[%c11_242, %c0_243, %c0_244] : memref<16x5x128xf32, #tpu.memory_space<vmem>>, vector<1x5x128xf32>
    %1077 = vector.shape_cast %1076 : vector<1x5x128xf32> to vector<5x128xf32>
    %1078 = arith.mulf %1077, %1075 : vector<5x128xf32>
    %1079 = arith.addf %1064, %1078 : vector<5x128xf32>
    %c6_245 = arith.constant 6 : index
    %c0_246 = arith.constant 0 : index
    %c0_247 = arith.constant 0 : index
    %c0_248 = arith.constant 0 : index
    %1080 = vector.load %arg1[%c6_245, %c0_246, %c0_247, %c0_248] : memref<10x10x8x128xf32, #tpu.memory_space<vmem>>, vector<1x10x8x128xf32>
    %1081 = vector.shape_cast %1080 : vector<1x10x8x128xf32> to vector<10x8x128xf32>
    %1082 = vector.extract_strided_slice %1081 {offsets = [0, 0, 0], sizes = [8, 8, 128], strides = [1, 1, 1]} : vector<10x8x128xf32> to vector<8x8x128xf32>
    %c0_249 = arith.constant 0 : index
    %1083 = memref.load %arg2[%c0_249] : memref<27xf32, #tpu.memory_space<smem>>
    %1084 = vector.extract_strided_slice %1082 {offsets = [0, 0, 0], sizes = [8, 6, 128], strides = [1, 1, 1]} : vector<8x8x128xf32> to vector<8x6x128xf32>
    %1085 = vector.broadcast %1083 : f32 to vector<8x6x128xf32>
    %1086 = arith.mulf %1085, %1084 : vector<8x6x128xf32>
    %c1_250 = arith.constant 1 : index
    %1087 = memref.load %arg2[%c1_250] : memref<27xf32, #tpu.memory_space<smem>>
    %1088 = vector.extract_strided_slice %1082 {offsets = [0, 1, 0], sizes = [8, 6, 128], strides = [1, 1, 1]} : vector<8x8x128xf32> to vector<8x6x128xf32>
    %1089 = vector.broadcast %1087 : f32 to vector<8x6x128xf32>
    %1090 = arith.mulf %1089, %1088 : vector<8x6x128xf32>
    %1091 = arith.addf %1086, %1090 : vector<8x6x128xf32>
    %c2_251 = arith.constant 2 : index
    %1092 = memref.load %arg2[%c2_251] : memref<27xf32, #tpu.memory_space<smem>>
    %1093 = vector.extract_strided_slice %1082 {offsets = [0, 2, 0], sizes = [8, 6, 128], strides = [1, 1, 1]} : vector<8x8x128xf32> to vector<8x6x128xf32>
    %1094 = vector.broadcast %1092 : f32 to vector<8x6x128xf32>
    %1095 = arith.mulf %1094, %1093 : vector<8x6x128xf32>
    %1096 = arith.addf %1091, %1095 : vector<8x6x128xf32>
    %1097 = vector.extract_strided_slice %1081 {offsets = [1, 0, 0], sizes = [8, 8, 128], strides = [1, 1, 1]} : vector<10x8x128xf32> to vector<8x8x128xf32>
    %c3_252 = arith.constant 3 : index
    %1098 = memref.load %arg2[%c3_252] : memref<27xf32, #tpu.memory_space<smem>>
    %1099 = vector.extract_strided_slice %1097 {offsets = [0, 0, 0], sizes = [8, 6, 128], strides = [1, 1, 1]} : vector<8x8x128xf32> to vector<8x6x128xf32>
    %1100 = vector.broadcast %1098 : f32 to vector<8x6x128xf32>
    %1101 = arith.mulf %1100, %1099 : vector<8x6x128xf32>
    %1102 = arith.addf %1096, %1101 : vector<8x6x128xf32>
    %c4_253 = arith.constant 4 : index
    %1103 = memref.load %arg2[%c4_253] : memref<27xf32, #tpu.memory_space<smem>>
    %1104 = vector.extract_strided_slice %1097 {offsets = [0, 1, 0], sizes = [8, 6, 128], strides = [1, 1, 1]} : vector<8x8x128xf32> to vector<8x6x128xf32>
    %1105 = vector.broadcast %1103 : f32 to vector<8x6x128xf32>
    %1106 = arith.mulf %1105, %1104 : vector<8x6x128xf32>
    %1107 = arith.addf %1102, %1106 : vector<8x6x128xf32>
    %c5_254 = arith.constant 5 : index
    %1108 = memref.load %arg2[%c5_254] : memref<27xf32, #tpu.memory_space<smem>>
    %1109 = vector.extract_strided_slice %1097 {offsets = [0, 2, 0], sizes = [8, 6, 128], strides = [1, 1, 1]} : vector<8x8x128xf32> to vector<8x6x128xf32>
    %1110 = vector.broadcast %1108 : f32 to vector<8x6x128xf32>
    %1111 = arith.mulf %1110, %1109 : vector<8x6x128xf32>
    %1112 = arith.addf %1107, %1111 : vector<8x6x128xf32>
    %1113 = vector.extract_strided_slice %1081 {offsets = [2, 0, 0], sizes = [8, 8, 128], strides = [1, 1, 1]} : vector<10x8x128xf32> to vector<8x8x128xf32>
    %c6_255 = arith.constant 6 : index
    %1114 = memref.load %arg2[%c6_255] : memref<27xf32, #tpu.memory_space<smem>>
    %1115 = vector.extract_strided_slice %1113 {offsets = [0, 0, 0], sizes = [8, 6, 128], strides = [1, 1, 1]} : vector<8x8x128xf32> to vector<8x6x128xf32>
    %1116 = vector.broadcast %1114 : f32 to vector<8x6x128xf32>
    %1117 = arith.mulf %1116, %1115 : vector<8x6x128xf32>
    %1118 = arith.addf %1112, %1117 : vector<8x6x128xf32>
    %c7_256 = arith.constant 7 : index
    %1119 = memref.load %arg2[%c7_256] : memref<27xf32, #tpu.memory_space<smem>>
    %1120 = vector.extract_strided_slice %1113 {offsets = [0, 1, 0], sizes = [8, 6, 128], strides = [1, 1, 1]} : vector<8x8x128xf32> to vector<8x6x128xf32>
    %1121 = vector.broadcast %1119 : f32 to vector<8x6x128xf32>
    %1122 = arith.mulf %1121, %1120 : vector<8x6x128xf32>
    %1123 = arith.addf %1118, %1122 : vector<8x6x128xf32>
    %c8_257 = arith.constant 8 : index
    %1124 = memref.load %arg2[%c8_257] : memref<27xf32, #tpu.memory_space<smem>>
    %1125 = vector.extract_strided_slice %1113 {offsets = [0, 2, 0], sizes = [8, 6, 128], strides = [1, 1, 1]} : vector<8x8x128xf32> to vector<8x6x128xf32>
    %1126 = vector.broadcast %1124 : f32 to vector<8x6x128xf32>
    %1127 = arith.mulf %1126, %1125 : vector<8x6x128xf32>
    %1128 = arith.addf %1123, %1127 : vector<8x6x128xf32>
    %c7_258 = arith.constant 7 : index
    %c0_259 = arith.constant 0 : index
    %c0_260 = arith.constant 0 : index
    %c0_261 = arith.constant 0 : index
    %1129 = vector.load %arg1[%c7_258, %c0_259, %c0_260, %c0_261] : memref<10x10x8x128xf32, #tpu.memory_space<vmem>>, vector<1x10x8x128xf32>
    %1130 = vector.shape_cast %1129 : vector<1x10x8x128xf32> to vector<10x8x128xf32>
    %1131 = vector.extract_strided_slice %1130 {offsets = [0, 0, 0], sizes = [8, 8, 128], strides = [1, 1, 1]} : vector<10x8x128xf32> to vector<8x8x128xf32>
    %c9_262 = arith.constant 9 : index
    %1132 = memref.load %arg2[%c9_262] : memref<27xf32, #tpu.memory_space<smem>>
    %1133 = vector.extract_strided_slice %1131 {offsets = [0, 0, 0], sizes = [8, 6, 128], strides = [1, 1, 1]} : vector<8x8x128xf32> to vector<8x6x128xf32>
    %1134 = vector.broadcast %1132 : f32 to vector<8x6x128xf32>
    %1135 = arith.mulf %1134, %1133 : vector<8x6x128xf32>
    %1136 = arith.addf %1128, %1135 : vector<8x6x128xf32>
    %c10_263 = arith.constant 10 : index
    %1137 = memref.load %arg2[%c10_263] : memref<27xf32, #tpu.memory_space<smem>>
    %1138 = vector.extract_strided_slice %1131 {offsets = [0, 1, 0], sizes = [8, 6, 128], strides = [1, 1, 1]} : vector<8x8x128xf32> to vector<8x6x128xf32>
    %1139 = vector.broadcast %1137 : f32 to vector<8x6x128xf32>
    %1140 = arith.mulf %1139, %1138 : vector<8x6x128xf32>
    %1141 = arith.addf %1136, %1140 : vector<8x6x128xf32>
    %c11_264 = arith.constant 11 : index
    %1142 = memref.load %arg2[%c11_264] : memref<27xf32, #tpu.memory_space<smem>>
    %1143 = vector.extract_strided_slice %1131 {offsets = [0, 2, 0], sizes = [8, 6, 128], strides = [1, 1, 1]} : vector<8x8x128xf32> to vector<8x6x128xf32>
    %1144 = vector.broadcast %1142 : f32 to vector<8x6x128xf32>
    %1145 = arith.mulf %1144, %1143 : vector<8x6x128xf32>
    %1146 = arith.addf %1141, %1145 : vector<8x6x128xf32>
    %1147 = vector.extract_strided_slice %1130 {offsets = [1, 0, 0], sizes = [8, 8, 128], strides = [1, 1, 1]} : vector<10x8x128xf32> to vector<8x8x128xf32>
    %c12_265 = arith.constant 12 : index
    %1148 = memref.load %arg2[%c12_265] : memref<27xf32, #tpu.memory_space<smem>>
    %1149 = vector.extract_strided_slice %1147 {offsets = [0, 0, 0], sizes = [8, 6, 128], strides = [1, 1, 1]} : vector<8x8x128xf32> to vector<8x6x128xf32>
    %1150 = vector.broadcast %1148 : f32 to vector<8x6x128xf32>
    %1151 = arith.mulf %1150, %1149 : vector<8x6x128xf32>
    %1152 = arith.addf %1146, %1151 : vector<8x6x128xf32>
    %c13_266 = arith.constant 13 : index
    %1153 = memref.load %arg2[%c13_266] : memref<27xf32, #tpu.memory_space<smem>>
    %1154 = vector.extract_strided_slice %1147 {offsets = [0, 1, 0], sizes = [8, 6, 128], strides = [1, 1, 1]} : vector<8x8x128xf32> to vector<8x6x128xf32>
    %1155 = vector.broadcast %1153 : f32 to vector<8x6x128xf32>
    %1156 = arith.mulf %1155, %1154 : vector<8x6x128xf32>
    %1157 = arith.addf %1152, %1156 : vector<8x6x128xf32>
    %c14_267 = arith.constant 14 : index
    %1158 = memref.load %arg2[%c14_267] : memref<27xf32, #tpu.memory_space<smem>>
    %1159 = vector.extract_strided_slice %1147 {offsets = [0, 2, 0], sizes = [8, 6, 128], strides = [1, 1, 1]} : vector<8x8x128xf32> to vector<8x6x128xf32>
    %1160 = vector.broadcast %1158 : f32 to vector<8x6x128xf32>
    %1161 = arith.mulf %1160, %1159 : vector<8x6x128xf32>
    %1162 = arith.addf %1157, %1161 : vector<8x6x128xf32>
    %1163 = vector.extract_strided_slice %1130 {offsets = [2, 0, 0], sizes = [8, 8, 128], strides = [1, 1, 1]} : vector<10x8x128xf32> to vector<8x8x128xf32>
    %c15_268 = arith.constant 15 : index
    %1164 = memref.load %arg2[%c15_268] : memref<27xf32, #tpu.memory_space<smem>>
    %1165 = vector.extract_strided_slice %1163 {offsets = [0, 0, 0], sizes = [8, 6, 128], strides = [1, 1, 1]} : vector<8x8x128xf32> to vector<8x6x128xf32>
    %1166 = vector.broadcast %1164 : f32 to vector<8x6x128xf32>
    %1167 = arith.mulf %1166, %1165 : vector<8x6x128xf32>
    %1168 = arith.addf %1162, %1167 : vector<8x6x128xf32>
    %c16_269 = arith.constant 16 : index
    %1169 = memref.load %arg2[%c16_269] : memref<27xf32, #tpu.memory_space<smem>>
    %1170 = vector.extract_strided_slice %1163 {offsets = [0, 1, 0], sizes = [8, 6, 128], strides = [1, 1, 1]} : vector<8x8x128xf32> to vector<8x6x128xf32>
    %1171 = vector.broadcast %1169 : f32 to vector<8x6x128xf32>
    %1172 = arith.mulf %1171, %1170 : vector<8x6x128xf32>
    %1173 = arith.addf %1168, %1172 : vector<8x6x128xf32>
    %c17_270 = arith.constant 17 : index
    %1174 = memref.load %arg2[%c17_270] : memref<27xf32, #tpu.memory_space<smem>>
    %1175 = vector.extract_strided_slice %1163 {offsets = [0, 2, 0], sizes = [8, 6, 128], strides = [1, 1, 1]} : vector<8x8x128xf32> to vector<8x6x128xf32>
    %1176 = vector.broadcast %1174 : f32 to vector<8x6x128xf32>
    %1177 = arith.mulf %1176, %1175 : vector<8x6x128xf32>
    %1178 = arith.addf %1173, %1177 : vector<8x6x128xf32>
    %c8_271 = arith.constant 8 : index
    %c0_272 = arith.constant 0 : index
    %c0_273 = arith.constant 0 : index
    %c0_274 = arith.constant 0 : index
    %1179 = vector.load %arg1[%c8_271, %c0_272, %c0_273, %c0_274] : memref<10x10x8x128xf32, #tpu.memory_space<vmem>>, vector<1x10x8x128xf32>
    %1180 = vector.shape_cast %1179 : vector<1x10x8x128xf32> to vector<10x8x128xf32>
    %1181 = vector.extract_strided_slice %1180 {offsets = [0, 0, 0], sizes = [8, 8, 128], strides = [1, 1, 1]} : vector<10x8x128xf32> to vector<8x8x128xf32>
    %c18_275 = arith.constant 18 : index
    %1182 = memref.load %arg2[%c18_275] : memref<27xf32, #tpu.memory_space<smem>>
    %1183 = vector.extract_strided_slice %1181 {offsets = [0, 0, 0], sizes = [8, 6, 128], strides = [1, 1, 1]} : vector<8x8x128xf32> to vector<8x6x128xf32>
    %1184 = vector.broadcast %1182 : f32 to vector<8x6x128xf32>
    %1185 = arith.mulf %1184, %1183 : vector<8x6x128xf32>
    %1186 = arith.addf %1178, %1185 : vector<8x6x128xf32>
    %c19_276 = arith.constant 19 : index
    %1187 = memref.load %arg2[%c19_276] : memref<27xf32, #tpu.memory_space<smem>>
    %1188 = vector.extract_strided_slice %1181 {offsets = [0, 1, 0], sizes = [8, 6, 128], strides = [1, 1, 1]} : vector<8x8x128xf32> to vector<8x6x128xf32>
    %1189 = vector.broadcast %1187 : f32 to vector<8x6x128xf32>
    %1190 = arith.mulf %1189, %1188 : vector<8x6x128xf32>
    %1191 = arith.addf %1186, %1190 : vector<8x6x128xf32>
    %c20_277 = arith.constant 20 : index
    %1192 = memref.load %arg2[%c20_277] : memref<27xf32, #tpu.memory_space<smem>>
    %1193 = vector.extract_strided_slice %1181 {offsets = [0, 2, 0], sizes = [8, 6, 128], strides = [1, 1, 1]} : vector<8x8x128xf32> to vector<8x6x128xf32>
    %1194 = vector.broadcast %1192 : f32 to vector<8x6x128xf32>
    %1195 = arith.mulf %1194, %1193 : vector<8x6x128xf32>
    %1196 = arith.addf %1191, %1195 : vector<8x6x128xf32>
    %1197 = vector.extract_strided_slice %1180 {offsets = [1, 0, 0], sizes = [8, 8, 128], strides = [1, 1, 1]} : vector<10x8x128xf32> to vector<8x8x128xf32>
    %c21_278 = arith.constant 21 : index
    %1198 = memref.load %arg2[%c21_278] : memref<27xf32, #tpu.memory_space<smem>>
    %1199 = vector.extract_strided_slice %1197 {offsets = [0, 0, 0], sizes = [8, 6, 128], strides = [1, 1, 1]} : vector<8x8x128xf32> to vector<8x6x128xf32>
    %1200 = vector.broadcast %1198 : f32 to vector<8x6x128xf32>
    %1201 = arith.mulf %1200, %1199 : vector<8x6x128xf32>
    %1202 = arith.addf %1196, %1201 : vector<8x6x128xf32>
    %c22_279 = arith.constant 22 : index
    %1203 = memref.load %arg2[%c22_279] : memref<27xf32, #tpu.memory_space<smem>>
    %1204 = vector.extract_strided_slice %1197 {offsets = [0, 1, 0], sizes = [8, 6, 128], strides = [1, 1, 1]} : vector<8x8x128xf32> to vector<8x6x128xf32>
    %1205 = vector.broadcast %1203 : f32 to vector<8x6x128xf32>
    %1206 = arith.mulf %1205, %1204 : vector<8x6x128xf32>
    %1207 = arith.addf %1202, %1206 : vector<8x6x128xf32>
    %c23_280 = arith.constant 23 : index
    %1208 = memref.load %arg2[%c23_280] : memref<27xf32, #tpu.memory_space<smem>>
    %1209 = vector.extract_strided_slice %1197 {offsets = [0, 2, 0], sizes = [8, 6, 128], strides = [1, 1, 1]} : vector<8x8x128xf32> to vector<8x6x128xf32>
    %1210 = vector.broadcast %1208 : f32 to vector<8x6x128xf32>
    %1211 = arith.mulf %1210, %1209 : vector<8x6x128xf32>
    %1212 = arith.addf %1207, %1211 : vector<8x6x128xf32>
    %1213 = vector.extract_strided_slice %1180 {offsets = [2, 0, 0], sizes = [8, 8, 128], strides = [1, 1, 1]} : vector<10x8x128xf32> to vector<8x8x128xf32>
    %c24_281 = arith.constant 24 : index
    %1214 = memref.load %arg2[%c24_281] : memref<27xf32, #tpu.memory_space<smem>>
    %1215 = vector.extract_strided_slice %1213 {offsets = [0, 0, 0], sizes = [8, 6, 128], strides = [1, 1, 1]} : vector<8x8x128xf32> to vector<8x6x128xf32>
    %1216 = vector.broadcast %1214 : f32 to vector<8x6x128xf32>
    %1217 = arith.mulf %1216, %1215 : vector<8x6x128xf32>
    %1218 = arith.addf %1212, %1217 : vector<8x6x128xf32>
    %c25_282 = arith.constant 25 : index
    %1219 = memref.load %arg2[%c25_282] : memref<27xf32, #tpu.memory_space<smem>>
    %1220 = vector.extract_strided_slice %1213 {offsets = [0, 1, 0], sizes = [8, 6, 128], strides = [1, 1, 1]} : vector<8x8x128xf32> to vector<8x6x128xf32>
    %1221 = vector.broadcast %1219 : f32 to vector<8x6x128xf32>
    %1222 = arith.mulf %1221, %1220 : vector<8x6x128xf32>
    %1223 = arith.addf %1218, %1222 : vector<8x6x128xf32>
    %c26_283 = arith.constant 26 : index
    %1224 = memref.load %arg2[%c26_283] : memref<27xf32, #tpu.memory_space<smem>>
    %1225 = vector.extract_strided_slice %1213 {offsets = [0, 2, 0], sizes = [8, 6, 128], strides = [1, 1, 1]} : vector<8x8x128xf32> to vector<8x6x128xf32>
    %1226 = vector.broadcast %1224 : f32 to vector<8x6x128xf32>
    %1227 = arith.mulf %1226, %1225 : vector<8x6x128xf32>
    %1228 = arith.addf %1223, %1227 : vector<8x6x128xf32>
    %c7_284 = arith.constant 7 : index
    %c0_285 = arith.constant 0 : index
    %c0_286 = arith.constant 0 : index
    %c0_287 = arith.constant 0 : index
    %1229 = vector.load %arg1[%c7_284, %c0_285, %c0_286, %c0_287] : memref<10x10x8x128xf32, #tpu.memory_space<vmem>>, vector<1x10x8x128xf32>
    %1230 = vector.shape_cast %1229 : vector<1x10x8x128xf32> to vector<10x8x128xf32>
    %1231 = vector.extract_strided_slice %1230 {offsets = [0, 0, 0], sizes = [8, 8, 128], strides = [1, 1, 1]} : vector<10x8x128xf32> to vector<8x8x128xf32>
    %c0_288 = arith.constant 0 : index
    %1232 = memref.load %arg2[%c0_288] : memref<27xf32, #tpu.memory_space<smem>>
    %1233 = vector.extract_strided_slice %1231 {offsets = [0, 0, 0], sizes = [8, 6, 128], strides = [1, 1, 1]} : vector<8x8x128xf32> to vector<8x6x128xf32>
    %1234 = vector.broadcast %1232 : f32 to vector<8x6x128xf32>
    %1235 = arith.mulf %1234, %1233 : vector<8x6x128xf32>
    %c1_289 = arith.constant 1 : index
    %1236 = memref.load %arg2[%c1_289] : memref<27xf32, #tpu.memory_space<smem>>
    %1237 = vector.extract_strided_slice %1231 {offsets = [0, 1, 0], sizes = [8, 6, 128], strides = [1, 1, 1]} : vector<8x8x128xf32> to vector<8x6x128xf32>
    %1238 = vector.broadcast %1236 : f32 to vector<8x6x128xf32>
    %1239 = arith.mulf %1238, %1237 : vector<8x6x128xf32>
    %1240 = arith.addf %1235, %1239 : vector<8x6x128xf32>
    %c2_290 = arith.constant 2 : index
    %1241 = memref.load %arg2[%c2_290] : memref<27xf32, #tpu.memory_space<smem>>
    %1242 = vector.extract_strided_slice %1231 {offsets = [0, 2, 0], sizes = [8, 6, 128], strides = [1, 1, 1]} : vector<8x8x128xf32> to vector<8x6x128xf32>
    %1243 = vector.broadcast %1241 : f32 to vector<8x6x128xf32>
    %1244 = arith.mulf %1243, %1242 : vector<8x6x128xf32>
    %1245 = arith.addf %1240, %1244 : vector<8x6x128xf32>
    %1246 = vector.extract_strided_slice %1230 {offsets = [1, 0, 0], sizes = [8, 8, 128], strides = [1, 1, 1]} : vector<10x8x128xf32> to vector<8x8x128xf32>
    %c3_291 = arith.constant 3 : index
    %1247 = memref.load %arg2[%c3_291] : memref<27xf32, #tpu.memory_space<smem>>
    %1248 = vector.extract_strided_slice %1246 {offsets = [0, 0, 0], sizes = [8, 6, 128], strides = [1, 1, 1]} : vector<8x8x128xf32> to vector<8x6x128xf32>
    %1249 = vector.broadcast %1247 : f32 to vector<8x6x128xf32>
    %1250 = arith.mulf %1249, %1248 : vector<8x6x128xf32>
    %1251 = arith.addf %1245, %1250 : vector<8x6x128xf32>
    %c4_292 = arith.constant 4 : index
    %1252 = memref.load %arg2[%c4_292] : memref<27xf32, #tpu.memory_space<smem>>
    %1253 = vector.extract_strided_slice %1246 {offsets = [0, 1, 0], sizes = [8, 6, 128], strides = [1, 1, 1]} : vector<8x8x128xf32> to vector<8x6x128xf32>
    %1254 = vector.broadcast %1252 : f32 to vector<8x6x128xf32>
    %1255 = arith.mulf %1254, %1253 : vector<8x6x128xf32>
    %1256 = arith.addf %1251, %1255 : vector<8x6x128xf32>
    %c5_293 = arith.constant 5 : index
    %1257 = memref.load %arg2[%c5_293] : memref<27xf32, #tpu.memory_space<smem>>
    %1258 = vector.extract_strided_slice %1246 {offsets = [0, 2, 0], sizes = [8, 6, 128], strides = [1, 1, 1]} : vector<8x8x128xf32> to vector<8x6x128xf32>
    %1259 = vector.broadcast %1257 : f32 to vector<8x6x128xf32>
    %1260 = arith.mulf %1259, %1258 : vector<8x6x128xf32>
    %1261 = arith.addf %1256, %1260 : vector<8x6x128xf32>
    %1262 = vector.extract_strided_slice %1230 {offsets = [2, 0, 0], sizes = [8, 8, 128], strides = [1, 1, 1]} : vector<10x8x128xf32> to vector<8x8x128xf32>
    %c6_294 = arith.constant 6 : index
    %1263 = memref.load %arg2[%c6_294] : memref<27xf32, #tpu.memory_space<smem>>
    %1264 = vector.extract_strided_slice %1262 {offsets = [0, 0, 0], sizes = [8, 6, 128], strides = [1, 1, 1]} : vector<8x8x128xf32> to vector<8x6x128xf32>
    %1265 = vector.broadcast %1263 : f32 to vector<8x6x128xf32>
    %1266 = arith.mulf %1265, %1264 : vector<8x6x128xf32>
    %1267 = arith.addf %1261, %1266 : vector<8x6x128xf32>
    %c7_295 = arith.constant 7 : index
    %1268 = memref.load %arg2[%c7_295] : memref<27xf32, #tpu.memory_space<smem>>
    %1269 = vector.extract_strided_slice %1262 {offsets = [0, 1, 0], sizes = [8, 6, 128], strides = [1, 1, 1]} : vector<8x8x128xf32> to vector<8x6x128xf32>
    %1270 = vector.broadcast %1268 : f32 to vector<8x6x128xf32>
    %1271 = arith.mulf %1270, %1269 : vector<8x6x128xf32>
    %1272 = arith.addf %1267, %1271 : vector<8x6x128xf32>
    %c8_296 = arith.constant 8 : index
    %1273 = memref.load %arg2[%c8_296] : memref<27xf32, #tpu.memory_space<smem>>
    %1274 = vector.extract_strided_slice %1262 {offsets = [0, 2, 0], sizes = [8, 6, 128], strides = [1, 1, 1]} : vector<8x8x128xf32> to vector<8x6x128xf32>
    %1275 = vector.broadcast %1273 : f32 to vector<8x6x128xf32>
    %1276 = arith.mulf %1275, %1274 : vector<8x6x128xf32>
    %1277 = arith.addf %1272, %1276 : vector<8x6x128xf32>
    %c8_297 = arith.constant 8 : index
    %c0_298 = arith.constant 0 : index
    %c0_299 = arith.constant 0 : index
    %c0_300 = arith.constant 0 : index
    %1278 = vector.load %arg1[%c8_297, %c0_298, %c0_299, %c0_300] : memref<10x10x8x128xf32, #tpu.memory_space<vmem>>, vector<1x10x8x128xf32>
    %1279 = vector.shape_cast %1278 : vector<1x10x8x128xf32> to vector<10x8x128xf32>
    %1280 = vector.extract_strided_slice %1279 {offsets = [0, 0, 0], sizes = [8, 8, 128], strides = [1, 1, 1]} : vector<10x8x128xf32> to vector<8x8x128xf32>
    %c9_301 = arith.constant 9 : index
    %1281 = memref.load %arg2[%c9_301] : memref<27xf32, #tpu.memory_space<smem>>
    %1282 = vector.extract_strided_slice %1280 {offsets = [0, 0, 0], sizes = [8, 6, 128], strides = [1, 1, 1]} : vector<8x8x128xf32> to vector<8x6x128xf32>
    %1283 = vector.broadcast %1281 : f32 to vector<8x6x128xf32>
    %1284 = arith.mulf %1283, %1282 : vector<8x6x128xf32>
    %1285 = arith.addf %1277, %1284 : vector<8x6x128xf32>
    %c10_302 = arith.constant 10 : index
    %1286 = memref.load %arg2[%c10_302] : memref<27xf32, #tpu.memory_space<smem>>
    %1287 = vector.extract_strided_slice %1280 {offsets = [0, 1, 0], sizes = [8, 6, 128], strides = [1, 1, 1]} : vector<8x8x128xf32> to vector<8x6x128xf32>
    %1288 = vector.broadcast %1286 : f32 to vector<8x6x128xf32>
    %1289 = arith.mulf %1288, %1287 : vector<8x6x128xf32>
    %1290 = arith.addf %1285, %1289 : vector<8x6x128xf32>
    %c11_303 = arith.constant 11 : index
    %1291 = memref.load %arg2[%c11_303] : memref<27xf32, #tpu.memory_space<smem>>
    %1292 = vector.extract_strided_slice %1280 {offsets = [0, 2, 0], sizes = [8, 6, 128], strides = [1, 1, 1]} : vector<8x8x128xf32> to vector<8x6x128xf32>
    %1293 = vector.broadcast %1291 : f32 to vector<8x6x128xf32>
    %1294 = arith.mulf %1293, %1292 : vector<8x6x128xf32>
    %1295 = arith.addf %1290, %1294 : vector<8x6x128xf32>
    %1296 = vector.extract_strided_slice %1279 {offsets = [1, 0, 0], sizes = [8, 8, 128], strides = [1, 1, 1]} : vector<10x8x128xf32> to vector<8x8x128xf32>
    %c12_304 = arith.constant 12 : index
    %1297 = memref.load %arg2[%c12_304] : memref<27xf32, #tpu.memory_space<smem>>
    %1298 = vector.extract_strided_slice %1296 {offsets = [0, 0, 0], sizes = [8, 6, 128], strides = [1, 1, 1]} : vector<8x8x128xf32> to vector<8x6x128xf32>
    %1299 = vector.broadcast %1297 : f32 to vector<8x6x128xf32>
    %1300 = arith.mulf %1299, %1298 : vector<8x6x128xf32>
    %1301 = arith.addf %1295, %1300 : vector<8x6x128xf32>
    %c13_305 = arith.constant 13 : index
    %1302 = memref.load %arg2[%c13_305] : memref<27xf32, #tpu.memory_space<smem>>
    %1303 = vector.extract_strided_slice %1296 {offsets = [0, 1, 0], sizes = [8, 6, 128], strides = [1, 1, 1]} : vector<8x8x128xf32> to vector<8x6x128xf32>
    %1304 = vector.broadcast %1302 : f32 to vector<8x6x128xf32>
    %1305 = arith.mulf %1304, %1303 : vector<8x6x128xf32>
    %1306 = arith.addf %1301, %1305 : vector<8x6x128xf32>
    %c14_306 = arith.constant 14 : index
    %1307 = memref.load %arg2[%c14_306] : memref<27xf32, #tpu.memory_space<smem>>
    %1308 = vector.extract_strided_slice %1296 {offsets = [0, 2, 0], sizes = [8, 6, 128], strides = [1, 1, 1]} : vector<8x8x128xf32> to vector<8x6x128xf32>
    %1309 = vector.broadcast %1307 : f32 to vector<8x6x128xf32>
    %1310 = arith.mulf %1309, %1308 : vector<8x6x128xf32>
    %1311 = arith.addf %1306, %1310 : vector<8x6x128xf32>
    %1312 = vector.extract_strided_slice %1279 {offsets = [2, 0, 0], sizes = [8, 8, 128], strides = [1, 1, 1]} : vector<10x8x128xf32> to vector<8x8x128xf32>
    %c15_307 = arith.constant 15 : index
    %1313 = memref.load %arg2[%c15_307] : memref<27xf32, #tpu.memory_space<smem>>
    %1314 = vector.extract_strided_slice %1312 {offsets = [0, 0, 0], sizes = [8, 6, 128], strides = [1, 1, 1]} : vector<8x8x128xf32> to vector<8x6x128xf32>
    %1315 = vector.broadcast %1313 : f32 to vector<8x6x128xf32>
    %1316 = arith.mulf %1315, %1314 : vector<8x6x128xf32>
    %1317 = arith.addf %1311, %1316 : vector<8x6x128xf32>
    %c16_308 = arith.constant 16 : index
    %1318 = memref.load %arg2[%c16_308] : memref<27xf32, #tpu.memory_space<smem>>
    %1319 = vector.extract_strided_slice %1312 {offsets = [0, 1, 0], sizes = [8, 6, 128], strides = [1, 1, 1]} : vector<8x8x128xf32> to vector<8x6x128xf32>
    %1320 = vector.broadcast %1318 : f32 to vector<8x6x128xf32>
    %1321 = arith.mulf %1320, %1319 : vector<8x6x128xf32>
    %1322 = arith.addf %1317, %1321 : vector<8x6x128xf32>
    %c17_309 = arith.constant 17 : index
    %1323 = memref.load %arg2[%c17_309] : memref<27xf32, #tpu.memory_space<smem>>
    %1324 = vector.extract_strided_slice %1312 {offsets = [0, 2, 0], sizes = [8, 6, 128], strides = [1, 1, 1]} : vector<8x8x128xf32> to vector<8x6x128xf32>
    %1325 = vector.broadcast %1323 : f32 to vector<8x6x128xf32>
    %1326 = arith.mulf %1325, %1324 : vector<8x6x128xf32>
    %1327 = arith.addf %1322, %1326 : vector<8x6x128xf32>
    %c9_310 = arith.constant 9 : index
    %c0_311 = arith.constant 0 : index
    %c0_312 = arith.constant 0 : index
    %c0_313 = arith.constant 0 : index
    %1328 = vector.load %arg1[%c9_310, %c0_311, %c0_312, %c0_313] : memref<10x10x8x128xf32, #tpu.memory_space<vmem>>, vector<1x10x8x128xf32>
    %1329 = vector.shape_cast %1328 : vector<1x10x8x128xf32> to vector<10x8x128xf32>
    %1330 = vector.extract_strided_slice %1329 {offsets = [0, 0, 0], sizes = [8, 8, 128], strides = [1, 1, 1]} : vector<10x8x128xf32> to vector<8x8x128xf32>
    %c18_314 = arith.constant 18 : index
    %1331 = memref.load %arg2[%c18_314] : memref<27xf32, #tpu.memory_space<smem>>
    %1332 = vector.extract_strided_slice %1330 {offsets = [0, 0, 0], sizes = [8, 6, 128], strides = [1, 1, 1]} : vector<8x8x128xf32> to vector<8x6x128xf32>
    %1333 = vector.broadcast %1331 : f32 to vector<8x6x128xf32>
    %1334 = arith.mulf %1333, %1332 : vector<8x6x128xf32>
    %1335 = arith.addf %1327, %1334 : vector<8x6x128xf32>
    %c19_315 = arith.constant 19 : index
    %1336 = memref.load %arg2[%c19_315] : memref<27xf32, #tpu.memory_space<smem>>
    %1337 = vector.extract_strided_slice %1330 {offsets = [0, 1, 0], sizes = [8, 6, 128], strides = [1, 1, 1]} : vector<8x8x128xf32> to vector<8x6x128xf32>
    %1338 = vector.broadcast %1336 : f32 to vector<8x6x128xf32>
    %1339 = arith.mulf %1338, %1337 : vector<8x6x128xf32>
    %1340 = arith.addf %1335, %1339 : vector<8x6x128xf32>
    %c20_316 = arith.constant 20 : index
    %1341 = memref.load %arg2[%c20_316] : memref<27xf32, #tpu.memory_space<smem>>
    %1342 = vector.extract_strided_slice %1330 {offsets = [0, 2, 0], sizes = [8, 6, 128], strides = [1, 1, 1]} : vector<8x8x128xf32> to vector<8x6x128xf32>
    %1343 = vector.broadcast %1341 : f32 to vector<8x6x128xf32>
    %1344 = arith.mulf %1343, %1342 : vector<8x6x128xf32>
    %1345 = arith.addf %1340, %1344 : vector<8x6x128xf32>
    %1346 = vector.extract_strided_slice %1329 {offsets = [1, 0, 0], sizes = [8, 8, 128], strides = [1, 1, 1]} : vector<10x8x128xf32> to vector<8x8x128xf32>
    %c21_317 = arith.constant 21 : index
    %1347 = memref.load %arg2[%c21_317] : memref<27xf32, #tpu.memory_space<smem>>
    %1348 = vector.extract_strided_slice %1346 {offsets = [0, 0, 0], sizes = [8, 6, 128], strides = [1, 1, 1]} : vector<8x8x128xf32> to vector<8x6x128xf32>
    %1349 = vector.broadcast %1347 : f32 to vector<8x6x128xf32>
    %1350 = arith.mulf %1349, %1348 : vector<8x6x128xf32>
    %1351 = arith.addf %1345, %1350 : vector<8x6x128xf32>
    %c22_318 = arith.constant 22 : index
    %1352 = memref.load %arg2[%c22_318] : memref<27xf32, #tpu.memory_space<smem>>
    %1353 = vector.extract_strided_slice %1346 {offsets = [0, 1, 0], sizes = [8, 6, 128], strides = [1, 1, 1]} : vector<8x8x128xf32> to vector<8x6x128xf32>
    %1354 = vector.broadcast %1352 : f32 to vector<8x6x128xf32>
    %1355 = arith.mulf %1354, %1353 : vector<8x6x128xf32>
    %1356 = arith.addf %1351, %1355 : vector<8x6x128xf32>
    %c23_319 = arith.constant 23 : index
    %1357 = memref.load %arg2[%c23_319] : memref<27xf32, #tpu.memory_space<smem>>
    %1358 = vector.extract_strided_slice %1346 {offsets = [0, 2, 0], sizes = [8, 6, 128], strides = [1, 1, 1]} : vector<8x8x128xf32> to vector<8x6x128xf32>
    %1359 = vector.broadcast %1357 : f32 to vector<8x6x128xf32>
    %1360 = arith.mulf %1359, %1358 : vector<8x6x128xf32>
    %1361 = arith.addf %1356, %1360 : vector<8x6x128xf32>
    %1362 = vector.extract_strided_slice %1329 {offsets = [2, 0, 0], sizes = [8, 8, 128], strides = [1, 1, 1]} : vector<10x8x128xf32> to vector<8x8x128xf32>
    %c24_320 = arith.constant 24 : index
    %1363 = memref.load %arg2[%c24_320] : memref<27xf32, #tpu.memory_space<smem>>
    %1364 = vector.extract_strided_slice %1362 {offsets = [0, 0, 0], sizes = [8, 6, 128], strides = [1, 1, 1]} : vector<8x8x128xf32> to vector<8x6x128xf32>
    %1365 = vector.broadcast %1363 : f32 to vector<8x6x128xf32>
    %1366 = arith.mulf %1365, %1364 : vector<8x6x128xf32>
    %1367 = arith.addf %1361, %1366 : vector<8x6x128xf32>
    %c25_321 = arith.constant 25 : index
    %1368 = memref.load %arg2[%c25_321] : memref<27xf32, #tpu.memory_space<smem>>
    %1369 = vector.extract_strided_slice %1362 {offsets = [0, 1, 0], sizes = [8, 6, 128], strides = [1, 1, 1]} : vector<8x8x128xf32> to vector<8x6x128xf32>
    %1370 = vector.broadcast %1368 : f32 to vector<8x6x128xf32>
    %1371 = arith.mulf %1370, %1369 : vector<8x6x128xf32>
    %1372 = arith.addf %1367, %1371 : vector<8x6x128xf32>
    %c26_322 = arith.constant 26 : index
    %1373 = memref.load %arg2[%c26_322] : memref<27xf32, #tpu.memory_space<smem>>
    %1374 = vector.extract_strided_slice %1362 {offsets = [0, 2, 0], sizes = [8, 6, 128], strides = [1, 1, 1]} : vector<8x8x128xf32> to vector<8x6x128xf32>
    %1375 = vector.broadcast %1373 : f32 to vector<8x6x128xf32>
    %1376 = arith.mulf %1375, %1374 : vector<8x6x128xf32>
    %1377 = arith.addf %1372, %1376 : vector<8x6x128xf32>
    %1378 = arith.maximumf %1228, %1377 : vector<8x6x128xf32>
    %1379 = vector.extract_strided_slice %1378 {offsets = [0, 0, 0], sizes = [1, 6, 128], strides = [1, 1, 1]} : vector<8x6x128xf32> to vector<1x6x128xf32>
    %1380 = vector.shape_cast %1379 : vector<1x6x128xf32> to vector<6x128xf32>
    %1381 = vector.extract_strided_slice %1378 {offsets = [1, 0, 0], sizes = [1, 6, 128], strides = [1, 1, 1]} : vector<8x6x128xf32> to vector<1x6x128xf32>
    %1382 = vector.shape_cast %1381 : vector<1x6x128xf32> to vector<6x128xf32>
    %1383 = arith.maximumf %1380, %1382 : vector<6x128xf32>
    %1384 = vector.extract_strided_slice %1383 {offsets = [0, 0], sizes = [5, 128], strides = [1, 1]} : vector<6x128xf32> to vector<5x128xf32>
    %1385 = vector.extract_strided_slice %1383 {offsets = [1, 0], sizes = [5, 128], strides = [1, 1]} : vector<6x128xf32> to vector<5x128xf32>
    %1386 = arith.maximumf %1384, %1385 : vector<5x128xf32>
    %1387 = vector.broadcast %0 : f32 to vector<5x128xf32>
    %1388 = arith.addf %1386, %1387 : vector<5x128xf32>
    %1389 = math.tanh %1388 : vector<5x128xf32>
    %c12_323 = arith.constant 12 : index
    %c0_324 = arith.constant 0 : index
    %c0_325 = arith.constant 0 : index
    %1390 = vector.load %arg4[%c12_323, %c0_324, %c0_325] : memref<16x5x128xf32, #tpu.memory_space<vmem>>, vector<1x5x128xf32>
    %1391 = vector.shape_cast %1390 : vector<1x5x128xf32> to vector<5x128xf32>
    %1392 = arith.mulf %1391, %1389 : vector<5x128xf32>
    %1393 = arith.addf %1079, %1392 : vector<5x128xf32>
    %1394 = vector.extract_strided_slice %1378 {offsets = [2, 0, 0], sizes = [1, 6, 128], strides = [1, 1, 1]} : vector<8x6x128xf32> to vector<1x6x128xf32>
    %1395 = vector.shape_cast %1394 : vector<1x6x128xf32> to vector<6x128xf32>
    %1396 = vector.extract_strided_slice %1378 {offsets = [3, 0, 0], sizes = [1, 6, 128], strides = [1, 1, 1]} : vector<8x6x128xf32> to vector<1x6x128xf32>
    %1397 = vector.shape_cast %1396 : vector<1x6x128xf32> to vector<6x128xf32>
    %1398 = arith.maximumf %1395, %1397 : vector<6x128xf32>
    %1399 = vector.extract_strided_slice %1398 {offsets = [0, 0], sizes = [5, 128], strides = [1, 1]} : vector<6x128xf32> to vector<5x128xf32>
    %1400 = vector.extract_strided_slice %1398 {offsets = [1, 0], sizes = [5, 128], strides = [1, 1]} : vector<6x128xf32> to vector<5x128xf32>
    %1401 = arith.maximumf %1399, %1400 : vector<5x128xf32>
    %1402 = vector.broadcast %0 : f32 to vector<5x128xf32>
    %1403 = arith.addf %1401, %1402 : vector<5x128xf32>
    %1404 = math.tanh %1403 : vector<5x128xf32>
    %c13_326 = arith.constant 13 : index
    %c0_327 = arith.constant 0 : index
    %c0_328 = arith.constant 0 : index
    %1405 = vector.load %arg4[%c13_326, %c0_327, %c0_328] : memref<16x5x128xf32, #tpu.memory_space<vmem>>, vector<1x5x128xf32>
    %1406 = vector.shape_cast %1405 : vector<1x5x128xf32> to vector<5x128xf32>
    %1407 = arith.mulf %1406, %1404 : vector<5x128xf32>
    %1408 = arith.addf %1393, %1407 : vector<5x128xf32>
    %1409 = vector.extract_strided_slice %1378 {offsets = [4, 0, 0], sizes = [1, 6, 128], strides = [1, 1, 1]} : vector<8x6x128xf32> to vector<1x6x128xf32>
    %1410 = vector.shape_cast %1409 : vector<1x6x128xf32> to vector<6x128xf32>
    %1411 = vector.extract_strided_slice %1378 {offsets = [5, 0, 0], sizes = [1, 6, 128], strides = [1, 1, 1]} : vector<8x6x128xf32> to vector<1x6x128xf32>
    %1412 = vector.shape_cast %1411 : vector<1x6x128xf32> to vector<6x128xf32>
    %1413 = arith.maximumf %1410, %1412 : vector<6x128xf32>
    %1414 = vector.extract_strided_slice %1413 {offsets = [0, 0], sizes = [5, 128], strides = [1, 1]} : vector<6x128xf32> to vector<5x128xf32>
    %1415 = vector.extract_strided_slice %1413 {offsets = [1, 0], sizes = [5, 128], strides = [1, 1]} : vector<6x128xf32> to vector<5x128xf32>
    %1416 = arith.maximumf %1414, %1415 : vector<5x128xf32>
    %1417 = vector.broadcast %0 : f32 to vector<5x128xf32>
    %1418 = arith.addf %1416, %1417 : vector<5x128xf32>
    %1419 = math.tanh %1418 : vector<5x128xf32>
    %c14_329 = arith.constant 14 : index
    %c0_330 = arith.constant 0 : index
    %c0_331 = arith.constant 0 : index
    %1420 = vector.load %arg4[%c14_329, %c0_330, %c0_331] : memref<16x5x128xf32, #tpu.memory_space<vmem>>, vector<1x5x128xf32>
    %1421 = vector.shape_cast %1420 : vector<1x5x128xf32> to vector<5x128xf32>
    %1422 = arith.mulf %1421, %1419 : vector<5x128xf32>
    %1423 = arith.addf %1408, %1422 : vector<5x128xf32>
    %1424 = vector.extract_strided_slice %1378 {offsets = [6, 0, 0], sizes = [1, 6, 128], strides = [1, 1, 1]} : vector<8x6x128xf32> to vector<1x6x128xf32>
    %1425 = vector.shape_cast %1424 : vector<1x6x128xf32> to vector<6x128xf32>
    %1426 = vector.extract_strided_slice %1378 {offsets = [7, 0, 0], sizes = [1, 6, 128], strides = [1, 1, 1]} : vector<8x6x128xf32> to vector<1x6x128xf32>
    %1427 = vector.shape_cast %1426 : vector<1x6x128xf32> to vector<6x128xf32>
    %1428 = arith.maximumf %1425, %1427 : vector<6x128xf32>
    %1429 = vector.extract_strided_slice %1428 {offsets = [0, 0], sizes = [5, 128], strides = [1, 1]} : vector<6x128xf32> to vector<5x128xf32>
    %1430 = vector.extract_strided_slice %1428 {offsets = [1, 0], sizes = [5, 128], strides = [1, 1]} : vector<6x128xf32> to vector<5x128xf32>
    %1431 = arith.maximumf %1429, %1430 : vector<5x128xf32>
    %1432 = vector.broadcast %0 : f32 to vector<5x128xf32>
    %1433 = arith.addf %1431, %1432 : vector<5x128xf32>
    %1434 = math.tanh %1433 : vector<5x128xf32>
    %c15_332 = arith.constant 15 : index
    %c0_333 = arith.constant 0 : index
    %c0_334 = arith.constant 0 : index
    %1435 = vector.load %arg4[%c15_332, %c0_333, %c0_334] : memref<16x5x128xf32, #tpu.memory_space<vmem>>, vector<1x5x128xf32>
    %1436 = vector.shape_cast %1435 : vector<1x5x128xf32> to vector<5x128xf32>
    %1437 = arith.mulf %1436, %1434 : vector<5x128xf32>
    %1438 = arith.addf %1423, %1437 : vector<5x128xf32>
    %cst_335 = arith.constant dense<0.000000e+00> : vector<128xf32>
    %1439 = vector.multi_reduction <add>, %1438, %cst_335 [0] : vector<5x128xf32> to vector<128xf32>
    %1440 = vector.shape_cast %1439 : vector<128xf32> to vector<1x128xf32>
    %1441 = vector.broadcast %1 : f32 to vector<1x128xf32>
    %1442 = arith.addf %1440, %1441 : vector<1x128xf32>
    %c0_336 = arith.constant 0 : index
    %c0_337 = arith.constant 0 : index
    %1443 = vector.load %arg6[%c0_336, %c0_337] : memref<1x128xf32, #tpu.memory_space<vmem>>, vector<1x128xf32>
    tpu.vector_store %arg6[%c0_336, %c0_337], %1442 {strides = array<i32>} : memref<1x128xf32, #tpu.memory_space<vmem>>, vector<1x128xf32>,
    return
  }
  func.func @transform_0(%arg0: i32) -> (i32, i32, i32, i32) {
    %c0_i32 = arith.constant 0 : i32
    %c0_i32_0 = arith.constant 0 : i32
    %c0_i32_1 = arith.constant 0 : i32
    %c0_i32_2 = arith.constant 0 : i32
    return %c0_i32, %c0_i32_0, %c0_i32_1, %arg0 : i32, i32, i32, i32
  }
  func.func @transform_1(%arg0: i32) -> i32 {
    %c0_i32 = arith.constant 0 : i32
    %c0_i32_0 = arith.constant 0 : i32
    return %c0_i32 : i32
  }
  func.func @transform_2(%arg0: i32) -> i32 {
    %c0_i32 = arith.constant 0 : i32
    %c0_i32_0 = arith.constant 0 : i32
    return %c0_i32 : i32
  }
  func.func @transform_3(%arg0: i32) -> (i32, i32, i32) {
    %c0_i32 = arith.constant 0 : i32
    %c0_i32_0 = arith.constant 0 : i32
    %c0_i32_1 = arith.constant 0 : i32
    %c0_i32_2 = arith.constant 0 : i32
    return %c0_i32, %c0_i32_0, %c0_i32_1 : i32, i32, i32
  }
  func.func @transform_4(%arg0: i32) -> i32 {
    %c0_i32 = arith.constant 0 : i32
    %c0_i32_0 = arith.constant 0 : i32
    return %c0_i32 : i32
  }
  func.func @transform_5(%arg0: i32) -> (i32, i32) {
    %c0_i32 = arith.constant 0 : i32
    %c0_i32_0 = arith.constant 0 : i32
    return %c0_i32, %arg0 : i32, i32
  }
}

</mosaic_0001>

<llo_original>
// kernel: tpu_custom_call.1
$region0: #{tpu_custom_call.1}
  #allocation0 [shape = 'u32[]', space=smem, size = 0x4, offset = 0x4, fixed_abs, tag = 'smem constant byte address 0x4 - core index']
  #allocation1 [shape = 'u32[144,128]{1,0:T(1,128)}', space=vmem, size = 0x12000, scoped, tag = 'internal scratch']
  #allocation2 [shape = 'f32[1]{0:T(128)S(6)}', space=smem, size = 0x200, scoped, tag = 'scoped memory for tpu_custom_call.1']
  #allocation3 [shape = 'f32[1]{0:T(128)S(6)}', space=smem, size = 0x200, scoped, tag = 'scoped memory for tpu_custom_call.1']
  %s0 = inlined_call_operand.hbm [shape: f32[10,10,8,128], index: 0, kind: input, shape index: {}]
  %s1 = inlined_call_operand.vmem [shape: f32[27], index: 1, kind: input, shape index: {}]
  %s2 = inlined_call_operand.<no memory space> [shape: f32[1], index: 2, kind: input, shape index: {}]
  %s3 = inlined_call_operand.vmem [shape: f32[16,5,128], index: 3, kind: input, shape index: {}]
  %s4 = inlined_call_operand.<no memory space> [shape: f32[1], index: 4, kind: input, shape index: {}]
  %s5 = inlined_call_operand.hbm [shape: f32[1,128], index: 5, kind: output, shape index: {}]
  %s6 = sld [smem:[#allocation0]]
  $region38: #{tpu_custom_call.1} parent=0
    _
  %s8 = ssub.s32 1, %s6
  %s9 = scalar_select 0, %s8, %s6
  %10 = sst [smem:[#allocation2]] %s2
  %11 = sst [smem:[#allocation3]] %s4
  $region1: #{tpu_custom_call.1} parent=0
    #allocation4 [shape = 'u8[409600]{0}', space=vmem, size = 0x64000, scoped, tag = 'input window, operand 0, single buffered']
    #allocation5 [shape = 's32[1]{0}', space=sflag, size = 0x4, scoped, tag = 'scoped memory for tpu_custom_call.1']
    #allocation6 [shape = 's32[1]{0}', space=sflag, size = 0x4, scoped, tag = 'scoped memory for tpu_custom_call.1']
    #allocation7 [shape = 's32[1]{0}', space=sflag, size = 0x4, scoped, tag = 'scoped memory for tpu_custom_call.1']
    #allocation8 [shape = 'u8[512]{0}', space=smem, size = 0x200, scoped, tag = 'input window, operand 1, single buffered']
    #allocation9 [shape = 'u8[512]{0}', space=vmem, size = 0x400, scoped, tag = 'output window, operand 0, single buffered']
    %12 = vsyncpa [#allocation5], 0
    %13 = vsyncpa [#allocation7], 0
    %14 = vsyncpa [#allocation6], 0
    // Predicated region
    $region2: #{tpu_custom_call.1} parent=1 // pred_check
      _
    $region3: #{tpu_custom_call.1} parent=1 // pred_check_branch
      %16 = sbr.rel (0) target = $region5
    $region4: #{tpu_custom_call.1} parent=1 // pred_region
      %s18 = ssub.s32 12800, 12800
      %19 = vsyncadd [#allocation5], %s18
      %s20 = sshll.u32 [#allocation4], 4
      %s21 = int_to_ptr.vmem [resolvable:$true] %s20
      %26 = dma.hbm_to_vmem [thread:$0]  %s0, 12800, %s21, [#allocation5], 128, 128, 8
    $region5: #{tpu_custom_call.1} parent=1 // pred_fallthru
      _
    // Predicated region
    $region6: #{tpu_custom_call.1} parent=1 // pred_check
      _
    $region7: #{tpu_custom_call.1} parent=1 // pred_check_branch
      %28 = sbr.rel (0) target = $region9
    $region8: #{tpu_custom_call.1} parent=1 // pred_region
      %s30 = ssub.s32 16, 16
      %31 = vsyncadd [#allocation7], %s30
      %s33 = sshll.u32 %s1, 4
      %s34 = int_to_ptr.vmem [resolvable:$true] %s33
      %36 = dma.vmem_to_smem %s34, 16, [#allocation8], [#allocation7]
    $region9: #{tpu_custom_call.1} parent=1 // pred_fallthru
      _
    // Predicated region
    $region10: #{tpu_custom_call.1} parent=1 // pred_check
      _
    $region11: #{tpu_custom_call.1} parent=1 // pred_check_branch
      %38 = sbr.rel (0) target = $region13
    $region12: #{tpu_custom_call.1} parent=1 // pred_region
      _
    $region13: #{tpu_custom_call.1} parent=1 // pred_fallthru
      _
    // Predicated region
    $region14: #{tpu_custom_call.1} parent=1 // pred_check
      _
    $region15: #{tpu_custom_call.1} parent=1 // pred_check_branch
      %40 = sbr.rel (0) target = $region17
    $region16: #{tpu_custom_call.1} parent=1 // pred_region
      _
    $region17: #{tpu_custom_call.1} parent=1 // pred_fallthru
      _
    // Predicated region
    $region18: #{tpu_custom_call.1} parent=1 // pred_check
      _
    $region19: #{tpu_custom_call.1} parent=1 // pred_check_branch
      %42 = sbr.rel (0) target = $region21
    $region20: #{tpu_custom_call.1} parent=1 // pred_region
      _
    $region21: #{tpu_custom_call.1} parent=1 // pred_fallthru
      _
    // Predicated region
    $region22: #{tpu_custom_call.1} parent=1 // pred_check
      _
    $region23: #{tpu_custom_call.1} parent=1 // pred_check_branch
      %44 = sbr.rel (0) target = $region25
    $region24: #{tpu_custom_call.1} parent=1 // pred_region
      %45 = dma.done [#allocation5], 12800
    $region25: #{tpu_custom_call.1} parent=1 // pred_fallthru
      _
    // Predicated region
    $region26: #{tpu_custom_call.1} parent=1 // pred_check
      _
    $region27: #{tpu_custom_call.1} parent=1 // pred_check_branch
      %47 = sbr.rel (0) target = $region29
    $region28: #{tpu_custom_call.1} parent=1 // pred_region
      %48 = dma.done [#allocation7], 16
    $region29: #{tpu_custom_call.1} parent=1 // pred_fallthru
      _
    %49 = sfence
    %s50 = sld [smem:[#allocation2]]
    %s51 = sld [smem:[#allocation3]]
    %v52 = vld [vmem:[#allocation4] sm:$0xff]
    %v53 = vld [vmem:[#allocation4 + $0x8] sm:$0xff]
    %v54 = vld [vmem:[#allocation4 + $0x10] sm:$0xff]
    %v55 = vld [vmem:[#allocation4 + $0x18] sm:$0xff]
    %v56 = vld [vmem:[#allocation4 + $0x20] sm:$0xff]
    %v57 = vld [vmem:[#allocation4 + $0x28] sm:$0xff]
    %v58 = vld [vmem:[#allocation4 + $0x30] sm:$0xff]
    %v59 = vld [vmem:[#allocation4 + $0x38] sm:$0xff]
    %v60 = vld [vmem:[#allocation4 + $0x40] sm:$0xff]
    %v61 = vld [vmem:[#allocation4 + $0x48] sm:$0xff]
    %s62 = sld [smem:[#allocation8]]
    %v63 = vstv %s62
    %v64 = vmul.f32 %v63, %v52
    %v65 = vmul.f32 %v63, %v53
    %v66 = vmul.f32 %v63, %v54
    %v67 = vmul.f32 %v63, %v55
    %v68 = vmul.f32 %v63, %v56
    %v69 = vmul.f32 %v63, %v57
    %v70 = vmul.f32 %v63, %v58
    %v71 = vmul.f32 %v63, %v59
    %s72 = sld [smem:[#allocation8 + $0x1]]
    %v73 = vstv %s72
    %v74 = vmul.f32 %v73, %v52
    %v75 = vmul.f32 %v73, %v53
    %v76 = vmul.f32 %v73, %v54
    %v77 = vmul.f32 %v73, %v55
    %v78 = vmul.f32 %v73, %v56
    %v79 = vmul.f32 %v73, %v57
    %v80 = vmul.f32 %v73, %v58
    %v81 = vmul.f32 %v73, %v59
    %v90 = vrot.slane %v74, 1
    %v91 = vrot.slane %v75, 1
    %v92 = vrot.slane %v76, 1
    %v93 = vrot.slane %v77, 1
    %v94 = vrot.slane %v78, 1
    %v95 = vrot.slane %v79, 1
    %v96 = vrot.slane %v80, 1
    %v97 = vrot.slane %v81, 1
    %v106 = vadd.f32 %v64, %v90
    %v107 = vadd.f32 %v65, %v91
    %v108 = vadd.f32 %v66, %v92
    %v109 = vadd.f32 %v67, %v93
    %v110 = vadd.f32 %v68, %v94
    %v111 = vadd.f32 %v69, %v95
    %v112 = vadd.f32 %v70, %v96
    %v113 = vadd.f32 %v71, %v97
    %s114 = sld [smem:[#allocation8 + $0x2]]
    %v115 = vstv %s114
    %v116 = vmul.f32 %v115, %v52
    %v117 = vmul.f32 %v115, %v53
    %v118 = vmul.f32 %v115, %v54
    %v119 = vmul.f32 %v115, %v55
    %v120 = vmul.f32 %v115, %v56
    %v121 = vmul.f32 %v115, %v57
    %v122 = vmul.f32 %v115, %v58
    %v123 = vmul.f32 %v115, %v59
    %v132 = vrot.slane %v116, 2
    %v133 = vrot.slane %v117, 2
    %v134 = vrot.slane %v118, 2
    %v135 = vrot.slane %v119, 2
    %v136 = vrot.slane %v120, 2
    %v137 = vrot.slane %v121, 2
    %v138 = vrot.slane %v122, 2
    %v139 = vrot.slane %v123, 2
    %v148 = vadd.f32 %v106, %v132
    %v149 = vadd.f32 %v107, %v133
    %v150 = vadd.f32 %v108, %v134
    %v151 = vadd.f32 %v109, %v135
    %v152 = vadd.f32 %v110, %v136
    %v153 = vadd.f32 %v111, %v137
    %v154 = vadd.f32 %v112, %v138
    %v155 = vadd.f32 %v113, %v139
    %s156 = sld [smem:[#allocation8 + $0x3]]
    %v157 = vstv %s156
    %v158 = vmul.f32 %v157, %v53
    %v159 = vmul.f32 %v157, %v54
    %v160 = vmul.f32 %v157, %v55
    %v161 = vmul.f32 %v157, %v56
    %v162 = vmul.f32 %v157, %v57
    %v163 = vmul.f32 %v157, %v58
    %v164 = vmul.f32 %v157, %v59
    %v165 = vmul.f32 %v157, %v60
    %v166 = vadd.f32 %v148, %v158
    %v167 = vadd.f32 %v149, %v159
    %v168 = vadd.f32 %v150, %v160
    %v169 = vadd.f32 %v151, %v161
    %v170 = vadd.f32 %v152, %v162
    %v171 = vadd.f32 %v153, %v163
    %v172 = vadd.f32 %v154, %v164
    %v173 = vadd.f32 %v155, %v165
    %s174 = sld [smem:[#allocation8 + $0x4]]
    %v175 = vstv %s174
    %v176 = vmul.f32 %v175, %v53
    %v177 = vmul.f32 %v175, %v54
    %v178 = vmul.f32 %v175, %v55
    %v179 = vmul.f32 %v175, %v56
    %v180 = vmul.f32 %v175, %v57
    %v181 = vmul.f32 %v175, %v58
    %v182 = vmul.f32 %v175, %v59
    %v183 = vmul.f32 %v175, %v60
    %v192 = vrot.slane %v176, 1
    %v193 = vrot.slane %v177, 1
    %v194 = vrot.slane %v178, 1
    %v195 = vrot.slane %v179, 1
    %v196 = vrot.slane %v180, 1
    %v197 = vrot.slane %v181, 1
    %v198 = vrot.slane %v182, 1
    %v199 = vrot.slane %v183, 1
    %v208 = vadd.f32 %v166, %v192
    %v209 = vadd.f32 %v167, %v193
    %v210 = vadd.f32 %v168, %v194
    %v211 = vadd.f32 %v169, %v195
    %v212 = vadd.f32 %v170, %v196
    %v213 = vadd.f32 %v171, %v197
    %v214 = vadd.f32 %v172, %v198
    %v215 = vadd.f32 %v173, %v199
    %s216 = sld [smem:[#allocation8 + $0x5]]
    %v217 = vstv %s216
    %v218 = vmul.f32 %v217, %v53
    %v219 = vmul.f32 %v217, %v54
    %v220 = vmul.f32 %v217, %v55
    %v221 = vmul.f32 %v217, %v56
    %v222 = vmul.f32 %v217, %v57
    %v223 = vmul.f32 %v217, %v58
    %v224 = vmul.f32 %v217, %v59
    %v225 = vmul.f32 %v217, %v60
    %v234 = vrot.slane %v218, 2
    %v235 = vrot.slane %v219, 2
    %v236 = vrot.slane %v220, 2
    %v237 = vrot.slane %v221, 2
    %v238 = vrot.slane %v222, 2
    %v239 = vrot.slane %v223, 2
    %v240 = vrot.slane %v224, 2
    %v241 = vrot.slane %v225, 2
    %v250 = vadd.f32 %v208, %v234
    %v251 = vadd.f32 %v209, %v235
    %v252 = vadd.f32 %v210, %v236
    %v253 = vadd.f32 %v211, %v237
    %v254 = vadd.f32 %v212, %v238
    %v255 = vadd.f32 %v213, %v239
    %v256 = vadd.f32 %v214, %v240
    %v257 = vadd.f32 %v215, %v241
    %s258 = sld [smem:[#allocation8 + $0x6]]
    %v259 = vstv %s258
    %v260 = vmul.f32 %v259, %v54
    %v261 = vmul.f32 %v259, %v55
    %v262 = vmul.f32 %v259, %v56
    %v263 = vmul.f32 %v259, %v57
    %v264 = vmul.f32 %v259, %v58
    %v265 = vmul.f32 %v259, %v59
    %v266 = vmul.f32 %v259, %v60
    %v267 = vmul.f32 %v259, %v61
    %v268 = vadd.f32 %v250, %v260
    %v269 = vadd.f32 %v251, %v261
    %v270 = vadd.f32 %v252, %v262
    %v271 = vadd.f32 %v253, %v263
    %v272 = vadd.f32 %v254, %v264
    %v273 = vadd.f32 %v255, %v265
    %v274 = vadd.f32 %v256, %v266
    %v275 = vadd.f32 %v257, %v267
    %s276 = sld [smem:[#allocation8 + $0x7]]
    %v277 = vstv %s276
    %v278 = vmul.f32 %v277, %v54
    %v279 = vmul.f32 %v277, %v55
    %v280 = vmul.f32 %v277, %v56
    %v281 = vmul.f32 %v277, %v57
    %v282 = vmul.f32 %v277, %v58
    %v283 = vmul.f32 %v277, %v59
    %v284 = vmul.f32 %v277, %v60
    %v285 = vmul.f32 %v277, %v61
    %v294 = vrot.slane %v278, 1
    %v295 = vrot.slane %v279, 1
    %v296 = vrot.slane %v280, 1
    %v297 = vrot.slane %v281, 1
    %v298 = vrot.slane %v282, 1
    %v299 = vrot.slane %v283, 1
    %v300 = vrot.slane %v284, 1
    %v301 = vrot.slane %v285, 1
    %v310 = vadd.f32 %v268, %v294
    %v311 = vadd.f32 %v269, %v295
    %v312 = vadd.f32 %v270, %v296
    %v313 = vadd.f32 %v271, %v297
    %v314 = vadd.f32 %v272, %v298
    %v315 = vadd.f32 %v273, %v299
    %v316 = vadd.f32 %v274, %v300
    %v317 = vadd.f32 %v275, %v301
    %s318 = sld [smem:[#allocation8 + $0x8]]
    %v319 = vstv %s318
    %v320 = vmul.f32 %v319, %v54
    %v321 = vmul.f32 %v319, %v55
    %v322 = vmul.f32 %v319, %v56
    %v323 = vmul.f32 %v319, %v57
    %v324 = vmul.f32 %v319, %v58
    %v325 = vmul.f32 %v319, %v59
    %v326 = vmul.f32 %v319, %v60
    %v327 = vmul.f32 %v319, %v61
    %v336 = vrot.slane %v320, 2
    %v337 = vrot.slane %v321, 2
    %v338 = vrot.slane %v322, 2
    %v339 = vrot.slane %v323, 2
    %v340 = vrot.slane %v324, 2
    %v341 = vrot.slane %v325, 2
    %v342 = vrot.slane %v326, 2
    %v343 = vrot.slane %v327, 2
    %v352 = vadd.f32 %v310, %v336
    %v353 = vadd.f32 %v311, %v337
    %v354 = vadd.f32 %v312, %v338
    %v355 = vadd.f32 %v313, %v339
    %v356 = vadd.f32 %v314, %v340
    %v357 = vadd.f32 %v315, %v341
    %v358 = vadd.f32 %v316, %v342
    %v359 = vadd.f32 %v317, %v343
    %s360 = scalar_lea.vmem [#allocation4], 80
    %v361 = vld [vmem:[%s360] sm:$0xff]
    %v362 = vld [vmem:[%s360 + $0x8] sm:$0xff]
    %v363 = vld [vmem:[%s360 + $0x10] sm:$0xff]
    %v364 = vld [vmem:[%s360 + $0x18] sm:$0xff]
    %v365 = vld [vmem:[%s360 + $0x20] sm:$0xff]
    %v366 = vld [vmem:[%s360 + $0x28] sm:$0xff]
    %v367 = vld [vmem:[%s360 + $0x30] sm:$0xff]
    %v368 = vld [vmem:[%s360 + $0x38] sm:$0xff]
    %v369 = vld [vmem:[%s360 + $0x40] sm:$0xff]
    %v370 = vld [vmem:[%s360 + $0x48] sm:$0xff]
    %s371 = sld [smem:[#allocation8 + $0x9]]
    %v372 = vstv %s371
    %v373 = vmul.f32 %v372, %v361
    %v374 = vmul.f32 %v372, %v362
    %v375 = vmul.f32 %v372, %v363
    %v376 = vmul.f32 %v372, %v364
    %v377 = vmul.f32 %v372, %v365
    %v378 = vmul.f32 %v372, %v366
    %v379 = vmul.f32 %v372, %v367
    %v380 = vmul.f32 %v372, %v368
    %v381 = vadd.f32 %v352, %v373
    %v382 = vadd.f32 %v353, %v374
    %v383 = vadd.f32 %v354, %v375
    %v384 = vadd.f32 %v355, %v376
    %v385 = vadd.f32 %v356, %v377
    %v386 = vadd.f32 %v357, %v378
    %v387 = vadd.f32 %v358, %v379
    %v388 = vadd.f32 %v359, %v380
    %s389 = sld [smem:[#allocation8 + $0xa]]
    %v390 = vstv %s389
    %v391 = vmul.f32 %v390, %v361
    %v392 = vmul.f32 %v390, %v362
    %v393 = vmul.f32 %v390, %v363
    %v394 = vmul.f32 %v390, %v364
    %v395 = vmul.f32 %v390, %v365
    %v396 = vmul.f32 %v390, %v366
    %v397 = vmul.f32 %v390, %v367
    %v398 = vmul.f32 %v390, %v368
    %v407 = vrot.slane %v391, 1
    %v408 = vrot.slane %v392, 1
    %v409 = vrot.slane %v393, 1
    %v410 = vrot.slane %v394, 1
    %v411 = vrot.slane %v395, 1
    %v412 = vrot.slane %v396, 1
    %v413 = vrot.slane %v397, 1
    %v414 = vrot.slane %v398, 1
    %v423 = vadd.f32 %v381, %v407
    %v424 = vadd.f32 %v382, %v408
    %v425 = vadd.f32 %v383, %v409
    %v426 = vadd.f32 %v384, %v410
    %v427 = vadd.f32 %v385, %v411
    %v428 = vadd.f32 %v386, %v412
    %v429 = vadd.f32 %v387, %v413
    %v430 = vadd.f32 %v388, %v414
    %s431 = sld [smem:[#allocation8 + $0xb]]
    %v432 = vstv %s431
    %v433 = vmul.f32 %v432, %v361
    %v434 = vmul.f32 %v432, %v362
    %v435 = vmul.f32 %v432, %v363
    %v436 = vmul.f32 %v432, %v364
    %v437 = vmul.f32 %v432, %v365
    %v438 = vmul.f32 %v432, %v366
    %v439 = vmul.f32 %v432, %v367
    %v440 = vmul.f32 %v432, %v368
    %v449 = vrot.slane %v433, 2
    %v450 = vrot.slane %v434, 2
    %v451 = vrot.slane %v435, 2
    %v452 = vrot.slane %v436, 2
    %v453 = vrot.slane %v437, 2
    %v454 = vrot.slane %v438, 2
    %v455 = vrot.slane %v439, 2
    %v456 = vrot.slane %v440, 2
    %v465 = vadd.f32 %v423, %v449
    %v466 = vadd.f32 %v424, %v450
    %v467 = vadd.f32 %v425, %v451
    %v468 = vadd.f32 %v426, %v452
    %v469 = vadd.f32 %v427, %v453
    %v470 = vadd.f32 %v428, %v454
    %v471 = vadd.f32 %v429, %v455
    %v472 = vadd.f32 %v430, %v456
    %s473 = sld [smem:[#allocation8 + $0xc]]
    %v474 = vstv %s473
    %v475 = vmul.f32 %v474, %v362
    %v476 = vmul.f32 %v474, %v363
    %v477 = vmul.f32 %v474, %v364
    %v478 = vmul.f32 %v474, %v365
    %v479 = vmul.f32 %v474, %v366
    %v480 = vmul.f32 %v474, %v367
    %v481 = vmul.f32 %v474, %v368
    %v482 = vmul.f32 %v474, %v369
    %v483 = vadd.f32 %v465, %v475
    %v484 = vadd.f32 %v466, %v476
    %v485 = vadd.f32 %v467, %v477
    %v486 = vadd.f32 %v468, %v478
    %v487 = vadd.f32 %v469, %v479
    %v488 = vadd.f32 %v470, %v480
    %v489 = vadd.f32 %v471, %v481
    %v490 = vadd.f32 %v472, %v482
    %s491 = sld [smem:[#allocation8 + $0xd]]
    %v492 = vstv %s491
    %v493 = vmul.f32 %v492, %v362
    %v494 = vmul.f32 %v492, %v363
    %v495 = vmul.f32 %v492, %v364
    %v496 = vmul.f32 %v492, %v365
    %v497 = vmul.f32 %v492, %v366
    %v498 = vmul.f32 %v492, %v367
    %v499 = vmul.f32 %v492, %v368
    %v500 = vmul.f32 %v492, %v369
    %v509 = vrot.slane %v493, 1
    %v510 = vrot.slane %v494, 1
    %v511 = vrot.slane %v495, 1
    %v512 = vrot.slane %v496, 1
    %v513 = vrot.slane %v497, 1
    %v514 = vrot.slane %v498, 1
    %v515 = vrot.slane %v499, 1
    %v516 = vrot.slane %v500, 1
    %v525 = vadd.f32 %v483, %v509
    %v526 = vadd.f32 %v484, %v510
    %v527 = vadd.f32 %v485, %v511
    %v528 = vadd.f32 %v486, %v512
    %v529 = vadd.f32 %v487, %v513
    %v530 = vadd.f32 %v488, %v514
    %v531 = vadd.f32 %v489, %v515
    %v532 = vadd.f32 %v490, %v516
    %s533 = sld [smem:[#allocation8 + $0xe]]
    %v534 = vstv %s533
    %v535 = vmul.f32 %v534, %v362
    %v536 = vmul.f32 %v534, %v363
    %v537 = vmul.f32 %v534, %v364
    %v538 = vmul.f32 %v534, %v365
    %v539 = vmul.f32 %v534, %v366
    %v540 = vmul.f32 %v534, %v367
    %v541 = vmul.f32 %v534, %v368
    %v542 = vmul.f32 %v534, %v369
    %v551 = vrot.slane %v535, 2
    %v552 = vrot.slane %v536, 2
    %v553 = vrot.slane %v537, 2
    %v554 = vrot.slane %v538, 2
    %v555 = vrot.slane %v539, 2
    %v556 = vrot.slane %v540, 2
    %v557 = vrot.slane %v541, 2
    %v558 = vrot.slane %v542, 2
    %v567 = vadd.f32 %v525, %v551
    %v568 = vadd.f32 %v526, %v552
    %v569 = vadd.f32 %v527, %v553
    %v570 = vadd.f32 %v528, %v554
    %v571 = vadd.f32 %v529, %v555
    %v572 = vadd.f32 %v530, %v556
    %v573 = vadd.f32 %v531, %v557
    %v574 = vadd.f32 %v532, %v558
    %s575 = sld [smem:[#allocation8 + $0xf]]
    %v576 = vstv %s575
    %v577 = vmul.f32 %v576, %v363
    %v578 = vmul.f32 %v576, %v364
    %v579 = vmul.f32 %v576, %v365
    %v580 = vmul.f32 %v576, %v366
    %v581 = vmul.f32 %v576, %v367
    %v582 = vmul.f32 %v576, %v368
    %v583 = vmul.f32 %v576, %v369
    %v584 = vmul.f32 %v576, %v370
    %v585 = vadd.f32 %v567, %v577
    %v586 = vadd.f32 %v568, %v578
    %v587 = vadd.f32 %v569, %v579
    %v588 = vadd.f32 %v570, %v580
    %v589 = vadd.f32 %v571, %v581
    %v590 = vadd.f32 %v572, %v582
    %v591 = vadd.f32 %v573, %v583
    %v592 = vadd.f32 %v574, %v584
    %s593 = sld [smem:[#allocation8 + $0x10]]
    %v594 = vstv %s593
    %v595 = vmul.f32 %v594, %v363
    %v596 = vmul.f32 %v594, %v364
    %v597 = vmul.f32 %v594, %v365
    %v598 = vmul.f32 %v594, %v366
    %v599 = vmul.f32 %v594, %v367
    %v600 = vmul.f32 %v594, %v368
    %v601 = vmul.f32 %v594, %v369
    %v602 = vmul.f32 %v594, %v370
    %v611 = vrot.slane %v595, 1
    %v612 = vrot.slane %v596, 1
    %v613 = vrot.slane %v597, 1
    %v614 = vrot.slane %v598, 1
    %v615 = vrot.slane %v599, 1
    %v616 = vrot.slane %v600, 1
    %v617 = vrot.slane %v601, 1
    %v618 = vrot.slane %v602, 1
    %v627 = vadd.f32 %v585, %v611
    %v628 = vadd.f32 %v586, %v612
    %v629 = vadd.f32 %v587, %v613
    %v630 = vadd.f32 %v588, %v614
    %v631 = vadd.f32 %v589, %v615
    %v632 = vadd.f32 %v590, %v616
    %v633 = vadd.f32 %v591, %v617
    %v634 = vadd.f32 %v592, %v618
    %s635 = sld [smem:[#allocation8 + $0x11]]
    %v636 = vstv %s635
    %v637 = vmul.f32 %v636, %v363
    %v638 = vmul.f32 %v636, %v364
    %v639 = vmul.f32 %v636, %v365
    %v640 = vmul.f32 %v636, %v366
    %v641 = vmul.f32 %v636, %v367
    %v642 = vmul.f32 %v636, %v368
    %v643 = vmul.f32 %v636, %v369
    %v644 = vmul.f32 %v636, %v370
    %v653 = vrot.slane %v637, 2
    %v654 = vrot.slane %v638, 2
    %v655 = vrot.slane %v639, 2
    %v656 = vrot.slane %v640, 2
    %v657 = vrot.slane %v641, 2
    %v658 = vrot.slane %v642, 2
    %v659 = vrot.slane %v643, 2
    %v660 = vrot.slane %v644, 2
    %v669 = vadd.f32 %v627, %v653
    %v670 = vadd.f32 %v628, %v654
    %v671 = vadd.f32 %v629, %v655
    %v672 = vadd.f32 %v630, %v656
    %v673 = vadd.f32 %v631, %v657
    %v674 = vadd.f32 %v632, %v658
    %v675 = vadd.f32 %v633, %v659
    %v676 = vadd.f32 %v634, %v660
    %s677 = scalar_lea.vmem [#allocation4], 160
    %v678 = vld [vmem:[%s677] sm:$0xff]
    %v679 = vld [vmem:[%s677 + $0x8] sm:$0xff]
    %v680 = vld [vmem:[%s677 + $0x10] sm:$0xff]
    %v681 = vld [vmem:[%s677 + $0x18] sm:$0xff]
    %v682 = vld [vmem:[%s677 + $0x20] sm:$0xff]
    %v683 = vld [vmem:[%s677 + $0x28] sm:$0xff]
    %v684 = vld [vmem:[%s677 + $0x30] sm:$0xff]
    %v685 = vld [vmem:[%s677 + $0x38] sm:$0xff]
    %v686 = vld [vmem:[%s677 + $0x40] sm:$0xff]
    %v687 = vld [vmem:[%s677 + $0x48] sm:$0xff]
    %s688 = sld [smem:[#allocation8 + $0x12]]
    %v689 = vstv %s688
    %v690 = vmul.f32 %v689, %v678
    %v691 = vmul.f32 %v689, %v679
    %v692 = vmul.f32 %v689, %v680
    %v693 = vmul.f32 %v689, %v681
    %v694 = vmul.f32 %v689, %v682
    %v695 = vmul.f32 %v689, %v683
    %v696 = vmul.f32 %v689, %v684
    %v697 = vmul.f32 %v689, %v685
    %v698 = vadd.f32 %v669, %v690
    %v699 = vadd.f32 %v670, %v691
    %v700 = vadd.f32 %v671, %v692
    %v701 = vadd.f32 %v672, %v693
    %v702 = vadd.f32 %v673, %v694
    %v703 = vadd.f32 %v674, %v695
    %v704 = vadd.f32 %v675, %v696
    %v705 = vadd.f32 %v676, %v697
    %s706 = sld [smem:[#allocation8 + $0x13]]
    %v707 = vstv %s706
    %v708 = vmul.f32 %v707, %v678
    %v709 = vmul.f32 %v707, %v679
    %v710 = vmul.f32 %v707, %v680
    %v711 = vmul.f32 %v707, %v681
    %v712 = vmul.f32 %v707, %v682
    %v713 = vmul.f32 %v707, %v683
    %v714 = vmul.f32 %v707, %v684
    %v715 = vmul.f32 %v707, %v685
    %v724 = vrot.slane %v708, 1
    %v725 = vrot.slane %v709, 1
    %v726 = vrot.slane %v710, 1
    %v727 = vrot.slane %v711, 1
    %v728 = vrot.slane %v712, 1
    %v729 = vrot.slane %v713, 1
    %v730 = vrot.slane %v714, 1
    %v731 = vrot.slane %v715, 1
    %v740 = vadd.f32 %v698, %v724
    %v741 = vadd.f32 %v699, %v725
    %v742 = vadd.f32 %v700, %v726
    %v743 = vadd.f32 %v701, %v727
    %v744 = vadd.f32 %v702, %v728
    %v745 = vadd.f32 %v703, %v729
    %v746 = vadd.f32 %v704, %v730
    %v747 = vadd.f32 %v705, %v731
    %s748 = sld [smem:[#allocation8 + $0x14]]
    %v749 = vstv %s748
    %v750 = vmul.f32 %v749, %v678
    %v751 = vmul.f32 %v749, %v679
    %v752 = vmul.f32 %v749, %v680
    %v753 = vmul.f32 %v749, %v681
    %v754 = vmul.f32 %v749, %v682
    %v755 = vmul.f32 %v749, %v683
    %v756 = vmul.f32 %v749, %v684
    %v757 = vmul.f32 %v749, %v685
    %v766 = vrot.slane %v750, 2
    %v767 = vrot.slane %v751, 2
    %v768 = vrot.slane %v752, 2
    %v769 = vrot.slane %v753, 2
    %v770 = vrot.slane %v754, 2
    %v771 = vrot.slane %v755, 2
    %v772 = vrot.slane %v756, 2
    %v773 = vrot.slane %v757, 2
    %v782 = vadd.f32 %v740, %v766
    %v783 = vadd.f32 %v741, %v767
    %v784 = vadd.f32 %v742, %v768
    %v785 = vadd.f32 %v743, %v769
    %v786 = vadd.f32 %v744, %v770
    %v787 = vadd.f32 %v745, %v771
    %v788 = vadd.f32 %v746, %v772
    %v789 = vadd.f32 %v747, %v773
    %s790 = sld [smem:[#allocation8 + $0x15]]
    %v791 = vstv %s790
    %v792 = vmul.f32 %v791, %v679
    %v793 = vmul.f32 %v791, %v680
    %v794 = vmul.f32 %v791, %v681
    %v795 = vmul.f32 %v791, %v682
    %v796 = vmul.f32 %v791, %v683
    %v797 = vmul.f32 %v791, %v684
    %v798 = vmul.f32 %v791, %v685
    %v799 = vmul.f32 %v791, %v686
    %v800 = vadd.f32 %v782, %v792
    %v801 = vadd.f32 %v783, %v793
    %v802 = vadd.f32 %v784, %v794
    %v803 = vadd.f32 %v785, %v795
    %v804 = vadd.f32 %v786, %v796
    %v805 = vadd.f32 %v787, %v797
    %v806 = vadd.f32 %v788, %v798
    %v807 = vadd.f32 %v789, %v799
    %s808 = sld [smem:[#allocation8 + $0x16]]
    %v809 = vstv %s808
    %v810 = vmul.f32 %v809, %v679
    %v811 = vmul.f32 %v809, %v680
    %v812 = vmul.f32 %v809, %v681
    %v813 = vmul.f32 %v809, %v682
    %v814 = vmul.f32 %v809, %v683
    %v815 = vmul.f32 %v809, %v684
    %v816 = vmul.f32 %v809, %v685
    %v817 = vmul.f32 %v809, %v686
    %v826 = vrot.slane %v810, 1
    %v827 = vrot.slane %v811, 1
    %v828 = vrot.slane %v812, 1
    %v829 = vrot.slane %v813, 1
    %v830 = vrot.slane %v814, 1
    %v831 = vrot.slane %v815, 1
    %v832 = vrot.slane %v816, 1
    %v833 = vrot.slane %v817, 1
    %v842 = vadd.f32 %v800, %v826
    %v843 = vadd.f32 %v801, %v827
    %v844 = vadd.f32 %v802, %v828
    %v845 = vadd.f32 %v803, %v829
    %v846 = vadd.f32 %v804, %v830
    %v847 = vadd.f32 %v805, %v831
    %v848 = vadd.f32 %v806, %v832
    %v849 = vadd.f32 %v807, %v833
    %s850 = sld [smem:[#allocation8 + $0x17]]
    %v851 = vstv %s850
    %v852 = vmul.f32 %v851, %v679
    %v853 = vmul.f32 %v851, %v680
    %v854 = vmul.f32 %v851, %v681
    %v855 = vmul.f32 %v851, %v682
    %v856 = vmul.f32 %v851, %v683
    %v857 = vmul.f32 %v851, %v684
    %v858 = vmul.f32 %v851, %v685
    %v859 = vmul.f32 %v851, %v686
    %v868 = vrot.slane %v852, 2
    %v869 = vrot.slane %v853, 2
    %v870 = vrot.slane %v854, 2
    %v871 = vrot.slane %v855, 2
    %v872 = vrot.slane %v856, 2
    %v873 = vrot.slane %v857, 2
    %v874 = vrot.slane %v858, 2
    %v875 = vrot.slane %v859, 2
    %v884 = vadd.f32 %v842, %v868
    %v885 = vadd.f32 %v843, %v869
    %v886 = vadd.f32 %v844, %v870
    %v887 = vadd.f32 %v845, %v871
    %v888 = vadd.f32 %v846, %v872
    %v889 = vadd.f32 %v847, %v873
    %v890 = vadd.f32 %v848, %v874
    %v891 = vadd.f32 %v849, %v875
    %s892 = sld [smem:[#allocation8 + $0x18]]
    %v893 = vstv %s892
    %v894 = vmul.f32 %v893, %v680
    %v895 = vmul.f32 %v893, %v681
    %v896 = vmul.f32 %v893, %v682
    %v897 = vmul.f32 %v893, %v683
    %v898 = vmul.f32 %v893, %v684
    %v899 = vmul.f32 %v893, %v685
    %v900 = vmul.f32 %v893, %v686
    %v901 = vmul.f32 %v893, %v687
    %v902 = vadd.f32 %v884, %v894
    %v903 = vadd.f32 %v885, %v895
    %v904 = vadd.f32 %v886, %v896
    %v905 = vadd.f32 %v887, %v897
    %v906 = vadd.f32 %v888, %v898
    %v907 = vadd.f32 %v889, %v899
    %v908 = vadd.f32 %v890, %v900
    %v909 = vadd.f32 %v891, %v901
    %s910 = sld [smem:[#allocation8 + $0x19]]
    %v911 = vstv %s910
    %v912 = vmul.f32 %v911, %v680
    %v913 = vmul.f32 %v911, %v681
    %v914 = vmul.f32 %v911, %v682
    %v915 = vmul.f32 %v911, %v683
    %v916 = vmul.f32 %v911, %v684
    %v917 = vmul.f32 %v911, %v685
    %v918 = vmul.f32 %v911, %v686
    %v919 = vmul.f32 %v911, %v687
    %v928 = vrot.slane %v912, 1
    %v929 = vrot.slane %v913, 1
    %v930 = vrot.slane %v914, 1
    %v931 = vrot.slane %v915, 1
    %v932 = vrot.slane %v916, 1
    %v933 = vrot.slane %v917, 1
    %v934 = vrot.slane %v918, 1
    %v935 = vrot.slane %v919, 1
    %v944 = vadd.f32 %v902, %v928
    %v945 = vadd.f32 %v903, %v929
    %v946 = vadd.f32 %v904, %v930
    %v947 = vadd.f32 %v905, %v931
    %v948 = vadd.f32 %v906, %v932
    %v949 = vadd.f32 %v907, %v933
    %v950 = vadd.f32 %v908, %v934
    %v951 = vadd.f32 %v909, %v935
    %s952 = sld [smem:[#allocation8 + $0x1a]]
    %v953 = vstv %s952
    %v954 = vmul.f32 %v953, %v680
    %v955 = vmul.f32 %v953, %v681
    %v956 = vmul.f32 %v953, %v682
    %v957 = vmul.f32 %v953, %v683
    %v958 = vmul.f32 %v953, %v684
    %v959 = vmul.f32 %v953, %v685
    %v960 = vmul.f32 %v953, %v686
    %v961 = vmul.f32 %v953, %v687
    %v970 = vrot.slane %v954, 2
    %v971 = vrot.slane %v955, 2
    %v972 = vrot.slane %v956, 2
    %v973 = vrot.slane %v957, 2
    %v974 = vrot.slane %v958, 2
    %v975 = vrot.slane %v959, 2
    %v976 = vrot.slane %v960, 2
    %v977 = vrot.slane %v961, 2
    %v986 = vadd.f32 %v944, %v970
    %v987 = vadd.f32 %v945, %v971
    %v988 = vadd.f32 %v946, %v972
    %v989 = vadd.f32 %v947, %v973
    %v990 = vadd.f32 %v948, %v974
    %v991 = vadd.f32 %v949, %v975
    %v992 = vadd.f32 %v950, %v976
    %v993 = vadd.f32 %v951, %v977
    %v994 = vmul.f32 %v63, %v361
    %v995 = vmul.f32 %v63, %v362
    %v996 = vmul.f32 %v63, %v363
    %v997 = vmul.f32 %v63, %v364
    %v998 = vmul.f32 %v63, %v365
    %v999 = vmul.f32 %v63, %v366
    %v1000 = vmul.f32 %v63, %v367
    %v1001 = vmul.f32 %v63, %v368
    %v1002 = vmul.f32 %v73, %v361
    %v1003 = vmul.f32 %v73, %v362
    %v1004 = vmul.f32 %v73, %v363
    %v1005 = vmul.f32 %v73, %v364
    %v1006 = vmul.f32 %v73, %v365
    %v1007 = vmul.f32 %v73, %v366
    %v1008 = vmul.f32 %v73, %v367
    %v1009 = vmul.f32 %v73, %v368
    %v1018 = vrot.slane %v1002, 1
    %v1019 = vrot.slane %v1003, 1
    %v1020 = vrot.slane %v1004, 1
    %v1021 = vrot.slane %v1005, 1
    %v1022 = vrot.slane %v1006, 1
    %v1023 = vrot.slane %v1007, 1
    %v1024 = vrot.slane %v1008, 1
    %v1025 = vrot.slane %v1009, 1
    %v1034 = vadd.f32 %v994, %v1018
    %v1035 = vadd.f32 %v995, %v1019
    %v1036 = vadd.f32 %v996, %v1020
    %v1037 = vadd.f32 %v997, %v1021
    %v1038 = vadd.f32 %v998, %v1022
    %v1039 = vadd.f32 %v999, %v1023
    %v1040 = vadd.f32 %v1000, %v1024
    %v1041 = vadd.f32 %v1001, %v1025
    %v1042 = vmul.f32 %v115, %v361
    %v1043 = vmul.f32 %v115, %v362
    %v1044 = vmul.f32 %v115, %v363
    %v1045 = vmul.f32 %v115, %v364
    %v1046 = vmul.f32 %v115, %v365
    %v1047 = vmul.f32 %v115, %v366
    %v1048 = vmul.f32 %v115, %v367
    %v1049 = vmul.f32 %v115, %v368
    %v1058 = vrot.slane %v1042, 2
    %v1059 = vrot.slane %v1043, 2
    %v1060 = vrot.slane %v1044, 2
    %v1061 = vrot.slane %v1045, 2
    %v1062 = vrot.slane %v1046, 2
    %v1063 = vrot.slane %v1047, 2
    %v1064 = vrot.slane %v1048, 2
    %v1065 = vrot.slane %v1049, 2
    %v1074 = vadd.f32 %v1034, %v1058
    %v1075 = vadd.f32 %v1035, %v1059
    %v1076 = vadd.f32 %v1036, %v1060
    %v1077 = vadd.f32 %v1037, %v1061
    %v1078 = vadd.f32 %v1038, %v1062
    %v1079 = vadd.f32 %v1039, %v1063
    %v1080 = vadd.f32 %v1040, %v1064
    %v1081 = vadd.f32 %v1041, %v1065
    %v1082 = vmul.f32 %v157, %v362
    %v1083 = vmul.f32 %v157, %v363
    %v1084 = vmul.f32 %v157, %v364
    %v1085 = vmul.f32 %v157, %v365
    %v1086 = vmul.f32 %v157, %v366
    %v1087 = vmul.f32 %v157, %v367
    %v1088 = vmul.f32 %v157, %v368
    %v1089 = vmul.f32 %v157, %v369
    %v1090 = vadd.f32 %v1074, %v1082
    %v1091 = vadd.f32 %v1075, %v1083
    %v1092 = vadd.f32 %v1076, %v1084
    %v1093 = vadd.f32 %v1077, %v1085
    %v1094 = vadd.f32 %v1078, %v1086
    %v1095 = vadd.f32 %v1079, %v1087
    %v1096 = vadd.f32 %v1080, %v1088
    %v1097 = vadd.f32 %v1081, %v1089
    %v1098 = vmul.f32 %v175, %v362
    %v1099 = vmul.f32 %v175, %v363
    %v1100 = vmul.f32 %v175, %v364
    %v1101 = vmul.f32 %v175, %v365
    %v1102 = vmul.f32 %v175, %v366
    %v1103 = vmul.f32 %v175, %v367
    %v1104 = vmul.f32 %v175, %v368
    %v1105 = vmul.f32 %v175, %v369
    %v1114 = vrot.slane %v1098, 1
    %v1115 = vrot.slane %v1099, 1
    %v1116 = vrot.slane %v1100, 1
    %v1117 = vrot.slane %v1101, 1
    %v1118 = vrot.slane %v1102, 1
    %v1119 = vrot.slane %v1103, 1
    %v1120 = vrot.slane %v1104, 1
    %v1121 = vrot.slane %v1105, 1
    %v1130 = vadd.f32 %v1090, %v1114
    %v1131 = vadd.f32 %v1091, %v1115
    %v1132 = vadd.f32 %v1092, %v1116
    %v1133 = vadd.f32 %v1093, %v1117
    %v1134 = vadd.f32 %v1094, %v1118
    %v1135 = vadd.f32 %v1095, %v1119
    %v1136 = vadd.f32 %v1096, %v1120
    %v1137 = vadd.f32 %v1097, %v1121
    %v1138 = vmul.f32 %v217, %v362
    %v1139 = vmul.f32 %v217, %v363
    %v1140 = vmul.f32 %v217, %v364
    %v1141 = vmul.f32 %v217, %v365
    %v1142 = vmul.f32 %v217, %v366
    %v1143 = vmul.f32 %v217, %v367
    %v1144 = vmul.f32 %v217, %v368
    %v1145 = vmul.f32 %v217, %v369
    %v1154 = vrot.slane %v1138, 2
    %v1155 = vrot.slane %v1139, 2
    %v1156 = vrot.slane %v1140, 2
    %v1157 = vrot.slane %v1141, 2
    %v1158 = vrot.slane %v1142, 2
    %v1159 = vrot.slane %v1143, 2
    %v1160 = vrot.slane %v1144, 2
    %v1161 = vrot.slane %v1145, 2
    %v1170 = vadd.f32 %v1130, %v1154
    %v1171 = vadd.f32 %v1131, %v1155
    %v1172 = vadd.f32 %v1132, %v1156
    %v1173 = vadd.f32 %v1133, %v1157
    %v1174 = vadd.f32 %v1134, %v1158
    %v1175 = vadd.f32 %v1135, %v1159
    %v1176 = vadd.f32 %v1136, %v1160
    %v1177 = vadd.f32 %v1137, %v1161
    %v1178 = vmul.f32 %v259, %v363
    %v1179 = vmul.f32 %v259, %v364
    %v1180 = vmul.f32 %v259, %v365
    %v1181 = vmul.f32 %v259, %v366
    %v1182 = vmul.f32 %v259, %v367
    %v1183 = vmul.f32 %v259, %v368
    %v1184 = vmul.f32 %v259, %v369
    %v1185 = vmul.f32 %v259, %v370
    %v1186 = vadd.f32 %v1170, %v1178
    %v1187 = vadd.f32 %v1171, %v1179
    %v1188 = vadd.f32 %v1172, %v1180
    %v1189 = vadd.f32 %v1173, %v1181
    %v1190 = vadd.f32 %v1174, %v1182
    %v1191 = vadd.f32 %v1175, %v1183
    %v1192 = vadd.f32 %v1176, %v1184
    %v1193 = vadd.f32 %v1177, %v1185
    %v1194 = vmul.f32 %v277, %v363
    %v1195 = vmul.f32 %v277, %v364
    %v1196 = vmul.f32 %v277, %v365
    %v1197 = vmul.f32 %v277, %v366
    %v1198 = vmul.f32 %v277, %v367
    %v1199 = vmul.f32 %v277, %v368
    %v1200 = vmul.f32 %v277, %v369
    %v1201 = vmul.f32 %v277, %v370
    %v1210 = vrot.slane %v1194, 1
    %v1211 = vrot.slane %v1195, 1
    %v1212 = vrot.slane %v1196, 1
    %v1213 = vrot.slane %v1197, 1
    %v1214 = vrot.slane %v1198, 1
    %v1215 = vrot.slane %v1199, 1
    %v1216 = vrot.slane %v1200, 1
    %v1217 = vrot.slane %v1201, 1
    %v1226 = vadd.f32 %v1186, %v1210
    %v1227 = vadd.f32 %v1187, %v1211
    %v1228 = vadd.f32 %v1188, %v1212
    %v1229 = vadd.f32 %v1189, %v1213
    %v1230 = vadd.f32 %v1190, %v1214
    %v1231 = vadd.f32 %v1191, %v1215
    %v1232 = vadd.f32 %v1192, %v1216
    %v1233 = vadd.f32 %v1193, %v1217
    %v1234 = vmul.f32 %v319, %v363
    %v1235 = vmul.f32 %v319, %v364
    %v1236 = vmul.f32 %v319, %v365
    %v1237 = vmul.f32 %v319, %v366
    %v1238 = vmul.f32 %v319, %v367
    %v1239 = vmul.f32 %v319, %v368
    %v1240 = vmul.f32 %v319, %v369
    %v1241 = vmul.f32 %v319, %v370
    %v1250 = vrot.slane %v1234, 2
    %v1251 = vrot.slane %v1235, 2
    %v1252 = vrot.slane %v1236, 2
    %v1253 = vrot.slane %v1237, 2
    %v1254 = vrot.slane %v1238, 2
    %v1255 = vrot.slane %v1239, 2
    %v1256 = vrot.slane %v1240, 2
    %v1257 = vrot.slane %v1241, 2
    %v1266 = vadd.f32 %v1226, %v1250
    %v1267 = vadd.f32 %v1227, %v1251
    %v1268 = vadd.f32 %v1228, %v1252
    %v1269 = vadd.f32 %v1229, %v1253
    %v1270 = vadd.f32 %v1230, %v1254
    %v1271 = vadd.f32 %v1231, %v1255
    %v1272 = vadd.f32 %v1232, %v1256
    %v1273 = vadd.f32 %v1233, %v1257
    %v1274 = vmul.f32 %v372, %v678
    %v1275 = vmul.f32 %v372, %v679
    %v1276 = vmul.f32 %v372, %v680
    %v1277 = vmul.f32 %v372, %v681
    %v1278 = vmul.f32 %v372, %v682
    %v1279 = vmul.f32 %v372, %v683
    %v1280 = vmul.f32 %v372, %v684
    %v1281 = vmul.f32 %v372, %v685
    %v1282 = vadd.f32 %v1266, %v1274
    %v1283 = vadd.f32 %v1267, %v1275
    %v1284 = vadd.f32 %v1268, %v1276
    %v1285 = vadd.f32 %v1269, %v1277
    %v1286 = vadd.f32 %v1270, %v1278
    %v1287 = vadd.f32 %v1271, %v1279
    %v1288 = vadd.f32 %v1272, %v1280
    %v1289 = vadd.f32 %v1273, %v1281
    %v1290 = vmul.f32 %v390, %v678
    %v1291 = vmul.f32 %v390, %v679
    %v1292 = vmul.f32 %v390, %v680
    %v1293 = vmul.f32 %v390, %v681
    %v1294 = vmul.f32 %v390, %v682
    %v1295 = vmul.f32 %v390, %v683
    %v1296 = vmul.f32 %v390, %v684
    %v1297 = vmul.f32 %v390, %v685
    %v1306 = vrot.slane %v1290, 1
    %v1307 = vrot.slane %v1291, 1
    %v1308 = vrot.slane %v1292, 1
    %v1309 = vrot.slane %v1293, 1
    %v1310 = vrot.slane %v1294, 1
    %v1311 = vrot.slane %v1295, 1
    %v1312 = vrot.slane %v1296, 1
    %v1313 = vrot.slane %v1297, 1
    %v1322 = vadd.f32 %v1282, %v1306
    %v1323 = vadd.f32 %v1283, %v1307
    %v1324 = vadd.f32 %v1284, %v1308
    %v1325 = vadd.f32 %v1285, %v1309
    %v1326 = vadd.f32 %v1286, %v1310
    %v1327 = vadd.f32 %v1287, %v1311
    %v1328 = vadd.f32 %v1288, %v1312
    %v1329 = vadd.f32 %v1289, %v1313
    %v1330 = vmul.f32 %v432, %v678
    %v1331 = vmul.f32 %v432, %v679
    %v1332 = vmul.f32 %v432, %v680
    %v1333 = vmul.f32 %v432, %v681
    %v1334 = vmul.f32 %v432, %v682
    %v1335 = vmul.f32 %v432, %v683
    %v1336 = vmul.f32 %v432, %v684
    %v1337 = vmul.f32 %v432, %v685
    %v1346 = vrot.slane %v1330, 2
    %v1347 = vrot.slane %v1331, 2
    %v1348 = vrot.slane %v1332, 2
    %v1349 = vrot.slane %v1333, 2
    %v1350 = vrot.slane %v1334, 2
    %v1351 = vrot.slane %v1335, 2
    %v1352 = vrot.slane %v1336, 2
    %v1353 = vrot.slane %v1337, 2
    %v1362 = vadd.f32 %v1322, %v1346
    %v1363 = vadd.f32 %v1323, %v1347
    %v1364 = vadd.f32 %v1324, %v1348
    %v1365 = vadd.f32 %v1325, %v1349
    %v1366 = vadd.f32 %v1326, %v1350
    %v1367 = vadd.f32 %v1327, %v1351
    %v1368 = vadd.f32 %v1328, %v1352
    %v1369 = vadd.f32 %v1329, %v1353
    %v1370 = vmul.f32 %v474, %v679
    %v1371 = vmul.f32 %v474, %v680
    %v1372 = vmul.f32 %v474, %v681
    %v1373 = vmul.f32 %v474, %v682
    %v1374 = vmul.f32 %v474, %v683
    %v1375 = vmul.f32 %v474, %v684
    %v1376 = vmul.f32 %v474, %v685
    %v1377 = vmul.f32 %v474, %v686
    %v1378 = vadd.f32 %v1362, %v1370
    %v1379 = vadd.f32 %v1363, %v1371
    %v1380 = vadd.f32 %v1364, %v1372
    %v1381 = vadd.f32 %v1365, %v1373
    %v1382 = vadd.f32 %v1366, %v1374
    %v1383 = vadd.f32 %v1367, %v1375
    %v1384 = vadd.f32 %v1368, %v1376
    %v1385 = vadd.f32 %v1369, %v1377
    %v1386 = vmul.f32 %v492, %v679
    %v1387 = vmul.f32 %v492, %v680
    %v1388 = vmul.f32 %v492, %v681
    %v1389 = vmul.f32 %v492, %v682
    %v1390 = vmul.f32 %v492, %v683
    %v1391 = vmul.f32 %v492, %v684
    %v1392 = vmul.f32 %v492, %v685
    %v1393 = vmul.f32 %v492, %v686
    %v1402 = vrot.slane %v1386, 1
    %v1403 = vrot.slane %v1387, 1
    %v1404 = vrot.slane %v1388, 1
    %v1405 = vrot.slane %v1389, 1
    %v1406 = vrot.slane %v1390, 1
    %v1407 = vrot.slane %v1391, 1
    %v1408 = vrot.slane %v1392, 1
    %v1409 = vrot.slane %v1393, 1
    %v1418 = vadd.f32 %v1378, %v1402
    %v1419 = vadd.f32 %v1379, %v1403
    %v1420 = vadd.f32 %v1380, %v1404
    %v1421 = vadd.f32 %v1381, %v1405
    %v1422 = vadd.f32 %v1382, %v1406
    %v1423 = vadd.f32 %v1383, %v1407
    %v1424 = vadd.f32 %v1384, %v1408
    %v1425 = vadd.f32 %v1385, %v1409
    %v1426 = vmul.f32 %v534, %v679
    %v1427 = vmul.f32 %v534, %v680
    %v1428 = vmul.f32 %v534, %v681
    %v1429 = vmul.f32 %v534, %v682
    %v1430 = vmul.f32 %v534, %v683
    %v1431 = vmul.f32 %v534, %v684
    %v1432 = vmul.f32 %v534, %v685
    %v1433 = vmul.f32 %v534, %v686
    %v1442 = vrot.slane %v1426, 2
    %v1443 = vrot.slane %v1427, 2
    %v1444 = vrot.slane %v1428, 2
    %v1445 = vrot.slane %v1429, 2
    %v1446 = vrot.slane %v1430, 2
    %v1447 = vrot.slane %v1431, 2
    %v1448 = vrot.slane %v1432, 2
    %v1449 = vrot.slane %v1433, 2
    %v1458 = vadd.f32 %v1418, %v1442
    %v1459 = vadd.f32 %v1419, %v1443
    %v1460 = vadd.f32 %v1420, %v1444
    %v1461 = vadd.f32 %v1421, %v1445
    %v1462 = vadd.f32 %v1422, %v1446
    %v1463 = vadd.f32 %v1423, %v1447
    %v1464 = vadd.f32 %v1424, %v1448
    %v1465 = vadd.f32 %v1425, %v1449
    %v1466 = vmul.f32 %v576, %v680
    %v1467 = vmul.f32 %v576, %v681
    %v1468 = vmul.f32 %v576, %v682
    %v1469 = vmul.f32 %v576, %v683
    %v1470 = vmul.f32 %v576, %v684
    %v1471 = vmul.f32 %v576, %v685
    %v1472 = vmul.f32 %v576, %v686
    %v1473 = vmul.f32 %v576, %v687
    %v1474 = vadd.f32 %v1458, %v1466
    %v1475 = vadd.f32 %v1459, %v1467
    %v1476 = vadd.f32 %v1460, %v1468
    %v1477 = vadd.f32 %v1461, %v1469
    %v1478 = vadd.f32 %v1462, %v1470
    %v1479 = vadd.f32 %v1463, %v1471
    %v1480 = vadd.f32 %v1464, %v1472
    %v1481 = vadd.f32 %v1465, %v1473
    %v1482 = vmul.f32 %v594, %v680
    %v1483 = vmul.f32 %v594, %v681
    %v1484 = vmul.f32 %v594, %v682
    %v1485 = vmul.f32 %v594, %v683
    %v1486 = vmul.f32 %v594, %v684
    %v1487 = vmul.f32 %v594, %v685
    %v1488 = vmul.f32 %v594, %v686
    %v1489 = vmul.f32 %v594, %v687
    %v1498 = vrot.slane %v1482, 1
    %v1499 = vrot.slane %v1483, 1
    %v1500 = vrot.slane %v1484, 1
    %v1501 = vrot.slane %v1485, 1
    %v1502 = vrot.slane %v1486, 1
    %v1503 = vrot.slane %v1487, 1
    %v1504 = vrot.slane %v1488, 1
    %v1505 = vrot.slane %v1489, 1
    %v1514 = vadd.f32 %v1474, %v1498
    %v1515 = vadd.f32 %v1475, %v1499
    %v1516 = vadd.f32 %v1476, %v1500
    %v1517 = vadd.f32 %v1477, %v1501
    %v1518 = vadd.f32 %v1478, %v1502
    %v1519 = vadd.f32 %v1479, %v1503
    %v1520 = vadd.f32 %v1480, %v1504
    %v1521 = vadd.f32 %v1481, %v1505
    %v1522 = vmul.f32 %v636, %v680
    %v1523 = vmul.f32 %v636, %v681
    %v1524 = vmul.f32 %v636, %v682
    %v1525 = vmul.f32 %v636, %v683
    %v1526 = vmul.f32 %v636, %v684
    %v1527 = vmul.f32 %v636, %v685
    %v1528 = vmul.f32 %v636, %v686
    %v1529 = vmul.f32 %v636, %v687
    %v1538 = vrot.slane %v1522, 2
    %v1539 = vrot.slane %v1523, 2
    %v1540 = vrot.slane %v1524, 2
    %v1541 = vrot.slane %v1525, 2
    %v1542 = vrot.slane %v1526, 2
    %v1543 = vrot.slane %v1527, 2
    %v1544 = vrot.slane %v1528, 2
    %v1545 = vrot.slane %v1529, 2
    %v1554 = vadd.f32 %v1514, %v1538
    %v1555 = vadd.f32 %v1515, %v1539
    %v1556 = vadd.f32 %v1516, %v1540
    %v1557 = vadd.f32 %v1517, %v1541
    %v1558 = vadd.f32 %v1518, %v1542
    %v1559 = vadd.f32 %v1519, %v1543
    %v1560 = vadd.f32 %v1520, %v1544
    %v1561 = vadd.f32 %v1521, %v1545
    %s1562 = scalar_lea.vmem [#allocation4], 240
    %v1563 = vld [vmem:[%s1562] sm:$0xff]
    %v1564 = vld [vmem:[%s1562 + $0x8] sm:$0xff]
    %v1565 = vld [vmem:[%s1562 + $0x10] sm:$0xff]
    %v1566 = vld [vmem:[%s1562 + $0x18] sm:$0xff]
    %v1567 = vld [vmem:[%s1562 + $0x20] sm:$0xff]
    %v1568 = vld [vmem:[%s1562 + $0x28] sm:$0xff]
    %v1569 = vld [vmem:[%s1562 + $0x30] sm:$0xff]
    %v1570 = vld [vmem:[%s1562 + $0x38] sm:$0xff]
    %v1571 = vld [vmem:[%s1562 + $0x40] sm:$0xff]
    %v1572 = vld [vmem:[%s1562 + $0x48] sm:$0xff]
    %v1573 = vmul.f32 %v689, %v1563
    %v1574 = vmul.f32 %v689, %v1564
    %v1575 = vmul.f32 %v689, %v1565
    %v1576 = vmul.f32 %v689, %v1566
    %v1577 = vmul.f32 %v689, %v1567
    %v1578 = vmul.f32 %v689, %v1568
    %v1579 = vmul.f32 %v689, %v1569
    %v1580 = vmul.f32 %v689, %v1570
    %v1581 = vadd.f32 %v1554, %v1573
    %v1582 = vadd.f32 %v1555, %v1574
    %v1583 = vadd.f32 %v1556, %v1575
    %v1584 = vadd.f32 %v1557, %v1576
    %v1585 = vadd.f32 %v1558, %v1577
    %v1586 = vadd.f32 %v1559, %v1578
    %v1587 = vadd.f32 %v1560, %v1579
    %v1588 = vadd.f32 %v1561, %v1580
    %v1589 = vmul.f32 %v707, %v1563
    %v1590 = vmul.f32 %v707, %v1564
    %v1591 = vmul.f32 %v707, %v1565
    %v1592 = vmul.f32 %v707, %v1566
    %v1593 = vmul.f32 %v707, %v1567
    %v1594 = vmul.f32 %v707, %v1568
    %v1595 = vmul.f32 %v707, %v1569
    %v1596 = vmul.f32 %v707, %v1570
    %v1605 = vrot.slane %v1589, 1
    %v1606 = vrot.slane %v1590, 1
    %v1607 = vrot.slane %v1591, 1
    %v1608 = vrot.slane %v1592, 1
    %v1609 = vrot.slane %v1593, 1
    %v1610 = vrot.slane %v1594, 1
    %v1611 = vrot.slane %v1595, 1
    %v1612 = vrot.slane %v1596, 1
    %v1621 = vadd.f32 %v1581, %v1605
    %v1622 = vadd.f32 %v1582, %v1606
    %v1623 = vadd.f32 %v1583, %v1607
    %v1624 = vadd.f32 %v1584, %v1608
    %v1625 = vadd.f32 %v1585, %v1609
    %v1626 = vadd.f32 %v1586, %v1610
    %v1627 = vadd.f32 %v1587, %v1611
    %v1628 = vadd.f32 %v1588, %v1612
    %v1629 = vmul.f32 %v749, %v1563
    %v1630 = vmul.f32 %v749, %v1564
    %v1631 = vmul.f32 %v749, %v1565
    %v1632 = vmul.f32 %v749, %v1566
    %v1633 = vmul.f32 %v749, %v1567
    %v1634 = vmul.f32 %v749, %v1568
    %v1635 = vmul.f32 %v749, %v1569
    %v1636 = vmul.f32 %v749, %v1570
    %v1645 = vrot.slane %v1629, 2
    %v1646 = vrot.slane %v1630, 2
    %v1647 = vrot.slane %v1631, 2
    %v1648 = vrot.slane %v1632, 2
    %v1649 = vrot.slane %v1633, 2
    %v1650 = vrot.slane %v1634, 2
    %v1651 = vrot.slane %v1635, 2
    %v1652 = vrot.slane %v1636, 2
    %v1661 = vadd.f32 %v1621, %v1645
    %v1662 = vadd.f32 %v1622, %v1646
    %v1663 = vadd.f32 %v1623, %v1647
    %v1664 = vadd.f32 %v1624, %v1648
    %v1665 = vadd.f32 %v1625, %v1649
    %v1666 = vadd.f32 %v1626, %v1650
    %v1667 = vadd.f32 %v1627, %v1651
    %v1668 = vadd.f32 %v1628, %v1652
    %v1669 = vmul.f32 %v791, %v1564
    %v1670 = vmul.f32 %v791, %v1565
    %v1671 = vmul.f32 %v791, %v1566
    %v1672 = vmul.f32 %v791, %v1567
    %v1673 = vmul.f32 %v791, %v1568
    %v1674 = vmul.f32 %v791, %v1569
    %v1675 = vmul.f32 %v791, %v1570
    %v1676 = vmul.f32 %v791, %v1571
    %v1677 = vadd.f32 %v1661, %v1669
    %v1678 = vadd.f32 %v1662, %v1670
    %v1679 = vadd.f32 %v1663, %v1671
    %v1680 = vadd.f32 %v1664, %v1672
    %v1681 = vadd.f32 %v1665, %v1673
    %v1682 = vadd.f32 %v1666, %v1674
    %v1683 = vadd.f32 %v1667, %v1675
    %v1684 = vadd.f32 %v1668, %v1676
    %v1685 = vmul.f32 %v809, %v1564
    %v1686 = vmul.f32 %v809, %v1565
    %v1687 = vmul.f32 %v809, %v1566
    %v1688 = vmul.f32 %v809, %v1567
    %v1689 = vmul.f32 %v809, %v1568
    %v1690 = vmul.f32 %v809, %v1569
    %v1691 = vmul.f32 %v809, %v1570
    %v1692 = vmul.f32 %v809, %v1571
    %v1701 = vrot.slane %v1685, 1
    %v1702 = vrot.slane %v1686, 1
    %v1703 = vrot.slane %v1687, 1
    %v1704 = vrot.slane %v1688, 1
    %v1705 = vrot.slane %v1689, 1
    %v1706 = vrot.slane %v1690, 1
    %v1707 = vrot.slane %v1691, 1
    %v1708 = vrot.slane %v1692, 1
    %v1717 = vadd.f32 %v1677, %v1701
    %v1718 = vadd.f32 %v1678, %v1702
    %v1719 = vadd.f32 %v1679, %v1703
    %v1720 = vadd.f32 %v1680, %v1704
    %v1721 = vadd.f32 %v1681, %v1705
    %v1722 = vadd.f32 %v1682, %v1706
    %v1723 = vadd.f32 %v1683, %v1707
    %v1724 = vadd.f32 %v1684, %v1708
    %v1725 = vmul.f32 %v851, %v1564
    %v1726 = vmul.f32 %v851, %v1565
    %v1727 = vmul.f32 %v851, %v1566
    %v1728 = vmul.f32 %v851, %v1567
    %v1729 = vmul.f32 %v851, %v1568
    %v1730 = vmul.f32 %v851, %v1569
    %v1731 = vmul.f32 %v851, %v1570
    %v1732 = vmul.f32 %v851, %v1571
    %v1741 = vrot.slane %v1725, 2
    %v1742 = vrot.slane %v1726, 2
    %v1743 = vrot.slane %v1727, 2
    %v1744 = vrot.slane %v1728, 2
    %v1745 = vrot.slane %v1729, 2
    %v1746 = vrot.slane %v1730, 2
    %v1747 = vrot.slane %v1731, 2
    %v1748 = vrot.slane %v1732, 2
    %v1757 = vadd.f32 %v1717, %v1741
    %v1758 = vadd.f32 %v1718, %v1742
    %v1759 = vadd.f32 %v1719, %v1743
    %v1760 = vadd.f32 %v1720, %v1744
    %v1761 = vadd.f32 %v1721, %v1745
    %v1762 = vadd.f32 %v1722, %v1746
    %v1763 = vadd.f32 %v1723, %v1747
    %v1764 = vadd.f32 %v1724, %v1748
    %v1765 = vmul.f32 %v893, %v1565
    %v1766 = vmul.f32 %v893, %v1566
    %v1767 = vmul.f32 %v893, %v1567
    %v1768 = vmul.f32 %v893, %v1568
    %v1769 = vmul.f32 %v893, %v1569
    %v1770 = vmul.f32 %v893, %v1570
    %v1771 = vmul.f32 %v893, %v1571
    %v1772 = vmul.f32 %v893, %v1572
    %v1773 = vadd.f32 %v1757, %v1765
    %v1774 = vadd.f32 %v1758, %v1766
    %v1775 = vadd.f32 %v1759, %v1767
    %v1776 = vadd.f32 %v1760, %v1768
    %v1777 = vadd.f32 %v1761, %v1769
    %v1778 = vadd.f32 %v1762, %v1770
    %v1779 = vadd.f32 %v1763, %v1771
    %v1780 = vadd.f32 %v1764, %v1772
    %v1781 = vmul.f32 %v911, %v1565
    %v1782 = vmul.f32 %v911, %v1566
    %v1783 = vmul.f32 %v911, %v1567
    %v1784 = vmul.f32 %v911, %v1568
    %v1785 = vmul.f32 %v911, %v1569
    %v1786 = vmul.f32 %v911, %v1570
    %v1787 = vmul.f32 %v911, %v1571
    %v1788 = vmul.f32 %v911, %v1572
    %v1797 = vrot.slane %v1781, 1
    %v1798 = vrot.slane %v1782, 1
    %v1799 = vrot.slane %v1783, 1
    %v1800 = vrot.slane %v1784, 1
    %v1801 = vrot.slane %v1785, 1
    %v1802 = vrot.slane %v1786, 1
    %v1803 = vrot.slane %v1787, 1
    %v1804 = vrot.slane %v1788, 1
    %v1813 = vadd.f32 %v1773, %v1797
    %v1814 = vadd.f32 %v1774, %v1798
    %v1815 = vadd.f32 %v1775, %v1799
    %v1816 = vadd.f32 %v1776, %v1800
    %v1817 = vadd.f32 %v1777, %v1801
    %v1818 = vadd.f32 %v1778, %v1802
    %v1819 = vadd.f32 %v1779, %v1803
    %v1820 = vadd.f32 %v1780, %v1804
    %v1821 = vmul.f32 %v953, %v1565
    %v1822 = vmul.f32 %v953, %v1566
    %v1823 = vmul.f32 %v953, %v1567
    %v1824 = vmul.f32 %v953, %v1568
    %v1825 = vmul.f32 %v953, %v1569
    %v1826 = vmul.f32 %v953, %v1570
    %v1827 = vmul.f32 %v953, %v1571
    %v1828 = vmul.f32 %v953, %v1572
    %v1837 = vrot.slane %v1821, 2
    %v1838 = vrot.slane %v1822, 2
    %v1839 = vrot.slane %v1823, 2
    %v1840 = vrot.slane %v1824, 2
    %v1841 = vrot.slane %v1825, 2
    %v1842 = vrot.slane %v1826, 2
    %v1843 = vrot.slane %v1827, 2
    %v1844 = vrot.slane %v1828, 2
    %v1853 = vadd.f32 %v1813, %v1837
    %v1854 = vadd.f32 %v1814, %v1838
    %v1855 = vadd.f32 %v1815, %v1839
    %v1856 = vadd.f32 %v1816, %v1840
    %v1857 = vadd.f32 %v1817, %v1841
    %v1858 = vadd.f32 %v1818, %v1842
    %v1859 = vadd.f32 %v1819, %v1843
    %v1860 = vadd.f32 %v1820, %v1844
    %v1861 = vmax.f32 %v986, %v1853
    %v1862 = vmax.f32 %v987, %v1854
    %v1863 = vmax.f32 %v988, %v1855
    %v1864 = vmax.f32 %v989, %v1856
    %v1865 = vmax.f32 %v990, %v1857
    %v1866 = vmax.f32 %v991, %v1858
    %v1867 = vmax.f32 %v992, %v1859
    %v1868 = vmax.f32 %v993, %v1860
    %v1869 = vmax.f32 %v1861, %v1862
    %v1871 = vrot.slane %v1869, 1
    %v1873 = vmax.f32 %v1869, %v1871
    %v1874 = vstv %s50
    %v1875 = vadd.f32 %v1873, %v1874
    %v1876 = vtanh.pop %v1875
    %v1877 = vld [vmem:[%s3] sm:$0x1f]
    %v1878 = vmul.f32 %v1877, %v1876
    %v1879 = vadd.f32 %v1878, 0.0
    %v1880 = vmax.f32 %v1863, %v1864
    %v1882 = vrot.slane %v1880, 1
    %v1884 = vmax.f32 %v1880, %v1882
    %v1885 = vadd.f32 %v1884, %v1874
    %v1886 = vtanh.pop %v1885
    %s1887 = scalar_lea.vmem %s3, 8
    %v1888 = vld [vmem:[%s1887] sm:$0x1f]
    %v1889 = vmul.f32 %v1888, %v1886
    %v1890 = vadd.f32 %v1879, %v1889
    %v1891 = vmax.f32 %v1865, %v1866
    %v1893 = vrot.slane %v1891, 1
    %v1895 = vmax.f32 %v1891, %v1893
    %v1896 = vadd.f32 %v1895, %v1874
    %v1897 = vtanh.pop %v1896
    %s1898 = scalar_lea.vmem %s3, 16
    %v1899 = vld [vmem:[%s1898] sm:$0x1f]
    %v1900 = vmul.f32 %v1899, %v1897
    %v1901 = vadd.f32 %v1890, %v1900
    %v1902 = vmax.f32 %v1867, %v1868
    %v1904 = vrot.slane %v1902, 1
    %v1906 = vmax.f32 %v1902, %v1904
    %v1907 = vadd.f32 %v1906, %v1874
    %v1908 = vtanh.pop %v1907
    %s1909 = scalar_lea.vmem %s3, 24
    %v1910 = vld [vmem:[%s1909] sm:$0x1f]
    %v1911 = vmul.f32 %v1910, %v1908
    %v1912 = vadd.f32 %v1901, %v1911
    %v1913 = vmul.f32 %v63, %v678
    %v1914 = vmul.f32 %v63, %v679
    %v1915 = vmul.f32 %v63, %v680
    %v1916 = vmul.f32 %v63, %v681
    %v1917 = vmul.f32 %v63, %v682
    %v1918 = vmul.f32 %v63, %v683
    %v1919 = vmul.f32 %v63, %v684
    %v1920 = vmul.f32 %v63, %v685
    %v1921 = vmul.f32 %v73, %v678
    %v1922 = vmul.f32 %v73, %v679
    %v1923 = vmul.f32 %v73, %v680
    %v1924 = vmul.f32 %v73, %v681
    %v1925 = vmul.f32 %v73, %v682
    %v1926 = vmul.f32 %v73, %v683
    %v1927 = vmul.f32 %v73, %v684
    %v1928 = vmul.f32 %v73, %v685
    %v1937 = vrot.slane %v1921, 1
    %v1938 = vrot.slane %v1922, 1
    %v1939 = vrot.slane %v1923, 1
    %v1940 = vrot.slane %v1924, 1
    %v1941 = vrot.slane %v1925, 1
    %v1942 = vrot.slane %v1926, 1
    %v1943 = vrot.slane %v1927, 1
    %v1944 = vrot.slane %v1928, 1
    %v1953 = vadd.f32 %v1913, %v1937
    %v1954 = vadd.f32 %v1914, %v1938
    %v1955 = vadd.f32 %v1915, %v1939
    %v1956 = vadd.f32 %v1916, %v1940
    %v1957 = vadd.f32 %v1917, %v1941
    %v1958 = vadd.f32 %v1918, %v1942
    %v1959 = vadd.f32 %v1919, %v1943
    %v1960 = vadd.f32 %v1920, %v1944
    %v1961 = vmul.f32 %v115, %v678
    %v1962 = vmul.f32 %v115, %v679
    %v1963 = vmul.f32 %v115, %v680
    %v1964 = vmul.f32 %v115, %v681
    %v1965 = vmul.f32 %v115, %v682
    %v1966 = vmul.f32 %v115, %v683
    %v1967 = vmul.f32 %v115, %v684
    %v1968 = vmul.f32 %v115, %v685
    %v1977 = vrot.slane %v1961, 2
    %v1978 = vrot.slane %v1962, 2
    %v1979 = vrot.slane %v1963, 2
    %v1980 = vrot.slane %v1964, 2
    %v1981 = vrot.slane %v1965, 2
    %v1982 = vrot.slane %v1966, 2
    %v1983 = vrot.slane %v1967, 2
    %v1984 = vrot.slane %v1968, 2
    %v1993 = vadd.f32 %v1953, %v1977
    %v1994 = vadd.f32 %v1954, %v1978
    %v1995 = vadd.f32 %v1955, %v1979
    %v1996 = vadd.f32 %v1956, %v1980
    %v1997 = vadd.f32 %v1957, %v1981
    %v1998 = vadd.f32 %v1958, %v1982
    %v1999 = vadd.f32 %v1959, %v1983
    %v2000 = vadd.f32 %v1960, %v1984
    %v2001 = vmul.f32 %v157, %v679
    %v2002 = vmul.f32 %v157, %v680
    %v2003 = vmul.f32 %v157, %v681
    %v2004 = vmul.f32 %v157, %v682
    %v2005 = vmul.f32 %v157, %v683
    %v2006 = vmul.f32 %v157, %v684
    %v2007 = vmul.f32 %v157, %v685
    %v2008 = vmul.f32 %v157, %v686
    %v2009 = vadd.f32 %v1993, %v2001
    %v2010 = vadd.f32 %v1994, %v2002
    %v2011 = vadd.f32 %v1995, %v2003
    %v2012 = vadd.f32 %v1996, %v2004
    %v2013 = vadd.f32 %v1997, %v2005
    %v2014 = vadd.f32 %v1998, %v2006
    %v2015 = vadd.f32 %v1999, %v2007
    %v2016 = vadd.f32 %v2000, %v2008
    %v2017 = vmul.f32 %v175, %v679
    %v2018 = vmul.f32 %v175, %v680
    %v2019 = vmul.f32 %v175, %v681
    %v2020 = vmul.f32 %v175, %v682
    %v2021 = vmul.f32 %v175, %v683
    %v2022 = vmul.f32 %v175, %v684
    %v2023 = vmul.f32 %v175, %v685
    %v2024 = vmul.f32 %v175, %v686
    %v2033 = vrot.slane %v2017, 1
    %v2034 = vrot.slane %v2018, 1
    %v2035 = vrot.slane %v2019, 1
    %v2036 = vrot.slane %v2020, 1
    %v2037 = vrot.slane %v2021, 1
    %v2038 = vrot.slane %v2022, 1
    %v2039 = vrot.slane %v2023, 1
    %v2040 = vrot.slane %v2024, 1
    %v2049 = vadd.f32 %v2009, %v2033
    %v2050 = vadd.f32 %v2010, %v2034
    %v2051 = vadd.f32 %v2011, %v2035
    %v2052 = vadd.f32 %v2012, %v2036
    %v2053 = vadd.f32 %v2013, %v2037
    %v2054 = vadd.f32 %v2014, %v2038
    %v2055 = vadd.f32 %v2015, %v2039
    %v2056 = vadd.f32 %v2016, %v2040
    %v2057 = vmul.f32 %v217, %v679
    %v2058 = vmul.f32 %v217, %v680
    %v2059 = vmul.f32 %v217, %v681
    %v2060 = vmul.f32 %v217, %v682
    %v2061 = vmul.f32 %v217, %v683
    %v2062 = vmul.f32 %v217, %v684
    %v2063 = vmul.f32 %v217, %v685
    %v2064 = vmul.f32 %v217, %v686
    %v2073 = vrot.slane %v2057, 2
    %v2074 = vrot.slane %v2058, 2
    %v2075 = vrot.slane %v2059, 2
    %v2076 = vrot.slane %v2060, 2
    %v2077 = vrot.slane %v2061, 2
    %v2078 = vrot.slane %v2062, 2
    %v2079 = vrot.slane %v2063, 2
    %v2080 = vrot.slane %v2064, 2
    %v2089 = vadd.f32 %v2049, %v2073
    %v2090 = vadd.f32 %v2050, %v2074
    %v2091 = vadd.f32 %v2051, %v2075
    %v2092 = vadd.f32 %v2052, %v2076
    %v2093 = vadd.f32 %v2053, %v2077
    %v2094 = vadd.f32 %v2054, %v2078
    %v2095 = vadd.f32 %v2055, %v2079
    %v2096 = vadd.f32 %v2056, %v2080
    %v2097 = vmul.f32 %v259, %v680
    %v2098 = vmul.f32 %v259, %v681
    %v2099 = vmul.f32 %v259, %v682
    %v2100 = vmul.f32 %v259, %v683
    %v2101 = vmul.f32 %v259, %v684
    %v2102 = vmul.f32 %v259, %v685
    %v2103 = vmul.f32 %v259, %v686
    %v2104 = vmul.f32 %v259, %v687
    %v2105 = vadd.f32 %v2089, %v2097
    %v2106 = vadd.f32 %v2090, %v2098
    %v2107 = vadd.f32 %v2091, %v2099
    %v2108 = vadd.f32 %v2092, %v2100
    %v2109 = vadd.f32 %v2093, %v2101
    %v2110 = vadd.f32 %v2094, %v2102
    %v2111 = vadd.f32 %v2095, %v2103
    %v2112 = vadd.f32 %v2096, %v2104
    %v2113 = vmul.f32 %v277, %v680
    %v2114 = vmul.f32 %v277, %v681
    %v2115 = vmul.f32 %v277, %v682
    %v2116 = vmul.f32 %v277, %v683
    %v2117 = vmul.f32 %v277, %v684
    %v2118 = vmul.f32 %v277, %v685
    %v2119 = vmul.f32 %v277, %v686
    %v2120 = vmul.f32 %v277, %v687
    %v2129 = vrot.slane %v2113, 1
    %v2130 = vrot.slane %v2114, 1
    %v2131 = vrot.slane %v2115, 1
    %v2132 = vrot.slane %v2116, 1
    %v2133 = vrot.slane %v2117, 1
    %v2134 = vrot.slane %v2118, 1
    %v2135 = vrot.slane %v2119, 1
    %v2136 = vrot.slane %v2120, 1
    %v2145 = vadd.f32 %v2105, %v2129
    %v2146 = vadd.f32 %v2106, %v2130
    %v2147 = vadd.f32 %v2107, %v2131
    %v2148 = vadd.f32 %v2108, %v2132
    %v2149 = vadd.f32 %v2109, %v2133
    %v2150 = vadd.f32 %v2110, %v2134
    %v2151 = vadd.f32 %v2111, %v2135
    %v2152 = vadd.f32 %v2112, %v2136
    %v2153 = vmul.f32 %v319, %v680
    %v2154 = vmul.f32 %v319, %v681
    %v2155 = vmul.f32 %v319, %v682
    %v2156 = vmul.f32 %v319, %v683
    %v2157 = vmul.f32 %v319, %v684
    %v2158 = vmul.f32 %v319, %v685
    %v2159 = vmul.f32 %v319, %v686
    %v2160 = vmul.f32 %v319, %v687
    %v2169 = vrot.slane %v2153, 2
    %v2170 = vrot.slane %v2154, 2
    %v2171 = vrot.slane %v2155, 2
    %v2172 = vrot.slane %v2156, 2
    %v2173 = vrot.slane %v2157, 2
    %v2174 = vrot.slane %v2158, 2
    %v2175 = vrot.slane %v2159, 2
    %v2176 = vrot.slane %v2160, 2
    %v2185 = vadd.f32 %v2145, %v2169
    %v2186 = vadd.f32 %v2146, %v2170
    %v2187 = vadd.f32 %v2147, %v2171
    %v2188 = vadd.f32 %v2148, %v2172
    %v2189 = vadd.f32 %v2149, %v2173
    %v2190 = vadd.f32 %v2150, %v2174
    %v2191 = vadd.f32 %v2151, %v2175
    %v2192 = vadd.f32 %v2152, %v2176
    %v2193 = vmul.f32 %v372, %v1563
    %v2194 = vmul.f32 %v372, %v1564
    %v2195 = vmul.f32 %v372, %v1565
    %v2196 = vmul.f32 %v372, %v1566
    %v2197 = vmul.f32 %v372, %v1567
    %v2198 = vmul.f32 %v372, %v1568
    %v2199 = vmul.f32 %v372, %v1569
    %v2200 = vmul.f32 %v372, %v1570
    %v2201 = vadd.f32 %v2185, %v2193
    %v2202 = vadd.f32 %v2186, %v2194
    %v2203 = vadd.f32 %v2187, %v2195
    %v2204 = vadd.f32 %v2188, %v2196
    %v2205 = vadd.f32 %v2189, %v2197
    %v2206 = vadd.f32 %v2190, %v2198
    %v2207 = vadd.f32 %v2191, %v2199
    %v2208 = vadd.f32 %v2192, %v2200
    %v2209 = vmul.f32 %v390, %v1563
    %v2210 = vmul.f32 %v390, %v1564
    %v2211 = vmul.f32 %v390, %v1565
    %v2212 = vmul.f32 %v390, %v1566
    %v2213 = vmul.f32 %v390, %v1567
    %v2214 = vmul.f32 %v390, %v1568
    %v2215 = vmul.f32 %v390, %v1569
    %v2216 = vmul.f32 %v390, %v1570
    %v2225 = vrot.slane %v2209, 1
    %v2226 = vrot.slane %v2210, 1
    %v2227 = vrot.slane %v2211, 1
    %v2228 = vrot.slane %v2212, 1
    %v2229 = vrot.slane %v2213, 1
    %v2230 = vrot.slane %v2214, 1
    %v2231 = vrot.slane %v2215, 1
    %v2232 = vrot.slane %v2216, 1
    %v2241 = vadd.f32 %v2201, %v2225
    %v2242 = vadd.f32 %v2202, %v2226
    %v2243 = vadd.f32 %v2203, %v2227
    %v2244 = vadd.f32 %v2204, %v2228
    %v2245 = vadd.f32 %v2205, %v2229
    %v2246 = vadd.f32 %v2206, %v2230
    %v2247 = vadd.f32 %v2207, %v2231
    %v2248 = vadd.f32 %v2208, %v2232
    %v2249 = vmul.f32 %v432, %v1563
    %v2250 = vmul.f32 %v432, %v1564
    %v2251 = vmul.f32 %v432, %v1565
    %v2252 = vmul.f32 %v432, %v1566
    %v2253 = vmul.f32 %v432, %v1567
    %v2254 = vmul.f32 %v432, %v1568
    %v2255 = vmul.f32 %v432, %v1569
    %v2256 = vmul.f32 %v432, %v1570
    %v2265 = vrot.slane %v2249, 2
    %v2266 = vrot.slane %v2250, 2
    %v2267 = vrot.slane %v2251, 2
    %v2268 = vrot.slane %v2252, 2
    %v2269 = vrot.slane %v2253, 2
    %v2270 = vrot.slane %v2254, 2
    %v2271 = vrot.slane %v2255, 2
    %v2272 = vrot.slane %v2256, 2
    %v2281 = vadd.f32 %v2241, %v2265
    %v2282 = vadd.f32 %v2242, %v2266
    %v2283 = vadd.f32 %v2243, %v2267
    %v2284 = vadd.f32 %v2244, %v2268
    %v2285 = vadd.f32 %v2245, %v2269
    %v2286 = vadd.f32 %v2246, %v2270
    %v2287 = vadd.f32 %v2247, %v2271
    %v2288 = vadd.f32 %v2248, %v2272
    %v2289 = vmul.f32 %v474, %v1564
    %v2290 = vmul.f32 %v474, %v1565
    %v2291 = vmul.f32 %v474, %v1566
    %v2292 = vmul.f32 %v474, %v1567
    %v2293 = vmul.f32 %v474, %v1568
    %v2294 = vmul.f32 %v474, %v1569
    %v2295 = vmul.f32 %v474, %v1570
    %v2296 = vmul.f32 %v474, %v1571
    %v2297 = vadd.f32 %v2281, %v2289
    %v2298 = vadd.f32 %v2282, %v2290
    %v2299 = vadd.f32 %v2283, %v2291
    %v2300 = vadd.f32 %v2284, %v2292
    %v2301 = vadd.f32 %v2285, %v2293
    %v2302 = vadd.f32 %v2286, %v2294
    %v2303 = vadd.f32 %v2287, %v2295
    %v2304 = vadd.f32 %v2288, %v2296
    %v2305 = vmul.f32 %v492, %v1564
    %v2306 = vmul.f32 %v492, %v1565
    %v2307 = vmul.f32 %v492, %v1566
    %v2308 = vmul.f32 %v492, %v1567
    %v2309 = vmul.f32 %v492, %v1568
    %v2310 = vmul.f32 %v492, %v1569
    %v2311 = vmul.f32 %v492, %v1570
    %v2312 = vmul.f32 %v492, %v1571
    %v2321 = vrot.slane %v2305, 1
    %v2322 = vrot.slane %v2306, 1
    %v2323 = vrot.slane %v2307, 1
    %v2324 = vrot.slane %v2308, 1
    %v2325 = vrot.slane %v2309, 1
    %v2326 = vrot.slane %v2310, 1
    %v2327 = vrot.slane %v2311, 1
    %v2328 = vrot.slane %v2312, 1
    %v2337 = vadd.f32 %v2297, %v2321
    %v2338 = vadd.f32 %v2298, %v2322
    %v2339 = vadd.f32 %v2299, %v2323
    %v2340 = vadd.f32 %v2300, %v2324
    %v2341 = vadd.f32 %v2301, %v2325
    %v2342 = vadd.f32 %v2302, %v2326
    %v2343 = vadd.f32 %v2303, %v2327
    %v2344 = vadd.f32 %v2304, %v2328
    %v2345 = vmul.f32 %v534, %v1564
    %v2346 = vmul.f32 %v534, %v1565
    %v2347 = vmul.f32 %v534, %v1566
    %v2348 = vmul.f32 %v534, %v1567
    %v2349 = vmul.f32 %v534, %v1568
    %v2350 = vmul.f32 %v534, %v1569
    %v2351 = vmul.f32 %v534, %v1570
    %v2352 = vmul.f32 %v534, %v1571
    %v2361 = vrot.slane %v2345, 2
    %v2362 = vrot.slane %v2346, 2
    %v2363 = vrot.slane %v2347, 2
    %v2364 = vrot.slane %v2348, 2
    %v2365 = vrot.slane %v2349, 2
    %v2366 = vrot.slane %v2350, 2
    %v2367 = vrot.slane %v2351, 2
    %v2368 = vrot.slane %v2352, 2
    %v2377 = vadd.f32 %v2337, %v2361
    %v2378 = vadd.f32 %v2338, %v2362
    %v2379 = vadd.f32 %v2339, %v2363
    %v2380 = vadd.f32 %v2340, %v2364
    %v2381 = vadd.f32 %v2341, %v2365
    %v2382 = vadd.f32 %v2342, %v2366
    %v2383 = vadd.f32 %v2343, %v2367
    %v2384 = vadd.f32 %v2344, %v2368
    %v2385 = vmul.f32 %v576, %v1565
    %v2386 = vmul.f32 %v576, %v1566
    %v2387 = vmul.f32 %v576, %v1567
    %v2388 = vmul.f32 %v576, %v1568
    %v2389 = vmul.f32 %v576, %v1569
    %v2390 = vmul.f32 %v576, %v1570
    %v2391 = vmul.f32 %v576, %v1571
    %v2392 = vmul.f32 %v576, %v1572
    %v2393 = vadd.f32 %v2377, %v2385
    %v2394 = vadd.f32 %v2378, %v2386
    %v2395 = vadd.f32 %v2379, %v2387
    %v2396 = vadd.f32 %v2380, %v2388
    %v2397 = vadd.f32 %v2381, %v2389
    %v2398 = vadd.f32 %v2382, %v2390
    %v2399 = vadd.f32 %v2383, %v2391
    %v2400 = vadd.f32 %v2384, %v2392
    %v2401 = vmul.f32 %v594, %v1565
    %v2402 = vmul.f32 %v594, %v1566
    %v2403 = vmul.f32 %v594, %v1567
    %v2404 = vmul.f32 %v594, %v1568
    %v2405 = vmul.f32 %v594, %v1569
    %v2406 = vmul.f32 %v594, %v1570
    %v2407 = vmul.f32 %v594, %v1571
    %v2408 = vmul.f32 %v594, %v1572
    %v2417 = vrot.slane %v2401, 1
    %v2418 = vrot.slane %v2402, 1
    %v2419 = vrot.slane %v2403, 1
    %v2420 = vrot.slane %v2404, 1
    %v2421 = vrot.slane %v2405, 1
    %v2422 = vrot.slane %v2406, 1
    %v2423 = vrot.slane %v2407, 1
    %v2424 = vrot.slane %v2408, 1
    %v2433 = vadd.f32 %v2393, %v2417
    %v2434 = vadd.f32 %v2394, %v2418
    %v2435 = vadd.f32 %v2395, %v2419
    %v2436 = vadd.f32 %v2396, %v2420
    %v2437 = vadd.f32 %v2397, %v2421
    %v2438 = vadd.f32 %v2398, %v2422
    %v2439 = vadd.f32 %v2399, %v2423
    %v2440 = vadd.f32 %v2400, %v2424
    %v2441 = vmul.f32 %v636, %v1565
    %v2442 = vmul.f32 %v636, %v1566
    %v2443 = vmul.f32 %v636, %v1567
    %v2444 = vmul.f32 %v636, %v1568
    %v2445 = vmul.f32 %v636, %v1569
    %v2446 = vmul.f32 %v636, %v1570
    %v2447 = vmul.f32 %v636, %v1571
    %v2448 = vmul.f32 %v636, %v1572
    %v2457 = vrot.slane %v2441, 2
    %v2458 = vrot.slane %v2442, 2
    %v2459 = vrot.slane %v2443, 2
    %v2460 = vrot.slane %v2444, 2
    %v2461 = vrot.slane %v2445, 2
    %v2462 = vrot.slane %v2446, 2
    %v2463 = vrot.slane %v2447, 2
    %v2464 = vrot.slane %v2448, 2
    %v2473 = vadd.f32 %v2433, %v2457
    %v2474 = vadd.f32 %v2434, %v2458
    %v2475 = vadd.f32 %v2435, %v2459
    %v2476 = vadd.f32 %v2436, %v2460
    %v2477 = vadd.f32 %v2437, %v2461
    %v2478 = vadd.f32 %v2438, %v2462
    %v2479 = vadd.f32 %v2439, %v2463
    %v2480 = vadd.f32 %v2440, %v2464
    %s2481 = scalar_lea.vmem [#allocation4], 320
    %v2482 = vld [vmem:[%s2481] sm:$0xff]
    %v2483 = vld [vmem:[%s2481 + $0x8] sm:$0xff]
    %v2484 = vld [vmem:[%s2481 + $0x10] sm:$0xff]
    %v2485 = vld [vmem:[%s2481 + $0x18] sm:$0xff]
    %v2486 = vld [vmem:[%s2481 + $0x20] sm:$0xff]
    %v2487 = vld [vmem:[%s2481 + $0x28] sm:$0xff]
    %v2488 = vld [vmem:[%s2481 + $0x30] sm:$0xff]
    %v2489 = vld [vmem:[%s2481 + $0x38] sm:$0xff]
    %v2490 = vld [vmem:[%s2481 + $0x40] sm:$0xff]
    %v2491 = vld [vmem:[%s2481 + $0x48] sm:$0xff]
    %v2492 = vmul.f32 %v689, %v2482
    %v2493 = vmul.f32 %v689, %v2483
    %v2494 = vmul.f32 %v689, %v2484
    %v2495 = vmul.f32 %v689, %v2485
    %v2496 = vmul.f32 %v689, %v2486
    %v2497 = vmul.f32 %v689, %v2487
    %v2498 = vmul.f32 %v689, %v2488
    %v2499 = vmul.f32 %v689, %v2489
    %v2500 = vadd.f32 %v2473, %v2492
    %v2501 = vadd.f32 %v2474, %v2493
    %v2502 = vadd.f32 %v2475, %v2494
    %v2503 = vadd.f32 %v2476, %v2495
    %v2504 = vadd.f32 %v2477, %v2496
    %v2505 = vadd.f32 %v2478, %v2497
    %v2506 = vadd.f32 %v2479, %v2498
    %v2507 = vadd.f32 %v2480, %v2499
    %v2508 = vmul.f32 %v707, %v2482
    %v2509 = vmul.f32 %v707, %v2483
    %v2510 = vmul.f32 %v707, %v2484
    %v2511 = vmul.f32 %v707, %v2485
    %v2512 = vmul.f32 %v707, %v2486
    %v2513 = vmul.f32 %v707, %v2487
    %v2514 = vmul.f32 %v707, %v2488
    %v2515 = vmul.f32 %v707, %v2489
    %v2524 = vrot.slane %v2508, 1
    %v2525 = vrot.slane %v2509, 1
    %v2526 = vrot.slane %v2510, 1
    %v2527 = vrot.slane %v2511, 1
    %v2528 = vrot.slane %v2512, 1
    %v2529 = vrot.slane %v2513, 1
    %v2530 = vrot.slane %v2514, 1
    %v2531 = vrot.slane %v2515, 1
    %v2540 = vadd.f32 %v2500, %v2524
    %v2541 = vadd.f32 %v2501, %v2525
    %v2542 = vadd.f32 %v2502, %v2526
    %v2543 = vadd.f32 %v2503, %v2527
    %v2544 = vadd.f32 %v2504, %v2528
    %v2545 = vadd.f32 %v2505, %v2529
    %v2546 = vadd.f32 %v2506, %v2530
    %v2547 = vadd.f32 %v2507, %v2531
    %v2548 = vmul.f32 %v749, %v2482
    %v2549 = vmul.f32 %v749, %v2483
    %v2550 = vmul.f32 %v749, %v2484
    %v2551 = vmul.f32 %v749, %v2485
    %v2552 = vmul.f32 %v749, %v2486
    %v2553 = vmul.f32 %v749, %v2487
    %v2554 = vmul.f32 %v749, %v2488
    %v2555 = vmul.f32 %v749, %v2489
    %v2564 = vrot.slane %v2548, 2
    %v2565 = vrot.slane %v2549, 2
    %v2566 = vrot.slane %v2550, 2
    %v2567 = vrot.slane %v2551, 2
    %v2568 = vrot.slane %v2552, 2
    %v2569 = vrot.slane %v2553, 2
    %v2570 = vrot.slane %v2554, 2
    %v2571 = vrot.slane %v2555, 2
    %v2580 = vadd.f32 %v2540, %v2564
    %v2581 = vadd.f32 %v2541, %v2565
    %v2582 = vadd.f32 %v2542, %v2566
    %v2583 = vadd.f32 %v2543, %v2567
    %v2584 = vadd.f32 %v2544, %v2568
    %v2585 = vadd.f32 %v2545, %v2569
    %v2586 = vadd.f32 %v2546, %v2570
    %v2587 = vadd.f32 %v2547, %v2571
    %v2588 = vmul.f32 %v791, %v2483
    %v2589 = vmul.f32 %v791, %v2484
    %v2590 = vmul.f32 %v791, %v2485
    %v2591 = vmul.f32 %v791, %v2486
    %v2592 = vmul.f32 %v791, %v2487
    %v2593 = vmul.f32 %v791, %v2488
    %v2594 = vmul.f32 %v791, %v2489
    %v2595 = vmul.f32 %v791, %v2490
    %v2596 = vadd.f32 %v2580, %v2588
    %v2597 = vadd.f32 %v2581, %v2589
    %v2598 = vadd.f32 %v2582, %v2590
    %v2599 = vadd.f32 %v2583, %v2591
    %v2600 = vadd.f32 %v2584, %v2592
    %v2601 = vadd.f32 %v2585, %v2593
    %v2602 = vadd.f32 %v2586, %v2594
    %v2603 = vadd.f32 %v2587, %v2595
    %v2604 = vmul.f32 %v809, %v2483
    %v2605 = vmul.f32 %v809, %v2484
    %v2606 = vmul.f32 %v809, %v2485
    %v2607 = vmul.f32 %v809, %v2486
    %v2608 = vmul.f32 %v809, %v2487
    %v2609 = vmul.f32 %v809, %v2488
    %v2610 = vmul.f32 %v809, %v2489
    %v2611 = vmul.f32 %v809, %v2490
    %v2620 = vrot.slane %v2604, 1
    %v2621 = vrot.slane %v2605, 1
    %v2622 = vrot.slane %v2606, 1
    %v2623 = vrot.slane %v2607, 1
    %v2624 = vrot.slane %v2608, 1
    %v2625 = vrot.slane %v2609, 1
    %v2626 = vrot.slane %v2610, 1
    %v2627 = vrot.slane %v2611, 1
    %v2636 = vadd.f32 %v2596, %v2620
    %v2637 = vadd.f32 %v2597, %v2621
    %v2638 = vadd.f32 %v2598, %v2622
    %v2639 = vadd.f32 %v2599, %v2623
    %v2640 = vadd.f32 %v2600, %v2624
    %v2641 = vadd.f32 %v2601, %v2625
    %v2642 = vadd.f32 %v2602, %v2626
    %v2643 = vadd.f32 %v2603, %v2627
    %v2644 = vmul.f32 %v851, %v2483
    %v2645 = vmul.f32 %v851, %v2484
    %v2646 = vmul.f32 %v851, %v2485
    %v2647 = vmul.f32 %v851, %v2486
    %v2648 = vmul.f32 %v851, %v2487
    %v2649 = vmul.f32 %v851, %v2488
    %v2650 = vmul.f32 %v851, %v2489
    %v2651 = vmul.f32 %v851, %v2490
    %v2660 = vrot.slane %v2644, 2
    %v2661 = vrot.slane %v2645, 2
    %v2662 = vrot.slane %v2646, 2
    %v2663 = vrot.slane %v2647, 2
    %v2664 = vrot.slane %v2648, 2
    %v2665 = vrot.slane %v2649, 2
    %v2666 = vrot.slane %v2650, 2
    %v2667 = vrot.slane %v2651, 2
    %v2676 = vadd.f32 %v2636, %v2660
    %v2677 = vadd.f32 %v2637, %v2661
    %v2678 = vadd.f32 %v2638, %v2662
    %v2679 = vadd.f32 %v2639, %v2663
    %v2680 = vadd.f32 %v2640, %v2664
    %v2681 = vadd.f32 %v2641, %v2665
    %v2682 = vadd.f32 %v2642, %v2666
    %v2683 = vadd.f32 %v2643, %v2667
    %v2684 = vmul.f32 %v893, %v2484
    %v2685 = vmul.f32 %v893, %v2485
    %v2686 = vmul.f32 %v893, %v2486
    %v2687 = vmul.f32 %v893, %v2487
    %v2688 = vmul.f32 %v893, %v2488
    %v2689 = vmul.f32 %v893, %v2489
    %v2690 = vmul.f32 %v893, %v2490
    %v2691 = vmul.f32 %v893, %v2491
    %v2692 = vadd.f32 %v2676, %v2684
    %v2693 = vadd.f32 %v2677, %v2685
    %v2694 = vadd.f32 %v2678, %v2686
    %v2695 = vadd.f32 %v2679, %v2687
    %v2696 = vadd.f32 %v2680, %v2688
    %v2697 = vadd.f32 %v2681, %v2689
    %v2698 = vadd.f32 %v2682, %v2690
    %v2699 = vadd.f32 %v2683, %v2691
    %v2700 = vmul.f32 %v911, %v2484
    %v2701 = vmul.f32 %v911, %v2485
    %v2702 = vmul.f32 %v911, %v2486
    %v2703 = vmul.f32 %v911, %v2487
    %v2704 = vmul.f32 %v911, %v2488
    %v2705 = vmul.f32 %v911, %v2489
    %v2706 = vmul.f32 %v911, %v2490
    %v2707 = vmul.f32 %v911, %v2491
    %v2716 = vrot.slane %v2700, 1
    %v2717 = vrot.slane %v2701, 1
    %v2718 = vrot.slane %v2702, 1
    %v2719 = vrot.slane %v2703, 1
    %v2720 = vrot.slane %v2704, 1
    %v2721 = vrot.slane %v2705, 1
    %v2722 = vrot.slane %v2706, 1
    %v2723 = vrot.slane %v2707, 1
    %v2732 = vadd.f32 %v2692, %v2716
    %v2733 = vadd.f32 %v2693, %v2717
    %v2734 = vadd.f32 %v2694, %v2718
    %v2735 = vadd.f32 %v2695, %v2719
    %v2736 = vadd.f32 %v2696, %v2720
    %v2737 = vadd.f32 %v2697, %v2721
    %v2738 = vadd.f32 %v2698, %v2722
    %v2739 = vadd.f32 %v2699, %v2723
    %v2740 = vmul.f32 %v953, %v2484
    %v2741 = vmul.f32 %v953, %v2485
    %v2742 = vmul.f32 %v953, %v2486
    %v2743 = vmul.f32 %v953, %v2487
    %v2744 = vmul.f32 %v953, %v2488
    %v2745 = vmul.f32 %v953, %v2489
    %v2746 = vmul.f32 %v953, %v2490
    %v2747 = vmul.f32 %v953, %v2491
    %v2756 = vrot.slane %v2740, 2
    %v2757 = vrot.slane %v2741, 2
    %v2758 = vrot.slane %v2742, 2
    %v2759 = vrot.slane %v2743, 2
    %v2760 = vrot.slane %v2744, 2
    %v2761 = vrot.slane %v2745, 2
    %v2762 = vrot.slane %v2746, 2
    %v2763 = vrot.slane %v2747, 2
    %v2772 = vadd.f32 %v2732, %v2756
    %v2773 = vadd.f32 %v2733, %v2757
    %v2774 = vadd.f32 %v2734, %v2758
    %v2775 = vadd.f32 %v2735, %v2759
    %v2776 = vadd.f32 %v2736, %v2760
    %v2777 = vadd.f32 %v2737, %v2761
    %v2778 = vadd.f32 %v2738, %v2762
    %v2779 = vadd.f32 %v2739, %v2763
    %v2780 = vmul.f32 %v63, %v1563
    %v2781 = vmul.f32 %v63, %v1564
    %v2782 = vmul.f32 %v63, %v1565
    %v2783 = vmul.f32 %v63, %v1566
    %v2784 = vmul.f32 %v63, %v1567
    %v2785 = vmul.f32 %v63, %v1568
    %v2786 = vmul.f32 %v63, %v1569
    %v2787 = vmul.f32 %v63, %v1570
    %v2788 = vmul.f32 %v73, %v1563
    %v2789 = vmul.f32 %v73, %v1564
    %v2790 = vmul.f32 %v73, %v1565
    %v2791 = vmul.f32 %v73, %v1566
    %v2792 = vmul.f32 %v73, %v1567
    %v2793 = vmul.f32 %v73, %v1568
    %v2794 = vmul.f32 %v73, %v1569
    %v2795 = vmul.f32 %v73, %v1570
    %v2804 = vrot.slane %v2788, 1
    %v2805 = vrot.slane %v2789, 1
    %v2806 = vrot.slane %v2790, 1
    %v2807 = vrot.slane %v2791, 1
    %v2808 = vrot.slane %v2792, 1
    %v2809 = vrot.slane %v2793, 1
    %v2810 = vrot.slane %v2794, 1
    %v2811 = vrot.slane %v2795, 1
    %v2820 = vadd.f32 %v2780, %v2804
    %v2821 = vadd.f32 %v2781, %v2805
    %v2822 = vadd.f32 %v2782, %v2806
    %v2823 = vadd.f32 %v2783, %v2807
    %v2824 = vadd.f32 %v2784, %v2808
    %v2825 = vadd.f32 %v2785, %v2809
    %v2826 = vadd.f32 %v2786, %v2810
    %v2827 = vadd.f32 %v2787, %v2811
    %v2828 = vmul.f32 %v115, %v1563
    %v2829 = vmul.f32 %v115, %v1564
    %v2830 = vmul.f32 %v115, %v1565
    %v2831 = vmul.f32 %v115, %v1566
    %v2832 = vmul.f32 %v115, %v1567
    %v2833 = vmul.f32 %v115, %v1568
    %v2834 = vmul.f32 %v115, %v1569
    %v2835 = vmul.f32 %v115, %v1570
    %v2844 = vrot.slane %v2828, 2
    %v2845 = vrot.slane %v2829, 2
    %v2846 = vrot.slane %v2830, 2
    %v2847 = vrot.slane %v2831, 2
    %v2848 = vrot.slane %v2832, 2
    %v2849 = vrot.slane %v2833, 2
    %v2850 = vrot.slane %v2834, 2
    %v2851 = vrot.slane %v2835, 2
    %v2860 = vadd.f32 %v2820, %v2844
    %v2861 = vadd.f32 %v2821, %v2845
    %v2862 = vadd.f32 %v2822, %v2846
    %v2863 = vadd.f32 %v2823, %v2847
    %v2864 = vadd.f32 %v2824, %v2848
    %v2865 = vadd.f32 %v2825, %v2849
    %v2866 = vadd.f32 %v2826, %v2850
    %v2867 = vadd.f32 %v2827, %v2851
    %v2868 = vmul.f32 %v157, %v1564
    %v2869 = vmul.f32 %v157, %v1565
    %v2870 = vmul.f32 %v157, %v1566
    %v2871 = vmul.f32 %v157, %v1567
    %v2872 = vmul.f32 %v157, %v1568
    %v2873 = vmul.f32 %v157, %v1569
    %v2874 = vmul.f32 %v157, %v1570
    %v2875 = vmul.f32 %v157, %v1571
    %v2876 = vadd.f32 %v2860, %v2868
    %v2877 = vadd.f32 %v2861, %v2869
    %v2878 = vadd.f32 %v2862, %v2870
    %v2879 = vadd.f32 %v2863, %v2871
    %v2880 = vadd.f32 %v2864, %v2872
    %v2881 = vadd.f32 %v2865, %v2873
    %v2882 = vadd.f32 %v2866, %v2874
    %v2883 = vadd.f32 %v2867, %v2875
    %v2884 = vmul.f32 %v175, %v1564
    %v2885 = vmul.f32 %v175, %v1565
    %v2886 = vmul.f32 %v175, %v1566
    %v2887 = vmul.f32 %v175, %v1567
    %v2888 = vmul.f32 %v175, %v1568
    %v2889 = vmul.f32 %v175, %v1569
    %v2890 = vmul.f32 %v175, %v1570
    %v2891 = vmul.f32 %v175, %v1571
    %v2900 = vrot.slane %v2884, 1
    %v2901 = vrot.slane %v2885, 1
    %v2902 = vrot.slane %v2886, 1
    %v2903 = vrot.slane %v2887, 1
    %v2904 = vrot.slane %v2888, 1
    %v2905 = vrot.slane %v2889, 1
    %v2906 = vrot.slane %v2890, 1
    %v2907 = vrot.slane %v2891, 1
    %v2916 = vadd.f32 %v2876, %v2900
    %v2917 = vadd.f32 %v2877, %v2901
    %v2918 = vadd.f32 %v2878, %v2902
    %v2919 = vadd.f32 %v2879, %v2903
    %v2920 = vadd.f32 %v2880, %v2904
    %v2921 = vadd.f32 %v2881, %v2905
    %v2922 = vadd.f32 %v2882, %v2906
    %v2923 = vadd.f32 %v2883, %v2907
    %v2924 = vmul.f32 %v217, %v1564
    %v2925 = vmul.f32 %v217, %v1565
    %v2926 = vmul.f32 %v217, %v1566
    %v2927 = vmul.f32 %v217, %v1567
    %v2928 = vmul.f32 %v217, %v1568
    %v2929 = vmul.f32 %v217, %v1569
    %v2930 = vmul.f32 %v217, %v1570
    %v2931 = vmul.f32 %v217, %v1571
    %v2940 = vrot.slane %v2924, 2
    %v2941 = vrot.slane %v2925, 2
    %v2942 = vrot.slane %v2926, 2
    %v2943 = vrot.slane %v2927, 2
    %v2944 = vrot.slane %v2928, 2
    %v2945 = vrot.slane %v2929, 2
    %v2946 = vrot.slane %v2930, 2
    %v2947 = vrot.slane %v2931, 2
    %v2956 = vadd.f32 %v2916, %v2940
    %v2957 = vadd.f32 %v2917, %v2941
    %v2958 = vadd.f32 %v2918, %v2942
    %v2959 = vadd.f32 %v2919, %v2943
    %v2960 = vadd.f32 %v2920, %v2944
    %v2961 = vadd.f32 %v2921, %v2945
    %v2962 = vadd.f32 %v2922, %v2946
    %v2963 = vadd.f32 %v2923, %v2947
    %v2964 = vmul.f32 %v259, %v1565
    %v2965 = vmul.f32 %v259, %v1566
    %v2966 = vmul.f32 %v259, %v1567
    %v2967 = vmul.f32 %v259, %v1568
    %v2968 = vmul.f32 %v259, %v1569
    %v2969 = vmul.f32 %v259, %v1570
    %v2970 = vmul.f32 %v259, %v1571
    %v2971 = vmul.f32 %v259, %v1572
    %v2972 = vadd.f32 %v2956, %v2964
    %v2973 = vadd.f32 %v2957, %v2965
    %v2974 = vadd.f32 %v2958, %v2966
    %v2975 = vadd.f32 %v2959, %v2967
    %v2976 = vadd.f32 %v2960, %v2968
    %v2977 = vadd.f32 %v2961, %v2969
    %v2978 = vadd.f32 %v2962, %v2970
    %v2979 = vadd.f32 %v2963, %v2971
    %v2980 = vmul.f32 %v277, %v1565
    %v2981 = vmul.f32 %v277, %v1566
    %v2982 = vmul.f32 %v277, %v1567
    %v2983 = vmul.f32 %v277, %v1568
    %v2984 = vmul.f32 %v277, %v1569
    %v2985 = vmul.f32 %v277, %v1570
    %v2986 = vmul.f32 %v277, %v1571
    %v2987 = vmul.f32 %v277, %v1572
    %v2996 = vrot.slane %v2980, 1
    %v2997 = vrot.slane %v2981, 1
    %v2998 = vrot.slane %v2982, 1
    %v2999 = vrot.slane %v2983, 1
    %v3000 = vrot.slane %v2984, 1
    %v3001 = vrot.slane %v2985, 1
    %v3002 = vrot.slane %v2986, 1
    %v3003 = vrot.slane %v2987, 1
    %v3012 = vadd.f32 %v2972, %v2996
    %v3013 = vadd.f32 %v2973, %v2997
    %v3014 = vadd.f32 %v2974, %v2998
    %v3015 = vadd.f32 %v2975, %v2999
    %v3016 = vadd.f32 %v2976, %v3000
    %v3017 = vadd.f32 %v2977, %v3001
    %v3018 = vadd.f32 %v2978, %v3002
    %v3019 = vadd.f32 %v2979, %v3003
    %v3020 = vmul.f32 %v319, %v1565
    %v3021 = vmul.f32 %v319, %v1566
    %v3022 = vmul.f32 %v319, %v1567
    %v3023 = vmul.f32 %v319, %v1568
    %v3024 = vmul.f32 %v319, %v1569
    %v3025 = vmul.f32 %v319, %v1570
    %v3026 = vmul.f32 %v319, %v1571
    %v3027 = vmul.f32 %v319, %v1572
    %v3036 = vrot.slane %v3020, 2
    %v3037 = vrot.slane %v3021, 2
    %v3038 = vrot.slane %v3022, 2
    %v3039 = vrot.slane %v3023, 2
    %v3040 = vrot.slane %v3024, 2
    %v3041 = vrot.slane %v3025, 2
    %v3042 = vrot.slane %v3026, 2
    %v3043 = vrot.slane %v3027, 2
    %v3052 = vadd.f32 %v3012, %v3036
    %v3053 = vadd.f32 %v3013, %v3037
    %v3054 = vadd.f32 %v3014, %v3038
    %v3055 = vadd.f32 %v3015, %v3039
    %v3056 = vadd.f32 %v3016, %v3040
    %v3057 = vadd.f32 %v3017, %v3041
    %v3058 = vadd.f32 %v3018, %v3042
    %v3059 = vadd.f32 %v3019, %v3043
    %v3060 = vmul.f32 %v372, %v2482
    %v3061 = vmul.f32 %v372, %v2483
    %v3062 = vmul.f32 %v372, %v2484
    %v3063 = vmul.f32 %v372, %v2485
    %v3064 = vmul.f32 %v372, %v2486
    %v3065 = vmul.f32 %v372, %v2487
    %v3066 = vmul.f32 %v372, %v2488
    %v3067 = vmul.f32 %v372, %v2489
    %v3068 = vadd.f32 %v3052, %v3060
    %v3069 = vadd.f32 %v3053, %v3061
    %v3070 = vadd.f32 %v3054, %v3062
    %v3071 = vadd.f32 %v3055, %v3063
    %v3072 = vadd.f32 %v3056, %v3064
    %v3073 = vadd.f32 %v3057, %v3065
    %v3074 = vadd.f32 %v3058, %v3066
    %v3075 = vadd.f32 %v3059, %v3067
    %v3076 = vmul.f32 %v390, %v2482
    %v3077 = vmul.f32 %v390, %v2483
    %v3078 = vmul.f32 %v390, %v2484
    %v3079 = vmul.f32 %v390, %v2485
    %v3080 = vmul.f32 %v390, %v2486
    %v3081 = vmul.f32 %v390, %v2487
    %v3082 = vmul.f32 %v390, %v2488
    %v3083 = vmul.f32 %v390, %v2489
    %v3092 = vrot.slane %v3076, 1
    %v3093 = vrot.slane %v3077, 1
    %v3094 = vrot.slane %v3078, 1
    %v3095 = vrot.slane %v3079, 1
    %v3096 = vrot.slane %v3080, 1
    %v3097 = vrot.slane %v3081, 1
    %v3098 = vrot.slane %v3082, 1
    %v3099 = vrot.slane %v3083, 1
    %v3108 = vadd.f32 %v3068, %v3092
    %v3109 = vadd.f32 %v3069, %v3093
    %v3110 = vadd.f32 %v3070, %v3094
    %v3111 = vadd.f32 %v3071, %v3095
    %v3112 = vadd.f32 %v3072, %v3096
    %v3113 = vadd.f32 %v3073, %v3097
    %v3114 = vadd.f32 %v3074, %v3098
    %v3115 = vadd.f32 %v3075, %v3099
    %v3116 = vmul.f32 %v432, %v2482
    %v3117 = vmul.f32 %v432, %v2483
    %v3118 = vmul.f32 %v432, %v2484
    %v3119 = vmul.f32 %v432, %v2485
    %v3120 = vmul.f32 %v432, %v2486
    %v3121 = vmul.f32 %v432, %v2487
    %v3122 = vmul.f32 %v432, %v2488
    %v3123 = vmul.f32 %v432, %v2489
    %v3132 = vrot.slane %v3116, 2
    %v3133 = vrot.slane %v3117, 2
    %v3134 = vrot.slane %v3118, 2
    %v3135 = vrot.slane %v3119, 2
    %v3136 = vrot.slane %v3120, 2
    %v3137 = vrot.slane %v3121, 2
    %v3138 = vrot.slane %v3122, 2
    %v3139 = vrot.slane %v3123, 2
    %v3148 = vadd.f32 %v3108, %v3132
    %v3149 = vadd.f32 %v3109, %v3133
    %v3150 = vadd.f32 %v3110, %v3134
    %v3151 = vadd.f32 %v3111, %v3135
    %v3152 = vadd.f32 %v3112, %v3136
    %v3153 = vadd.f32 %v3113, %v3137
    %v3154 = vadd.f32 %v3114, %v3138
    %v3155 = vadd.f32 %v3115, %v3139
    %v3156 = vmul.f32 %v474, %v2483
    %v3157 = vmul.f32 %v474, %v2484
    %v3158 = vmul.f32 %v474, %v2485
    %v3159 = vmul.f32 %v474, %v2486
    %v3160 = vmul.f32 %v474, %v2487
    %v3161 = vmul.f32 %v474, %v2488
    %v3162 = vmul.f32 %v474, %v2489
    %v3163 = vmul.f32 %v474, %v2490
    %v3164 = vadd.f32 %v3148, %v3156
    %v3165 = vadd.f32 %v3149, %v3157
    %v3166 = vadd.f32 %v3150, %v3158
    %v3167 = vadd.f32 %v3151, %v3159
    %v3168 = vadd.f32 %v3152, %v3160
    %v3169 = vadd.f32 %v3153, %v3161
    %v3170 = vadd.f32 %v3154, %v3162
    %v3171 = vadd.f32 %v3155, %v3163
    %v3172 = vmul.f32 %v492, %v2483
    %v3173 = vmul.f32 %v492, %v2484
    %v3174 = vmul.f32 %v492, %v2485
    %v3175 = vmul.f32 %v492, %v2486
    %v3176 = vmul.f32 %v492, %v2487
    %v3177 = vmul.f32 %v492, %v2488
    %v3178 = vmul.f32 %v492, %v2489
    %v3179 = vmul.f32 %v492, %v2490
    %v3188 = vrot.slane %v3172, 1
    %v3189 = vrot.slane %v3173, 1
    %v3190 = vrot.slane %v3174, 1
    %v3191 = vrot.slane %v3175, 1
    %v3192 = vrot.slane %v3176, 1
    %v3193 = vrot.slane %v3177, 1
    %v3194 = vrot.slane %v3178, 1
    %v3195 = vrot.slane %v3179, 1
    %v3204 = vadd.f32 %v3164, %v3188
    %v3205 = vadd.f32 %v3165, %v3189
    %v3206 = vadd.f32 %v3166, %v3190
    %v3207 = vadd.f32 %v3167, %v3191
    %v3208 = vadd.f32 %v3168, %v3192
    %v3209 = vadd.f32 %v3169, %v3193
    %v3210 = vadd.f32 %v3170, %v3194
    %v3211 = vadd.f32 %v3171, %v3195
    %v3212 = vmul.f32 %v534, %v2483
    %v3213 = vmul.f32 %v534, %v2484
    %v3214 = vmul.f32 %v534, %v2485
    %v3215 = vmul.f32 %v534, %v2486
    %v3216 = vmul.f32 %v534, %v2487
    %v3217 = vmul.f32 %v534, %v2488
    %v3218 = vmul.f32 %v534, %v2489
    %v3219 = vmul.f32 %v534, %v2490
    %v3228 = vrot.slane %v3212, 2
    %v3229 = vrot.slane %v3213, 2
    %v3230 = vrot.slane %v3214, 2
    %v3231 = vrot.slane %v3215, 2
    %v3232 = vrot.slane %v3216, 2
    %v3233 = vrot.slane %v3217, 2
    %v3234 = vrot.slane %v3218, 2
    %v3235 = vrot.slane %v3219, 2
    %v3244 = vadd.f32 %v3204, %v3228
    %v3245 = vadd.f32 %v3205, %v3229
    %v3246 = vadd.f32 %v3206, %v3230
    %v3247 = vadd.f32 %v3207, %v3231
    %v3248 = vadd.f32 %v3208, %v3232
    %v3249 = vadd.f32 %v3209, %v3233
    %v3250 = vadd.f32 %v3210, %v3234
    %v3251 = vadd.f32 %v3211, %v3235
    %v3252 = vmul.f32 %v576, %v2484
    %v3253 = vmul.f32 %v576, %v2485
    %v3254 = vmul.f32 %v576, %v2486
    %v3255 = vmul.f32 %v576, %v2487
    %v3256 = vmul.f32 %v576, %v2488
    %v3257 = vmul.f32 %v576, %v2489
    %v3258 = vmul.f32 %v576, %v2490
    %v3259 = vmul.f32 %v576, %v2491
    %v3260 = vadd.f32 %v3244, %v3252
    %v3261 = vadd.f32 %v3245, %v3253
    %v3262 = vadd.f32 %v3246, %v3254
    %v3263 = vadd.f32 %v3247, %v3255
    %v3264 = vadd.f32 %v3248, %v3256
    %v3265 = vadd.f32 %v3249, %v3257
    %v3266 = vadd.f32 %v3250, %v3258
    %v3267 = vadd.f32 %v3251, %v3259
    %v3268 = vmul.f32 %v594, %v2484
    %v3269 = vmul.f32 %v594, %v2485
    %v3270 = vmul.f32 %v594, %v2486
    %v3271 = vmul.f32 %v594, %v2487
    %v3272 = vmul.f32 %v594, %v2488
    %v3273 = vmul.f32 %v594, %v2489
    %v3274 = vmul.f32 %v594, %v2490
    %v3275 = vmul.f32 %v594, %v2491
    %v3284 = vrot.slane %v3268, 1
    %v3285 = vrot.slane %v3269, 1
    %v3286 = vrot.slane %v3270, 1
    %v3287 = vrot.slane %v3271, 1
    %v3288 = vrot.slane %v3272, 1
    %v3289 = vrot.slane %v3273, 1
    %v3290 = vrot.slane %v3274, 1
    %v3291 = vrot.slane %v3275, 1
    %v3300 = vadd.f32 %v3260, %v3284
    %v3301 = vadd.f32 %v3261, %v3285
    %v3302 = vadd.f32 %v3262, %v3286
    %v3303 = vadd.f32 %v3263, %v3287
    %v3304 = vadd.f32 %v3264, %v3288
    %v3305 = vadd.f32 %v3265, %v3289
    %v3306 = vadd.f32 %v3266, %v3290
    %v3307 = vadd.f32 %v3267, %v3291
    %v3308 = vmul.f32 %v636, %v2484
    %v3309 = vmul.f32 %v636, %v2485
    %v3310 = vmul.f32 %v636, %v2486
    %v3311 = vmul.f32 %v636, %v2487
    %v3312 = vmul.f32 %v636, %v2488
    %v3313 = vmul.f32 %v636, %v2489
    %v3314 = vmul.f32 %v636, %v2490
    %v3315 = vmul.f32 %v636, %v2491
    %v3324 = vrot.slane %v3308, 2
    %v3325 = vrot.slane %v3309, 2
    %v3326 = vrot.slane %v3310, 2
    %v3327 = vrot.slane %v3311, 2
    %v3328 = vrot.slane %v3312, 2
    %v3329 = vrot.slane %v3313, 2
    %v3330 = vrot.slane %v3314, 2
    %v3331 = vrot.slane %v3315, 2
    %v3340 = vadd.f32 %v3300, %v3324
    %v3341 = vadd.f32 %v3301, %v3325
    %v3342 = vadd.f32 %v3302, %v3326
    %v3343 = vadd.f32 %v3303, %v3327
    %v3344 = vadd.f32 %v3304, %v3328
    %v3345 = vadd.f32 %v3305, %v3329
    %v3346 = vadd.f32 %v3306, %v3330
    %v3347 = vadd.f32 %v3307, %v3331
    %s3348 = scalar_lea.vmem [#allocation4], 400
    %v3349 = vld [vmem:[%s3348] sm:$0xff]
    %v3350 = vld [vmem:[%s3348 + $0x8] sm:$0xff]
    %v3351 = vld [vmem:[%s3348 + $0x10] sm:$0xff]
    %v3352 = vld [vmem:[%s3348 + $0x18] sm:$0xff]
    %v3353 = vld [vmem:[%s3348 + $0x20] sm:$0xff]
    %v3354 = vld [vmem:[%s3348 + $0x28] sm:$0xff]
    %v3355 = vld [vmem:[%s3348 + $0x30] sm:$0xff]
    %v3356 = vld [vmem:[%s3348 + $0x38] sm:$0xff]
    %v3357 = vld [vmem:[%s3348 + $0x40] sm:$0xff]
    %v3358 = vld [vmem:[%s3348 + $0x48] sm:$0xff]
    %v3359 = vmul.f32 %v689, %v3349
    %v3360 = vmul.f32 %v689, %v3350
    %v3361 = vmul.f32 %v689, %v3351
    %v3362 = vmul.f32 %v689, %v3352
    %v3363 = vmul.f32 %v689, %v3353
    %v3364 = vmul.f32 %v689, %v3354
    %v3365 = vmul.f32 %v689, %v3355
    %v3366 = vmul.f32 %v689, %v3356
    %v3367 = vadd.f32 %v3340, %v3359
    %v3368 = vadd.f32 %v3341, %v3360
    %v3369 = vadd.f32 %v3342, %v3361
    %v3370 = vadd.f32 %v3343, %v3362
    %v3371 = vadd.f32 %v3344, %v3363
    %v3372 = vadd.f32 %v3345, %v3364
    %v3373 = vadd.f32 %v3346, %v3365
    %v3374 = vadd.f32 %v3347, %v3366
    %v3375 = vmul.f32 %v707, %v3349
    %v3376 = vmul.f32 %v707, %v3350
    %v3377 = vmul.f32 %v707, %v3351
    %v3378 = vmul.f32 %v707, %v3352
    %v3379 = vmul.f32 %v707, %v3353
    %v3380 = vmul.f32 %v707, %v3354
    %v3381 = vmul.f32 %v707, %v3355
    %v3382 = vmul.f32 %v707, %v3356
    %v3391 = vrot.slane %v3375, 1
    %v3392 = vrot.slane %v3376, 1
    %v3393 = vrot.slane %v3377, 1
    %v3394 = vrot.slane %v3378, 1
    %v3395 = vrot.slane %v3379, 1
    %v3396 = vrot.slane %v3380, 1
    %v3397 = vrot.slane %v3381, 1
    %v3398 = vrot.slane %v3382, 1
    %v3407 = vadd.f32 %v3367, %v3391
    %v3408 = vadd.f32 %v3368, %v3392
    %v3409 = vadd.f32 %v3369, %v3393
    %v3410 = vadd.f32 %v3370, %v3394
    %v3411 = vadd.f32 %v3371, %v3395
    %v3412 = vadd.f32 %v3372, %v3396
    %v3413 = vadd.f32 %v3373, %v3397
    %v3414 = vadd.f32 %v3374, %v3398
    %v3415 = vmul.f32 %v749, %v3349
    %v3416 = vmul.f32 %v749, %v3350
    %v3417 = vmul.f32 %v749, %v3351
    %v3418 = vmul.f32 %v749, %v3352
    %v3419 = vmul.f32 %v749, %v3353
    %v3420 = vmul.f32 %v749, %v3354
    %v3421 = vmul.f32 %v749, %v3355
    %v3422 = vmul.f32 %v749, %v3356
    %v3431 = vrot.slane %v3415, 2
    %v3432 = vrot.slane %v3416, 2
    %v3433 = vrot.slane %v3417, 2
    %v3434 = vrot.slane %v3418, 2
    %v3435 = vrot.slane %v3419, 2
    %v3436 = vrot.slane %v3420, 2
    %v3437 = vrot.slane %v3421, 2
    %v3438 = vrot.slane %v3422, 2
    %v3447 = vadd.f32 %v3407, %v3431
    %v3448 = vadd.f32 %v3408, %v3432
    %v3449 = vadd.f32 %v3409, %v3433
    %v3450 = vadd.f32 %v3410, %v3434
    %v3451 = vadd.f32 %v3411, %v3435
    %v3452 = vadd.f32 %v3412, %v3436
    %v3453 = vadd.f32 %v3413, %v3437
    %v3454 = vadd.f32 %v3414, %v3438
    %v3455 = vmul.f32 %v791, %v3350
    %v3456 = vmul.f32 %v791, %v3351
    %v3457 = vmul.f32 %v791, %v3352
    %v3458 = vmul.f32 %v791, %v3353
    %v3459 = vmul.f32 %v791, %v3354
    %v3460 = vmul.f32 %v791, %v3355
    %v3461 = vmul.f32 %v791, %v3356
    %v3462 = vmul.f32 %v791, %v3357
    %v3463 = vadd.f32 %v3447, %v3455
    %v3464 = vadd.f32 %v3448, %v3456
    %v3465 = vadd.f32 %v3449, %v3457
    %v3466 = vadd.f32 %v3450, %v3458
    %v3467 = vadd.f32 %v3451, %v3459
    %v3468 = vadd.f32 %v3452, %v3460
    %v3469 = vadd.f32 %v3453, %v3461
    %v3470 = vadd.f32 %v3454, %v3462
    %v3471 = vmul.f32 %v809, %v3350
    %v3472 = vmul.f32 %v809, %v3351
    %v3473 = vmul.f32 %v809, %v3352
    %v3474 = vmul.f32 %v809, %v3353
    %v3475 = vmul.f32 %v809, %v3354
    %v3476 = vmul.f32 %v809, %v3355
    %v3477 = vmul.f32 %v809, %v3356
    %v3478 = vmul.f32 %v809, %v3357
    %v3487 = vrot.slane %v3471, 1
    %v3488 = vrot.slane %v3472, 1
    %v3489 = vrot.slane %v3473, 1
    %v3490 = vrot.slane %v3474, 1
    %v3491 = vrot.slane %v3475, 1
    %v3492 = vrot.slane %v3476, 1
    %v3493 = vrot.slane %v3477, 1
    %v3494 = vrot.slane %v3478, 1
    %v3503 = vadd.f32 %v3463, %v3487
    %v3504 = vadd.f32 %v3464, %v3488
    %v3505 = vadd.f32 %v3465, %v3489
    %v3506 = vadd.f32 %v3466, %v3490
    %v3507 = vadd.f32 %v3467, %v3491
    %v3508 = vadd.f32 %v3468, %v3492
    %v3509 = vadd.f32 %v3469, %v3493
    %v3510 = vadd.f32 %v3470, %v3494
    %v3511 = vmul.f32 %v851, %v3350
    %v3512 = vmul.f32 %v851, %v3351
    %v3513 = vmul.f32 %v851, %v3352
    %v3514 = vmul.f32 %v851, %v3353
    %v3515 = vmul.f32 %v851, %v3354
    %v3516 = vmul.f32 %v851, %v3355
    %v3517 = vmul.f32 %v851, %v3356
    %v3518 = vmul.f32 %v851, %v3357
    %v3527 = vrot.slane %v3511, 2
    %v3528 = vrot.slane %v3512, 2
    %v3529 = vrot.slane %v3513, 2
    %v3530 = vrot.slane %v3514, 2
    %v3531 = vrot.slane %v3515, 2
    %v3532 = vrot.slane %v3516, 2
    %v3533 = vrot.slane %v3517, 2
    %v3534 = vrot.slane %v3518, 2
    %v3543 = vadd.f32 %v3503, %v3527
    %v3544 = vadd.f32 %v3504, %v3528
    %v3545 = vadd.f32 %v3505, %v3529
    %v3546 = vadd.f32 %v3506, %v3530
    %v3547 = vadd.f32 %v3507, %v3531
    %v3548 = vadd.f32 %v3508, %v3532
    %v3549 = vadd.f32 %v3509, %v3533
    %v3550 = vadd.f32 %v3510, %v3534
    %v3551 = vmul.f32 %v893, %v3351
    %v3552 = vmul.f32 %v893, %v3352
    %v3553 = vmul.f32 %v893, %v3353
    %v3554 = vmul.f32 %v893, %v3354
    %v3555 = vmul.f32 %v893, %v3355
    %v3556 = vmul.f32 %v893, %v3356
    %v3557 = vmul.f32 %v893, %v3357
    %v3558 = vmul.f32 %v893, %v3358
    %v3559 = vadd.f32 %v3543, %v3551
    %v3560 = vadd.f32 %v3544, %v3552
    %v3561 = vadd.f32 %v3545, %v3553
    %v3562 = vadd.f32 %v3546, %v3554
    %v3563 = vadd.f32 %v3547, %v3555
    %v3564 = vadd.f32 %v3548, %v3556
    %v3565 = vadd.f32 %v3549, %v3557
    %v3566 = vadd.f32 %v3550, %v3558
    %v3567 = vmul.f32 %v911, %v3351
    %v3568 = vmul.f32 %v911, %v3352
    %v3569 = vmul.f32 %v911, %v3353
    %v3570 = vmul.f32 %v911, %v3354
    %v3571 = vmul.f32 %v911, %v3355
    %v3572 = vmul.f32 %v911, %v3356
    %v3573 = vmul.f32 %v911, %v3357
    %v3574 = vmul.f32 %v911, %v3358
    %v3583 = vrot.slane %v3567, 1
    %v3584 = vrot.slane %v3568, 1
    %v3585 = vrot.slane %v3569, 1
    %v3586 = vrot.slane %v3570, 1
    %v3587 = vrot.slane %v3571, 1
    %v3588 = vrot.slane %v3572, 1
    %v3589 = vrot.slane %v3573, 1
    %v3590 = vrot.slane %v3574, 1
    %v3599 = vadd.f32 %v3559, %v3583
    %v3600 = vadd.f32 %v3560, %v3584
    %v3601 = vadd.f32 %v3561, %v3585
    %v3602 = vadd.f32 %v3562, %v3586
    %v3603 = vadd.f32 %v3563, %v3587
    %v3604 = vadd.f32 %v3564, %v3588
    %v3605 = vadd.f32 %v3565, %v3589
    %v3606 = vadd.f32 %v3566, %v3590
    %v3607 = vmul.f32 %v953, %v3351
    %v3608 = vmul.f32 %v953, %v3352
    %v3609 = vmul.f32 %v953, %v3353
    %v3610 = vmul.f32 %v953, %v3354
    %v3611 = vmul.f32 %v953, %v3355
    %v3612 = vmul.f32 %v953, %v3356
    %v3613 = vmul.f32 %v953, %v3357
    %v3614 = vmul.f32 %v953, %v3358
    %v3623 = vrot.slane %v3607, 2
    %v3624 = vrot.slane %v3608, 2
    %v3625 = vrot.slane %v3609, 2
    %v3626 = vrot.slane %v3610, 2
    %v3627 = vrot.slane %v3611, 2
    %v3628 = vrot.slane %v3612, 2
    %v3629 = vrot.slane %v3613, 2
    %v3630 = vrot.slane %v3614, 2
    %v3639 = vadd.f32 %v3599, %v3623
    %v3640 = vadd.f32 %v3600, %v3624
    %v3641 = vadd.f32 %v3601, %v3625
    %v3642 = vadd.f32 %v3602, %v3626
    %v3643 = vadd.f32 %v3603, %v3627
    %v3644 = vadd.f32 %v3604, %v3628
    %v3645 = vadd.f32 %v3605, %v3629
    %v3646 = vadd.f32 %v3606, %v3630
    %v3647 = vmax.f32 %v2772, %v3639
    %v3648 = vmax.f32 %v2773, %v3640
    %v3649 = vmax.f32 %v2774, %v3641
    %v3650 = vmax.f32 %v2775, %v3642
    %v3651 = vmax.f32 %v2776, %v3643
    %v3652 = vmax.f32 %v2777, %v3644
    %v3653 = vmax.f32 %v2778, %v3645
    %v3654 = vmax.f32 %v2779, %v3646
    %v3655 = vmax.f32 %v3647, %v3648
    %v3657 = vrot.slane %v3655, 1
    %v3659 = vmax.f32 %v3655, %v3657
    %v3660 = vadd.f32 %v3659, %v1874
    %v3661 = vtanh.pop %v3660
    %s3662 = scalar_lea.vmem %s3, 32
    %v3663 = vld [vmem:[%s3662] sm:$0x1f]
    %v3664 = vmul.f32 %v3663, %v3661
    %v3665 = vadd.f32 %v1912, %v3664
    %v3666 = vmax.f32 %v3649, %v3650
    %v3668 = vrot.slane %v3666, 1
    %v3670 = vmax.f32 %v3666, %v3668
    %v3671 = vadd.f32 %v3670, %v1874
    %v3672 = vtanh.pop %v3671
    %s3673 = scalar_lea.vmem %s3, 40
    %v3674 = vld [vmem:[%s3673] sm:$0x1f]
    %v3675 = vmul.f32 %v3674, %v3672
    %v3676 = vadd.f32 %v3665, %v3675
    %v3677 = vmax.f32 %v3651, %v3652
    %v3679 = vrot.slane %v3677, 1
    %v3681 = vmax.f32 %v3677, %v3679
    %v3682 = vadd.f32 %v3681, %v1874
    %v3683 = vtanh.pop %v3682
    %s3684 = scalar_lea.vmem %s3, 48
    %v3685 = vld [vmem:[%s3684] sm:$0x1f]
    %v3686 = vmul.f32 %v3685, %v3683
    %v3687 = vadd.f32 %v3676, %v3686
    %v3688 = vmax.f32 %v3653, %v3654
    %v3690 = vrot.slane %v3688, 1
    %v3692 = vmax.f32 %v3688, %v3690
    %v3693 = vadd.f32 %v3692, %v1874
    %v3694 = vtanh.pop %v3693
    %s3695 = scalar_lea.vmem %s3, 56
    %v3696 = vld [vmem:[%s3695] sm:$0x1f]
    %v3697 = vmul.f32 %v3696, %v3694
    %v3698 = vadd.f32 %v3687, %v3697
    %v3699 = vmul.f32 %v63, %v2482
    %v3700 = vmul.f32 %v63, %v2483
    %v3701 = vmul.f32 %v63, %v2484
    %v3702 = vmul.f32 %v63, %v2485
    %v3703 = vmul.f32 %v63, %v2486
    %v3704 = vmul.f32 %v63, %v2487
    %v3705 = vmul.f32 %v63, %v2488
    %v3706 = vmul.f32 %v63, %v2489
    %v3707 = vmul.f32 %v73, %v2482
    %v3708 = vmul.f32 %v73, %v2483
    %v3709 = vmul.f32 %v73, %v2484
    %v3710 = vmul.f32 %v73, %v2485
    %v3711 = vmul.f32 %v73, %v2486
    %v3712 = vmul.f32 %v73, %v2487
    %v3713 = vmul.f32 %v73, %v2488
    %v3714 = vmul.f32 %v73, %v2489
    %v3723 = vrot.slane %v3707, 1
    %v3724 = vrot.slane %v3708, 1
    %v3725 = vrot.slane %v3709, 1
    %v3726 = vrot.slane %v3710, 1
    %v3727 = vrot.slane %v3711, 1
    %v3728 = vrot.slane %v3712, 1
    %v3729 = vrot.slane %v3713, 1
    %v3730 = vrot.slane %v3714, 1
    %v3739 = vadd.f32 %v3699, %v3723
    %v3740 = vadd.f32 %v3700, %v3724
    %v3741 = vadd.f32 %v3701, %v3725
    %v3742 = vadd.f32 %v3702, %v3726
    %v3743 = vadd.f32 %v3703, %v3727
    %v3744 = vadd.f32 %v3704, %v3728
    %v3745 = vadd.f32 %v3705, %v3729
    %v3746 = vadd.f32 %v3706, %v3730
    %v3747 = vmul.f32 %v115, %v2482
    %v3748 = vmul.f32 %v115, %v2483
    %v3749 = vmul.f32 %v115, %v2484
    %v3750 = vmul.f32 %v115, %v2485
    %v3751 = vmul.f32 %v115, %v2486
    %v3752 = vmul.f32 %v115, %v2487
    %v3753 = vmul.f32 %v115, %v2488
    %v3754 = vmul.f32 %v115, %v2489
    %v3763 = vrot.slane %v3747, 2
    %v3764 = vrot.slane %v3748, 2
    %v3765 = vrot.slane %v3749, 2
    %v3766 = vrot.slane %v3750, 2
    %v3767 = vrot.slane %v3751, 2
    %v3768 = vrot.slane %v3752, 2
    %v3769 = vrot.slane %v3753, 2
    %v3770 = vrot.slane %v3754, 2
    %v3779 = vadd.f32 %v3739, %v3763
    %v3780 = vadd.f32 %v3740, %v3764
    %v3781 = vadd.f32 %v3741, %v3765
    %v3782 = vadd.f32 %v3742, %v3766
    %v3783 = vadd.f32 %v3743, %v3767
    %v3784 = vadd.f32 %v3744, %v3768
    %v3785 = vadd.f32 %v3745, %v3769
    %v3786 = vadd.f32 %v3746, %v3770
    %v3787 = vmul.f32 %v157, %v2483
    %v3788 = vmul.f32 %v157, %v2484
    %v3789 = vmul.f32 %v157, %v2485
    %v3790 = vmul.f32 %v157, %v2486
    %v3791 = vmul.f32 %v157, %v2487
    %v3792 = vmul.f32 %v157, %v2488
    %v3793 = vmul.f32 %v157, %v2489
    %v3794 = vmul.f32 %v157, %v2490
    %v3795 = vadd.f32 %v3779, %v3787
    %v3796 = vadd.f32 %v3780, %v3788
    %v3797 = vadd.f32 %v3781, %v3789
    %v3798 = vadd.f32 %v3782, %v3790
    %v3799 = vadd.f32 %v3783, %v3791
    %v3800 = vadd.f32 %v3784, %v3792
    %v3801 = vadd.f32 %v3785, %v3793
    %v3802 = vadd.f32 %v3786, %v3794
    %v3803 = vmul.f32 %v175, %v2483
    %v3804 = vmul.f32 %v175, %v2484
    %v3805 = vmul.f32 %v175, %v2485
    %v3806 = vmul.f32 %v175, %v2486
    %v3807 = vmul.f32 %v175, %v2487
    %v3808 = vmul.f32 %v175, %v2488
    %v3809 = vmul.f32 %v175, %v2489
    %v3810 = vmul.f32 %v175, %v2490
    %v3819 = vrot.slane %v3803, 1
    %v3820 = vrot.slane %v3804, 1
    %v3821 = vrot.slane %v3805, 1
    %v3822 = vrot.slane %v3806, 1
    %v3823 = vrot.slane %v3807, 1
    %v3824 = vrot.slane %v3808, 1
    %v3825 = vrot.slane %v3809, 1
    %v3826 = vrot.slane %v3810, 1
    %v3835 = vadd.f32 %v3795, %v3819
    %v3836 = vadd.f32 %v3796, %v3820
    %v3837 = vadd.f32 %v3797, %v3821
    %v3838 = vadd.f32 %v3798, %v3822
    %v3839 = vadd.f32 %v3799, %v3823
    %v3840 = vadd.f32 %v3800, %v3824
    %v3841 = vadd.f32 %v3801, %v3825
    %v3842 = vadd.f32 %v3802, %v3826
    %v3843 = vmul.f32 %v217, %v2483
    %v3844 = vmul.f32 %v217, %v2484
    %v3845 = vmul.f32 %v217, %v2485
    %v3846 = vmul.f32 %v217, %v2486
    %v3847 = vmul.f32 %v217, %v2487
    %v3848 = vmul.f32 %v217, %v2488
    %v3849 = vmul.f32 %v217, %v2489
    %v3850 = vmul.f32 %v217, %v2490
    %v3859 = vrot.slane %v3843, 2
    %v3860 = vrot.slane %v3844, 2
    %v3861 = vrot.slane %v3845, 2
    %v3862 = vrot.slane %v3846, 2
    %v3863 = vrot.slane %v3847, 2
    %v3864 = vrot.slane %v3848, 2
    %v3865 = vrot.slane %v3849, 2
    %v3866 = vrot.slane %v3850, 2
    %v3875 = vadd.f32 %v3835, %v3859
    %v3876 = vadd.f32 %v3836, %v3860
    %v3877 = vadd.f32 %v3837, %v3861
    %v3878 = vadd.f32 %v3838, %v3862
    %v3879 = vadd.f32 %v3839, %v3863
    %v3880 = vadd.f32 %v3840, %v3864
    %v3881 = vadd.f32 %v3841, %v3865
    %v3882 = vadd.f32 %v3842, %v3866
    %v3883 = vmul.f32 %v259, %v2484
    %v3884 = vmul.f32 %v259, %v2485
    %v3885 = vmul.f32 %v259, %v2486
    %v3886 = vmul.f32 %v259, %v2487
    %v3887 = vmul.f32 %v259, %v2488
    %v3888 = vmul.f32 %v259, %v2489
    %v3889 = vmul.f32 %v259, %v2490
    %v3890 = vmul.f32 %v259, %v2491
    %v3891 = vadd.f32 %v3875, %v3883
    %v3892 = vadd.f32 %v3876, %v3884
    %v3893 = vadd.f32 %v3877, %v3885
    %v3894 = vadd.f32 %v3878, %v3886
    %v3895 = vadd.f32 %v3879, %v3887
    %v3896 = vadd.f32 %v3880, %v3888
    %v3897 = vadd.f32 %v3881, %v3889
    %v3898 = vadd.f32 %v3882, %v3890
    %v3899 = vmul.f32 %v277, %v2484
    %v3900 = vmul.f32 %v277, %v2485
    %v3901 = vmul.f32 %v277, %v2486
    %v3902 = vmul.f32 %v277, %v2487
    %v3903 = vmul.f32 %v277, %v2488
    %v3904 = vmul.f32 %v277, %v2489
    %v3905 = vmul.f32 %v277, %v2490
    %v3906 = vmul.f32 %v277, %v2491
    %v3915 = vrot.slane %v3899, 1
    %v3916 = vrot.slane %v3900, 1
    %v3917 = vrot.slane %v3901, 1
    %v3918 = vrot.slane %v3902, 1
    %v3919 = vrot.slane %v3903, 1
    %v3920 = vrot.slane %v3904, 1
    %v3921 = vrot.slane %v3905, 1
    %v3922 = vrot.slane %v3906, 1
    %v3931 = vadd.f32 %v3891, %v3915
    %v3932 = vadd.f32 %v3892, %v3916
    %v3933 = vadd.f32 %v3893, %v3917
    %v3934 = vadd.f32 %v3894, %v3918
    %v3935 = vadd.f32 %v3895, %v3919
    %v3936 = vadd.f32 %v3896, %v3920
    %v3937 = vadd.f32 %v3897, %v3921
    %v3938 = vadd.f32 %v3898, %v3922
    %v3939 = vmul.f32 %v319, %v2484
    %v3940 = vmul.f32 %v319, %v2485
    %v3941 = vmul.f32 %v319, %v2486
    %v3942 = vmul.f32 %v319, %v2487
    %v3943 = vmul.f32 %v319, %v2488
    %v3944 = vmul.f32 %v319, %v2489
    %v3945 = vmul.f32 %v319, %v2490
    %v3946 = vmul.f32 %v319, %v2491
    %v3955 = vrot.slane %v3939, 2
    %v3956 = vrot.slane %v3940, 2
    %v3957 = vrot.slane %v3941, 2
    %v3958 = vrot.slane %v3942, 2
    %v3959 = vrot.slane %v3943, 2
    %v3960 = vrot.slane %v3944, 2
    %v3961 = vrot.slane %v3945, 2
    %v3962 = vrot.slane %v3946, 2
    %v3971 = vadd.f32 %v3931, %v3955
    %v3972 = vadd.f32 %v3932, %v3956
    %v3973 = vadd.f32 %v3933, %v3957
    %v3974 = vadd.f32 %v3934, %v3958
    %v3975 = vadd.f32 %v3935, %v3959
    %v3976 = vadd.f32 %v3936, %v3960
    %v3977 = vadd.f32 %v3937, %v3961
    %v3978 = vadd.f32 %v3938, %v3962
    %v3979 = vmul.f32 %v372, %v3349
    %v3980 = vmul.f32 %v372, %v3350
    %v3981 = vmul.f32 %v372, %v3351
    %v3982 = vmul.f32 %v372, %v3352
    %v3983 = vmul.f32 %v372, %v3353
    %v3984 = vmul.f32 %v372, %v3354
    %v3985 = vmul.f32 %v372, %v3355
    %v3986 = vmul.f32 %v372, %v3356
    %v3987 = vadd.f32 %v3971, %v3979
    %v3988 = vadd.f32 %v3972, %v3980
    %v3989 = vadd.f32 %v3973, %v3981
    %v3990 = vadd.f32 %v3974, %v3982
    %v3991 = vadd.f32 %v3975, %v3983
    %v3992 = vadd.f32 %v3976, %v3984
    %v3993 = vadd.f32 %v3977, %v3985
    %v3994 = vadd.f32 %v3978, %v3986
    %v3995 = vmul.f32 %v390, %v3349
    %v3996 = vmul.f32 %v390, %v3350
    %v3997 = vmul.f32 %v390, %v3351
    %v3998 = vmul.f32 %v390, %v3352
    %v3999 = vmul.f32 %v390, %v3353
    %v4000 = vmul.f32 %v390, %v3354
    %v4001 = vmul.f32 %v390, %v3355
    %v4002 = vmul.f32 %v390, %v3356
    %v4011 = vrot.slane %v3995, 1
    %v4012 = vrot.slane %v3996, 1
    %v4013 = vrot.slane %v3997, 1
    %v4014 = vrot.slane %v3998, 1
    %v4015 = vrot.slane %v3999, 1
    %v4016 = vrot.slane %v4000, 1
    %v4017 = vrot.slane %v4001, 1
    %v4018 = vrot.slane %v4002, 1
    %v4027 = vadd.f32 %v3987, %v4011
    %v4028 = vadd.f32 %v3988, %v4012
    %v4029 = vadd.f32 %v3989, %v4013
    %v4030 = vadd.f32 %v3990, %v4014
    %v4031 = vadd.f32 %v3991, %v4015
    %v4032 = vadd.f32 %v3992, %v4016
    %v4033 = vadd.f32 %v3993, %v4017
    %v4034 = vadd.f32 %v3994, %v4018
    %v4035 = vmul.f32 %v432, %v3349
    %v4036 = vmul.f32 %v432, %v3350
    %v4037 = vmul.f32 %v432, %v3351
    %v4038 = vmul.f32 %v432, %v3352
    %v4039 = vmul.f32 %v432, %v3353
    %v4040 = vmul.f32 %v432, %v3354
    %v4041 = vmul.f32 %v432, %v3355
    %v4042 = vmul.f32 %v432, %v3356
    %v4051 = vrot.slane %v4035, 2
    %v4052 = vrot.slane %v4036, 2
    %v4053 = vrot.slane %v4037, 2
    %v4054 = vrot.slane %v4038, 2
    %v4055 = vrot.slane %v4039, 2
    %v4056 = vrot.slane %v4040, 2
    %v4057 = vrot.slane %v4041, 2
    %v4058 = vrot.slane %v4042, 2
    %v4067 = vadd.f32 %v4027, %v4051
    %v4068 = vadd.f32 %v4028, %v4052
    %v4069 = vadd.f32 %v4029, %v4053
    %v4070 = vadd.f32 %v4030, %v4054
    %v4071 = vadd.f32 %v4031, %v4055
    %v4072 = vadd.f32 %v4032, %v4056
    %v4073 = vadd.f32 %v4033, %v4057
    %v4074 = vadd.f32 %v4034, %v4058
    %v4075 = vmul.f32 %v474, %v3350
    %v4076 = vmul.f32 %v474, %v3351
    %v4077 = vmul.f32 %v474, %v3352
    %v4078 = vmul.f32 %v474, %v3353
    %v4079 = vmul.f32 %v474, %v3354
    %v4080 = vmul.f32 %v474, %v3355
    %v4081 = vmul.f32 %v474, %v3356
    %v4082 = vmul.f32 %v474, %v3357
    %v4083 = vadd.f32 %v4067, %v4075
    %v4084 = vadd.f32 %v4068, %v4076
    %v4085 = vadd.f32 %v4069, %v4077
    %v4086 = vadd.f32 %v4070, %v4078
    %v4087 = vadd.f32 %v4071, %v4079
    %v4088 = vadd.f32 %v4072, %v4080
    %v4089 = vadd.f32 %v4073, %v4081
    %v4090 = vadd.f32 %v4074, %v4082
    %v4091 = vmul.f32 %v492, %v3350
    %v4092 = vmul.f32 %v492, %v3351
    %v4093 = vmul.f32 %v492, %v3352
    %v4094 = vmul.f32 %v492, %v3353
    %v4095 = vmul.f32 %v492, %v3354
    %v4096 = vmul.f32 %v492, %v3355
    %v4097 = vmul.f32 %v492, %v3356
    %v4098 = vmul.f32 %v492, %v3357
    %v4107 = vrot.slane %v4091, 1
    %v4108 = vrot.slane %v4092, 1
    %v4109 = vrot.slane %v4093, 1
    %v4110 = vrot.slane %v4094, 1
    %v4111 = vrot.slane %v4095, 1
    %v4112 = vrot.slane %v4096, 1
    %v4113 = vrot.slane %v4097, 1
    %v4114 = vrot.slane %v4098, 1
    %v4123 = vadd.f32 %v4083, %v4107
    %v4124 = vadd.f32 %v4084, %v4108
    %v4125 = vadd.f32 %v4085, %v4109
    %v4126 = vadd.f32 %v4086, %v4110
    %v4127 = vadd.f32 %v4087, %v4111
    %v4128 = vadd.f32 %v4088, %v4112
    %v4129 = vadd.f32 %v4089, %v4113
    %v4130 = vadd.f32 %v4090, %v4114
    %v4131 = vmul.f32 %v534, %v3350
    %v4132 = vmul.f32 %v534, %v3351
    %v4133 = vmul.f32 %v534, %v3352
    %v4134 = vmul.f32 %v534, %v3353
    %v4135 = vmul.f32 %v534, %v3354
    %v4136 = vmul.f32 %v534, %v3355
    %v4137 = vmul.f32 %v534, %v3356
    %v4138 = vmul.f32 %v534, %v3357
    %v4147 = vrot.slane %v4131, 2
    %v4148 = vrot.slane %v4132, 2
    %v4149 = vrot.slane %v4133, 2
    %v4150 = vrot.slane %v4134, 2
    %v4151 = vrot.slane %v4135, 2
    %v4152 = vrot.slane %v4136, 2
    %v4153 = vrot.slane %v4137, 2
    %v4154 = vrot.slane %v4138, 2
    %v4163 = vadd.f32 %v4123, %v4147
    %v4164 = vadd.f32 %v4124, %v4148
    %v4165 = vadd.f32 %v4125, %v4149
    %v4166 = vadd.f32 %v4126, %v4150
    %v4167 = vadd.f32 %v4127, %v4151
    %v4168 = vadd.f32 %v4128, %v4152
    %v4169 = vadd.f32 %v4129, %v4153
    %v4170 = vadd.f32 %v4130, %v4154
    %v4171 = vmul.f32 %v576, %v3351
    %v4172 = vmul.f32 %v576, %v3352
    %v4173 = vmul.f32 %v576, %v3353
    %v4174 = vmul.f32 %v576, %v3354
    %v4175 = vmul.f32 %v576, %v3355
    %v4176 = vmul.f32 %v576, %v3356
    %v4177 = vmul.f32 %v576, %v3357
    %v4178 = vmul.f32 %v576, %v3358
    %v4179 = vadd.f32 %v4163, %v4171
    %v4180 = vadd.f32 %v4164, %v4172
    %v4181 = vadd.f32 %v4165, %v4173
    %v4182 = vadd.f32 %v4166, %v4174
    %v4183 = vadd.f32 %v4167, %v4175
    %v4184 = vadd.f32 %v4168, %v4176
    %v4185 = vadd.f32 %v4169, %v4177
    %v4186 = vadd.f32 %v4170, %v4178
    %v4187 = vmul.f32 %v594, %v3351
    %v4188 = vmul.f32 %v594, %v3352
    %v4189 = vmul.f32 %v594, %v3353
    %v4190 = vmul.f32 %v594, %v3354
    %v4191 = vmul.f32 %v594, %v3355
    %v4192 = vmul.f32 %v594, %v3356
    %v4193 = vmul.f32 %v594, %v3357
    %v4194 = vmul.f32 %v594, %v3358
    %v4203 = vrot.slane %v4187, 1
    %v4204 = vrot.slane %v4188, 1
    %v4205 = vrot.slane %v4189, 1
    %v4206 = vrot.slane %v4190, 1
    %v4207 = vrot.slane %v4191, 1
    %v4208 = vrot.slane %v4192, 1
    %v4209 = vrot.slane %v4193, 1
    %v4210 = vrot.slane %v4194, 1
    %v4219 = vadd.f32 %v4179, %v4203
    %v4220 = vadd.f32 %v4180, %v4204
    %v4221 = vadd.f32 %v4181, %v4205
    %v4222 = vadd.f32 %v4182, %v4206
    %v4223 = vadd.f32 %v4183, %v4207
    %v4224 = vadd.f32 %v4184, %v4208
    %v4225 = vadd.f32 %v4185, %v4209
    %v4226 = vadd.f32 %v4186, %v4210
    %v4227 = vmul.f32 %v636, %v3351
    %v4228 = vmul.f32 %v636, %v3352
    %v4229 = vmul.f32 %v636, %v3353
    %v4230 = vmul.f32 %v636, %v3354
    %v4231 = vmul.f32 %v636, %v3355
    %v4232 = vmul.f32 %v636, %v3356
    %v4233 = vmul.f32 %v636, %v3357
    %v4234 = vmul.f32 %v636, %v3358
    %v4243 = vrot.slane %v4227, 2
    %v4244 = vrot.slane %v4228, 2
    %v4245 = vrot.slane %v4229, 2
    %v4246 = vrot.slane %v4230, 2
    %v4247 = vrot.slane %v4231, 2
    %v4248 = vrot.slane %v4232, 2
    %v4249 = vrot.slane %v4233, 2
    %v4250 = vrot.slane %v4234, 2
    %v4259 = vadd.f32 %v4219, %v4243
    %v4260 = vadd.f32 %v4220, %v4244
    %v4261 = vadd.f32 %v4221, %v4245
    %v4262 = vadd.f32 %v4222, %v4246
    %v4263 = vadd.f32 %v4223, %v4247
    %v4264 = vadd.f32 %v4224, %v4248
    %v4265 = vadd.f32 %v4225, %v4249
    %v4266 = vadd.f32 %v4226, %v4250
    %s4267 = scalar_lea.vmem [#allocation4], 480
    %v4268 = vld [vmem:[%s4267] sm:$0xff]
    %v4269 = vld [vmem:[%s4267 + $0x8] sm:$0xff]
    %v4270 = vld [vmem:[%s4267 + $0x10] sm:$0xff]
    %v4271 = vld [vmem:[%s4267 + $0x18] sm:$0xff]
    %v4272 = vld [vmem:[%s4267 + $0x20] sm:$0xff]
    %v4273 = vld [vmem:[%s4267 + $0x28] sm:$0xff]
    %v4274 = vld [vmem:[%s4267 + $0x30] sm:$0xff]
    %v4275 = vld [vmem:[%s4267 + $0x38] sm:$0xff]
    %v4276 = vld [vmem:[%s4267 + $0x40] sm:$0xff]
    %v4277 = vld [vmem:[%s4267 + $0x48] sm:$0xff]
    %v4278 = vmul.f32 %v689, %v4268
    %v4279 = vmul.f32 %v689, %v4269
    %v4280 = vmul.f32 %v689, %v4270
    %v4281 = vmul.f32 %v689, %v4271
    %v4282 = vmul.f32 %v689, %v4272
    %v4283 = vmul.f32 %v689, %v4273
    %v4284 = vmul.f32 %v689, %v4274
    %v4285 = vmul.f32 %v689, %v4275
    %v4286 = vadd.f32 %v4259, %v4278
    %v4287 = vadd.f32 %v4260, %v4279
    %v4288 = vadd.f32 %v4261, %v4280
    %v4289 = vadd.f32 %v4262, %v4281
    %v4290 = vadd.f32 %v4263, %v4282
    %v4291 = vadd.f32 %v4264, %v4283
    %v4292 = vadd.f32 %v4265, %v4284
    %v4293 = vadd.f32 %v4266, %v4285
    %v4294 = vmul.f32 %v707, %v4268
    %v4295 = vmul.f32 %v707, %v4269
    %v4296 = vmul.f32 %v707, %v4270
    %v4297 = vmul.f32 %v707, %v4271
    %v4298 = vmul.f32 %v707, %v4272
    %v4299 = vmul.f32 %v707, %v4273
    %v4300 = vmul.f32 %v707, %v4274
    %v4301 = vmul.f32 %v707, %v4275
    %v4310 = vrot.slane %v4294, 1
    %v4311 = vrot.slane %v4295, 1
    %v4312 = vrot.slane %v4296, 1
    %v4313 = vrot.slane %v4297, 1
    %v4314 = vrot.slane %v4298, 1
    %v4315 = vrot.slane %v4299, 1
    %v4316 = vrot.slane %v4300, 1
    %v4317 = vrot.slane %v4301, 1
    %v4326 = vadd.f32 %v4286, %v4310
    %v4327 = vadd.f32 %v4287, %v4311
    %v4328 = vadd.f32 %v4288, %v4312
    %v4329 = vadd.f32 %v4289, %v4313
    %v4330 = vadd.f32 %v4290, %v4314
    %v4331 = vadd.f32 %v4291, %v4315
    %v4332 = vadd.f32 %v4292, %v4316
    %v4333 = vadd.f32 %v4293, %v4317
    %v4334 = vmul.f32 %v749, %v4268
    %v4335 = vmul.f32 %v749, %v4269
    %v4336 = vmul.f32 %v749, %v4270
    %v4337 = vmul.f32 %v749, %v4271
    %v4338 = vmul.f32 %v749, %v4272
    %v4339 = vmul.f32 %v749, %v4273
    %v4340 = vmul.f32 %v749, %v4274
    %v4341 = vmul.f32 %v749, %v4275
    %v4350 = vrot.slane %v4334, 2
    %v4351 = vrot.slane %v4335, 2
    %v4352 = vrot.slane %v4336, 2
    %v4353 = vrot.slane %v4337, 2
    %v4354 = vrot.slane %v4338, 2
    %v4355 = vrot.slane %v4339, 2
    %v4356 = vrot.slane %v4340, 2
    %v4357 = vrot.slane %v4341, 2
    %v4366 = vadd.f32 %v4326, %v4350
    %v4367 = vadd.f32 %v4327, %v4351
    %v4368 = vadd.f32 %v4328, %v4352
    %v4369 = vadd.f32 %v4329, %v4353
    %v4370 = vadd.f32 %v4330, %v4354
    %v4371 = vadd.f32 %v4331, %v4355
    %v4372 = vadd.f32 %v4332, %v4356
    %v4373 = vadd.f32 %v4333, %v4357
    %v4374 = vmul.f32 %v791, %v4269
    %v4375 = vmul.f32 %v791, %v4270
    %v4376 = vmul.f32 %v791, %v4271
    %v4377 = vmul.f32 %v791, %v4272
    %v4378 = vmul.f32 %v791, %v4273
    %v4379 = vmul.f32 %v791, %v4274
    %v4380 = vmul.f32 %v791, %v4275
    %v4381 = vmul.f32 %v791, %v4276
    %v4382 = vadd.f32 %v4366, %v4374
    %v4383 = vadd.f32 %v4367, %v4375
    %v4384 = vadd.f32 %v4368, %v4376
    %v4385 = vadd.f32 %v4369, %v4377
    %v4386 = vadd.f32 %v4370, %v4378
    %v4387 = vadd.f32 %v4371, %v4379
    %v4388 = vadd.f32 %v4372, %v4380
    %v4389 = vadd.f32 %v4373, %v4381
    %v4390 = vmul.f32 %v809, %v4269
    %v4391 = vmul.f32 %v809, %v4270
    %v4392 = vmul.f32 %v809, %v4271
    %v4393 = vmul.f32 %v809, %v4272
    %v4394 = vmul.f32 %v809, %v4273
    %v4395 = vmul.f32 %v809, %v4274
    %v4396 = vmul.f32 %v809, %v4275
    %v4397 = vmul.f32 %v809, %v4276
    %v4406 = vrot.slane %v4390, 1
    %v4407 = vrot.slane %v4391, 1
    %v4408 = vrot.slane %v4392, 1
    %v4409 = vrot.slane %v4393, 1
    %v4410 = vrot.slane %v4394, 1
    %v4411 = vrot.slane %v4395, 1
    %v4412 = vrot.slane %v4396, 1
    %v4413 = vrot.slane %v4397, 1
    %v4422 = vadd.f32 %v4382, %v4406
    %v4423 = vadd.f32 %v4383, %v4407
    %v4424 = vadd.f32 %v4384, %v4408
    %v4425 = vadd.f32 %v4385, %v4409
    %v4426 = vadd.f32 %v4386, %v4410
    %v4427 = vadd.f32 %v4387, %v4411
    %v4428 = vadd.f32 %v4388, %v4412
    %v4429 = vadd.f32 %v4389, %v4413
    %v4430 = vmul.f32 %v851, %v4269
    %v4431 = vmul.f32 %v851, %v4270
    %v4432 = vmul.f32 %v851, %v4271
    %v4433 = vmul.f32 %v851, %v4272
    %v4434 = vmul.f32 %v851, %v4273
    %v4435 = vmul.f32 %v851, %v4274
    %v4436 = vmul.f32 %v851, %v4275
    %v4437 = vmul.f32 %v851, %v4276
    %v4446 = vrot.slane %v4430, 2
    %v4447 = vrot.slane %v4431, 2
    %v4448 = vrot.slane %v4432, 2
    %v4449 = vrot.slane %v4433, 2
    %v4450 = vrot.slane %v4434, 2
    %v4451 = vrot.slane %v4435, 2
    %v4452 = vrot.slane %v4436, 2
    %v4453 = vrot.slane %v4437, 2
    %v4462 = vadd.f32 %v4422, %v4446
    %v4463 = vadd.f32 %v4423, %v4447
    %v4464 = vadd.f32 %v4424, %v4448
    %v4465 = vadd.f32 %v4425, %v4449
    %v4466 = vadd.f32 %v4426, %v4450
    %v4467 = vadd.f32 %v4427, %v4451
    %v4468 = vadd.f32 %v4428, %v4452
    %v4469 = vadd.f32 %v4429, %v4453
    %v4470 = vmul.f32 %v893, %v4270
    %v4471 = vmul.f32 %v893, %v4271
    %v4472 = vmul.f32 %v893, %v4272
    %v4473 = vmul.f32 %v893, %v4273
    %v4474 = vmul.f32 %v893, %v4274
    %v4475 = vmul.f32 %v893, %v4275
    %v4476 = vmul.f32 %v893, %v4276
    %v4477 = vmul.f32 %v893, %v4277
    %v4478 = vadd.f32 %v4462, %v4470
    %v4479 = vadd.f32 %v4463, %v4471
    %v4480 = vadd.f32 %v4464, %v4472
    %v4481 = vadd.f32 %v4465, %v4473
    %v4482 = vadd.f32 %v4466, %v4474
    %v4483 = vadd.f32 %v4467, %v4475
    %v4484 = vadd.f32 %v4468, %v4476
    %v4485 = vadd.f32 %v4469, %v4477
    %v4486 = vmul.f32 %v911, %v4270
    %v4487 = vmul.f32 %v911, %v4271
    %v4488 = vmul.f32 %v911, %v4272
    %v4489 = vmul.f32 %v911, %v4273
    %v4490 = vmul.f32 %v911, %v4274
    %v4491 = vmul.f32 %v911, %v4275
    %v4492 = vmul.f32 %v911, %v4276
    %v4493 = vmul.f32 %v911, %v4277
    %v4502 = vrot.slane %v4486, 1
    %v4503 = vrot.slane %v4487, 1
    %v4504 = vrot.slane %v4488, 1
    %v4505 = vrot.slane %v4489, 1
    %v4506 = vrot.slane %v4490, 1
    %v4507 = vrot.slane %v4491, 1
    %v4508 = vrot.slane %v4492, 1
    %v4509 = vrot.slane %v4493, 1
    %v4518 = vadd.f32 %v4478, %v4502
    %v4519 = vadd.f32 %v4479, %v4503
    %v4520 = vadd.f32 %v4480, %v4504
    %v4521 = vadd.f32 %v4481, %v4505
    %v4522 = vadd.f32 %v4482, %v4506
    %v4523 = vadd.f32 %v4483, %v4507
    %v4524 = vadd.f32 %v4484, %v4508
    %v4525 = vadd.f32 %v4485, %v4509
    %v4526 = vmul.f32 %v953, %v4270
    %v4527 = vmul.f32 %v953, %v4271
    %v4528 = vmul.f32 %v953, %v4272
    %v4529 = vmul.f32 %v953, %v4273
    %v4530 = vmul.f32 %v953, %v4274
    %v4531 = vmul.f32 %v953, %v4275
    %v4532 = vmul.f32 %v953, %v4276
    %v4533 = vmul.f32 %v953, %v4277
    %v4542 = vrot.slane %v4526, 2
    %v4543 = vrot.slane %v4527, 2
    %v4544 = vrot.slane %v4528, 2
    %v4545 = vrot.slane %v4529, 2
    %v4546 = vrot.slane %v4530, 2
    %v4547 = vrot.slane %v4531, 2
    %v4548 = vrot.slane %v4532, 2
    %v4549 = vrot.slane %v4533, 2
    %v4558 = vadd.f32 %v4518, %v4542
    %v4559 = vadd.f32 %v4519, %v4543
    %v4560 = vadd.f32 %v4520, %v4544
    %v4561 = vadd.f32 %v4521, %v4545
    %v4562 = vadd.f32 %v4522, %v4546
    %v4563 = vadd.f32 %v4523, %v4547
    %v4564 = vadd.f32 %v4524, %v4548
    %v4565 = vadd.f32 %v4525, %v4549
    %v4566 = vmul.f32 %v63, %v3349
    %v4567 = vmul.f32 %v63, %v3350
    %v4568 = vmul.f32 %v63, %v3351
    %v4569 = vmul.f32 %v63, %v3352
    %v4570 = vmul.f32 %v63, %v3353
    %v4571 = vmul.f32 %v63, %v3354
    %v4572 = vmul.f32 %v63, %v3355
    %v4573 = vmul.f32 %v63, %v3356
    %v4574 = vmul.f32 %v73, %v3349
    %v4575 = vmul.f32 %v73, %v3350
    %v4576 = vmul.f32 %v73, %v3351
    %v4577 = vmul.f32 %v73, %v3352
    %v4578 = vmul.f32 %v73, %v3353
    %v4579 = vmul.f32 %v73, %v3354
    %v4580 = vmul.f32 %v73, %v3355
    %v4581 = vmul.f32 %v73, %v3356
    %v4590 = vrot.slane %v4574, 1
    %v4591 = vrot.slane %v4575, 1
    %v4592 = vrot.slane %v4576, 1
    %v4593 = vrot.slane %v4577, 1
    %v4594 = vrot.slane %v4578, 1
    %v4595 = vrot.slane %v4579, 1
    %v4596 = vrot.slane %v4580, 1
    %v4597 = vrot.slane %v4581, 1
    %v4606 = vadd.f32 %v4566, %v4590
    %v4607 = vadd.f32 %v4567, %v4591
    %v4608 = vadd.f32 %v4568, %v4592
    %v4609 = vadd.f32 %v4569, %v4593
    %v4610 = vadd.f32 %v4570, %v4594
    %v4611 = vadd.f32 %v4571, %v4595
    %v4612 = vadd.f32 %v4572, %v4596
    %v4613 = vadd.f32 %v4573, %v4597
    %v4614 = vmul.f32 %v115, %v3349
    %v4615 = vmul.f32 %v115, %v3350
    %v4616 = vmul.f32 %v115, %v3351
    %v4617 = vmul.f32 %v115, %v3352
    %v4618 = vmul.f32 %v115, %v3353
    %v4619 = vmul.f32 %v115, %v3354
    %v4620 = vmul.f32 %v115, %v3355
    %v4621 = vmul.f32 %v115, %v3356
    %v4630 = vrot.slane %v4614, 2
    %v4631 = vrot.slane %v4615, 2
    %v4632 = vrot.slane %v4616, 2
    %v4633 = vrot.slane %v4617, 2
    %v4634 = vrot.slane %v4618, 2
    %v4635 = vrot.slane %v4619, 2
    %v4636 = vrot.slane %v4620, 2
    %v4637 = vrot.slane %v4621, 2
    %v4646 = vadd.f32 %v4606, %v4630
    %v4647 = vadd.f32 %v4607, %v4631
    %v4648 = vadd.f32 %v4608, %v4632
    %v4649 = vadd.f32 %v4609, %v4633
    %v4650 = vadd.f32 %v4610, %v4634
    %v4651 = vadd.f32 %v4611, %v4635
    %v4652 = vadd.f32 %v4612, %v4636
    %v4653 = vadd.f32 %v4613, %v4637
    %v4654 = vmul.f32 %v157, %v3350
    %v4655 = vmul.f32 %v157, %v3351
    %v4656 = vmul.f32 %v157, %v3352
    %v4657 = vmul.f32 %v157, %v3353
    %v4658 = vmul.f32 %v157, %v3354
    %v4659 = vmul.f32 %v157, %v3355
    %v4660 = vmul.f32 %v157, %v3356
    %v4661 = vmul.f32 %v157, %v3357
    %v4662 = vadd.f32 %v4646, %v4654
    %v4663 = vadd.f32 %v4647, %v4655
    %v4664 = vadd.f32 %v4648, %v4656
    %v4665 = vadd.f32 %v4649, %v4657
    %v4666 = vadd.f32 %v4650, %v4658
    %v4667 = vadd.f32 %v4651, %v4659
    %v4668 = vadd.f32 %v4652, %v4660
    %v4669 = vadd.f32 %v4653, %v4661
    %v4670 = vmul.f32 %v175, %v3350
    %v4671 = vmul.f32 %v175, %v3351
    %v4672 = vmul.f32 %v175, %v3352
    %v4673 = vmul.f32 %v175, %v3353
    %v4674 = vmul.f32 %v175, %v3354
    %v4675 = vmul.f32 %v175, %v3355
    %v4676 = vmul.f32 %v175, %v3356
    %v4677 = vmul.f32 %v175, %v3357
    %v4686 = vrot.slane %v4670, 1
    %v4687 = vrot.slane %v4671, 1
    %v4688 = vrot.slane %v4672, 1
    %v4689 = vrot.slane %v4673, 1
    %v4690 = vrot.slane %v4674, 1
    %v4691 = vrot.slane %v4675, 1
    %v4692 = vrot.slane %v4676, 1
    %v4693 = vrot.slane %v4677, 1
    %v4702 = vadd.f32 %v4662, %v4686
    %v4703 = vadd.f32 %v4663, %v4687
    %v4704 = vadd.f32 %v4664, %v4688
    %v4705 = vadd.f32 %v4665, %v4689
    %v4706 = vadd.f32 %v4666, %v4690
    %v4707 = vadd.f32 %v4667, %v4691
    %v4708 = vadd.f32 %v4668, %v4692
    %v4709 = vadd.f32 %v4669, %v4693
    %v4710 = vmul.f32 %v217, %v3350
    %v4711 = vmul.f32 %v217, %v3351
    %v4712 = vmul.f32 %v217, %v3352
    %v4713 = vmul.f32 %v217, %v3353
    %v4714 = vmul.f32 %v217, %v3354
    %v4715 = vmul.f32 %v217, %v3355
    %v4716 = vmul.f32 %v217, %v3356
    %v4717 = vmul.f32 %v217, %v3357
    %v4726 = vrot.slane %v4710, 2
    %v4727 = vrot.slane %v4711, 2
    %v4728 = vrot.slane %v4712, 2
    %v4729 = vrot.slane %v4713, 2
    %v4730 = vrot.slane %v4714, 2
    %v4731 = vrot.slane %v4715, 2
    %v4732 = vrot.slane %v4716, 2
    %v4733 = vrot.slane %v4717, 2
    %v4742 = vadd.f32 %v4702, %v4726
    %v4743 = vadd.f32 %v4703, %v4727
    %v4744 = vadd.f32 %v4704, %v4728
    %v4745 = vadd.f32 %v4705, %v4729
    %v4746 = vadd.f32 %v4706, %v4730
    %v4747 = vadd.f32 %v4707, %v4731
    %v4748 = vadd.f32 %v4708, %v4732
    %v4749 = vadd.f32 %v4709, %v4733
    %v4750 = vmul.f32 %v259, %v3351
    %v4751 = vmul.f32 %v259, %v3352
    %v4752 = vmul.f32 %v259, %v3353
    %v4753 = vmul.f32 %v259, %v3354
    %v4754 = vmul.f32 %v259, %v3355
    %v4755 = vmul.f32 %v259, %v3356
    %v4756 = vmul.f32 %v259, %v3357
    %v4757 = vmul.f32 %v259, %v3358
    %v4758 = vadd.f32 %v4742, %v4750
    %v4759 = vadd.f32 %v4743, %v4751
    %v4760 = vadd.f32 %v4744, %v4752
    %v4761 = vadd.f32 %v4745, %v4753
    %v4762 = vadd.f32 %v4746, %v4754
    %v4763 = vadd.f32 %v4747, %v4755
    %v4764 = vadd.f32 %v4748, %v4756
    %v4765 = vadd.f32 %v4749, %v4757
    %v4766 = vmul.f32 %v277, %v3351
    %v4767 = vmul.f32 %v277, %v3352
    %v4768 = vmul.f32 %v277, %v3353
    %v4769 = vmul.f32 %v277, %v3354
    %v4770 = vmul.f32 %v277, %v3355
    %v4771 = vmul.f32 %v277, %v3356
    %v4772 = vmul.f32 %v277, %v3357
    %v4773 = vmul.f32 %v277, %v3358
    %v4782 = vrot.slane %v4766, 1
    %v4783 = vrot.slane %v4767, 1
    %v4784 = vrot.slane %v4768, 1
    %v4785 = vrot.slane %v4769, 1
    %v4786 = vrot.slane %v4770, 1
    %v4787 = vrot.slane %v4771, 1
    %v4788 = vrot.slane %v4772, 1
    %v4789 = vrot.slane %v4773, 1
    %v4798 = vadd.f32 %v4758, %v4782
    %v4799 = vadd.f32 %v4759, %v4783
    %v4800 = vadd.f32 %v4760, %v4784
    %v4801 = vadd.f32 %v4761, %v4785
    %v4802 = vadd.f32 %v4762, %v4786
    %v4803 = vadd.f32 %v4763, %v4787
    %v4804 = vadd.f32 %v4764, %v4788
    %v4805 = vadd.f32 %v4765, %v4789
    %v4806 = vmul.f32 %v319, %v3351
    %v4807 = vmul.f32 %v319, %v3352
    %v4808 = vmul.f32 %v319, %v3353
    %v4809 = vmul.f32 %v319, %v3354
    %v4810 = vmul.f32 %v319, %v3355
    %v4811 = vmul.f32 %v319, %v3356
    %v4812 = vmul.f32 %v319, %v3357
    %v4813 = vmul.f32 %v319, %v3358
    %v4822 = vrot.slane %v4806, 2
    %v4823 = vrot.slane %v4807, 2
    %v4824 = vrot.slane %v4808, 2
    %v4825 = vrot.slane %v4809, 2
    %v4826 = vrot.slane %v4810, 2
    %v4827 = vrot.slane %v4811, 2
    %v4828 = vrot.slane %v4812, 2
    %v4829 = vrot.slane %v4813, 2
    %v4838 = vadd.f32 %v4798, %v4822
    %v4839 = vadd.f32 %v4799, %v4823
    %v4840 = vadd.f32 %v4800, %v4824
    %v4841 = vadd.f32 %v4801, %v4825
    %v4842 = vadd.f32 %v4802, %v4826
    %v4843 = vadd.f32 %v4803, %v4827
    %v4844 = vadd.f32 %v4804, %v4828
    %v4845 = vadd.f32 %v4805, %v4829
    %v4846 = vmul.f32 %v372, %v4268
    %v4847 = vmul.f32 %v372, %v4269
    %v4848 = vmul.f32 %v372, %v4270
    %v4849 = vmul.f32 %v372, %v4271
    %v4850 = vmul.f32 %v372, %v4272
    %v4851 = vmul.f32 %v372, %v4273
    %v4852 = vmul.f32 %v372, %v4274
    %v4853 = vmul.f32 %v372, %v4275
    %v4854 = vadd.f32 %v4838, %v4846
    %v4855 = vadd.f32 %v4839, %v4847
    %v4856 = vadd.f32 %v4840, %v4848
    %v4857 = vadd.f32 %v4841, %v4849
    %v4858 = vadd.f32 %v4842, %v4850
    %v4859 = vadd.f32 %v4843, %v4851
    %v4860 = vadd.f32 %v4844, %v4852
    %v4861 = vadd.f32 %v4845, %v4853
    %v4862 = vmul.f32 %v390, %v4268
    %v4863 = vmul.f32 %v390, %v4269
    %v4864 = vmul.f32 %v390, %v4270
    %v4865 = vmul.f32 %v390, %v4271
    %v4866 = vmul.f32 %v390, %v4272
    %v4867 = vmul.f32 %v390, %v4273
    %v4868 = vmul.f32 %v390, %v4274
    %v4869 = vmul.f32 %v390, %v4275
    %v4878 = vrot.slane %v4862, 1
    %v4879 = vrot.slane %v4863, 1
    %v4880 = vrot.slane %v4864, 1
    %v4881 = vrot.slane %v4865, 1
    %v4882 = vrot.slane %v4866, 1
    %v4883 = vrot.slane %v4867, 1
    %v4884 = vrot.slane %v4868, 1
    %v4885 = vrot.slane %v4869, 1
    %v4894 = vadd.f32 %v4854, %v4878
    %v4895 = vadd.f32 %v4855, %v4879
    %v4896 = vadd.f32 %v4856, %v4880
    %v4897 = vadd.f32 %v4857, %v4881
    %v4898 = vadd.f32 %v4858, %v4882
    %v4899 = vadd.f32 %v4859, %v4883
    %v4900 = vadd.f32 %v4860, %v4884
    %v4901 = vadd.f32 %v4861, %v4885
    %v4902 = vmul.f32 %v432, %v4268
    %v4903 = vmul.f32 %v432, %v4269
    %v4904 = vmul.f32 %v432, %v4270
    %v4905 = vmul.f32 %v432, %v4271
    %v4906 = vmul.f32 %v432, %v4272
    %v4907 = vmul.f32 %v432, %v4273
    %v4908 = vmul.f32 %v432, %v4274
    %v4909 = vmul.f32 %v432, %v4275
    %v4918 = vrot.slane %v4902, 2
    %v4919 = vrot.slane %v4903, 2
    %v4920 = vrot.slane %v4904, 2
    %v4921 = vrot.slane %v4905, 2
    %v4922 = vrot.slane %v4906, 2
    %v4923 = vrot.slane %v4907, 2
    %v4924 = vrot.slane %v4908, 2
    %v4925 = vrot.slane %v4909, 2
    %v4934 = vadd.f32 %v4894, %v4918
    %v4935 = vadd.f32 %v4895, %v4919
    %v4936 = vadd.f32 %v4896, %v4920
    %v4937 = vadd.f32 %v4897, %v4921
    %v4938 = vadd.f32 %v4898, %v4922
    %v4939 = vadd.f32 %v4899, %v4923
    %v4940 = vadd.f32 %v4900, %v4924
    %v4941 = vadd.f32 %v4901, %v4925
    %v4942 = vmul.f32 %v474, %v4269
    %v4943 = vmul.f32 %v474, %v4270
    %v4944 = vmul.f32 %v474, %v4271
    %v4945 = vmul.f32 %v474, %v4272
    %v4946 = vmul.f32 %v474, %v4273
    %v4947 = vmul.f32 %v474, %v4274
    %v4948 = vmul.f32 %v474, %v4275
    %v4949 = vmul.f32 %v474, %v4276
    %v4950 = vadd.f32 %v4934, %v4942
    %v4951 = vadd.f32 %v4935, %v4943
    %v4952 = vadd.f32 %v4936, %v4944
    %v4953 = vadd.f32 %v4937, %v4945
    %v4954 = vadd.f32 %v4938, %v4946
    %v4955 = vadd.f32 %v4939, %v4947
    %v4956 = vadd.f32 %v4940, %v4948
    %v4957 = vadd.f32 %v4941, %v4949
    %v4958 = vmul.f32 %v492, %v4269
    %v4959 = vmul.f32 %v492, %v4270
    %v4960 = vmul.f32 %v492, %v4271
    %v4961 = vmul.f32 %v492, %v4272
    %v4962 = vmul.f32 %v492, %v4273
    %v4963 = vmul.f32 %v492, %v4274
    %v4964 = vmul.f32 %v492, %v4275
    %v4965 = vmul.f32 %v492, %v4276
    %v4974 = vrot.slane %v4958, 1
    %v4975 = vrot.slane %v4959, 1
    %v4976 = vrot.slane %v4960, 1
    %v4977 = vrot.slane %v4961, 1
    %v4978 = vrot.slane %v4962, 1
    %v4979 = vrot.slane %v4963, 1
    %v4980 = vrot.slane %v4964, 1
    %v4981 = vrot.slane %v4965, 1
    %v4990 = vadd.f32 %v4950, %v4974
    %v4991 = vadd.f32 %v4951, %v4975
    %v4992 = vadd.f32 %v4952, %v4976
    %v4993 = vadd.f32 %v4953, %v4977
    %v4994 = vadd.f32 %v4954, %v4978
    %v4995 = vadd.f32 %v4955, %v4979
    %v4996 = vadd.f32 %v4956, %v4980
    %v4997 = vadd.f32 %v4957, %v4981
    %v4998 = vmul.f32 %v534, %v4269
    %v4999 = vmul.f32 %v534, %v4270
    %v5000 = vmul.f32 %v534, %v4271
    %v5001 = vmul.f32 %v534, %v4272
    %v5002 = vmul.f32 %v534, %v4273
    %v5003 = vmul.f32 %v534, %v4274
    %v5004 = vmul.f32 %v534, %v4275
    %v5005 = vmul.f32 %v534, %v4276
    %v5014 = vrot.slane %v4998, 2
    %v5015 = vrot.slane %v4999, 2
    %v5016 = vrot.slane %v5000, 2
    %v5017 = vrot.slane %v5001, 2
    %v5018 = vrot.slane %v5002, 2
    %v5019 = vrot.slane %v5003, 2
    %v5020 = vrot.slane %v5004, 2
    %v5021 = vrot.slane %v5005, 2
    %v5030 = vadd.f32 %v4990, %v5014
    %v5031 = vadd.f32 %v4991, %v5015
    %v5032 = vadd.f32 %v4992, %v5016
    %v5033 = vadd.f32 %v4993, %v5017
    %v5034 = vadd.f32 %v4994, %v5018
    %v5035 = vadd.f32 %v4995, %v5019
    %v5036 = vadd.f32 %v4996, %v5020
    %v5037 = vadd.f32 %v4997, %v5021
    %v5038 = vmul.f32 %v576, %v4270
    %v5039 = vmul.f32 %v576, %v4271
    %v5040 = vmul.f32 %v576, %v4272
    %v5041 = vmul.f32 %v576, %v4273
    %v5042 = vmul.f32 %v576, %v4274
    %v5043 = vmul.f32 %v576, %v4275
    %v5044 = vmul.f32 %v576, %v4276
    %v5045 = vmul.f32 %v576, %v4277
    %v5046 = vadd.f32 %v5030, %v5038
    %v5047 = vadd.f32 %v5031, %v5039
    %v5048 = vadd.f32 %v5032, %v5040
    %v5049 = vadd.f32 %v5033, %v5041
    %v5050 = vadd.f32 %v5034, %v5042
    %v5051 = vadd.f32 %v5035, %v5043
    %v5052 = vadd.f32 %v5036, %v5044
    %v5053 = vadd.f32 %v5037, %v5045
    %v5054 = vmul.f32 %v594, %v4270
    %v5055 = vmul.f32 %v594, %v4271
    %v5056 = vmul.f32 %v594, %v4272
    %v5057 = vmul.f32 %v594, %v4273
    %v5058 = vmul.f32 %v594, %v4274
    %v5059 = vmul.f32 %v594, %v4275
    %v5060 = vmul.f32 %v594, %v4276
    %v5061 = vmul.f32 %v594, %v4277
    %v5070 = vrot.slane %v5054, 1
    %v5071 = vrot.slane %v5055, 1
    %v5072 = vrot.slane %v5056, 1
    %v5073 = vrot.slane %v5057, 1
    %v5074 = vrot.slane %v5058, 1
    %v5075 = vrot.slane %v5059, 1
    %v5076 = vrot.slane %v5060, 1
    %v5077 = vrot.slane %v5061, 1
    %v5086 = vadd.f32 %v5046, %v5070
    %v5087 = vadd.f32 %v5047, %v5071
    %v5088 = vadd.f32 %v5048, %v5072
    %v5089 = vadd.f32 %v5049, %v5073
    %v5090 = vadd.f32 %v5050, %v5074
    %v5091 = vadd.f32 %v5051, %v5075
    %v5092 = vadd.f32 %v5052, %v5076
    %v5093 = vadd.f32 %v5053, %v5077
    %v5094 = vmul.f32 %v636, %v4270
    %v5095 = vmul.f32 %v636, %v4271
    %v5096 = vmul.f32 %v636, %v4272
    %v5097 = vmul.f32 %v636, %v4273
    %v5098 = vmul.f32 %v636, %v4274
    %v5099 = vmul.f32 %v636, %v4275
    %v5100 = vmul.f32 %v636, %v4276
    %v5101 = vmul.f32 %v636, %v4277
    %v5110 = vrot.slane %v5094, 2
    %v5111 = vrot.slane %v5095, 2
    %v5112 = vrot.slane %v5096, 2
    %v5113 = vrot.slane %v5097, 2
    %v5114 = vrot.slane %v5098, 2
    %v5115 = vrot.slane %v5099, 2
    %v5116 = vrot.slane %v5100, 2
    %v5117 = vrot.slane %v5101, 2
    %v5126 = vadd.f32 %v5086, %v5110
    %v5127 = vadd.f32 %v5087, %v5111
    %v5128 = vadd.f32 %v5088, %v5112
    %v5129 = vadd.f32 %v5089, %v5113
    %v5130 = vadd.f32 %v5090, %v5114
    %v5131 = vadd.f32 %v5091, %v5115
    %v5132 = vadd.f32 %v5092, %v5116
    %v5133 = vadd.f32 %v5093, %v5117
    %s5134 = scalar_lea.vmem [#allocation4], 560
    %v5135 = vld [vmem:[%s5134] sm:$0xff]
    %v5136 = vld [vmem:[%s5134 + $0x8] sm:$0xff]
    %v5137 = vld [vmem:[%s5134 + $0x10] sm:$0xff]
    %v5138 = vld [vmem:[%s5134 + $0x18] sm:$0xff]
    %v5139 = vld [vmem:[%s5134 + $0x20] sm:$0xff]
    %v5140 = vld [vmem:[%s5134 + $0x28] sm:$0xff]
    %v5141 = vld [vmem:[%s5134 + $0x30] sm:$0xff]
    %v5142 = vld [vmem:[%s5134 + $0x38] sm:$0xff]
    %v5143 = vld [vmem:[%s5134 + $0x40] sm:$0xff]
    %v5144 = vld [vmem:[%s5134 + $0x48] sm:$0xff]
    %v5145 = vmul.f32 %v689, %v5135
    %v5146 = vmul.f32 %v689, %v5136
    %v5147 = vmul.f32 %v689, %v5137
    %v5148 = vmul.f32 %v689, %v5138
    %v5149 = vmul.f32 %v689, %v5139
    %v5150 = vmul.f32 %v689, %v5140
    %v5151 = vmul.f32 %v689, %v5141
    %v5152 = vmul.f32 %v689, %v5142
    %v5153 = vadd.f32 %v5126, %v5145
    %v5154 = vadd.f32 %v5127, %v5146
    %v5155 = vadd.f32 %v5128, %v5147
    %v5156 = vadd.f32 %v5129, %v5148
    %v5157 = vadd.f32 %v5130, %v5149
    %v5158 = vadd.f32 %v5131, %v5150
    %v5159 = vadd.f32 %v5132, %v5151
    %v5160 = vadd.f32 %v5133, %v5152
    %v5161 = vmul.f32 %v707, %v5135
    %v5162 = vmul.f32 %v707, %v5136
    %v5163 = vmul.f32 %v707, %v5137
    %v5164 = vmul.f32 %v707, %v5138
    %v5165 = vmul.f32 %v707, %v5139
    %v5166 = vmul.f32 %v707, %v5140
    %v5167 = vmul.f32 %v707, %v5141
    %v5168 = vmul.f32 %v707, %v5142
    %v5177 = vrot.slane %v5161, 1
    %v5178 = vrot.slane %v5162, 1
    %v5179 = vrot.slane %v5163, 1
    %v5180 = vrot.slane %v5164, 1
    %v5181 = vrot.slane %v5165, 1
    %v5182 = vrot.slane %v5166, 1
    %v5183 = vrot.slane %v5167, 1
    %v5184 = vrot.slane %v5168, 1
    %v5193 = vadd.f32 %v5153, %v5177
    %v5194 = vadd.f32 %v5154, %v5178
    %v5195 = vadd.f32 %v5155, %v5179
    %v5196 = vadd.f32 %v5156, %v5180
    %v5197 = vadd.f32 %v5157, %v5181
    %v5198 = vadd.f32 %v5158, %v5182
    %v5199 = vadd.f32 %v5159, %v5183
    %v5200 = vadd.f32 %v5160, %v5184
    %v5201 = vmul.f32 %v749, %v5135
    %v5202 = vmul.f32 %v749, %v5136
    %v5203 = vmul.f32 %v749, %v5137
    %v5204 = vmul.f32 %v749, %v5138
    %v5205 = vmul.f32 %v749, %v5139
    %v5206 = vmul.f32 %v749, %v5140
    %v5207 = vmul.f32 %v749, %v5141
    %v5208 = vmul.f32 %v749, %v5142
    %v5217 = vrot.slane %v5201, 2
    %v5218 = vrot.slane %v5202, 2
    %v5219 = vrot.slane %v5203, 2
    %v5220 = vrot.slane %v5204, 2
    %v5221 = vrot.slane %v5205, 2
    %v5222 = vrot.slane %v5206, 2
    %v5223 = vrot.slane %v5207, 2
    %v5224 = vrot.slane %v5208, 2
    %v5233 = vadd.f32 %v5193, %v5217
    %v5234 = vadd.f32 %v5194, %v5218
    %v5235 = vadd.f32 %v5195, %v5219
    %v5236 = vadd.f32 %v5196, %v5220
    %v5237 = vadd.f32 %v5197, %v5221
    %v5238 = vadd.f32 %v5198, %v5222
    %v5239 = vadd.f32 %v5199, %v5223
    %v5240 = vadd.f32 %v5200, %v5224
    %v5241 = vmul.f32 %v791, %v5136
    %v5242 = vmul.f32 %v791, %v5137
    %v5243 = vmul.f32 %v791, %v5138
    %v5244 = vmul.f32 %v791, %v5139
    %v5245 = vmul.f32 %v791, %v5140
    %v5246 = vmul.f32 %v791, %v5141
    %v5247 = vmul.f32 %v791, %v5142
    %v5248 = vmul.f32 %v791, %v5143
    %v5249 = vadd.f32 %v5233, %v5241
    %v5250 = vadd.f32 %v5234, %v5242
    %v5251 = vadd.f32 %v5235, %v5243
    %v5252 = vadd.f32 %v5236, %v5244
    %v5253 = vadd.f32 %v5237, %v5245
    %v5254 = vadd.f32 %v5238, %v5246
    %v5255 = vadd.f32 %v5239, %v5247
    %v5256 = vadd.f32 %v5240, %v5248
    %v5257 = vmul.f32 %v809, %v5136
    %v5258 = vmul.f32 %v809, %v5137
    %v5259 = vmul.f32 %v809, %v5138
    %v5260 = vmul.f32 %v809, %v5139
    %v5261 = vmul.f32 %v809, %v5140
    %v5262 = vmul.f32 %v809, %v5141
    %v5263 = vmul.f32 %v809, %v5142
    %v5264 = vmul.f32 %v809, %v5143
    %v5273 = vrot.slane %v5257, 1
    %v5274 = vrot.slane %v5258, 1
    %v5275 = vrot.slane %v5259, 1
    %v5276 = vrot.slane %v5260, 1
    %v5277 = vrot.slane %v5261, 1
    %v5278 = vrot.slane %v5262, 1
    %v5279 = vrot.slane %v5263, 1
    %v5280 = vrot.slane %v5264, 1
    %v5289 = vadd.f32 %v5249, %v5273
    %v5290 = vadd.f32 %v5250, %v5274
    %v5291 = vadd.f32 %v5251, %v5275
    %v5292 = vadd.f32 %v5252, %v5276
    %v5293 = vadd.f32 %v5253, %v5277
    %v5294 = vadd.f32 %v5254, %v5278
    %v5295 = vadd.f32 %v5255, %v5279
    %v5296 = vadd.f32 %v5256, %v5280
    %v5297 = vmul.f32 %v851, %v5136
    %v5298 = vmul.f32 %v851, %v5137
    %v5299 = vmul.f32 %v851, %v5138
    %v5300 = vmul.f32 %v851, %v5139
    %v5301 = vmul.f32 %v851, %v5140
    %v5302 = vmul.f32 %v851, %v5141
    %v5303 = vmul.f32 %v851, %v5142
    %v5304 = vmul.f32 %v851, %v5143
    %v5313 = vrot.slane %v5297, 2
    %v5314 = vrot.slane %v5298, 2
    %v5315 = vrot.slane %v5299, 2
    %v5316 = vrot.slane %v5300, 2
    %v5317 = vrot.slane %v5301, 2
    %v5318 = vrot.slane %v5302, 2
    %v5319 = vrot.slane %v5303, 2
    %v5320 = vrot.slane %v5304, 2
    %v5329 = vadd.f32 %v5289, %v5313
    %v5330 = vadd.f32 %v5290, %v5314
    %v5331 = vadd.f32 %v5291, %v5315
    %v5332 = vadd.f32 %v5292, %v5316
    %v5333 = vadd.f32 %v5293, %v5317
    %v5334 = vadd.f32 %v5294, %v5318
    %v5335 = vadd.f32 %v5295, %v5319
    %v5336 = vadd.f32 %v5296, %v5320
    %v5337 = vmul.f32 %v893, %v5137
    %v5338 = vmul.f32 %v893, %v5138
    %v5339 = vmul.f32 %v893, %v5139
    %v5340 = vmul.f32 %v893, %v5140
    %v5341 = vmul.f32 %v893, %v5141
    %v5342 = vmul.f32 %v893, %v5142
    %v5343 = vmul.f32 %v893, %v5143
    %v5344 = vmul.f32 %v893, %v5144
    %v5345 = vadd.f32 %v5329, %v5337
    %v5346 = vadd.f32 %v5330, %v5338
    %v5347 = vadd.f32 %v5331, %v5339
    %v5348 = vadd.f32 %v5332, %v5340
    %v5349 = vadd.f32 %v5333, %v5341
    %v5350 = vadd.f32 %v5334, %v5342
    %v5351 = vadd.f32 %v5335, %v5343
    %v5352 = vadd.f32 %v5336, %v5344
    %v5353 = vmul.f32 %v911, %v5137
    %v5354 = vmul.f32 %v911, %v5138
    %v5355 = vmul.f32 %v911, %v5139
    %v5356 = vmul.f32 %v911, %v5140
    %v5357 = vmul.f32 %v911, %v5141
    %v5358 = vmul.f32 %v911, %v5142
    %v5359 = vmul.f32 %v911, %v5143
    %v5360 = vmul.f32 %v911, %v5144
    %v5369 = vrot.slane %v5353, 1
    %v5370 = vrot.slane %v5354, 1
    %v5371 = vrot.slane %v5355, 1
    %v5372 = vrot.slane %v5356, 1
    %v5373 = vrot.slane %v5357, 1
    %v5374 = vrot.slane %v5358, 1
    %v5375 = vrot.slane %v5359, 1
    %v5376 = vrot.slane %v5360, 1
    %v5385 = vadd.f32 %v5345, %v5369
    %v5386 = vadd.f32 %v5346, %v5370
    %v5387 = vadd.f32 %v5347, %v5371
    %v5388 = vadd.f32 %v5348, %v5372
    %v5389 = vadd.f32 %v5349, %v5373
    %v5390 = vadd.f32 %v5350, %v5374
    %v5391 = vadd.f32 %v5351, %v5375
    %v5392 = vadd.f32 %v5352, %v5376
    %v5393 = vmul.f32 %v953, %v5137
    %v5394 = vmul.f32 %v953, %v5138
    %v5395 = vmul.f32 %v953, %v5139
    %v5396 = vmul.f32 %v953, %v5140
    %v5397 = vmul.f32 %v953, %v5141
    %v5398 = vmul.f32 %v953, %v5142
    %v5399 = vmul.f32 %v953, %v5143
    %v5400 = vmul.f32 %v953, %v5144
    %v5409 = vrot.slane %v5393, 2
    %v5410 = vrot.slane %v5394, 2
    %v5411 = vrot.slane %v5395, 2
    %v5412 = vrot.slane %v5396, 2
    %v5413 = vrot.slane %v5397, 2
    %v5414 = vrot.slane %v5398, 2
    %v5415 = vrot.slane %v5399, 2
    %v5416 = vrot.slane %v5400, 2
    %v5425 = vadd.f32 %v5385, %v5409
    %v5426 = vadd.f32 %v5386, %v5410
    %v5427 = vadd.f32 %v5387, %v5411
    %v5428 = vadd.f32 %v5388, %v5412
    %v5429 = vadd.f32 %v5389, %v5413
    %v5430 = vadd.f32 %v5390, %v5414
    %v5431 = vadd.f32 %v5391, %v5415
    %v5432 = vadd.f32 %v5392, %v5416
    %v5433 = vmax.f32 %v4558, %v5425
    %v5434 = vmax.f32 %v4559, %v5426
    %v5435 = vmax.f32 %v4560, %v5427
    %v5436 = vmax.f32 %v4561, %v5428
    %v5437 = vmax.f32 %v4562, %v5429
    %v5438 = vmax.f32 %v4563, %v5430
    %v5439 = vmax.f32 %v4564, %v5431
    %v5440 = vmax.f32 %v4565, %v5432
    %v5441 = vmax.f32 %v5433, %v5434
    %v5443 = vrot.slane %v5441, 1
    %v5445 = vmax.f32 %v5441, %v5443
    %v5446 = vadd.f32 %v5445, %v1874
    %v5447 = vtanh.pop %v5446
    %s5448 = scalar_lea.vmem %s3, 64
    %v5449 = vld [vmem:[%s5448] sm:$0x1f]
    %v5450 = vmul.f32 %v5449, %v5447
    %v5451 = vadd.f32 %v3698, %v5450
    %v5452 = vmax.f32 %v5435, %v5436
    %v5454 = vrot.slane %v5452, 1
    %v5456 = vmax.f32 %v5452, %v5454
    %v5457 = vadd.f32 %v5456, %v1874
    %v5458 = vtanh.pop %v5457
    %s5459 = scalar_lea.vmem %s3, 72
    %v5460 = vld [vmem:[%s5459] sm:$0x1f]
    %v5461 = vmul.f32 %v5460, %v5458
    %v5462 = vadd.f32 %v5451, %v5461
    %v5463 = vmax.f32 %v5437, %v5438
    %v5465 = vrot.slane %v5463, 1
    %v5467 = vmax.f32 %v5463, %v5465
    %v5468 = vadd.f32 %v5467, %v1874
    %v5469 = vtanh.pop %v5468
    %s5470 = scalar_lea.vmem %s3, 80
    %v5471 = vld [vmem:[%s5470] sm:$0x1f]
    %v5472 = vmul.f32 %v5471, %v5469
    %v5473 = vadd.f32 %v5462, %v5472
    %v5474 = vmax.f32 %v5439, %v5440
    %v5476 = vrot.slane %v5474, 1
    %v5478 = vmax.f32 %v5474, %v5476
    %v5479 = vadd.f32 %v5478, %v1874
    %v5480 = vtanh.pop %v5479
    %s5481 = scalar_lea.vmem %s3, 88
    %v5482 = vld [vmem:[%s5481] sm:$0x1f]
    %v5483 = vmul.f32 %v5482, %v5480
    %v5484 = vadd.f32 %v5473, %v5483
    %v5485 = vmul.f32 %v63, %v4268
    %v5486 = vmul.f32 %v63, %v4269
    %v5487 = vmul.f32 %v63, %v4270
    %v5488 = vmul.f32 %v63, %v4271
    %v5489 = vmul.f32 %v63, %v4272
    %v5490 = vmul.f32 %v63, %v4273
    %v5491 = vmul.f32 %v63, %v4274
    %v5492 = vmul.f32 %v63, %v4275
    %v5493 = vmul.f32 %v73, %v4268
    %v5494 = vmul.f32 %v73, %v4269
    %v5495 = vmul.f32 %v73, %v4270
    %v5496 = vmul.f32 %v73, %v4271
    %v5497 = vmul.f32 %v73, %v4272
    %v5498 = vmul.f32 %v73, %v4273
    %v5499 = vmul.f32 %v73, %v4274
    %v5500 = vmul.f32 %v73, %v4275
    %v5509 = vrot.slane %v5493, 1
    %v5510 = vrot.slane %v5494, 1
    %v5511 = vrot.slane %v5495, 1
    %v5512 = vrot.slane %v5496, 1
    %v5513 = vrot.slane %v5497, 1
    %v5514 = vrot.slane %v5498, 1
    %v5515 = vrot.slane %v5499, 1
    %v5516 = vrot.slane %v5500, 1
    %v5525 = vadd.f32 %v5485, %v5509
    %v5526 = vadd.f32 %v5486, %v5510
    %v5527 = vadd.f32 %v5487, %v5511
    %v5528 = vadd.f32 %v5488, %v5512
    %v5529 = vadd.f32 %v5489, %v5513
    %v5530 = vadd.f32 %v5490, %v5514
    %v5531 = vadd.f32 %v5491, %v5515
    %v5532 = vadd.f32 %v5492, %v5516
    %v5533 = vmul.f32 %v115, %v4268
    %v5534 = vmul.f32 %v115, %v4269
    %v5535 = vmul.f32 %v115, %v4270
    %v5536 = vmul.f32 %v115, %v4271
    %v5537 = vmul.f32 %v115, %v4272
    %v5538 = vmul.f32 %v115, %v4273
    %v5539 = vmul.f32 %v115, %v4274
    %v5540 = vmul.f32 %v115, %v4275
    %v5549 = vrot.slane %v5533, 2
    %v5550 = vrot.slane %v5534, 2
    %v5551 = vrot.slane %v5535, 2
    %v5552 = vrot.slane %v5536, 2
    %v5553 = vrot.slane %v5537, 2
    %v5554 = vrot.slane %v5538, 2
    %v5555 = vrot.slane %v5539, 2
    %v5556 = vrot.slane %v5540, 2
    %v5565 = vadd.f32 %v5525, %v5549
    %v5566 = vadd.f32 %v5526, %v5550
    %v5567 = vadd.f32 %v5527, %v5551
    %v5568 = vadd.f32 %v5528, %v5552
    %v5569 = vadd.f32 %v5529, %v5553
    %v5570 = vadd.f32 %v5530, %v5554
    %v5571 = vadd.f32 %v5531, %v5555
    %v5572 = vadd.f32 %v5532, %v5556
    %v5573 = vmul.f32 %v157, %v4269
    %v5574 = vmul.f32 %v157, %v4270
    %v5575 = vmul.f32 %v157, %v4271
    %v5576 = vmul.f32 %v157, %v4272
    %v5577 = vmul.f32 %v157, %v4273
    %v5578 = vmul.f32 %v157, %v4274
    %v5579 = vmul.f32 %v157, %v4275
    %v5580 = vmul.f32 %v157, %v4276
    %v5581 = vadd.f32 %v5565, %v5573
    %v5582 = vadd.f32 %v5566, %v5574
    %v5583 = vadd.f32 %v5567, %v5575
    %v5584 = vadd.f32 %v5568, %v5576
    %v5585 = vadd.f32 %v5569, %v5577
    %v5586 = vadd.f32 %v5570, %v5578
    %v5587 = vadd.f32 %v5571, %v5579
    %v5588 = vadd.f32 %v5572, %v5580
    %v5589 = vmul.f32 %v175, %v4269
    %v5590 = vmul.f32 %v175, %v4270
    %v5591 = vmul.f32 %v175, %v4271
    %v5592 = vmul.f32 %v175, %v4272
    %v5593 = vmul.f32 %v175, %v4273
    %v5594 = vmul.f32 %v175, %v4274
    %v5595 = vmul.f32 %v175, %v4275
    %v5596 = vmul.f32 %v175, %v4276
    %v5605 = vrot.slane %v5589, 1
    %v5606 = vrot.slane %v5590, 1
    %v5607 = vrot.slane %v5591, 1
    %v5608 = vrot.slane %v5592, 1
    %v5609 = vrot.slane %v5593, 1
    %v5610 = vrot.slane %v5594, 1
    %v5611 = vrot.slane %v5595, 1
    %v5612 = vrot.slane %v5596, 1
    %v5621 = vadd.f32 %v5581, %v5605
    %v5622 = vadd.f32 %v5582, %v5606
    %v5623 = vadd.f32 %v5583, %v5607
    %v5624 = vadd.f32 %v5584, %v5608
    %v5625 = vadd.f32 %v5585, %v5609
    %v5626 = vadd.f32 %v5586, %v5610
    %v5627 = vadd.f32 %v5587, %v5611
    %v5628 = vadd.f32 %v5588, %v5612
    %v5629 = vmul.f32 %v217, %v4269
    %v5630 = vmul.f32 %v217, %v4270
    %v5631 = vmul.f32 %v217, %v4271
    %v5632 = vmul.f32 %v217, %v4272
    %v5633 = vmul.f32 %v217, %v4273
    %v5634 = vmul.f32 %v217, %v4274
    %v5635 = vmul.f32 %v217, %v4275
    %v5636 = vmul.f32 %v217, %v4276
    %v5645 = vrot.slane %v5629, 2
    %v5646 = vrot.slane %v5630, 2
    %v5647 = vrot.slane %v5631, 2
    %v5648 = vrot.slane %v5632, 2
    %v5649 = vrot.slane %v5633, 2
    %v5650 = vrot.slane %v5634, 2
    %v5651 = vrot.slane %v5635, 2
    %v5652 = vrot.slane %v5636, 2
    %v5661 = vadd.f32 %v5621, %v5645
    %v5662 = vadd.f32 %v5622, %v5646
    %v5663 = vadd.f32 %v5623, %v5647
    %v5664 = vadd.f32 %v5624, %v5648
    %v5665 = vadd.f32 %v5625, %v5649
    %v5666 = vadd.f32 %v5626, %v5650
    %v5667 = vadd.f32 %v5627, %v5651
    %v5668 = vadd.f32 %v5628, %v5652
    %v5669 = vmul.f32 %v259, %v4270
    %v5670 = vmul.f32 %v259, %v4271
    %v5671 = vmul.f32 %v259, %v4272
    %v5672 = vmul.f32 %v259, %v4273
    %v5673 = vmul.f32 %v259, %v4274
    %v5674 = vmul.f32 %v259, %v4275
    %v5675 = vmul.f32 %v259, %v4276
    %v5676 = vmul.f32 %v259, %v4277
    %v5677 = vadd.f32 %v5661, %v5669
    %v5678 = vadd.f32 %v5662, %v5670
    %v5679 = vadd.f32 %v5663, %v5671
    %v5680 = vadd.f32 %v5664, %v5672
    %v5681 = vadd.f32 %v5665, %v5673
    %v5682 = vadd.f32 %v5666, %v5674
    %v5683 = vadd.f32 %v5667, %v5675
    %v5684 = vadd.f32 %v5668, %v5676
    %v5685 = vmul.f32 %v277, %v4270
    %v5686 = vmul.f32 %v277, %v4271
    %v5687 = vmul.f32 %v277, %v4272
    %v5688 = vmul.f32 %v277, %v4273
    %v5689 = vmul.f32 %v277, %v4274
    %v5690 = vmul.f32 %v277, %v4275
    %v5691 = vmul.f32 %v277, %v4276
    %v5692 = vmul.f32 %v277, %v4277
    %v5701 = vrot.slane %v5685, 1
    %v5702 = vrot.slane %v5686, 1
    %v5703 = vrot.slane %v5687, 1
    %v5704 = vrot.slane %v5688, 1
    %v5705 = vrot.slane %v5689, 1
    %v5706 = vrot.slane %v5690, 1
    %v5707 = vrot.slane %v5691, 1
    %v5708 = vrot.slane %v5692, 1
    %v5717 = vadd.f32 %v5677, %v5701
    %v5718 = vadd.f32 %v5678, %v5702
    %v5719 = vadd.f32 %v5679, %v5703
    %v5720 = vadd.f32 %v5680, %v5704
    %v5721 = vadd.f32 %v5681, %v5705
    %v5722 = vadd.f32 %v5682, %v5706
    %v5723 = vadd.f32 %v5683, %v5707
    %v5724 = vadd.f32 %v5684, %v5708
    %v5725 = vmul.f32 %v319, %v4270
    %v5726 = vmul.f32 %v319, %v4271
    %v5727 = vmul.f32 %v319, %v4272
    %v5728 = vmul.f32 %v319, %v4273
    %v5729 = vmul.f32 %v319, %v4274
    %v5730 = vmul.f32 %v319, %v4275
    %v5731 = vmul.f32 %v319, %v4276
    %v5732 = vmul.f32 %v319, %v4277
    %v5741 = vrot.slane %v5725, 2
    %v5742 = vrot.slane %v5726, 2
    %v5743 = vrot.slane %v5727, 2
    %v5744 = vrot.slane %v5728, 2
    %v5745 = vrot.slane %v5729, 2
    %v5746 = vrot.slane %v5730, 2
    %v5747 = vrot.slane %v5731, 2
    %v5748 = vrot.slane %v5732, 2
    %v5757 = vadd.f32 %v5717, %v5741
    %v5758 = vadd.f32 %v5718, %v5742
    %v5759 = vadd.f32 %v5719, %v5743
    %v5760 = vadd.f32 %v5720, %v5744
    %v5761 = vadd.f32 %v5721, %v5745
    %v5762 = vadd.f32 %v5722, %v5746
    %v5763 = vadd.f32 %v5723, %v5747
    %v5764 = vadd.f32 %v5724, %v5748
    %v5765 = vmul.f32 %v372, %v5135
    %v5766 = vmul.f32 %v372, %v5136
    %v5767 = vmul.f32 %v372, %v5137
    %v5768 = vmul.f32 %v372, %v5138
    %v5769 = vmul.f32 %v372, %v5139
    %v5770 = vmul.f32 %v372, %v5140
    %v5771 = vmul.f32 %v372, %v5141
    %v5772 = vmul.f32 %v372, %v5142
    %v5773 = vadd.f32 %v5757, %v5765
    %v5774 = vadd.f32 %v5758, %v5766
    %v5775 = vadd.f32 %v5759, %v5767
    %v5776 = vadd.f32 %v5760, %v5768
    %v5777 = vadd.f32 %v5761, %v5769
    %v5778 = vadd.f32 %v5762, %v5770
    %v5779 = vadd.f32 %v5763, %v5771
    %v5780 = vadd.f32 %v5764, %v5772
    %v5781 = vmul.f32 %v390, %v5135
    %v5782 = vmul.f32 %v390, %v5136
    %v5783 = vmul.f32 %v390, %v5137
    %v5784 = vmul.f32 %v390, %v5138
    %v5785 = vmul.f32 %v390, %v5139
    %v5786 = vmul.f32 %v390, %v5140
    %v5787 = vmul.f32 %v390, %v5141
    %v5788 = vmul.f32 %v390, %v5142
    %v5797 = vrot.slane %v5781, 1
    %v5798 = vrot.slane %v5782, 1
    %v5799 = vrot.slane %v5783, 1
    %v5800 = vrot.slane %v5784, 1
    %v5801 = vrot.slane %v5785, 1
    %v5802 = vrot.slane %v5786, 1
    %v5803 = vrot.slane %v5787, 1
    %v5804 = vrot.slane %v5788, 1
    %v5813 = vadd.f32 %v5773, %v5797
    %v5814 = vadd.f32 %v5774, %v5798
    %v5815 = vadd.f32 %v5775, %v5799
    %v5816 = vadd.f32 %v5776, %v5800
    %v5817 = vadd.f32 %v5777, %v5801
    %v5818 = vadd.f32 %v5778, %v5802
    %v5819 = vadd.f32 %v5779, %v5803
    %v5820 = vadd.f32 %v5780, %v5804
    %v5821 = vmul.f32 %v432, %v5135
    %v5822 = vmul.f32 %v432, %v5136
    %v5823 = vmul.f32 %v432, %v5137
    %v5824 = vmul.f32 %v432, %v5138
    %v5825 = vmul.f32 %v432, %v5139
    %v5826 = vmul.f32 %v432, %v5140
    %v5827 = vmul.f32 %v432, %v5141
    %v5828 = vmul.f32 %v432, %v5142
    %v5837 = vrot.slane %v5821, 2
    %v5838 = vrot.slane %v5822, 2
    %v5839 = vrot.slane %v5823, 2
    %v5840 = vrot.slane %v5824, 2
    %v5841 = vrot.slane %v5825, 2
    %v5842 = vrot.slane %v5826, 2
    %v5843 = vrot.slane %v5827, 2
    %v5844 = vrot.slane %v5828, 2
    %v5853 = vadd.f32 %v5813, %v5837
    %v5854 = vadd.f32 %v5814, %v5838
    %v5855 = vadd.f32 %v5815, %v5839
    %v5856 = vadd.f32 %v5816, %v5840
    %v5857 = vadd.f32 %v5817, %v5841
    %v5858 = vadd.f32 %v5818, %v5842
    %v5859 = vadd.f32 %v5819, %v5843
    %v5860 = vadd.f32 %v5820, %v5844
    %v5861 = vmul.f32 %v474, %v5136
    %v5862 = vmul.f32 %v474, %v5137
    %v5863 = vmul.f32 %v474, %v5138
    %v5864 = vmul.f32 %v474, %v5139
    %v5865 = vmul.f32 %v474, %v5140
    %v5866 = vmul.f32 %v474, %v5141
    %v5867 = vmul.f32 %v474, %v5142
    %v5868 = vmul.f32 %v474, %v5143
    %v5869 = vadd.f32 %v5853, %v5861
    %v5870 = vadd.f32 %v5854, %v5862
    %v5871 = vadd.f32 %v5855, %v5863
    %v5872 = vadd.f32 %v5856, %v5864
    %v5873 = vadd.f32 %v5857, %v5865
    %v5874 = vadd.f32 %v5858, %v5866
    %v5875 = vadd.f32 %v5859, %v5867
    %v5876 = vadd.f32 %v5860, %v5868
    %v5877 = vmul.f32 %v492, %v5136
    %v5878 = vmul.f32 %v492, %v5137
    %v5879 = vmul.f32 %v492, %v5138
    %v5880 = vmul.f32 %v492, %v5139
    %v5881 = vmul.f32 %v492, %v5140
    %v5882 = vmul.f32 %v492, %v5141
    %v5883 = vmul.f32 %v492, %v5142
    %v5884 = vmul.f32 %v492, %v5143
    %v5893 = vrot.slane %v5877, 1
    %v5894 = vrot.slane %v5878, 1
    %v5895 = vrot.slane %v5879, 1
    %v5896 = vrot.slane %v5880, 1
    %v5897 = vrot.slane %v5881, 1
    %v5898 = vrot.slane %v5882, 1
    %v5899 = vrot.slane %v5883, 1
    %v5900 = vrot.slane %v5884, 1
    %v5909 = vadd.f32 %v5869, %v5893
    %v5910 = vadd.f32 %v5870, %v5894
    %v5911 = vadd.f32 %v5871, %v5895
    %v5912 = vadd.f32 %v5872, %v5896
    %v5913 = vadd.f32 %v5873, %v5897
    %v5914 = vadd.f32 %v5874, %v5898
    %v5915 = vadd.f32 %v5875, %v5899
    %v5916 = vadd.f32 %v5876, %v5900
    %v5917 = vmul.f32 %v534, %v5136
    %v5918 = vmul.f32 %v534, %v5137
    %v5919 = vmul.f32 %v534, %v5138
    %v5920 = vmul.f32 %v534, %v5139
    %v5921 = vmul.f32 %v534, %v5140
    %v5922 = vmul.f32 %v534, %v5141
    %v5923 = vmul.f32 %v534, %v5142
    %v5924 = vmul.f32 %v534, %v5143
    %v5933 = vrot.slane %v5917, 2
    %v5934 = vrot.slane %v5918, 2
    %v5935 = vrot.slane %v5919, 2
    %v5936 = vrot.slane %v5920, 2
    %v5937 = vrot.slane %v5921, 2
    %v5938 = vrot.slane %v5922, 2
    %v5939 = vrot.slane %v5923, 2
    %v5940 = vrot.slane %v5924, 2
    %v5949 = vadd.f32 %v5909, %v5933
    %v5950 = vadd.f32 %v5910, %v5934
    %v5951 = vadd.f32 %v5911, %v5935
    %v5952 = vadd.f32 %v5912, %v5936
    %v5953 = vadd.f32 %v5913, %v5937
    %v5954 = vadd.f32 %v5914, %v5938
    %v5955 = vadd.f32 %v5915, %v5939
    %v5956 = vadd.f32 %v5916, %v5940
    %v5957 = vmul.f32 %v576, %v5137
    %v5958 = vmul.f32 %v576, %v5138
    %v5959 = vmul.f32 %v576, %v5139
    %v5960 = vmul.f32 %v576, %v5140
    %v5961 = vmul.f32 %v576, %v5141
    %v5962 = vmul.f32 %v576, %v5142
    %v5963 = vmul.f32 %v576, %v5143
    %v5964 = vmul.f32 %v576, %v5144
    %v5965 = vadd.f32 %v5949, %v5957
    %v5966 = vadd.f32 %v5950, %v5958
    %v5967 = vadd.f32 %v5951, %v5959
    %v5968 = vadd.f32 %v5952, %v5960
    %v5969 = vadd.f32 %v5953, %v5961
    %v5970 = vadd.f32 %v5954, %v5962
    %v5971 = vadd.f32 %v5955, %v5963
    %v5972 = vadd.f32 %v5956, %v5964
    %v5973 = vmul.f32 %v594, %v5137
    %v5974 = vmul.f32 %v594, %v5138
    %v5975 = vmul.f32 %v594, %v5139
    %v5976 = vmul.f32 %v594, %v5140
    %v5977 = vmul.f32 %v594, %v5141
    %v5978 = vmul.f32 %v594, %v5142
    %v5979 = vmul.f32 %v594, %v5143
    %v5980 = vmul.f32 %v594, %v5144
    %v5989 = vrot.slane %v5973, 1
    %v5990 = vrot.slane %v5974, 1
    %v5991 = vrot.slane %v5975, 1
    %v5992 = vrot.slane %v5976, 1
    %v5993 = vrot.slane %v5977, 1
    %v5994 = vrot.slane %v5978, 1
    %v5995 = vrot.slane %v5979, 1
    %v5996 = vrot.slane %v5980, 1
    %v6005 = vadd.f32 %v5965, %v5989
    %v6006 = vadd.f32 %v5966, %v5990
    %v6007 = vadd.f32 %v5967, %v5991
    %v6008 = vadd.f32 %v5968, %v5992
    %v6009 = vadd.f32 %v5969, %v5993
    %v6010 = vadd.f32 %v5970, %v5994
    %v6011 = vadd.f32 %v5971, %v5995
    %v6012 = vadd.f32 %v5972, %v5996
    %v6013 = vmul.f32 %v636, %v5137
    %v6014 = vmul.f32 %v636, %v5138
    %v6015 = vmul.f32 %v636, %v5139
    %v6016 = vmul.f32 %v636, %v5140
    %v6017 = vmul.f32 %v636, %v5141
    %v6018 = vmul.f32 %v636, %v5142
    %v6019 = vmul.f32 %v636, %v5143
    %v6020 = vmul.f32 %v636, %v5144
    %v6029 = vrot.slane %v6013, 2
    %v6030 = vrot.slane %v6014, 2
    %v6031 = vrot.slane %v6015, 2
    %v6032 = vrot.slane %v6016, 2
    %v6033 = vrot.slane %v6017, 2
    %v6034 = vrot.slane %v6018, 2
    %v6035 = vrot.slane %v6019, 2
    %v6036 = vrot.slane %v6020, 2
    %v6045 = vadd.f32 %v6005, %v6029
    %v6046 = vadd.f32 %v6006, %v6030
    %v6047 = vadd.f32 %v6007, %v6031
    %v6048 = vadd.f32 %v6008, %v6032
    %v6049 = vadd.f32 %v6009, %v6033
    %v6050 = vadd.f32 %v6010, %v6034
    %v6051 = vadd.f32 %v6011, %v6035
    %v6052 = vadd.f32 %v6012, %v6036
    %s6053 = scalar_lea.vmem [#allocation4], 640
    %v6054 = vld [vmem:[%s6053] sm:$0xff]
    %v6055 = vld [vmem:[%s6053 + $0x8] sm:$0xff]
    %v6056 = vld [vmem:[%s6053 + $0x10] sm:$0xff]
    %v6057 = vld [vmem:[%s6053 + $0x18] sm:$0xff]
    %v6058 = vld [vmem:[%s6053 + $0x20] sm:$0xff]
    %v6059 = vld [vmem:[%s6053 + $0x28] sm:$0xff]
    %v6060 = vld [vmem:[%s6053 + $0x30] sm:$0xff]
    %v6061 = vld [vmem:[%s6053 + $0x38] sm:$0xff]
    %v6062 = vld [vmem:[%s6053 + $0x40] sm:$0xff]
    %v6063 = vld [vmem:[%s6053 + $0x48] sm:$0xff]
    %v6064 = vmul.f32 %v689, %v6054
    %v6065 = vmul.f32 %v689, %v6055
    %v6066 = vmul.f32 %v689, %v6056
    %v6067 = vmul.f32 %v689, %v6057
    %v6068 = vmul.f32 %v689, %v6058
    %v6069 = vmul.f32 %v689, %v6059
    %v6070 = vmul.f32 %v689, %v6060
    %v6071 = vmul.f32 %v689, %v6061
    %v6072 = vadd.f32 %v6045, %v6064
    %v6073 = vadd.f32 %v6046, %v6065
    %v6074 = vadd.f32 %v6047, %v6066
    %v6075 = vadd.f32 %v6048, %v6067
    %v6076 = vadd.f32 %v6049, %v6068
    %v6077 = vadd.f32 %v6050, %v6069
    %v6078 = vadd.f32 %v6051, %v6070
    %v6079 = vadd.f32 %v6052, %v6071
    %v6080 = vmul.f32 %v707, %v6054
    %v6081 = vmul.f32 %v707, %v6055
    %v6082 = vmul.f32 %v707, %v6056
    %v6083 = vmul.f32 %v707, %v6057
    %v6084 = vmul.f32 %v707, %v6058
    %v6085 = vmul.f32 %v707, %v6059
    %v6086 = vmul.f32 %v707, %v6060
    %v6087 = vmul.f32 %v707, %v6061
    %v6096 = vrot.slane %v6080, 1
    %v6097 = vrot.slane %v6081, 1
    %v6098 = vrot.slane %v6082, 1
    %v6099 = vrot.slane %v6083, 1
    %v6100 = vrot.slane %v6084, 1
    %v6101 = vrot.slane %v6085, 1
    %v6102 = vrot.slane %v6086, 1
    %v6103 = vrot.slane %v6087, 1
    %v6112 = vadd.f32 %v6072, %v6096
    %v6113 = vadd.f32 %v6073, %v6097
    %v6114 = vadd.f32 %v6074, %v6098
    %v6115 = vadd.f32 %v6075, %v6099
    %v6116 = vadd.f32 %v6076, %v6100
    %v6117 = vadd.f32 %v6077, %v6101
    %v6118 = vadd.f32 %v6078, %v6102
    %v6119 = vadd.f32 %v6079, %v6103
    %v6120 = vmul.f32 %v749, %v6054
    %v6121 = vmul.f32 %v749, %v6055
    %v6122 = vmul.f32 %v749, %v6056
    %v6123 = vmul.f32 %v749, %v6057
    %v6124 = vmul.f32 %v749, %v6058
    %v6125 = vmul.f32 %v749, %v6059
    %v6126 = vmul.f32 %v749, %v6060
    %v6127 = vmul.f32 %v749, %v6061
    %v6136 = vrot.slane %v6120, 2
    %v6137 = vrot.slane %v6121, 2
    %v6138 = vrot.slane %v6122, 2
    %v6139 = vrot.slane %v6123, 2
    %v6140 = vrot.slane %v6124, 2
    %v6141 = vrot.slane %v6125, 2
    %v6142 = vrot.slane %v6126, 2
    %v6143 = vrot.slane %v6127, 2
    %v6152 = vadd.f32 %v6112, %v6136
    %v6153 = vadd.f32 %v6113, %v6137
    %v6154 = vadd.f32 %v6114, %v6138
    %v6155 = vadd.f32 %v6115, %v6139
    %v6156 = vadd.f32 %v6116, %v6140
    %v6157 = vadd.f32 %v6117, %v6141
    %v6158 = vadd.f32 %v6118, %v6142
    %v6159 = vadd.f32 %v6119, %v6143
    %v6160 = vmul.f32 %v791, %v6055
    %v6161 = vmul.f32 %v791, %v6056
    %v6162 = vmul.f32 %v791, %v6057
    %v6163 = vmul.f32 %v791, %v6058
    %v6164 = vmul.f32 %v791, %v6059
    %v6165 = vmul.f32 %v791, %v6060
    %v6166 = vmul.f32 %v791, %v6061
    %v6167 = vmul.f32 %v791, %v6062
    %v6168 = vadd.f32 %v6152, %v6160
    %v6169 = vadd.f32 %v6153, %v6161
    %v6170 = vadd.f32 %v6154, %v6162
    %v6171 = vadd.f32 %v6155, %v6163
    %v6172 = vadd.f32 %v6156, %v6164
    %v6173 = vadd.f32 %v6157, %v6165
    %v6174 = vadd.f32 %v6158, %v6166
    %v6175 = vadd.f32 %v6159, %v6167
    %v6176 = vmul.f32 %v809, %v6055
    %v6177 = vmul.f32 %v809, %v6056
    %v6178 = vmul.f32 %v809, %v6057
    %v6179 = vmul.f32 %v809, %v6058
    %v6180 = vmul.f32 %v809, %v6059
    %v6181 = vmul.f32 %v809, %v6060
    %v6182 = vmul.f32 %v809, %v6061
    %v6183 = vmul.f32 %v809, %v6062
    %v6192 = vrot.slane %v6176, 1
    %v6193 = vrot.slane %v6177, 1
    %v6194 = vrot.slane %v6178, 1
    %v6195 = vrot.slane %v6179, 1
    %v6196 = vrot.slane %v6180, 1
    %v6197 = vrot.slane %v6181, 1
    %v6198 = vrot.slane %v6182, 1
    %v6199 = vrot.slane %v6183, 1
    %v6208 = vadd.f32 %v6168, %v6192
    %v6209 = vadd.f32 %v6169, %v6193
    %v6210 = vadd.f32 %v6170, %v6194
    %v6211 = vadd.f32 %v6171, %v6195
    %v6212 = vadd.f32 %v6172, %v6196
    %v6213 = vadd.f32 %v6173, %v6197
    %v6214 = vadd.f32 %v6174, %v6198
    %v6215 = vadd.f32 %v6175, %v6199
    %v6216 = vmul.f32 %v851, %v6055
    %v6217 = vmul.f32 %v851, %v6056
    %v6218 = vmul.f32 %v851, %v6057
    %v6219 = vmul.f32 %v851, %v6058
    %v6220 = vmul.f32 %v851, %v6059
    %v6221 = vmul.f32 %v851, %v6060
    %v6222 = vmul.f32 %v851, %v6061
    %v6223 = vmul.f32 %v851, %v6062
    %v6232 = vrot.slane %v6216, 2
    %v6233 = vrot.slane %v6217, 2
    %v6234 = vrot.slane %v6218, 2
    %v6235 = vrot.slane %v6219, 2
    %v6236 = vrot.slane %v6220, 2
    %v6237 = vrot.slane %v6221, 2
    %v6238 = vrot.slane %v6222, 2
    %v6239 = vrot.slane %v6223, 2
    %v6248 = vadd.f32 %v6208, %v6232
    %v6249 = vadd.f32 %v6209, %v6233
    %v6250 = vadd.f32 %v6210, %v6234
    %v6251 = vadd.f32 %v6211, %v6235
    %v6252 = vadd.f32 %v6212, %v6236
    %v6253 = vadd.f32 %v6213, %v6237
    %v6254 = vadd.f32 %v6214, %v6238
    %v6255 = vadd.f32 %v6215, %v6239
    %v6256 = vmul.f32 %v893, %v6056
    %v6257 = vmul.f32 %v893, %v6057
    %v6258 = vmul.f32 %v893, %v6058
    %v6259 = vmul.f32 %v893, %v6059
    %v6260 = vmul.f32 %v893, %v6060
    %v6261 = vmul.f32 %v893, %v6061
    %v6262 = vmul.f32 %v893, %v6062
    %v6263 = vmul.f32 %v893, %v6063
    %v6264 = vadd.f32 %v6248, %v6256
    %v6265 = vadd.f32 %v6249, %v6257
    %v6266 = vadd.f32 %v6250, %v6258
    %v6267 = vadd.f32 %v6251, %v6259
    %v6268 = vadd.f32 %v6252, %v6260
    %v6269 = vadd.f32 %v6253, %v6261
    %v6270 = vadd.f32 %v6254, %v6262
    %v6271 = vadd.f32 %v6255, %v6263
    %v6272 = vmul.f32 %v911, %v6056
    %v6273 = vmul.f32 %v911, %v6057
    %v6274 = vmul.f32 %v911, %v6058
    %v6275 = vmul.f32 %v911, %v6059
    %v6276 = vmul.f32 %v911, %v6060
    %v6277 = vmul.f32 %v911, %v6061
    %v6278 = vmul.f32 %v911, %v6062
    %v6279 = vmul.f32 %v911, %v6063
    %v6288 = vrot.slane %v6272, 1
    %v6289 = vrot.slane %v6273, 1
    %v6290 = vrot.slane %v6274, 1
    %v6291 = vrot.slane %v6275, 1
    %v6292 = vrot.slane %v6276, 1
    %v6293 = vrot.slane %v6277, 1
    %v6294 = vrot.slane %v6278, 1
    %v6295 = vrot.slane %v6279, 1
    %v6304 = vadd.f32 %v6264, %v6288
    %v6305 = vadd.f32 %v6265, %v6289
    %v6306 = vadd.f32 %v6266, %v6290
    %v6307 = vadd.f32 %v6267, %v6291
    %v6308 = vadd.f32 %v6268, %v6292
    %v6309 = vadd.f32 %v6269, %v6293
    %v6310 = vadd.f32 %v6270, %v6294
    %v6311 = vadd.f32 %v6271, %v6295
    %v6312 = vmul.f32 %v953, %v6056
    %v6313 = vmul.f32 %v953, %v6057
    %v6314 = vmul.f32 %v953, %v6058
    %v6315 = vmul.f32 %v953, %v6059
    %v6316 = vmul.f32 %v953, %v6060
    %v6317 = vmul.f32 %v953, %v6061
    %v6318 = vmul.f32 %v953, %v6062
    %v6319 = vmul.f32 %v953, %v6063
    %v6328 = vrot.slane %v6312, 2
    %v6329 = vrot.slane %v6313, 2
    %v6330 = vrot.slane %v6314, 2
    %v6331 = vrot.slane %v6315, 2
    %v6332 = vrot.slane %v6316, 2
    %v6333 = vrot.slane %v6317, 2
    %v6334 = vrot.slane %v6318, 2
    %v6335 = vrot.slane %v6319, 2
    %v6344 = vadd.f32 %v6304, %v6328
    %v6345 = vadd.f32 %v6305, %v6329
    %v6346 = vadd.f32 %v6306, %v6330
    %v6347 = vadd.f32 %v6307, %v6331
    %v6348 = vadd.f32 %v6308, %v6332
    %v6349 = vadd.f32 %v6309, %v6333
    %v6350 = vadd.f32 %v6310, %v6334
    %v6351 = vadd.f32 %v6311, %v6335
    %v6352 = vmul.f32 %v63, %v5135
    %v6353 = vmul.f32 %v63, %v5136
    %v6354 = vmul.f32 %v63, %v5137
    %v6355 = vmul.f32 %v63, %v5138
    %v6356 = vmul.f32 %v63, %v5139
    %v6357 = vmul.f32 %v63, %v5140
    %v6358 = vmul.f32 %v63, %v5141
    %v6359 = vmul.f32 %v63, %v5142
    %v6360 = vmul.f32 %v73, %v5135
    %v6361 = vmul.f32 %v73, %v5136
    %v6362 = vmul.f32 %v73, %v5137
    %v6363 = vmul.f32 %v73, %v5138
    %v6364 = vmul.f32 %v73, %v5139
    %v6365 = vmul.f32 %v73, %v5140
    %v6366 = vmul.f32 %v73, %v5141
    %v6367 = vmul.f32 %v73, %v5142
    %v6376 = vrot.slane %v6360, 1
    %v6377 = vrot.slane %v6361, 1
    %v6378 = vrot.slane %v6362, 1
    %v6379 = vrot.slane %v6363, 1
    %v6380 = vrot.slane %v6364, 1
    %v6381 = vrot.slane %v6365, 1
    %v6382 = vrot.slane %v6366, 1
    %v6383 = vrot.slane %v6367, 1
    %v6392 = vadd.f32 %v6352, %v6376
    %v6393 = vadd.f32 %v6353, %v6377
    %v6394 = vadd.f32 %v6354, %v6378
    %v6395 = vadd.f32 %v6355, %v6379
    %v6396 = vadd.f32 %v6356, %v6380
    %v6397 = vadd.f32 %v6357, %v6381
    %v6398 = vadd.f32 %v6358, %v6382
    %v6399 = vadd.f32 %v6359, %v6383
    %v6400 = vmul.f32 %v115, %v5135
    %v6401 = vmul.f32 %v115, %v5136
    %v6402 = vmul.f32 %v115, %v5137
    %v6403 = vmul.f32 %v115, %v5138
    %v6404 = vmul.f32 %v115, %v5139
    %v6405 = vmul.f32 %v115, %v5140
    %v6406 = vmul.f32 %v115, %v5141
    %v6407 = vmul.f32 %v115, %v5142
    %v6416 = vrot.slane %v6400, 2
    %v6417 = vrot.slane %v6401, 2
    %v6418 = vrot.slane %v6402, 2
    %v6419 = vrot.slane %v6403, 2
    %v6420 = vrot.slane %v6404, 2
    %v6421 = vrot.slane %v6405, 2
    %v6422 = vrot.slane %v6406, 2
    %v6423 = vrot.slane %v6407, 2
    %v6432 = vadd.f32 %v6392, %v6416
    %v6433 = vadd.f32 %v6393, %v6417
    %v6434 = vadd.f32 %v6394, %v6418
    %v6435 = vadd.f32 %v6395, %v6419
    %v6436 = vadd.f32 %v6396, %v6420
    %v6437 = vadd.f32 %v6397, %v6421
    %v6438 = vadd.f32 %v6398, %v6422
    %v6439 = vadd.f32 %v6399, %v6423
    %v6440 = vmul.f32 %v157, %v5136
    %v6441 = vmul.f32 %v157, %v5137
    %v6442 = vmul.f32 %v157, %v5138
    %v6443 = vmul.f32 %v157, %v5139
    %v6444 = vmul.f32 %v157, %v5140
    %v6445 = vmul.f32 %v157, %v5141
    %v6446 = vmul.f32 %v157, %v5142
    %v6447 = vmul.f32 %v157, %v5143
    %v6448 = vadd.f32 %v6432, %v6440
    %v6449 = vadd.f32 %v6433, %v6441
    %v6450 = vadd.f32 %v6434, %v6442
    %v6451 = vadd.f32 %v6435, %v6443
    %v6452 = vadd.f32 %v6436, %v6444
    %v6453 = vadd.f32 %v6437, %v6445
    %v6454 = vadd.f32 %v6438, %v6446
    %v6455 = vadd.f32 %v6439, %v6447
    %v6456 = vmul.f32 %v175, %v5136
    %v6457 = vmul.f32 %v175, %v5137
    %v6458 = vmul.f32 %v175, %v5138
    %v6459 = vmul.f32 %v175, %v5139
    %v6460 = vmul.f32 %v175, %v5140
    %v6461 = vmul.f32 %v175, %v5141
    %v6462 = vmul.f32 %v175, %v5142
    %v6463 = vmul.f32 %v175, %v5143
    %v6472 = vrot.slane %v6456, 1
    %v6473 = vrot.slane %v6457, 1
    %v6474 = vrot.slane %v6458, 1
    %v6475 = vrot.slane %v6459, 1
    %v6476 = vrot.slane %v6460, 1
    %v6477 = vrot.slane %v6461, 1
    %v6478 = vrot.slane %v6462, 1
    %v6479 = vrot.slane %v6463, 1
    %v6488 = vadd.f32 %v6448, %v6472
    %v6489 = vadd.f32 %v6449, %v6473
    %v6490 = vadd.f32 %v6450, %v6474
    %v6491 = vadd.f32 %v6451, %v6475
    %v6492 = vadd.f32 %v6452, %v6476
    %v6493 = vadd.f32 %v6453, %v6477
    %v6494 = vadd.f32 %v6454, %v6478
    %v6495 = vadd.f32 %v6455, %v6479
    %v6496 = vmul.f32 %v217, %v5136
    %v6497 = vmul.f32 %v217, %v5137
    %v6498 = vmul.f32 %v217, %v5138
    %v6499 = vmul.f32 %v217, %v5139
    %v6500 = vmul.f32 %v217, %v5140
    %v6501 = vmul.f32 %v217, %v5141
    %v6502 = vmul.f32 %v217, %v5142
    %v6503 = vmul.f32 %v217, %v5143
    %v6512 = vrot.slane %v6496, 2
    %v6513 = vrot.slane %v6497, 2
    %v6514 = vrot.slane %v6498, 2
    %v6515 = vrot.slane %v6499, 2
    %v6516 = vrot.slane %v6500, 2
    %v6517 = vrot.slane %v6501, 2
    %v6518 = vrot.slane %v6502, 2
    %v6519 = vrot.slane %v6503, 2
    %v6528 = vadd.f32 %v6488, %v6512
    %v6529 = vadd.f32 %v6489, %v6513
    %v6530 = vadd.f32 %v6490, %v6514
    %v6531 = vadd.f32 %v6491, %v6515
    %v6532 = vadd.f32 %v6492, %v6516
    %v6533 = vadd.f32 %v6493, %v6517
    %v6534 = vadd.f32 %v6494, %v6518
    %v6535 = vadd.f32 %v6495, %v6519
    %v6536 = vmul.f32 %v259, %v5137
    %v6537 = vmul.f32 %v259, %v5138
    %v6538 = vmul.f32 %v259, %v5139
    %v6539 = vmul.f32 %v259, %v5140
    %v6540 = vmul.f32 %v259, %v5141
    %v6541 = vmul.f32 %v259, %v5142
    %v6542 = vmul.f32 %v259, %v5143
    %v6543 = vmul.f32 %v259, %v5144
    %v6544 = vadd.f32 %v6528, %v6536
    %v6545 = vadd.f32 %v6529, %v6537
    %v6546 = vadd.f32 %v6530, %v6538
    %v6547 = vadd.f32 %v6531, %v6539
    %v6548 = vadd.f32 %v6532, %v6540
    %v6549 = vadd.f32 %v6533, %v6541
    %v6550 = vadd.f32 %v6534, %v6542
    %v6551 = vadd.f32 %v6535, %v6543
    %v6552 = vmul.f32 %v277, %v5137
    %v6553 = vmul.f32 %v277, %v5138
    %v6554 = vmul.f32 %v277, %v5139
    %v6555 = vmul.f32 %v277, %v5140
    %v6556 = vmul.f32 %v277, %v5141
    %v6557 = vmul.f32 %v277, %v5142
    %v6558 = vmul.f32 %v277, %v5143
    %v6559 = vmul.f32 %v277, %v5144
    %v6568 = vrot.slane %v6552, 1
    %v6569 = vrot.slane %v6553, 1
    %v6570 = vrot.slane %v6554, 1
    %v6571 = vrot.slane %v6555, 1
    %v6572 = vrot.slane %v6556, 1
    %v6573 = vrot.slane %v6557, 1
    %v6574 = vrot.slane %v6558, 1
    %v6575 = vrot.slane %v6559, 1
    %v6584 = vadd.f32 %v6544, %v6568
    %v6585 = vadd.f32 %v6545, %v6569
    %v6586 = vadd.f32 %v6546, %v6570
    %v6587 = vadd.f32 %v6547, %v6571
    %v6588 = vadd.f32 %v6548, %v6572
    %v6589 = vadd.f32 %v6549, %v6573
    %v6590 = vadd.f32 %v6550, %v6574
    %v6591 = vadd.f32 %v6551, %v6575
    %v6592 = vmul.f32 %v319, %v5137
    %v6593 = vmul.f32 %v319, %v5138
    %v6594 = vmul.f32 %v319, %v5139
    %v6595 = vmul.f32 %v319, %v5140
    %v6596 = vmul.f32 %v319, %v5141
    %v6597 = vmul.f32 %v319, %v5142
    %v6598 = vmul.f32 %v319, %v5143
    %v6599 = vmul.f32 %v319, %v5144
    %v6608 = vrot.slane %v6592, 2
    %v6609 = vrot.slane %v6593, 2
    %v6610 = vrot.slane %v6594, 2
    %v6611 = vrot.slane %v6595, 2
    %v6612 = vrot.slane %v6596, 2
    %v6613 = vrot.slane %v6597, 2
    %v6614 = vrot.slane %v6598, 2
    %v6615 = vrot.slane %v6599, 2
    %v6624 = vadd.f32 %v6584, %v6608
    %v6625 = vadd.f32 %v6585, %v6609
    %v6626 = vadd.f32 %v6586, %v6610
    %v6627 = vadd.f32 %v6587, %v6611
    %v6628 = vadd.f32 %v6588, %v6612
    %v6629 = vadd.f32 %v6589, %v6613
    %v6630 = vadd.f32 %v6590, %v6614
    %v6631 = vadd.f32 %v6591, %v6615
    %v6632 = vmul.f32 %v372, %v6054
    %v6633 = vmul.f32 %v372, %v6055
    %v6634 = vmul.f32 %v372, %v6056
    %v6635 = vmul.f32 %v372, %v6057
    %v6636 = vmul.f32 %v372, %v6058
    %v6637 = vmul.f32 %v372, %v6059
    %v6638 = vmul.f32 %v372, %v6060
    %v6639 = vmul.f32 %v372, %v6061
    %v6640 = vadd.f32 %v6624, %v6632
    %v6641 = vadd.f32 %v6625, %v6633
    %v6642 = vadd.f32 %v6626, %v6634
    %v6643 = vadd.f32 %v6627, %v6635
    %v6644 = vadd.f32 %v6628, %v6636
    %v6645 = vadd.f32 %v6629, %v6637
    %v6646 = vadd.f32 %v6630, %v6638
    %v6647 = vadd.f32 %v6631, %v6639
    %v6648 = vmul.f32 %v390, %v6054
    %v6649 = vmul.f32 %v390, %v6055
    %v6650 = vmul.f32 %v390, %v6056
    %v6651 = vmul.f32 %v390, %v6057
    %v6652 = vmul.f32 %v390, %v6058
    %v6653 = vmul.f32 %v390, %v6059
    %v6654 = vmul.f32 %v390, %v6060
    %v6655 = vmul.f32 %v390, %v6061
    %v6664 = vrot.slane %v6648, 1
    %v6665 = vrot.slane %v6649, 1
    %v6666 = vrot.slane %v6650, 1
    %v6667 = vrot.slane %v6651, 1
    %v6668 = vrot.slane %v6652, 1
    %v6669 = vrot.slane %v6653, 1
    %v6670 = vrot.slane %v6654, 1
    %v6671 = vrot.slane %v6655, 1
    %v6680 = vadd.f32 %v6640, %v6664
    %v6681 = vadd.f32 %v6641, %v6665
    %v6682 = vadd.f32 %v6642, %v6666
    %v6683 = vadd.f32 %v6643, %v6667
    %v6684 = vadd.f32 %v6644, %v6668
    %v6685 = vadd.f32 %v6645, %v6669
    %v6686 = vadd.f32 %v6646, %v6670
    %v6687 = vadd.f32 %v6647, %v6671
    %v6688 = vmul.f32 %v432, %v6054
    %v6689 = vmul.f32 %v432, %v6055
    %v6690 = vmul.f32 %v432, %v6056
    %v6691 = vmul.f32 %v432, %v6057
    %v6692 = vmul.f32 %v432, %v6058
    %v6693 = vmul.f32 %v432, %v6059
    %v6694 = vmul.f32 %v432, %v6060
    %v6695 = vmul.f32 %v432, %v6061
    %v6704 = vrot.slane %v6688, 2
    %v6705 = vrot.slane %v6689, 2
    %v6706 = vrot.slane %v6690, 2
    %v6707 = vrot.slane %v6691, 2
    %v6708 = vrot.slane %v6692, 2
    %v6709 = vrot.slane %v6693, 2
    %v6710 = vrot.slane %v6694, 2
    %v6711 = vrot.slane %v6695, 2
    %v6720 = vadd.f32 %v6680, %v6704
    %v6721 = vadd.f32 %v6681, %v6705
    %v6722 = vadd.f32 %v6682, %v6706
    %v6723 = vadd.f32 %v6683, %v6707
    %v6724 = vadd.f32 %v6684, %v6708
    %v6725 = vadd.f32 %v6685, %v6709
    %v6726 = vadd.f32 %v6686, %v6710
    %v6727 = vadd.f32 %v6687, %v6711
    %v6728 = vmul.f32 %v474, %v6055
    %v6729 = vmul.f32 %v474, %v6056
    %v6730 = vmul.f32 %v474, %v6057
    %v6731 = vmul.f32 %v474, %v6058
    %v6732 = vmul.f32 %v474, %v6059
    %v6733 = vmul.f32 %v474, %v6060
    %v6734 = vmul.f32 %v474, %v6061
    %v6735 = vmul.f32 %v474, %v6062
    %v6736 = vadd.f32 %v6720, %v6728
    %v6737 = vadd.f32 %v6721, %v6729
    %v6738 = vadd.f32 %v6722, %v6730
    %v6739 = vadd.f32 %v6723, %v6731
    %v6740 = vadd.f32 %v6724, %v6732
    %v6741 = vadd.f32 %v6725, %v6733
    %v6742 = vadd.f32 %v6726, %v6734
    %v6743 = vadd.f32 %v6727, %v6735
    %v6744 = vmul.f32 %v492, %v6055
    %v6745 = vmul.f32 %v492, %v6056
    %v6746 = vmul.f32 %v492, %v6057
    %v6747 = vmul.f32 %v492, %v6058
    %v6748 = vmul.f32 %v492, %v6059
    %v6749 = vmul.f32 %v492, %v6060
    %v6750 = vmul.f32 %v492, %v6061
    %v6751 = vmul.f32 %v492, %v6062
    %v6760 = vrot.slane %v6744, 1
    %v6761 = vrot.slane %v6745, 1
    %v6762 = vrot.slane %v6746, 1
    %v6763 = vrot.slane %v6747, 1
    %v6764 = vrot.slane %v6748, 1
    %v6765 = vrot.slane %v6749, 1
    %v6766 = vrot.slane %v6750, 1
    %v6767 = vrot.slane %v6751, 1
    %v6776 = vadd.f32 %v6736, %v6760
    %v6777 = vadd.f32 %v6737, %v6761
    %v6778 = vadd.f32 %v6738, %v6762
    %v6779 = vadd.f32 %v6739, %v6763
    %v6780 = vadd.f32 %v6740, %v6764
    %v6781 = vadd.f32 %v6741, %v6765
    %v6782 = vadd.f32 %v6742, %v6766
    %v6783 = vadd.f32 %v6743, %v6767
    %v6784 = vmul.f32 %v534, %v6055
    %v6785 = vmul.f32 %v534, %v6056
    %v6786 = vmul.f32 %v534, %v6057
    %v6787 = vmul.f32 %v534, %v6058
    %v6788 = vmul.f32 %v534, %v6059
    %v6789 = vmul.f32 %v534, %v6060
    %v6790 = vmul.f32 %v534, %v6061
    %v6791 = vmul.f32 %v534, %v6062
    %v6800 = vrot.slane %v6784, 2
    %v6801 = vrot.slane %v6785, 2
    %v6802 = vrot.slane %v6786, 2
    %v6803 = vrot.slane %v6787, 2
    %v6804 = vrot.slane %v6788, 2
    %v6805 = vrot.slane %v6789, 2
    %v6806 = vrot.slane %v6790, 2
    %v6807 = vrot.slane %v6791, 2
    %v6816 = vadd.f32 %v6776, %v6800
    %v6817 = vadd.f32 %v6777, %v6801
    %v6818 = vadd.f32 %v6778, %v6802
    %v6819 = vadd.f32 %v6779, %v6803
    %v6820 = vadd.f32 %v6780, %v6804
    %v6821 = vadd.f32 %v6781, %v6805
    %v6822 = vadd.f32 %v6782, %v6806
    %v6823 = vadd.f32 %v6783, %v6807
    %v6824 = vmul.f32 %v576, %v6056
    %v6825 = vmul.f32 %v576, %v6057
    %v6826 = vmul.f32 %v576, %v6058
    %v6827 = vmul.f32 %v576, %v6059
    %v6828 = vmul.f32 %v576, %v6060
    %v6829 = vmul.f32 %v576, %v6061
    %v6830 = vmul.f32 %v576, %v6062
    %v6831 = vmul.f32 %v576, %v6063
    %v6832 = vadd.f32 %v6816, %v6824
    %v6833 = vadd.f32 %v6817, %v6825
    %v6834 = vadd.f32 %v6818, %v6826
    %v6835 = vadd.f32 %v6819, %v6827
    %v6836 = vadd.f32 %v6820, %v6828
    %v6837 = vadd.f32 %v6821, %v6829
    %v6838 = vadd.f32 %v6822, %v6830
    %v6839 = vadd.f32 %v6823, %v6831
    %v6840 = vmul.f32 %v594, %v6056
    %v6841 = vmul.f32 %v594, %v6057
    %v6842 = vmul.f32 %v594, %v6058
    %v6843 = vmul.f32 %v594, %v6059
    %v6844 = vmul.f32 %v594, %v6060
    %v6845 = vmul.f32 %v594, %v6061
    %v6846 = vmul.f32 %v594, %v6062
    %v6847 = vmul.f32 %v594, %v6063
    %v6856 = vrot.slane %v6840, 1
    %v6857 = vrot.slane %v6841, 1
    %v6858 = vrot.slane %v6842, 1
    %v6859 = vrot.slane %v6843, 1
    %v6860 = vrot.slane %v6844, 1
    %v6861 = vrot.slane %v6845, 1
    %v6862 = vrot.slane %v6846, 1
    %v6863 = vrot.slane %v6847, 1
    %v6872 = vadd.f32 %v6832, %v6856
    %v6873 = vadd.f32 %v6833, %v6857
    %v6874 = vadd.f32 %v6834, %v6858
    %v6875 = vadd.f32 %v6835, %v6859
    %v6876 = vadd.f32 %v6836, %v6860
    %v6877 = vadd.f32 %v6837, %v6861
    %v6878 = vadd.f32 %v6838, %v6862
    %v6879 = vadd.f32 %v6839, %v6863
    %v6880 = vmul.f32 %v636, %v6056
    %v6881 = vmul.f32 %v636, %v6057
    %v6882 = vmul.f32 %v636, %v6058
    %v6883 = vmul.f32 %v636, %v6059
    %v6884 = vmul.f32 %v636, %v6060
    %v6885 = vmul.f32 %v636, %v6061
    %v6886 = vmul.f32 %v636, %v6062
    %v6887 = vmul.f32 %v636, %v6063
    %v6896 = vrot.slane %v6880, 2
    %v6897 = vrot.slane %v6881, 2
    %v6898 = vrot.slane %v6882, 2
    %v6899 = vrot.slane %v6883, 2
    %v6900 = vrot.slane %v6884, 2
    %v6901 = vrot.slane %v6885, 2
    %v6902 = vrot.slane %v6886, 2
    %v6903 = vrot.slane %v6887, 2
    %v6912 = vadd.f32 %v6872, %v6896
    %v6913 = vadd.f32 %v6873, %v6897
    %v6914 = vadd.f32 %v6874, %v6898
    %v6915 = vadd.f32 %v6875, %v6899
    %v6916 = vadd.f32 %v6876, %v6900
    %v6917 = vadd.f32 %v6877, %v6901
    %v6918 = vadd.f32 %v6878, %v6902
    %v6919 = vadd.f32 %v6879, %v6903
    %s6920 = scalar_lea.vmem [#allocation4], 720
    %v6921 = vld [vmem:[%s6920] sm:$0xff]
    %v6922 = vld [vmem:[%s6920 + $0x8] sm:$0xff]
    %v6923 = vld [vmem:[%s6920 + $0x10] sm:$0xff]
    %v6924 = vld [vmem:[%s6920 + $0x18] sm:$0xff]
    %v6925 = vld [vmem:[%s6920 + $0x20] sm:$0xff]
    %v6926 = vld [vmem:[%s6920 + $0x28] sm:$0xff]
    %v6927 = vld [vmem:[%s6920 + $0x30] sm:$0xff]
    %v6928 = vld [vmem:[%s6920 + $0x38] sm:$0xff]
    %v6929 = vld [vmem:[%s6920 + $0x40] sm:$0xff]
    %v6930 = vld [vmem:[%s6920 + $0x48] sm:$0xff]
    %v6931 = vmul.f32 %v689, %v6921
    %v6932 = vmul.f32 %v689, %v6922
    %v6933 = vmul.f32 %v689, %v6923
    %v6934 = vmul.f32 %v689, %v6924
    %v6935 = vmul.f32 %v689, %v6925
    %v6936 = vmul.f32 %v689, %v6926
    %v6937 = vmul.f32 %v689, %v6927
    %v6938 = vmul.f32 %v689, %v6928
    %v6939 = vadd.f32 %v6912, %v6931
    %v6940 = vadd.f32 %v6913, %v6932
    %v6941 = vadd.f32 %v6914, %v6933
    %v6942 = vadd.f32 %v6915, %v6934
    %v6943 = vadd.f32 %v6916, %v6935
    %v6944 = vadd.f32 %v6917, %v6936
    %v6945 = vadd.f32 %v6918, %v6937
    %v6946 = vadd.f32 %v6919, %v6938
    %v6947 = vmul.f32 %v707, %v6921
    %v6948 = vmul.f32 %v707, %v6922
    %v6949 = vmul.f32 %v707, %v6923
    %v6950 = vmul.f32 %v707, %v6924
    %v6951 = vmul.f32 %v707, %v6925
    %v6952 = vmul.f32 %v707, %v6926
    %v6953 = vmul.f32 %v707, %v6927
    %v6954 = vmul.f32 %v707, %v6928
    %v6963 = vrot.slane %v6947, 1
    %v6964 = vrot.slane %v6948, 1
    %v6965 = vrot.slane %v6949, 1
    %v6966 = vrot.slane %v6950, 1
    %v6967 = vrot.slane %v6951, 1
    %v6968 = vrot.slane %v6952, 1
    %v6969 = vrot.slane %v6953, 1
    %v6970 = vrot.slane %v6954, 1
    %v6979 = vadd.f32 %v6939, %v6963
    %v6980 = vadd.f32 %v6940, %v6964
    %v6981 = vadd.f32 %v6941, %v6965
    %v6982 = vadd.f32 %v6942, %v6966
    %v6983 = vadd.f32 %v6943, %v6967
    %v6984 = vadd.f32 %v6944, %v6968
    %v6985 = vadd.f32 %v6945, %v6969
    %v6986 = vadd.f32 %v6946, %v6970
    %v6987 = vmul.f32 %v749, %v6921
    %v6988 = vmul.f32 %v749, %v6922
    %v6989 = vmul.f32 %v749, %v6923
    %v6990 = vmul.f32 %v749, %v6924
    %v6991 = vmul.f32 %v749, %v6925
    %v6992 = vmul.f32 %v749, %v6926
    %v6993 = vmul.f32 %v749, %v6927
    %v6994 = vmul.f32 %v749, %v6928
    %v7003 = vrot.slane %v6987, 2
    %v7004 = vrot.slane %v6988, 2
    %v7005 = vrot.slane %v6989, 2
    %v7006 = vrot.slane %v6990, 2
    %v7007 = vrot.slane %v6991, 2
    %v7008 = vrot.slane %v6992, 2
    %v7009 = vrot.slane %v6993, 2
    %v7010 = vrot.slane %v6994, 2
    %v7019 = vadd.f32 %v6979, %v7003
    %v7020 = vadd.f32 %v6980, %v7004
    %v7021 = vadd.f32 %v6981, %v7005
    %v7022 = vadd.f32 %v6982, %v7006
    %v7023 = vadd.f32 %v6983, %v7007
    %v7024 = vadd.f32 %v6984, %v7008
    %v7025 = vadd.f32 %v6985, %v7009
    %v7026 = vadd.f32 %v6986, %v7010
    %v7027 = vmul.f32 %v791, %v6922
    %v7028 = vmul.f32 %v791, %v6923
    %v7029 = vmul.f32 %v791, %v6924
    %v7030 = vmul.f32 %v791, %v6925
    %v7031 = vmul.f32 %v791, %v6926
    %v7032 = vmul.f32 %v791, %v6927
    %v7033 = vmul.f32 %v791, %v6928
    %v7034 = vmul.f32 %v791, %v6929
    %v7035 = vadd.f32 %v7019, %v7027
    %v7036 = vadd.f32 %v7020, %v7028
    %v7037 = vadd.f32 %v7021, %v7029
    %v7038 = vadd.f32 %v7022, %v7030
    %v7039 = vadd.f32 %v7023, %v7031
    %v7040 = vadd.f32 %v7024, %v7032
    %v7041 = vadd.f32 %v7025, %v7033
    %v7042 = vadd.f32 %v7026, %v7034
    %v7043 = vmul.f32 %v809, %v6922
    %v7044 = vmul.f32 %v809, %v6923
    %v7045 = vmul.f32 %v809, %v6924
    %v7046 = vmul.f32 %v809, %v6925
    %v7047 = vmul.f32 %v809, %v6926
    %v7048 = vmul.f32 %v809, %v6927
    %v7049 = vmul.f32 %v809, %v6928
    %v7050 = vmul.f32 %v809, %v6929
    %v7059 = vrot.slane %v7043, 1
    %v7060 = vrot.slane %v7044, 1
    %v7061 = vrot.slane %v7045, 1
    %v7062 = vrot.slane %v7046, 1
    %v7063 = vrot.slane %v7047, 1
    %v7064 = vrot.slane %v7048, 1
    %v7065 = vrot.slane %v7049, 1
    %v7066 = vrot.slane %v7050, 1
    %v7075 = vadd.f32 %v7035, %v7059
    %v7076 = vadd.f32 %v7036, %v7060
    %v7077 = vadd.f32 %v7037, %v7061
    %v7078 = vadd.f32 %v7038, %v7062
    %v7079 = vadd.f32 %v7039, %v7063
    %v7080 = vadd.f32 %v7040, %v7064
    %v7081 = vadd.f32 %v7041, %v7065
    %v7082 = vadd.f32 %v7042, %v7066
    %v7083 = vmul.f32 %v851, %v6922
    %v7084 = vmul.f32 %v851, %v6923
    %v7085 = vmul.f32 %v851, %v6924
    %v7086 = vmul.f32 %v851, %v6925
    %v7087 = vmul.f32 %v851, %v6926
    %v7088 = vmul.f32 %v851, %v6927
    %v7089 = vmul.f32 %v851, %v6928
    %v7090 = vmul.f32 %v851, %v6929
    %v7099 = vrot.slane %v7083, 2
    %v7100 = vrot.slane %v7084, 2
    %v7101 = vrot.slane %v7085, 2
    %v7102 = vrot.slane %v7086, 2
    %v7103 = vrot.slane %v7087, 2
    %v7104 = vrot.slane %v7088, 2
    %v7105 = vrot.slane %v7089, 2
    %v7106 = vrot.slane %v7090, 2
    %v7115 = vadd.f32 %v7075, %v7099
    %v7116 = vadd.f32 %v7076, %v7100
    %v7117 = vadd.f32 %v7077, %v7101
    %v7118 = vadd.f32 %v7078, %v7102
    %v7119 = vadd.f32 %v7079, %v7103
    %v7120 = vadd.f32 %v7080, %v7104
    %v7121 = vadd.f32 %v7081, %v7105
    %v7122 = vadd.f32 %v7082, %v7106
    %v7123 = vmul.f32 %v893, %v6923
    %v7124 = vmul.f32 %v893, %v6924
    %v7125 = vmul.f32 %v893, %v6925
    %v7126 = vmul.f32 %v893, %v6926
    %v7127 = vmul.f32 %v893, %v6927
    %v7128 = vmul.f32 %v893, %v6928
    %v7129 = vmul.f32 %v893, %v6929
    %v7130 = vmul.f32 %v893, %v6930
    %v7131 = vadd.f32 %v7115, %v7123
    %v7132 = vadd.f32 %v7116, %v7124
    %v7133 = vadd.f32 %v7117, %v7125
    %v7134 = vadd.f32 %v7118, %v7126
    %v7135 = vadd.f32 %v7119, %v7127
    %v7136 = vadd.f32 %v7120, %v7128
    %v7137 = vadd.f32 %v7121, %v7129
    %v7138 = vadd.f32 %v7122, %v7130
    %v7139 = vmul.f32 %v911, %v6923
    %v7140 = vmul.f32 %v911, %v6924
    %v7141 = vmul.f32 %v911, %v6925
    %v7142 = vmul.f32 %v911, %v6926
    %v7143 = vmul.f32 %v911, %v6927
    %v7144 = vmul.f32 %v911, %v6928
    %v7145 = vmul.f32 %v911, %v6929
    %v7146 = vmul.f32 %v911, %v6930
    %v7155 = vrot.slane %v7139, 1
    %v7156 = vrot.slane %v7140, 1
    %v7157 = vrot.slane %v7141, 1
    %v7158 = vrot.slane %v7142, 1
    %v7159 = vrot.slane %v7143, 1
    %v7160 = vrot.slane %v7144, 1
    %v7161 = vrot.slane %v7145, 1
    %v7162 = vrot.slane %v7146, 1
    %v7171 = vadd.f32 %v7131, %v7155
    %v7172 = vadd.f32 %v7132, %v7156
    %v7173 = vadd.f32 %v7133, %v7157
    %v7174 = vadd.f32 %v7134, %v7158
    %v7175 = vadd.f32 %v7135, %v7159
    %v7176 = vadd.f32 %v7136, %v7160
    %v7177 = vadd.f32 %v7137, %v7161
    %v7178 = vadd.f32 %v7138, %v7162
    %v7179 = vmul.f32 %v953, %v6923
    %v7180 = vmul.f32 %v953, %v6924
    %v7181 = vmul.f32 %v953, %v6925
    %v7182 = vmul.f32 %v953, %v6926
    %v7183 = vmul.f32 %v953, %v6927
    %v7184 = vmul.f32 %v953, %v6928
    %v7185 = vmul.f32 %v953, %v6929
    %v7186 = vmul.f32 %v953, %v6930
    %v7195 = vrot.slane %v7179, 2
    %v7196 = vrot.slane %v7180, 2
    %v7197 = vrot.slane %v7181, 2
    %v7198 = vrot.slane %v7182, 2
    %v7199 = vrot.slane %v7183, 2
    %v7200 = vrot.slane %v7184, 2
    %v7201 = vrot.slane %v7185, 2
    %v7202 = vrot.slane %v7186, 2
    %v7211 = vadd.f32 %v7171, %v7195
    %v7212 = vadd.f32 %v7172, %v7196
    %v7213 = vadd.f32 %v7173, %v7197
    %v7214 = vadd.f32 %v7174, %v7198
    %v7215 = vadd.f32 %v7175, %v7199
    %v7216 = vadd.f32 %v7176, %v7200
    %v7217 = vadd.f32 %v7177, %v7201
    %v7218 = vadd.f32 %v7178, %v7202
    %v7219 = vmax.f32 %v6344, %v7211
    %v7220 = vmax.f32 %v6345, %v7212
    %v7221 = vmax.f32 %v6346, %v7213
    %v7222 = vmax.f32 %v6347, %v7214
    %v7223 = vmax.f32 %v6348, %v7215
    %v7224 = vmax.f32 %v6349, %v7216
    %v7225 = vmax.f32 %v6350, %v7217
    %v7226 = vmax.f32 %v6351, %v7218
    %v7227 = vmax.f32 %v7219, %v7220
    %v7229 = vrot.slane %v7227, 1
    %v7231 = vmax.f32 %v7227, %v7229
    %v7232 = vadd.f32 %v7231, %v1874
    %v7233 = vtanh.pop %v7232
    %s7234 = scalar_lea.vmem %s3, 96
    %v7235 = vld [vmem:[%s7234] sm:$0x1f]
    %v7236 = vmul.f32 %v7235, %v7233
    %v7237 = vadd.f32 %v5484, %v7236
    %v7238 = vmax.f32 %v7221, %v7222
    %v7240 = vrot.slane %v7238, 1
    %v7242 = vmax.f32 %v7238, %v7240
    %v7243 = vadd.f32 %v7242, %v1874
    %v7244 = vtanh.pop %v7243
    %s7245 = scalar_lea.vmem %s3, 104
    %v7246 = vld [vmem:[%s7245] sm:$0x1f]
    %v7247 = vmul.f32 %v7246, %v7244
    %v7248 = vadd.f32 %v7237, %v7247
    %v7249 = vmax.f32 %v7223, %v7224
    %v7251 = vrot.slane %v7249, 1
    %v7253 = vmax.f32 %v7249, %v7251
    %v7254 = vadd.f32 %v7253, %v1874
    %v7255 = vtanh.pop %v7254
    %s7256 = scalar_lea.vmem %s3, 112
    %v7257 = vld [vmem:[%s7256] sm:$0x1f]
    %v7258 = vmul.f32 %v7257, %v7255
    %v7259 = vadd.f32 %v7248, %v7258
    %v7260 = vmax.f32 %v7225, %v7226
    %v7262 = vrot.slane %v7260, 1
    %v7264 = vmax.f32 %v7260, %v7262
    %v7265 = vadd.f32 %v7264, %v1874
    %v7266 = vtanh.pop %v7265
    %s7267 = scalar_lea.vmem %s3, 120
    %v7268 = vld [vmem:[%s7267] sm:$0x1f]
    %v7269 = vmul.f32 %v7268, %v7266
    %v7270 = vadd.f32 %v7259, %v7269
    %vm7271 = vcmask 1044480
    %v7272 = vsel %vm7271, %v7270, 0.0
    %v7273 = vrot.slane %v7272, 4
    %v7274 = vadd.f32 %v7272, %v7273
    %v7275 = vrot.slane %v7274, 2
    %v7276 = vadd.f32 %v7274, %v7275
    %v7277 = vrot.slane %v7276, 1
    %v7278 = vadd.f32 %v7276, %v7277
    %v7279 = vstv %s51
    %v7280 = vadd.f32 %v7278, %v7279
    %7281 = vst [vmem:[#allocation9] sm:$0x1] %v7280
    // Predicated region
    $region30: #{tpu_custom_call.1} parent=1 // pred_check
      _
    $region31: #{tpu_custom_call.1} parent=1 // pred_check_branch
      %7283 = sbr.rel (0) target = $region33
    $region32: #{tpu_custom_call.1} parent=1 // pred_region
      %s7285 = ssub.s32 16, 16
      %7286 = vsyncadd [#allocation6], %s7285
      %s7288 = sshll.u32 [#allocation9], 4
      %s7289 = int_to_ptr.vmem [resolvable:$true] %s7288
      %7291 = dma.vmem_to_hbm [thread:$0]  %s7289, 16, %s5, [#allocation6]
    $region33: #{tpu_custom_call.1} parent=1 // pred_fallthru
      _
    // Predicated region
    $region34: #{tpu_custom_call.1} parent=1 // pred_check
      _
    $region35: #{tpu_custom_call.1} parent=1 // pred_check_branch
      %7293 = sbr.rel (0) target = $region37
    $region36: #{tpu_custom_call.1} parent=1 // pred_region
      %7294 = dma.done [#allocation6], 16
    $region37: #{tpu_custom_call.1} parent=1 // pred_fallthru
      _
    %7295 = vsyncpa [#allocation5], 1
    %7296 = vsyncpa [#allocation6], 1
    %7297 = vsyncpa [#allocation7], 1

</llo_original>
